<compile_context>
chip_gen: v5e
topology: v5e:2x2
jax: 0.10.0
libtpu: 0.0.40
codegen_flags: <defaults>
</compile_context>

<pallas_src>
import functools

import jax
import jax.numpy as jnp
from jax.experimental import pallas as pl
from jax.experimental.pallas import tpu as pltpu


# ============================================================================
# The single fused kernel: encoder (both convs as dense GEMMs) + flatten +
# the entire TransformationDecoder. Everything between the input tile and the
# two small output heads stays in VMEM / vregs.
# ============================================================================
def _trance_kernel(
        x_ref, desc_ref, tgt_ref,                    # per-batch-tile data
        w0_ref, b0_ref,                              # conv0 folded to dense GEMM
        w1_ref, b1_ref,                              # conv1 folded (+ NCHW flatten)
        wi0_ref, bi0_ref, wi1_ref, bi1_ref,          # image MLP
        wq_ref, bq_ref,                              # obj query head
        wf0h_ref, wf0o_ref, bf0_ref,                 # fusion_fc0, split (no concat)
        wf1_ref, bf1_ref,                            # fusion_fc1
        wp_ref, bp_ref,                              # pair head (lane-padded to 128)
        obj_ref, pair_ref,                           # outputs
        *, use_target):
    f32, bf16 = jnp.float32, jnp.bfloat16

    def mm(a, w_ref):
        # bf16 MXU operands, f32 accumulate; all elementwise stays f32.
        return jnp.dot(a.astype(bf16), w_ref[...], preferred_element_type=f32)

    # ---- encoder: conv0 / conv1 (3x3, stride 2, pad 1) as dense GEMMs ----
    a0 = jnp.maximum(mm(x_ref[...], w0_ref) + b0_ref[...], 0.0)   # [tb, Ho0*Wo0*C0]
    img = jnp.maximum(mm(a0, w1_ref) + b1_ref[...], 0.0)          # [tb, c_flat]

    # ---- decoder: image MLP ----
    h = jnp.maximum(mm(img, wi0_ref) + bi0_ref[...], 0.0)
    h = jnp.maximum(mm(h, wi1_ref) + bi1_ref[...], 0.0)

    # ---- object query + per-object scores (obj_choice = bmm(init_desc, q)) ----
    q = mm(h, wq_ref) + bq_ref[...]                                # [tb, c_obj]
    d = desc_ref[...]                                              # [tb, n_obj, c_obj] f32
    scores = jnp.sum(d * q[:, None, :], axis=-1)                   # [tb, n_obj]
    obj_ref[...] = scores.astype(obj_ref.dtype)
    # TODO(synk): if n_obj/c_obj grow, restage desc as [B, c_obj, n_obj] so the
    # contraction sits on sublanes and the score result is lane-contiguous.

    if use_target:
        obj_vec = tgt_ref[...]                                     # teacher forcing
    else:
        # inference path: select init_desc row of the (first) argmax, in-kernel.
        n_obj = scores.shape[-1]
        lane = jax.lax.broadcasted_iota(jnp.int32, scores.shape, 1)
        mx = jnp.max(scores, axis=-1, keepdims=True)
        first = jnp.min(jnp.where(scores == mx, lane, n_obj), axis=-1, keepdims=True)
        obj_vec = jnp.sum((lane == first).astype(f32)[:, :, None] * d, axis=1)

    # ---- fusion MLP: concat(h, obj_vec) @ Wf0 == h @ Wf0[:d] + obj_vec @ Wf0[d:] ----
    f = jnp.maximum(mm(h, wf0h_ref) + mm(obj_vec, wf0o_ref) + bf0_ref[...], 0.0)
    f = jnp.maximum(mm(f, wf1_ref) + bf1_ref[...], 0.0)
    # Lane-dense (128-wide, zero-padded) pair logits -> unmasked vst.
    pair_ref[...] = (mm(f, wp_ref) + bp_ref[...]).astype(pair_ref.dtype)


def _fused_forward(x_flat, init_desc, obj_target_vec, pp, *, tb=256):
    B, k_in = x_flat.shape
    n_obj, c_obj = init_desc.shape[1], init_desc.shape[2]
    n_pair_pad = pp["b_pair"].shape[-1]
    use_target = obj_target_vec is not None
    tgt = obj_target_vec if use_target else jnp.zeros((B, c_obj), jnp.float32)

    # tb=256 fills the 256-wide MXU M dim on v6e/v7x and stays within v5e's VMEM
    # given the explicit limit below; on v7x prefer tb <= B//2 so both TensorCores
    # get grid steps (the batch axis is marked "parallel").
    tb = min(tb, B)

    weights = [
        pp["w_conv0"], pp["b_conv0"], pp["w_conv1"], pp["b_conv1"],
        pp["w_img0"], pp["b_img0"], pp["w_img1"], pp["b_img1"],
        pp["w_obj"], pp["b_obj"],
        pp["w_fu0_img"], pp["w_fu0_obj"], pp["b_fu0"],
        pp["w_fu1"], pp["b_fu1"],
        pp["w_pair"], pp["b_pair"],
    ]
    # Constant-index full-array blocks: fetched once and revisited across the batch
    # grid. (pl.Buffered(1) would also drop their second pipeline buffer; at the
    # ~4.5 MB bf16 weight footprint here the default double buffer fits easily.)
    w_specs = [pl.BlockSpec(w.shape, lambda i: (0, 0)) for w in weights]
    in_specs = [
        pl.BlockSpec((tb, k_in), lambda i: (i, 0)),
        pl.BlockSpec((tb, n_obj, c_obj), lambda i: (i, 0, 0)),
        pl.BlockSpec((tb, c_obj), lambda i: (i, 0)),
    ] + w_specs
    out_specs = [
        pl.BlockSpec((tb, n_obj), lambda i: (i, 0)),        # tiny head (masked store ok)
        pl.BlockSpec((tb, n_pair_pad), lambda i: (i, 0)),   # lane-dense 128-wide store
    ]

    # Explicit VMEM budget: 2x weights (default double buffer) + 2x in/out tiles
    # + intermediate headroom; keeps tb sweeps portable across v5e/v6e/v7x.
    weight_bytes = sum(int(w.size) * w.dtype.itemsize for w in weights)
    in_tile_bytes = 4 * tb * (k_in + n_obj * c_obj + c_obj)
    out_tile_bytes = 4 * tb * (n_obj + n_pair_pad)
    est = (2 * weight_bytes + 2 * (in_tile_bytes + out_tile_bytes)
           + 8 * tb * 1024 * 4 + (4 << 20))
    vmem_limit = int(min(64 << 20, max(32 << 20, est)))

    flops = 2 * B * (sum(int(w.shape[0]) * int(w.shape[1])
                         for w in weights if w.shape[0] > 1)
                     + 2 * n_obj * c_obj)
    bytes_acc = weight_bytes + 4 * B * (k_in + n_obj * c_obj + c_obj
                                        + n_obj + n_pair_pad)

    obj_choice, pair_pad = pl.pallas_call(
        functools.partial(_trance_kernel, use_target=use_target),
        out_shape=(jax.ShapeDtypeStruct((B, n_obj), jnp.float32),
                   jax.ShapeDtypeStruct((B, n_pair_pad), jnp.float32)),
        grid_spec=pltpu.PrefetchScalarGridSpec(
            num_scalar_prefetch=0,
            grid=(pl.cdiv(B, tb),),
            in_specs=in_specs,
            out_specs=out_specs,
        ),
        compiler_params=pltpu.CompilerParams(
            dimension_semantics=("parallel",),
            vmem_limit_bytes=vmem_limit),
        cost_estimate=pl.CostEstimate(flops=int(flops), transcendentals=0,
                                      bytes_accessed=int(bytes_acc)),
    )(x_flat, init_desc, tgt, *weights)
    return obj_choice, pair_pad


# ============================================================================
# Offline weight packing (one-time, outside the hot path)
# ============================================================================
def _conv3x3_s2_as_dense(w, b, h_in, w_in, *, in_layout, out_layout):
    """Fold a 3x3/stride-2/pad-1 conv into a dense [in_flat, out_flat] matrix by
    pushing an identity basis through lax.conv. Entries are exact copies of the
    conv weights (identity inputs), so no precision is lost in the fold."""
    kh, kw, cin, cout = w.shape
    n_in = h_in * w_in * cin
    if in_layout == "NCHW":
        eye = jnp.eye(n_in, dtype=jnp.float32).reshape(n_in, cin, h_in, w_in)
    else:
        eye = jnp.eye(n_in, dtype=jnp.float32).reshape(n_in, h_in, w_in, cin)
    out = jax.lax.conv_general_dilated(
        eye, w, window_strides=(2, 2), padding=((1, 1), (1, 1)),
        dimension_numbers=(in_layout, "HWIO", out_layout),
        precision=jax.lax.Precision.HIGHEST)
    if out_layout == "NHWC":
        _, ho, wo, _ = out.shape
        b_flat = jnp.tile(b, ho * wo)            # flat = (h*wo + w)*cout + c
    else:
        _, _, ho, wo = out.shape
        b_flat = jnp.repeat(b, ho * wo)          # flat = (c*ho + h)*wo + w
    return out.reshape(n_in, -1), b_flat, ho, wo


def prepare_params(params, *, height=16, width=16, lane_pad=128):
    """Pack PyTorch-layout weights into the fused-kernel layout: dense-conv fold,
    flatten-permutation fold, split-concat fusion weight, bf16 MXU operands."""
    bf16 = jnp.bfloat16
    p = {}

    w0, b0 = params["conv0"]
    w1, b1 = params["conv1"]
    # conv0: NCHW-flat input -> NHWC-flat activation; conv1: NHWC-flat -> NCHW-flat,
    # which bakes torch's NCHW flatten(start_dim=1) into the conv1 matrix so
    # img_fc0 can be used unpermuted.
    w0d, b0d, ho0, wo0 = _conv3x3_s2_as_dense(w0, b0, height, width,
                                              in_layout="NCHW", out_layout="NHWC")
    w1d, b1d, _, _ = _conv3x3_s2_as_dense(w1, b1, ho0, wo0,
                                          in_layout="NHWC", out_layout="NCHW")
    # TODO(synk): at TRANCE's full 120x160 resolution the dense conv0 matrix is
    # infeasible (O((HWC)^2)); switch to an in-kernel 9-shift conv accumulation
    # over an NHWC VMEM tile at that scale.
    p["w_conv0"], p["b_conv0"] = w0d.astype(bf16), b0d.reshape(1, -1)
    p["w_conv1"], p["b_conv1"] = w1d.astype(bf16), b1d.reshape(1, -1)

    wi0, bi0 = params["img_fc0"]
    wi1, bi1 = params["img_fc1"]
    p["w_img0"], p["b_img0"] = wi0.astype(bf16), bi0.reshape(1, -1)
    p["w_img1"], p["b_img1"] = wi1.astype(bf16), bi1.reshape(1, -1)

    wq, bq = params["obj_select"]
    p["w_obj"], p["b_obj"] = wq.astype(bf16), bq.reshape(1, -1)

    # fusion_fc0 split so concat(img_emb, obj_vec) never needs to be built.
    wf0, bf0 = params["fusion_fc0"]
    d_img = wi1.shape[1]
    p["w_fu0_img"] = wf0[:d_img].astype(bf16)
    p["w_fu0_obj"] = wf0[d_img:].astype(bf16)
    p["b_fu0"] = bf0.reshape(1, -1)

    wf1, bf1 = params["fusion_fc1"]
    p["w_fu1"], p["b_fu1"] = wf1.astype(bf16), bf1.reshape(1, -1)

    # pair head: zero-pad to a lane-dense multiple of 128 (unmasked vst in-kernel);
    # the wrapper slices back to n_pair.
    wp, bp = params["pair_cls"]
    n_pair = wp.shape[1]
    n_pad = ((n_pair + lane_pad - 1) // lane_pad) * lane_pad
    p["w_pair"] = jnp.pad(wp, ((0, 0), (0, n_pad - n_pair))).astype(bf16)
    p["b_pair"] = jnp.pad(bp, (0, n_pad - n_pair)).reshape(1, -1)
    return p


# ============================================================================
# Forward (the only XLA glue left is a channel-concat + flatten)
# ============================================================================
def single_trance_net(prepped, init, fin, init_desc, obj_target_vec=None,
                      *, n_pair=33, tb=256):
    B = init.shape[0]
    x_flat = jnp.concatenate([init, fin], axis=1).reshape(B, -1)   # NCHW-flat
    obj_choice, pair_pad = _fused_forward(x_flat, init_desc, obj_target_vec,
                                          prepped, tb=tb)
    return {"obj_choice": obj_choice, "pair_choice": pair_pad[:, :n_pair]}


# ============================================================================
# Parameters (PyTorch-like layout, He init so activations stay O(1))
# ============================================================================
def init_params(key, *, in_ch=6, conv_chs=(16, 8), height=16, width=16,
                c_obj=19, n_pair=33, fc_img_en=(1024, 256), fc_fusion=(256, 256)):
    ks = iter(jax.random.split(key, 32))

    def dense(k, fan_in, fan_out):
        w = jax.random.normal(k, (fan_in, fan_out), jnp.float32) * (2.0 / fan_in) ** 0.5
        return w, jnp.zeros((fan_out,), jnp.float32)

    params = {}
    c_prev = in_ch
    for i, c in enumerate(conv_chs):
        w = (jax.random.normal(next(ks), (3, 3, c_prev, c), jnp.float32)
             * (2.0 / (9 * c_prev)) ** 0.5)
        params[f"conv{i}"] = (w, jnp.zeros((c,), jnp.float32))
        c_prev = c
    h_out, w_out = height, width
    for _ in conv_chs:
        h_out = (h_out + 2 - 3) // 2 + 1
        w_out = (w_out + 2 - 3) // 2 + 1
    c_flat = conv_chs[-1] * h_out * w_out

    dims = [c_flat] + list(fc_img_en)
    for i in range(len(fc_img_en)):
        params[f"img_fc{i}"] = dense(next(ks), dims[i], dims[i + 1])
    params["obj_select"] = dense(next(ks), fc_img_en[-1], c_obj)
    fdims = [fc_img_en[-1] + c_obj] + list(fc_fusion)
    for i in range(len(fc_fusion)):
        params[f"fusion_fc{i}"] = dense(next(ks), fdims[i], fdims[i + 1])
    params["pair_cls"] = dense(next(ks), fc_fusion[-1], n_pair)
    return params


# ============================================================================
# Pure-JAX reference (validates the dense-conv / flatten / split-concat folds)
# ============================================================================
def reference_forward(params, init, fin, init_desc, obj_target_vec):
    hi = jax.lax.Precision.HIGHEST
    x = jnp.concatenate([init, fin], axis=1)
    x = jnp.transpose(x, (0, 2, 3, 1))
    for i in range(2):
        w, b = params[f"conv{i}"]
        x = jax.lax.conv_general_dilated(
            x, w, window_strides=(2, 2), padding=((1, 1), (1, 1)),
            dimension_numbers=("NHWC", "HWIO", "NHWC"), precision=hi)
        x = jnp.maximum(x + b, 0.0)
    img = jnp.transpose(x, (0, 3, 1, 2)).reshape(x.shape[0], -1)   # NCHW flatten
    h = img
    for i in range(2):
        w, b = params[f"img_fc{i}"]
        h = jnp.maximum(jnp.dot(h, w, precision=hi) + b, 0.0)
    wq, bq = params["obj_select"]
    q = jnp.dot(h, wq, precision=hi) + bq
    obj_choice = jnp.einsum("boc,bc->bo", init_desc, q, precision=hi)
    f = jnp.concatenate([h, obj_target_vec], axis=-1)
    for i in range(2):
        w, b = params[f"fusion_fc{i}"]
        f = jnp.maximum(jnp.dot(f, w, precision=hi) + b, 0.0)
    wp, bp = params["pair_cls"]
    return obj_choice, jnp.dot(f, wp, precision=hi) + bp


# ============================================================================
if __name__ == "__main__":
    key = jax.random.PRNGKey(0)
    k1, k2, k3, k4, kp = jax.random.split(key, 5)

    B, C_IMG, H, W = 2, 3, 16, 16
    N_OBJ, C_OBJ, N_PAIR = 10, 19, 33

    init = jax.random.normal(k1, (B, C_IMG, H, W), jnp.float32)
    fin = jax.random.normal(k2, (B, C_IMG, H, W), jnp.float32)
    init_desc = jax.random.normal(k3, (B, N_OBJ, C_OBJ), jnp.float32)
    obj_target_vec = jax.random.normal(k4, (B, C_OBJ), jnp.float32)

    params = init_params(kp, height=H, width=W, c_obj=C_OBJ, n_pair=N_PAIR)
    prepped = prepare_params(params, height=H, width=W)

    fwd = jax.jit(single_trance_net, static_argnames=("n_pair", "tb"))
    out = fwd(prepped, init, fin, init_desc, obj_target_vec, n_pair=N_PAIR)
    out = jax.block_until_ready(out)

    assert out["obj_choice"].shape == (B, N_OBJ)
    assert out["pair_choice"].shape == (B, N_PAIR)
    assert bool(jnp.all(jnp.isfinite(out["obj_choice"])))
    assert bool(jnp.all(jnp.isfinite(out["pair_choice"])))

    ref_obj, ref_pair = reference_forward(params, init, fin, init_desc, obj_target_vec)

    def rel_err(a, b):
        return float(jnp.linalg.norm(a - b) / (jnp.linalg.norm(b) + 1e-6))

    # bf16 MXU operands vs f32-HIGHEST reference: expect <1% relative L2 error;
    # any packing/fold bug would show up as O(1).
    assert rel_err(out["obj_choice"], ref_obj) < 3e-2, rel_err(out["obj_choice"], ref_obj)
    assert rel_err(out["pair_choice"], ref_pair) < 3e-2, rel_err(out["pair_choice"], ref_pair)

    print("KERNEL_OK")
</pallas_src>

<mosaic_0001>
module attributes {stable_mosaic.version = 11 : i64} {
  func.func @_trance_kernel(%arg0: i32, %arg1: memref<2x1536xf32, #tpu.memory_space<vmem>>, %arg2: memref<2x10x19xf32, #tpu.memory_space<vmem>>, %arg3: memref<2x19xf32, #tpu.memory_space<vmem>>, %arg4: memref<1536x1024xbf16, #tpu.memory_space<vmem>>, %arg5: memref<1x1024xf32, #tpu.memory_space<vmem>>, %arg6: memref<1024x128xbf16, #tpu.memory_space<vmem>>, %arg7: memref<1x128xf32, #tpu.memory_space<vmem>>, %arg8: memref<128x1024xbf16, #tpu.memory_space<vmem>>, %arg9: memref<1x1024xf32, #tpu.memory_space<vmem>>, %arg10: memref<1024x256xbf16, #tpu.memory_space<vmem>>, %arg11: memref<1x256xf32, #tpu.memory_space<vmem>>, %arg12: memref<256x19xbf16, #tpu.memory_space<vmem>>, %arg13: memref<1x19xf32, #tpu.memory_space<vmem>>, %arg14: memref<256x256xbf16, #tpu.memory_space<vmem>>, %arg15: memref<19x256xbf16, #tpu.memory_space<vmem>>, %arg16: memref<1x256xf32, #tpu.memory_space<vmem>>, %arg17: memref<256x256xbf16, #tpu.memory_space<vmem>>, %arg18: memref<1x256xf32, #tpu.memory_space<vmem>>, %arg19: memref<256x128xbf16, #tpu.memory_space<vmem>>, %arg20: memref<1x128xf32, #tpu.memory_space<vmem>>, %arg21: memref<2x10xf32, #tpu.memory_space<vmem>>, %arg22: memref<2x128xf32, #tpu.memory_space<vmem>>) attributes {dimension_semantics = [#tpu.dimension_semantics<parallel>], iteration_bounds = array<i64: 1>, scalar_prefetch = 0 : i64, scratch_operands = 0 : i64, tpu.core_type = #tpu.core_type<tc>, window_params = [{transform_indices = @transform_0, window_bounds = array<i64: 2, 1536>}, {transform_indices = @transform_1, window_bounds = array<i64: 2, 10, 19>}, {transform_indices = @transform_2, window_bounds = array<i64: 2, 19>}, {pipeline_mode = #tpu.pipeline_mode<synchronous>, transform_indices = @transform_3, window_bounds = array<i64: 1536, 1024>}, {pipeline_mode = #tpu.pipeline_mode<synchronous>, transform_indices = @transform_4, window_bounds = array<i64: 1, 1024>}, {pipeline_mode = #tpu.pipeline_mode<synchronous>, transform_indices = @transform_5, window_bounds = array<i64: 1024, 128>}, {pipeline_mode = #tpu.pipeline_mode<synchronous>, transform_indices = @transform_6, window_bounds = array<i64: 1, 128>}, {pipeline_mode = #tpu.pipeline_mode<synchronous>, transform_indices = @transform_7, window_bounds = array<i64: 128, 1024>}, {pipeline_mode = #tpu.pipeline_mode<synchronous>, transform_indices = @transform_8, window_bounds = array<i64: 1, 1024>}, {pipeline_mode = #tpu.pipeline_mode<synchronous>, transform_indices = @transform_9, window_bounds = array<i64: 1024, 256>}, {pipeline_mode = #tpu.pipeline_mode<synchronous>, transform_indices = @transform_10, window_bounds = array<i64: 1, 256>}, {pipeline_mode = #tpu.pipeline_mode<synchronous>, transform_indices = @transform_11, window_bounds = array<i64: 256, 19>}, {pipeline_mode = #tpu.pipeline_mode<synchronous>, transform_indices = @transform_12, window_bounds = array<i64: 1, 19>}, {pipeline_mode = #tpu.pipeline_mode<synchronous>, transform_indices = @transform_13, window_bounds = array<i64: 256, 256>}, {pipeline_mode = #tpu.pipeline_mode<synchronous>, transform_indices = @transform_14, window_bounds = array<i64: 19, 256>}, {pipeline_mode = #tpu.pipeline_mode<synchronous>, transform_indices = @transform_15, window_bounds = array<i64: 1, 256>}, {pipeline_mode = #tpu.pipeline_mode<synchronous>, transform_indices = @transform_16, window_bounds = array<i64: 256, 256>}, {pipeline_mode = #tpu.pipeline_mode<synchronous>, transform_indices = @transform_17, window_bounds = array<i64: 1, 256>}, {pipeline_mode = #tpu.pipeline_mode<synchronous>, transform_indices = @transform_18, window_bounds = array<i64: 256, 128>}, {pipeline_mode = #tpu.pipeline_mode<synchronous>, transform_indices = @transform_19, window_bounds = array<i64: 1, 128>}, {transform_indices = @transform_20, window_bounds = array<i64: 2, 10>}, {transform_indices = @transform_21, window_bounds = array<i64: 2, 128>}]} {
    %c0 = arith.constant 0 : index
    %c0_0 = arith.constant 0 : index
    %0 = vector.load %arg1[%c0, %c0_0] : memref<2x1536xf32, #tpu.memory_space<vmem>>, vector<2x1536xf32>
    %1 = arith.truncf %0 : vector<2x1536xf32> to vector<2x1536xbf16>
    %c0_1 = arith.constant 0 : index
    %c0_2 = arith.constant 0 : index
    %2 = vector.load %arg4[%c0_1, %c0_2] : memref<1536x1024xbf16, #tpu.memory_space<vmem>>, vector<1536x1024xbf16>
    %cst = arith.constant dense<0.000000e+00> : vector<2x1024xf32>
    %3 = tpu.matmul %1, %2, %cst {dimension_numbers = #tpu.dot_dimension_numbers<[1], [0], [0], [1], [0, 0, 1, 1], [], []>} : vector<2x1536xbf16>, vector<1536x1024xbf16>, vector<2x1024xf32> -> vector<2x1024xf32>
    %c0_3 = arith.constant 0 : index
    %c0_4 = arith.constant 0 : index
    %4 = vector.load %arg5[%c0_3, %c0_4] : memref<1x1024xf32, #tpu.memory_space<vmem>>, vector<1x1024xf32>
    %5 = vector.broadcast %4 : vector<1x1024xf32> to vector<2x1024xf32>
    %6 = arith.addf %3, %5 : vector<2x1024xf32>
    %cst_5 = arith.constant 0.000000e+00 : f32
    %7 = vector.broadcast %cst_5 : f32 to vector<2x1024xf32>
    %8 = arith.maximumf %6, %7 : vector<2x1024xf32>
    %9 = arith.truncf %8 : vector<2x1024xf32> to vector<2x1024xbf16>
    %c0_6 = arith.constant 0 : index
    %c0_7 = arith.constant 0 : index
    %10 = vector.load %arg6[%c0_6, %c0_7] : memref<1024x128xbf16, #tpu.memory_space<vmem>>, vector<1024x128xbf16>
    %cst_8 = arith.constant dense<0.000000e+00> : vector<2x128xf32>
    %11 = tpu.matmul %9, %10, %cst_8 {dimension_numbers = #tpu.dot_dimension_numbers<[1], [0], [0], [1], [0, 0, 1, 1], [], []>} : vector<2x1024xbf16>, vector<1024x128xbf16>, vector<2x128xf32> -> vector<2x128xf32>
    %c0_9 = arith.constant 0 : index
    %c0_10 = arith.constant 0 : index
    %12 = vector.load %arg7[%c0_9, %c0_10] : memref<1x128xf32, #tpu.memory_space<vmem>>, vector<1x128xf32>
    %13 = vector.broadcast %12 : vector<1x128xf32> to vector<2x128xf32>
    %14 = arith.addf %11, %13 : vector<2x128xf32>
    %cst_11 = arith.constant 0.000000e+00 : f32
    %15 = vector.broadcast %cst_11 : f32 to vector<2x128xf32>
    %16 = arith.maximumf %14, %15 : vector<2x128xf32>
    %17 = arith.truncf %16 : vector<2x128xf32> to vector<2x128xbf16>
    %c0_12 = arith.constant 0 : index
    %c0_13 = arith.constant 0 : index
    %18 = vector.load %arg8[%c0_12, %c0_13] : memref<128x1024xbf16, #tpu.memory_space<vmem>>, vector<128x1024xbf16>
    %cst_14 = arith.constant dense<0.000000e+00> : vector<2x1024xf32>
    %19 = tpu.matmul %17, %18, %cst_14 {dimension_numbers = #tpu.dot_dimension_numbers<[1], [0], [0], [1], [0, 0, 1, 1], [], []>} : vector<2x128xbf16>, vector<128x1024xbf16>, vector<2x1024xf32> -> vector<2x1024xf32>
    %c0_15 = arith.constant 0 : index
    %c0_16 = arith.constant 0 : index
    %20 = vector.load %arg9[%c0_15, %c0_16] : memref<1x1024xf32, #tpu.memory_space<vmem>>, vector<1x1024xf32>
    %21 = vector.broadcast %20 : vector<1x1024xf32> to vector<2x1024xf32>
    %22 = arith.addf %19, %21 : vector<2x1024xf32>
    %cst_17 = arith.constant 0.000000e+00 : f32
    %23 = vector.broadcast %cst_17 : f32 to vector<2x1024xf32>
    %24 = arith.maximumf %22, %23 : vector<2x1024xf32>
    %25 = arith.truncf %24 : vector<2x1024xf32> to vector<2x1024xbf16>
    %c0_18 = arith.constant 0 : index
    %c0_19 = arith.constant 0 : index
    %26 = vector.load %arg10[%c0_18, %c0_19] : memref<1024x256xbf16, #tpu.memory_space<vmem>>, vector<1024x256xbf16>
    %cst_20 = arith.constant dense<0.000000e+00> : vector<2x256xf32>
    %27 = tpu.matmul %25, %26, %cst_20 {dimension_numbers = #tpu.dot_dimension_numbers<[1], [0], [0], [1], [0, 0, 1, 1], [], []>} : vector<2x1024xbf16>, vector<1024x256xbf16>, vector<2x256xf32> -> vector<2x256xf32>
    %c0_21 = arith.constant 0 : index
    %c0_22 = arith.constant 0 : index
    %28 = vector.load %arg11[%c0_21, %c0_22] : memref<1x256xf32, #tpu.memory_space<vmem>>, vector<1x256xf32>
    %29 = vector.broadcast %28 : vector<1x256xf32> to vector<2x256xf32>
    %30 = arith.addf %27, %29 : vector<2x256xf32>
    %cst_23 = arith.constant 0.000000e+00 : f32
    %31 = vector.broadcast %cst_23 : f32 to vector<2x256xf32>
    %32 = arith.maximumf %30, %31 : vector<2x256xf32>
    %33 = arith.truncf %32 : vector<2x256xf32> to vector<2x256xbf16>
    %c0_24 = arith.constant 0 : index
    %c0_25 = arith.constant 0 : index
    %34 = vector.load %arg12[%c0_24, %c0_25] : memref<256x19xbf16, #tpu.memory_space<vmem>>, vector<256x19xbf16>
    %cst_26 = arith.constant dense<0.000000e+00> : vector<2x19xf32>
    %35 = tpu.matmul %33, %34, %cst_26 {dimension_numbers = #tpu.dot_dimension_numbers<[1], [0], [0], [1], [0, 0, 1, 1], [], []>} : vector<2x256xbf16>, vector<256x19xbf16>, vector<2x19xf32> -> vector<2x19xf32>
    %c0_27 = arith.constant 0 : index
    %c0_28 = arith.constant 0 : index
    %36 = vector.load %arg13[%c0_27, %c0_28] : memref<1x19xf32, #tpu.memory_space<vmem>>, vector<1x19xf32>
    %37 = vector.broadcast %36 : vector<1x19xf32> to vector<2x19xf32>
    %38 = arith.addf %35, %37 : vector<2x19xf32>
    %c0_29 = arith.constant 0 : index
    %c0_30 = arith.constant 0 : index
    %c0_31 = arith.constant 0 : index
    %39 = vector.load %arg2[%c0_29, %c0_30, %c0_31] : memref<2x10x19xf32, #tpu.memory_space<vmem>>, vector<2x10x19xf32>
    %40 = vector.shape_cast %38 : vector<2x19xf32> to vector<2x1x19xf32>
    %41 = vector.broadcast %40 : vector<2x1x19xf32> to vector<2x10x19xf32>
    %42 = arith.mulf %39, %41 : vector<2x10x19xf32>
    %cst_32 = arith.constant dense<0.000000e+00> : vector<2x10xf32>
    %43 = vector.multi_reduction <add>, %42, %cst_32 [2] : vector<2x10x19xf32> to vector<2x10xf32>
    %c0_33 = arith.constant 0 : index
    %c0_34 = arith.constant 0 : index
    %44 = vector.load %arg21[%c0_33, %c0_34] : memref<2x10xf32, #tpu.memory_space<vmem>>, vector<2x10xf32>
    tpu.vector_store %arg21[%c0_33, %c0_34], %43 {strides = array<i32>} : memref<2x10xf32, #tpu.memory_space<vmem>>, vector<2x10xf32>,
    %c0_35 = arith.constant 0 : index
    %c0_36 = arith.constant 0 : index
    %45 = vector.load %arg3[%c0_35, %c0_36] : memref<2x19xf32, #tpu.memory_space<vmem>>, vector<2x19xf32>
    %46 = arith.truncf %32 : vector<2x256xf32> to vector<2x256xbf16>
    %c0_37 = arith.constant 0 : index
    %c0_38 = arith.constant 0 : index
    %47 = vector.load %arg14[%c0_37, %c0_38] : memref<256x256xbf16, #tpu.memory_space<vmem>>, vector<256x256xbf16>
    %cst_39 = arith.constant dense<0.000000e+00> : vector<2x256xf32>
    %48 = tpu.matmul %46, %47, %cst_39 {dimension_numbers = #tpu.dot_dimension_numbers<[1], [0], [0], [1], [0, 0, 1, 1], [], []>} : vector<2x256xbf16>, vector<256x256xbf16>, vector<2x256xf32> -> vector<2x256xf32>
    %49 = arith.truncf %45 : vector<2x19xf32> to vector<2x19xbf16>
    %c0_40 = arith.constant 0 : index
    %c0_41 = arith.constant 0 : index
    %50 = vector.load %arg15[%c0_40, %c0_41] : memref<19x256xbf16, #tpu.memory_space<vmem>>, vector<19x256xbf16>
    %cst_42 = arith.constant dense<0.000000e+00> : vector<2x256xf32>
    %51 = tpu.matmul %49, %50, %cst_42 {dimension_numbers = #tpu.dot_dimension_numbers<[1], [0], [0], [1], [0, 0, 1, 1], [], []>} : vector<2x19xbf16>, vector<19x256xbf16>, vector<2x256xf32> -> vector<2x256xf32>
    %52 = arith.addf %48, %51 : vector<2x256xf32>
    %c0_43 = arith.constant 0 : index
    %c0_44 = arith.constant 0 : index
    %53 = vector.load %arg16[%c0_43, %c0_44] : memref<1x256xf32, #tpu.memory_space<vmem>>, vector<1x256xf32>
    %54 = vector.broadcast %53 : vector<1x256xf32> to vector<2x256xf32>
    %55 = arith.addf %52, %54 : vector<2x256xf32>
    %cst_45 = arith.constant 0.000000e+00 : f32
    %56 = vector.broadcast %cst_45 : f32 to vector<2x256xf32>
    %57 = arith.maximumf %55, %56 : vector<2x256xf32>
    %58 = arith.truncf %57 : vector<2x256xf32> to vector<2x256xbf16>
    %c0_46 = arith.constant 0 : index
    %c0_47 = arith.constant 0 : index
    %59 = vector.load %arg17[%c0_46, %c0_47] : memref<256x256xbf16, #tpu.memory_space<vmem>>, vector<256x256xbf16>
    %cst_48 = arith.constant dense<0.000000e+00> : vector<2x256xf32>
    %60 = tpu.matmul %58, %59, %cst_48 {dimension_numbers = #tpu.dot_dimension_numbers<[1], [0], [0], [1], [0, 0, 1, 1], [], []>} : vector<2x256xbf16>, vector<256x256xbf16>, vector<2x256xf32> -> vector<2x256xf32>
    %c0_49 = arith.constant 0 : index
    %c0_50 = arith.constant 0 : index
    %61 = vector.load %arg18[%c0_49, %c0_50] : memref<1x256xf32, #tpu.memory_space<vmem>>, vector<1x256xf32>
    %62 = vector.broadcast %61 : vector<1x256xf32> to vector<2x256xf32>
    %63 = arith.addf %60, %62 : vector<2x256xf32>
    %cst_51 = arith.constant 0.000000e+00 : f32
    %64 = vector.broadcast %cst_51 : f32 to vector<2x256xf32>
    %65 = arith.maximumf %63, %64 : vector<2x256xf32>
    %66 = arith.truncf %65 : vector<2x256xf32> to vector<2x256xbf16>
    %c0_52 = arith.constant 0 : index
    %c0_53 = arith.constant 0 : index
    %67 = vector.load %arg19[%c0_52, %c0_53] : memref<256x128xbf16, #tpu.memory_space<vmem>>, vector<256x128xbf16>
    %cst_54 = arith.constant dense<0.000000e+00> : vector<2x128xf32>
    %68 = tpu.matmul %66, %67, %cst_54 {dimension_numbers = #tpu.dot_dimension_numbers<[1], [0], [0], [1], [0, 0, 1, 1], [], []>} : vector<2x256xbf16>, vector<256x128xbf16>, vector<2x128xf32> -> vector<2x128xf32>
    %c0_55 = arith.constant 0 : index
    %c0_56 = arith.constant 0 : index
    %69 = vector.load %arg20[%c0_55, %c0_56] : memref<1x128xf32, #tpu.memory_space<vmem>>, vector<1x128xf32>
    %70 = vector.broadcast %69 : vector<1x128xf32> to vector<2x128xf32>
    %71 = arith.addf %68, %70 : vector<2x128xf32>
    %c0_57 = arith.constant 0 : index
    %c0_58 = arith.constant 0 : index
    %72 = vector.load %arg22[%c0_57, %c0_58] : memref<2x128xf32, #tpu.memory_space<vmem>>, vector<2x128xf32>
    tpu.vector_store %arg22[%c0_57, %c0_58], %71 {strides = array<i32>} : memref<2x128xf32, #tpu.memory_space<vmem>>, vector<2x128xf32>,
    return
  }
  func.func @transform_0(%arg0: i32) -> (i32, i32) {
    %c0_i32 = arith.constant 0 : i32
    %c0_i32_0 = arith.constant 0 : i32
    return %arg0, %c0_i32 : i32, i32
  }
  func.func @transform_1(%arg0: i32) -> (i32, i32, i32) {
    %c0_i32 = arith.constant 0 : i32
    %c0_i32_0 = arith.constant 0 : i32
    %c0_i32_1 = arith.constant 0 : i32
    return %arg0, %c0_i32, %c0_i32_0 : i32, i32, i32
  }
  func.func @transform_2(%arg0: i32) -> (i32, i32) {
    %c0_i32 = arith.constant 0 : i32
    %c0_i32_0 = arith.constant 0 : i32
    return %arg0, %c0_i32 : i32, i32
  }
  func.func @transform_3(%arg0: i32) -> (i32, i32) {
    %c0_i32 = arith.constant 0 : i32
    %c0_i32_0 = arith.constant 0 : i32
    %c0_i32_1 = arith.constant 0 : i32
    return %c0_i32, %c0_i32_0 : i32, i32
  }
  func.func @transform_4(%arg0: i32) -> (i32, i32) {
    %c0_i32 = arith.constant 0 : i32
    %c0_i32_0 = arith.constant 0 : i32
    %c0_i32_1 = arith.constant 0 : i32
    return %c0_i32, %c0_i32_0 : i32, i32
  }
  func.func @transform_5(%arg0: i32) -> (i32, i32) {
    %c0_i32 = arith.constant 0 : i32
    %c0_i32_0 = arith.constant 0 : i32
    %c0_i32_1 = arith.constant 0 : i32
    return %c0_i32, %c0_i32_0 : i32, i32
  }
  func.func @transform_6(%arg0: i32) -> (i32, i32) {
    %c0_i32 = arith.constant 0 : i32
    %c0_i32_0 = arith.constant 0 : i32
    %c0_i32_1 = arith.constant 0 : i32
    return %c0_i32, %c0_i32_0 : i32, i32
  }
  func.func @transform_7(%arg0: i32) -> (i32, i32) {
    %c0_i32 = arith.constant 0 : i32
    %c0_i32_0 = arith.constant 0 : i32
    %c0_i32_1 = arith.constant 0 : i32
    return %c0_i32, %c0_i32_0 : i32, i32
  }
  func.func @transform_8(%arg0: i32) -> (i32, i32) {
    %c0_i32 = arith.constant 0 : i32
    %c0_i32_0 = arith.constant 0 : i32
    %c0_i32_1 = arith.constant 0 : i32
    return %c0_i32, %c0_i32_0 : i32, i32
  }
  func.func @transform_9(%arg0: i32) -> (i32, i32) {
    %c0_i32 = arith.constant 0 : i32
    %c0_i32_0 = arith.constant 0 : i32
    %c0_i32_1 = arith.constant 0 : i32
    return %c0_i32, %c0_i32_0 : i32, i32
  }
  func.func @transform_10(%arg0: i32) -> (i32, i32) {
    %c0_i32 = arith.constant 0 : i32
    %c0_i32_0 = arith.constant 0 : i32
    %c0_i32_1 = arith.constant 0 : i32
    return %c0_i32, %c0_i32_0 : i32, i32
  }
  func.func @transform_11(%arg0: i32) -> (i32, i32) {
    %c0_i32 = arith.constant 0 : i32
    %c0_i32_0 = arith.constant 0 : i32
    %c0_i32_1 = arith.constant 0 : i32
    return %c0_i32, %c0_i32_0 : i32, i32
  }
  func.func @transform_12(%arg0: i32) -> (i32, i32) {
    %c0_i32 = arith.constant 0 : i32
    %c0_i32_0 = arith.constant 0 : i32
    %c0_i32_1 = arith.constant 0 : i32
    return %c0_i32, %c0_i32_0 : i32, i32
  }
  func.func @transform_13(%arg0: i32) -> (i32, i32) {
    %c0_i32 = arith.constant 0 : i32
    %c0_i32_0 = arith.constant 0 : i32
    %c0_i32_1 = arith.constant 0 : i32
    return %c0_i32, %c0_i32_0 : i32, i32
  }
  func.func @transform_14(%arg0: i32) -> (i32, i32) {
    %c0_i32 = arith.constant 0 : i32
    %c0_i32_0 = arith.constant 0 : i32
    %c0_i32_1 = arith.constant 0 : i32
    return %c0_i32, %c0_i32_0 : i32, i32
  }
  func.func @transform_15(%arg0: i32) -> (i32, i32) {
    %c0_i32 = arith.constant 0 : i32
    %c0_i32_0 = arith.constant 0 : i32
    %c0_i32_1 = arith.constant 0 : i32
    return %c0_i32, %c0_i32_0 : i32, i32
  }
  func.func @transform_16(%arg0: i32) -> (i32, i32) {
    %c0_i32 = arith.constant 0 : i32
    %c0_i32_0 = arith.constant 0 : i32
    %c0_i32_1 = arith.constant 0 : i32
    return %c0_i32, %c0_i32_0 : i32, i32
  }
  func.func @transform_17(%arg0: i32) -> (i32, i32) {
    %c0_i32 = arith.constant 0 : i32
    %c0_i32_0 = arith.constant 0 : i32
    %c0_i32_1 = arith.constant 0 : i32
    return %c0_i32, %c0_i32_0 : i32, i32
  }
  func.func @transform_18(%arg0: i32) -> (i32, i32) {
    %c0_i32 = arith.constant 0 : i32
    %c0_i32_0 = arith.constant 0 : i32
    %c0_i32_1 = arith.constant 0 : i32
    return %c0_i32, %c0_i32_0 : i32, i32
  }
  func.func @transform_19(%arg0: i32) -> (i32, i32) {
    %c0_i32 = arith.constant 0 : i32
    %c0_i32_0 = arith.constant 0 : i32
    %c0_i32_1 = arith.constant 0 : i32
    return %c0_i32, %c0_i32_0 : i32, i32
  }
  func.func @transform_20(%arg0: i32) -> (i32, i32) {
    %c0_i32 = arith.constant 0 : i32
    %c0_i32_0 = arith.constant 0 : i32
    return %arg0, %c0_i32 : i32, i32
  }
  func.func @transform_21(%arg0: i32) -> (i32, i32) {
    %c0_i32 = arith.constant 0 : i32
    %c0_i32_0 = arith.constant 0 : i32
    return %arg0, %c0_i32 : i32, i32
  }
}

</mosaic_0001>

<llo_original>
// kernel: single_trance_net.1
$region0: #{single_trance_net.1}
  #allocation0 [shape = 'u32[]', space=smem, size = 0x4, offset = 0x4, fixed_abs, tag = 'smem constant byte address 0x4 - core index']
  #allocation1 [shape = 'u32[72,128]{1,0:T(1,128)}', space=vmem, size = 0x9000, scoped, tag = 'internal scratch']
  %s0 = inlined_call_operand.vmem [shape: f32[2,1536], index: 0, kind: input, shape index: {}]
  %s1 = inlined_call_operand.vmem [shape: f32[2,10,19], index: 1, kind: input, shape index: {}]
  %s2 = inlined_call_operand.hbm [shape: f32[2,19], index: 2, kind: input, shape index: {}]
  %s3 = inlined_call_operand.hbm [shape: bf16[1536,1024], index: 3, kind: input, shape index: {}]
  %s4 = inlined_call_operand.hbm [shape: f32[1,1024], index: 4, kind: input, shape index: {}]
  %s5 = inlined_call_operand.hbm [shape: bf16[1024,128], index: 5, kind: input, shape index: {}]
  %s6 = inlined_call_operand.hbm [shape: f32[1,128], index: 6, kind: input, shape index: {}]
  %s7 = inlined_call_operand.hbm [shape: bf16[128,1024], index: 7, kind: input, shape index: {}]
  %s8 = inlined_call_operand.hbm [shape: f32[1,1024], index: 8, kind: input, shape index: {}]
  %s9 = inlined_call_operand.hbm [shape: bf16[1024,256], index: 9, kind: input, shape index: {}]
  %s10 = inlined_call_operand.hbm [shape: f32[1,256], index: 10, kind: input, shape index: {}]
  %s11 = inlined_call_operand.vmem [shape: bf16[256,19], index: 11, kind: input, shape index: {}]
  %s12 = inlined_call_operand.hbm [shape: f32[1,19], index: 12, kind: input, shape index: {}]
  %s13 = inlined_call_operand.hbm [shape: bf16[256,256], index: 13, kind: input, shape index: {}]
  %s14 = inlined_call_operand.hbm [shape: bf16[19,256], index: 14, kind: input, shape index: {}]
  %s15 = inlined_call_operand.hbm [shape: f32[1,256], index: 15, kind: input, shape index: {}]
  %s16 = inlined_call_operand.hbm [shape: bf16[256,256], index: 16, kind: input, shape index: {}]
  %s17 = inlined_call_operand.hbm [shape: f32[1,256], index: 17, kind: input, shape index: {}]
  %s18 = inlined_call_operand.hbm [shape: bf16[256,128], index: 18, kind: input, shape index: {}]
  %s19 = inlined_call_operand.hbm [shape: f32[1,128], index: 19, kind: input, shape index: {}]
  %s20 = inlined_call_operand.hbm [shape: f32[2,10], index: 20, kind: output, shape index: {0}]
  %s21 = inlined_call_operand.hbm [shape: f32[2,128], index: 21, kind: output, shape index: {1}]
  %22 = xla_tuple %s20, %s21
  %s23 = sld [smem:[#allocation0]]
  $region166: #{single_trance_net.1} parent=0
    _
  %s25 = ssub.s32 1, %s23
  %s26 = scalar_select 0, %s25, %s23
  $region1: #{single_trance_net.1} parent=0
    #allocation2 [shape = 'u8[1024]{0}', space=vmem, size = 0x400, scoped, tag = 'input window, operand 2, single buffered']
    #allocation3 [shape = 's32[1]{0}', space=sflag, size = 0x4, scoped, tag = 'scoped memory for single_trance_net.1']
    #allocation4 [shape = 's32[1]{0}', space=sflag, size = 0x4, scoped, tag = 'scoped memory for single_trance_net.1']
    #allocation5 [shape = 'u8[3145728]{0}', space=vmem, size = 0x300000, scoped, tag = 'input window, operand 3, single buffered']
    #allocation6 [shape = 's32[1]{0}', space=sflag, size = 0x4, scoped, tag = 'scoped memory for single_trance_net.1']
    #allocation7 [shape = 'u8[4096]{0}', space=vmem, size = 0x1000, scoped, tag = 'input window, operand 4, single buffered']
    #allocation8 [shape = 'u8[262144]{0}', space=vmem, size = 0x40000, scoped, tag = 'input window, operand 5, single buffered']
    #allocation9 [shape = 's32[1]{0}', space=sflag, size = 0x4, scoped, tag = 'scoped memory for single_trance_net.1']
    #allocation10 [shape = 'u8[512]{0}', space=vmem, size = 0x400, scoped, tag = 'input window, operand 6, single buffered']
    #allocation11 [shape = 'u8[262144]{0}', space=vmem, size = 0x40000, scoped, tag = 'input window, operand 7, single buffered']
    #allocation12 [shape = 's32[1]{0}', space=sflag, size = 0x4, scoped, tag = 'scoped memory for single_trance_net.1']
    #allocation13 [shape = 'u8[4096]{0}', space=vmem, size = 0x1000, scoped, tag = 'input window, operand 8, single buffered']
    #allocation14 [shape = 'u8[524288]{0}', space=vmem, size = 0x80000, scoped, tag = 'input window, operand 9, single buffered']
    #allocation15 [shape = 's32[1]{0}', space=sflag, size = 0x4, scoped, tag = 'scoped memory for single_trance_net.1']
    #allocation16 [shape = 'u8[1024]{0}', space=vmem, size = 0x400, scoped, tag = 'input window, operand 10, single buffered']
    #allocation17 [shape = 'u8[512]{0}', space=vmem, size = 0x400, scoped, tag = 'input window, operand 12, single buffered']
    #allocation18 [shape = 's32[1]{0}', space=sflag, size = 0x4, scoped, tag = 'scoped memory for single_trance_net.1']
    #allocation19 [shape = 'u8[131072]{0}', space=vmem, size = 0x20000, scoped, tag = 'input window, operand 13, single buffered']
    #allocation20 [shape = 'u8[12288]{0}', space=vmem, size = 0x3000, scoped, tag = 'input window, operand 14, single buffered']
    #allocation21 [shape = 's32[1]{0}', space=sflag, size = 0x4, scoped, tag = 'scoped memory for single_trance_net.1']
    #allocation22 [shape = 'u8[1024]{0}', space=vmem, size = 0x400, scoped, tag = 'input window, operand 15, single buffered']
    #allocation23 [shape = 'u8[131072]{0}', space=vmem, size = 0x20000, scoped, tag = 'input window, operand 16, single buffered']
    #allocation24 [shape = 's32[1]{0}', space=sflag, size = 0x4, scoped, tag = 'scoped memory for single_trance_net.1']
    #allocation25 [shape = 'u8[1024]{0}', space=vmem, size = 0x400, scoped, tag = 'input window, operand 17, single buffered']
    #allocation26 [shape = 'u8[65536]{0}', space=vmem, size = 0x10000, scoped, tag = 'input window, operand 18, single buffered']
    #allocation27 [shape = 's32[1]{0}', space=sflag, size = 0x4, scoped, tag = 'scoped memory for single_trance_net.1']
    #allocation28 [shape = 'u8[512]{0}', space=vmem, size = 0x400, scoped, tag = 'input window, operand 19, single buffered']
    #allocation29 [shape = 'u8[1024]{0}', space=vmem, size = 0x400, scoped, tag = 'output window, operand 0, single buffered']
    #allocation30 [shape = 'u8[1024]{0}', space=vmem, size = 0x400, scoped, tag = 'output window, operand 1, single buffered']
    #allocation31 [shape = 's32[1]{0}', space=sflag, size = 0x4, scoped, tag = 'scoped memory for single_trance_net.1']
    %27 = vsyncpa [#allocation3], 0
    %28 = vsyncpa [#allocation6], 0
    %29 = vsyncpa [#allocation9], 0
    %30 = vsyncpa [#allocation12], 0
    %31 = vsyncpa [#allocation15], 0
    %32 = vsyncpa [#allocation18], 0
    %33 = vsyncpa [#allocation21], 0
    %34 = vsyncpa [#allocation24], 0
    %35 = vsyncpa [#allocation27], 0
    %36 = vsyncpa [#allocation4], 0
    %37 = vsyncpa [#allocation31], 0
    // Predicated region
    $region2: #{single_trance_net.1} parent=1 // pred_check
      _
    $region3: #{single_trance_net.1} parent=1 // pred_check_branch
      %39 = sbr.rel (0) target = $region5
    $region4: #{single_trance_net.1} parent=1 // pred_region
      _
    $region5: #{single_trance_net.1} parent=1 // pred_fallthru
      _
    // Predicated region
    $region6: #{single_trance_net.1} parent=1 // pred_check
      _
    $region7: #{single_trance_net.1} parent=1 // pred_check_branch
      %41 = sbr.rel (0) target = $region9
    $region8: #{single_trance_net.1} parent=1 // pred_region
      _
    $region9: #{single_trance_net.1} parent=1 // pred_fallthru
      _
    // Predicated region
    $region10: #{single_trance_net.1} parent=1 // pred_check
      _
    $region11: #{single_trance_net.1} parent=1 // pred_check_branch
      %43 = sbr.rel (0) target = $region13
    $region12: #{single_trance_net.1} parent=1 // pred_region
      %45 = vsyncadd [#allocation3], 0
      %s47 = sshll.u32 %s2, 4
      %s48 = int_to_ptr.hbm [resolvable:$true] %s47
      %s49 = sshll.u32 [#allocation2], 4
      %s50 = int_to_ptr.vmem [resolvable:$true] %s49
      %52 = dma.hbm_to_vmem [thread:$0]  %s48, 32, %s50, [#allocation3]
    $region13: #{single_trance_net.1} parent=1 // pred_fallthru
      _
    // Predicated region
    $region14: #{single_trance_net.1} parent=1 // pred_check
      _
    $region15: #{single_trance_net.1} parent=1 // pred_check_branch
      %54 = sbr.rel (0) target = $region17
    $region16: #{single_trance_net.1} parent=1 // pred_region
      %56 = vsyncadd [#allocation6], 0
      %s57 = sshll.u32 %s3, 4
      %s58 = int_to_ptr.hbm [resolvable:$true] %s57
      %s59 = sshll.u32 [#allocation5], 4
      %s60 = int_to_ptr.vmem [resolvable:$true] %s59
      %65 = dma.hbm_to_vmem [thread:$0]  %s58, 98304, %s60, [#allocation6], 512, 512, 32
    $region17: #{single_trance_net.1} parent=1 // pred_fallthru
      _
    // Predicated region
    $region18: #{single_trance_net.1} parent=1 // pred_check
      _
    $region19: #{single_trance_net.1} parent=1 // pred_check_branch
      %67 = sbr.rel (0) target = $region21
    $region20: #{single_trance_net.1} parent=1 // pred_region
      %69 = vsyncadd [#allocation6], 0
      %s71 = sshll.u32 %s4, 4
      %s72 = int_to_ptr.hbm [resolvable:$true] %s71
      %s73 = sshll.u32 [#allocation7], 4
      %s74 = int_to_ptr.vmem [resolvable:$true] %s73
      %76 = dma.hbm_to_vmem [thread:$0]  %s72, 128, %s74, [#allocation6]
    $region21: #{single_trance_net.1} parent=1 // pred_fallthru
      _
    // Predicated region
    $region22: #{single_trance_net.1} parent=1 // pred_check
      _
    $region23: #{single_trance_net.1} parent=1 // pred_check_branch
      %78 = sbr.rel (0) target = $region25
    $region24: #{single_trance_net.1} parent=1 // pred_region
      %80 = vsyncadd [#allocation9], 0
      %s81 = sshll.u32 %s5, 4
      %s82 = int_to_ptr.hbm [resolvable:$true] %s81
      %s83 = sshll.u32 [#allocation8], 4
      %s84 = int_to_ptr.vmem [resolvable:$true] %s83
      %89 = dma.hbm_to_vmem [thread:$0]  %s82, 8192, %s84, [#allocation9], 64, 64, 4
    $region25: #{single_trance_net.1} parent=1 // pred_fallthru
      _
    // Predicated region
    $region26: #{single_trance_net.1} parent=1 // pred_check
      _
    $region27: #{single_trance_net.1} parent=1 // pred_check_branch
      %91 = sbr.rel (0) target = $region29
    $region28: #{single_trance_net.1} parent=1 // pred_region
      %93 = vsyncadd [#allocation9], 0
      %s95 = sshll.u32 %s6, 4
      %s96 = int_to_ptr.hbm [resolvable:$true] %s95
      %s97 = sshll.u32 [#allocation10], 4
      %s98 = int_to_ptr.vmem [resolvable:$true] %s97
      %100 = dma.hbm_to_vmem [thread:$0]  %s96, 16, %s98, [#allocation9]
    $region29: #{single_trance_net.1} parent=1 // pred_fallthru
      _
    // Predicated region
    $region30: #{single_trance_net.1} parent=1 // pred_check
      _
    $region31: #{single_trance_net.1} parent=1 // pred_check_branch
      %102 = sbr.rel (0) target = $region33
    $region32: #{single_trance_net.1} parent=1 // pred_region
      %104 = vsyncadd [#allocation12], 0
      %s105 = sshll.u32 %s7, 4
      %s106 = int_to_ptr.hbm [resolvable:$true] %s105
      %s107 = sshll.u32 [#allocation11], 4
      %s108 = int_to_ptr.vmem [resolvable:$true] %s107
      %113 = dma.hbm_to_vmem [thread:$0]  %s106, 8192, %s108, [#allocation12], 512, 512, 32
    $region33: #{single_trance_net.1} parent=1 // pred_fallthru
      _
    // Predicated region
    $region34: #{single_trance_net.1} parent=1 // pred_check
      _
    $region35: #{single_trance_net.1} parent=1 // pred_check_branch
      %115 = sbr.rel (0) target = $region37
    $region36: #{single_trance_net.1} parent=1 // pred_region
      %117 = vsyncadd [#allocation12], 0
      %s119 = sshll.u32 %s8, 4
      %s120 = int_to_ptr.hbm [resolvable:$true] %s119
      %s121 = sshll.u32 [#allocation13], 4
      %s122 = int_to_ptr.vmem [resolvable:$true] %s121
      %124 = dma.hbm_to_vmem [thread:$0]  %s120, 128, %s122, [#allocation12]
    $region37: #{single_trance_net.1} parent=1 // pred_fallthru
      _
    // Predicated region
    $region38: #{single_trance_net.1} parent=1 // pred_check
      _
    $region39: #{single_trance_net.1} parent=1 // pred_check_branch
      %126 = sbr.rel (0) target = $region41
    $region40: #{single_trance_net.1} parent=1 // pred_region
      %128 = vsyncadd [#allocation15], 0
      %s129 = sshll.u32 %s9, 4
      %s130 = int_to_ptr.hbm [resolvable:$true] %s129
      %s131 = sshll.u32 [#allocation14], 4
      %s132 = int_to_ptr.vmem [resolvable:$true] %s131
      %137 = dma.hbm_to_vmem [thread:$0]  %s130, 16384, %s132, [#allocation15], 128, 128, 8
    $region41: #{single_trance_net.1} parent=1 // pred_fallthru
      _
    // Predicated region
    $region42: #{single_trance_net.1} parent=1 // pred_check
      _
    $region43: #{single_trance_net.1} parent=1 // pred_check_branch
      %139 = sbr.rel (0) target = $region45
    $region44: #{single_trance_net.1} parent=1 // pred_region
      %141 = vsyncadd [#allocation15], 0
      %s143 = sshll.u32 %s10, 4
      %s144 = int_to_ptr.hbm [resolvable:$true] %s143
      %s145 = sshll.u32 [#allocation16], 4
      %s146 = int_to_ptr.vmem [resolvable:$true] %s145
      %148 = dma.hbm_to_vmem [thread:$0]  %s144, 32, %s146, [#allocation15]
    $region45: #{single_trance_net.1} parent=1 // pred_fallthru
      _
    // Predicated region
    $region46: #{single_trance_net.1} parent=1 // pred_check
      _
    $region47: #{single_trance_net.1} parent=1 // pred_check_branch
      %150 = sbr.rel (0) target = $region49
    $region48: #{single_trance_net.1} parent=1 // pred_region
      _
    $region49: #{single_trance_net.1} parent=1 // pred_fallthru
      _
    // Predicated region
    $region50: #{single_trance_net.1} parent=1 // pred_check
      _
    $region51: #{single_trance_net.1} parent=1 // pred_check_branch
      %152 = sbr.rel (0) target = $region53
    $region52: #{single_trance_net.1} parent=1 // pred_region
      %154 = vsyncadd [#allocation18], 0
      %s156 = sshll.u32 %s12, 4
      %s157 = int_to_ptr.hbm [resolvable:$true] %s156
      %s158 = sshll.u32 [#allocation17], 4
      %s159 = int_to_ptr.vmem [resolvable:$true] %s158
      %161 = dma.hbm_to_vmem [thread:$0]  %s157, 16, %s159, [#allocation18]
    $region53: #{single_trance_net.1} parent=1 // pred_fallthru
      _
    // Predicated region
    $region54: #{single_trance_net.1} parent=1 // pred_check
      _
    $region55: #{single_trance_net.1} parent=1 // pred_check_branch
      %163 = sbr.rel (0) target = $region57
    $region56: #{single_trance_net.1} parent=1 // pred_region
      %165 = vsyncadd [#allocation18], 0
      %s166 = sshll.u32 %s13, 4
      %s167 = int_to_ptr.hbm [resolvable:$true] %s166
      %s168 = sshll.u32 [#allocation19], 4
      %s169 = int_to_ptr.vmem [resolvable:$true] %s168
      %174 = dma.hbm_to_vmem [thread:$0]  %s167, 4096, %s169, [#allocation18], 128, 128, 8
    $region57: #{single_trance_net.1} parent=1 // pred_fallthru
      _
    // Predicated region
    $region58: #{single_trance_net.1} parent=1 // pred_check
      _
    $region59: #{single_trance_net.1} parent=1 // pred_check_branch
      %176 = sbr.rel (0) target = $region61
    $region60: #{single_trance_net.1} parent=1 // pred_region
      %178 = vsyncadd [#allocation21], 0
      %s179 = sshll.u32 %s14, 4
      %s180 = int_to_ptr.hbm [resolvable:$true] %s179
      %s181 = sshll.u32 [#allocation20], 4
      %s182 = int_to_ptr.vmem [resolvable:$true] %s181
      %187 = dma.hbm_to_vmem [thread:$0]  %s180, 384, %s182, [#allocation21], 128, 128, 8
    $region61: #{single_trance_net.1} parent=1 // pred_fallthru
      _
    // Predicated region
    $region62: #{single_trance_net.1} parent=1 // pred_check
      _
    $region63: #{single_trance_net.1} parent=1 // pred_check_branch
      %189 = sbr.rel (0) target = $region65
    $region64: #{single_trance_net.1} parent=1 // pred_region
      %191 = vsyncadd [#allocation21], 0
      %s193 = sshll.u32 %s15, 4
      %s194 = int_to_ptr.hbm [resolvable:$true] %s193
      %s195 = sshll.u32 [#allocation22], 4
      %s196 = int_to_ptr.vmem [resolvable:$true] %s195
      %198 = dma.hbm_to_vmem [thread:$0]  %s194, 32, %s196, [#allocation21]
    $region65: #{single_trance_net.1} parent=1 // pred_fallthru
      _
    // Predicated region
    $region66: #{single_trance_net.1} parent=1 // pred_check
      _
    $region67: #{single_trance_net.1} parent=1 // pred_check_branch
      %200 = sbr.rel (0) target = $region69
    $region68: #{single_trance_net.1} parent=1 // pred_region
      %202 = vsyncadd [#allocation24], 0
      %s203 = sshll.u32 %s16, 4
      %s204 = int_to_ptr.hbm [resolvable:$true] %s203
      %s205 = sshll.u32 [#allocation23], 4
      %s206 = int_to_ptr.vmem [resolvable:$true] %s205
      %211 = dma.hbm_to_vmem [thread:$0]  %s204, 4096, %s206, [#allocation24], 128, 128, 8
    $region69: #{single_trance_net.1} parent=1 // pred_fallthru
      _
    // Predicated region
    $region70: #{single_trance_net.1} parent=1 // pred_check
      _
    $region71: #{single_trance_net.1} parent=1 // pred_check_branch
      %213 = sbr.rel (0) target = $region73
    $region72: #{single_trance_net.1} parent=1 // pred_region
      %215 = vsyncadd [#allocation24], 0
      %s217 = sshll.u32 %s17, 4
      %s218 = int_to_ptr.hbm [resolvable:$true] %s217
      %s219 = sshll.u32 [#allocation25], 4
      %s220 = int_to_ptr.vmem [resolvable:$true] %s219
      %222 = dma.hbm_to_vmem [thread:$0]  %s218, 32, %s220, [#allocation24]
    $region73: #{single_trance_net.1} parent=1 // pred_fallthru
      _
    // Predicated region
    $region74: #{single_trance_net.1} parent=1 // pred_check
      _
    $region75: #{single_trance_net.1} parent=1 // pred_check_branch
      %224 = sbr.rel (0) target = $region77
    $region76: #{single_trance_net.1} parent=1 // pred_region
      %226 = vsyncadd [#allocation27], 0
      %s227 = sshll.u32 %s18, 4
      %s228 = int_to_ptr.hbm [resolvable:$true] %s227
      %s229 = sshll.u32 [#allocation26], 4
      %s230 = int_to_ptr.vmem [resolvable:$true] %s229
      %235 = dma.hbm_to_vmem [thread:$0]  %s228, 2048, %s230, [#allocation27], 64, 64, 4
    $region77: #{single_trance_net.1} parent=1 // pred_fallthru
      _
    // Predicated region
    $region78: #{single_trance_net.1} parent=1 // pred_check
      _
    $region79: #{single_trance_net.1} parent=1 // pred_check_branch
      %237 = sbr.rel (0) target = $region81
    $region80: #{single_trance_net.1} parent=1 // pred_region
      %239 = vsyncadd [#allocation27], 0
      %s241 = sshll.u32 %s19, 4
      %s242 = int_to_ptr.hbm [resolvable:$true] %s241
      %s243 = sshll.u32 [#allocation28], 4
      %s244 = int_to_ptr.vmem [resolvable:$true] %s243
      %246 = dma.hbm_to_vmem [thread:$0]  %s242, 16, %s244, [#allocation27]
    $region81: #{single_trance_net.1} parent=1 // pred_fallthru
      _
    // Predicated region
    $region82: #{single_trance_net.1} parent=1 // pred_check
      _
    $region83: #{single_trance_net.1} parent=1 // pred_check_branch
      %248 = sbr.rel (0) target = $region85
    $region84: #{single_trance_net.1} parent=1 // pred_region
      %250 = dma.done [#allocation3], 32
    $region85: #{single_trance_net.1} parent=1 // pred_fallthru
      _
    // Predicated region
    $region86: #{single_trance_net.1} parent=1 // pred_check
      _
    $region87: #{single_trance_net.1} parent=1 // pred_check_branch
      %252 = sbr.rel (0) target = $region89
    $region88: #{single_trance_net.1} parent=1 // pred_region
      %254 = dma.done [#allocation6], 98304
    $region89: #{single_trance_net.1} parent=1 // pred_fallthru
      _
    // Predicated region
    $region90: #{single_trance_net.1} parent=1 // pred_check
      _
    $region91: #{single_trance_net.1} parent=1 // pred_check_branch
      %256 = sbr.rel (0) target = $region93
    $region92: #{single_trance_net.1} parent=1 // pred_region
      %258 = dma.done [#allocation6], 128
    $region93: #{single_trance_net.1} parent=1 // pred_fallthru
      _
    // Predicated region
    $region94: #{single_trance_net.1} parent=1 // pred_check
      _
    $region95: #{single_trance_net.1} parent=1 // pred_check_branch
      %260 = sbr.rel (0) target = $region97
    $region96: #{single_trance_net.1} parent=1 // pred_region
      %262 = dma.done [#allocation9], 8192
    $region97: #{single_trance_net.1} parent=1 // pred_fallthru
      _
    // Predicated region
    $region98: #{single_trance_net.1} parent=1 // pred_check
      _
    $region99: #{single_trance_net.1} parent=1 // pred_check_branch
      %264 = sbr.rel (0) target = $region101
    $region100: #{single_trance_net.1} parent=1 // pred_region
      %266 = dma.done [#allocation9], 16
    $region101: #{single_trance_net.1} parent=1 // pred_fallthru
      _
    // Predicated region
    $region102: #{single_trance_net.1} parent=1 // pred_check
      _
    $region103: #{single_trance_net.1} parent=1 // pred_check_branch
      %268 = sbr.rel (0) target = $region105
    $region104: #{single_trance_net.1} parent=1 // pred_region
      %270 = dma.done [#allocation12], 8192
    $region105: #{single_trance_net.1} parent=1 // pred_fallthru
      _
    // Predicated region
    $region106: #{single_trance_net.1} parent=1 // pred_check
      _
    $region107: #{single_trance_net.1} parent=1 // pred_check_branch
      %272 = sbr.rel (0) target = $region109
    $region108: #{single_trance_net.1} parent=1 // pred_region
      %274 = dma.done [#allocation12], 128
    $region109: #{single_trance_net.1} parent=1 // pred_fallthru
      _
    // Predicated region
    $region110: #{single_trance_net.1} parent=1 // pred_check
      _
    $region111: #{single_trance_net.1} parent=1 // pred_check_branch
      %276 = sbr.rel (0) target = $region113
    $region112: #{single_trance_net.1} parent=1 // pred_region
      %278 = dma.done [#allocation15], 16384
    $region113: #{single_trance_net.1} parent=1 // pred_fallthru
      _
    // Predicated region
    $region114: #{single_trance_net.1} parent=1 // pred_check
      _
    $region115: #{single_trance_net.1} parent=1 // pred_check_branch
      %280 = sbr.rel (0) target = $region117
    $region116: #{single_trance_net.1} parent=1 // pred_region
      %282 = dma.done [#allocation15], 32
    $region117: #{single_trance_net.1} parent=1 // pred_fallthru
      _
    // Predicated region
    $region118: #{single_trance_net.1} parent=1 // pred_check
      _
    $region119: #{single_trance_net.1} parent=1 // pred_check_branch
      %284 = sbr.rel (0) target = $region121
    $region120: #{single_trance_net.1} parent=1 // pred_region
      %286 = dma.done [#allocation18], 16
    $region121: #{single_trance_net.1} parent=1 // pred_fallthru
      _
    // Predicated region
    $region122: #{single_trance_net.1} parent=1 // pred_check
      _
    $region123: #{single_trance_net.1} parent=1 // pred_check_branch
      %288 = sbr.rel (0) target = $region125
    $region124: #{single_trance_net.1} parent=1 // pred_region
      %290 = dma.done [#allocation18], 4096
    $region125: #{single_trance_net.1} parent=1 // pred_fallthru
      _
    // Predicated region
    $region126: #{single_trance_net.1} parent=1 // pred_check
      _
    $region127: #{single_trance_net.1} parent=1 // pred_check_branch
      %292 = sbr.rel (0) target = $region129
    $region128: #{single_trance_net.1} parent=1 // pred_region
      %294 = dma.done [#allocation21], 384
    $region129: #{single_trance_net.1} parent=1 // pred_fallthru
      _
    // Predicated region
    $region130: #{single_trance_net.1} parent=1 // pred_check
      _
    $region131: #{single_trance_net.1} parent=1 // pred_check_branch
      %296 = sbr.rel (0) target = $region133
    $region132: #{single_trance_net.1} parent=1 // pred_region
      %298 = dma.done [#allocation21], 32
    $region133: #{single_trance_net.1} parent=1 // pred_fallthru
      _
    // Predicated region
    $region134: #{single_trance_net.1} parent=1 // pred_check
      _
    $region135: #{single_trance_net.1} parent=1 // pred_check_branch
      %300 = sbr.rel (0) target = $region137
    $region136: #{single_trance_net.1} parent=1 // pred_region
      %302 = dma.done [#allocation24], 4096
    $region137: #{single_trance_net.1} parent=1 // pred_fallthru
      _
    // Predicated region
    $region138: #{single_trance_net.1} parent=1 // pred_check
      _
    $region139: #{single_trance_net.1} parent=1 // pred_check_branch
      %304 = sbr.rel (0) target = $region141
    $region140: #{single_trance_net.1} parent=1 // pred_region
      %306 = dma.done [#allocation24], 32
    $region141: #{single_trance_net.1} parent=1 // pred_fallthru
      _
    // Predicated region
    $region142: #{single_trance_net.1} parent=1 // pred_check
      _
    $region143: #{single_trance_net.1} parent=1 // pred_check_branch
      %308 = sbr.rel (0) target = $region145
    $region144: #{single_trance_net.1} parent=1 // pred_region
      %310 = dma.done [#allocation27], 2048
    $region145: #{single_trance_net.1} parent=1 // pred_fallthru
      _
    // Predicated region
    $region146: #{single_trance_net.1} parent=1 // pred_check
      _
    $region147: #{single_trance_net.1} parent=1 // pred_check_branch
      %312 = sbr.rel (0) target = $region149
    $region148: #{single_trance_net.1} parent=1 // pred_region
      %314 = dma.done [#allocation27], 16
    $region149: #{single_trance_net.1} parent=1 // pred_fallthru
      _
    %v316 = vld [vmem:[%s0] sm:$0xff]
    %v317 = vld [vmem:[%s0 + $0x8] sm:$0xff]
    %v318 = vld [vmem:[%s0 + $0x10] sm:$0xff]
    %322 = vst [vmem:[#allocation1] ss:$4 sm:$0xff] %v316
    %s323 = scalar_lea.vmem [#allocation1], 32
    %324 = vst [vmem:[%s323] ss:$4 sm:$0xff] %v317
    %v325 = vld.sshfl [vmem:[#allocation1] sm:$0xff pattern:$0x73625140]
    %v326 = vld.sshfl [vmem:[#allocation1 + $0x8] sm:$0xff pattern:$0x73625140]
    %v327 = vld.sshfl [vmem:[#allocation1 + $0x10] sm:$0xff pattern:$0x73625140]
    %v328 = vld.sshfl [vmem:[#allocation1 + $0x18] sm:$0xff pattern:$0x73625140]
    %v329 = vld.sshfl [vmem:[#allocation1 + $0x20] sm:$0xff pattern:$0x73625140]
    %v330 = vld.sshfl [vmem:[#allocation1 + $0x28] sm:$0xff pattern:$0x73625140]
    %v331 = vld.sshfl [vmem:[#allocation1 + $0x30] sm:$0xff pattern:$0x73625140]
    %v332 = vld.sshfl [vmem:[#allocation1 + $0x38] sm:$0xff pattern:$0x73625140]
    %333 = vst [vmem:[#allocation1] ss:$4 sm:$0xff] %v318
    %v334 = vld.sshfl [vmem:[#allocation1] sm:$0xff pattern:$0x73625140]
    %v335 = vld.sshfl [vmem:[#allocation1 + $0x8] sm:$0xff pattern:$0x73625140]
    %v336 = vld.sshfl [vmem:[#allocation1 + $0x10] sm:$0xff pattern:$0x73625140]
    %v337 = vld.sshfl [vmem:[#allocation1 + $0x18] sm:$0xff pattern:$0x73625140]
    %v350 = vpack.c.bf16 %v325, %v325
    %v351 = vpack.c.bf16 %v326, %v326
    %v352 = vpack.c.bf16 %v327, %v327
    %v353 = vpack.c.bf16 %v328, %v328
    %v354 = vpack.c.bf16 %v329, %v329
    %v355 = vpack.c.bf16 %v330, %v330
    %v356 = vpack.c.bf16 %v331, %v331
    %v357 = vpack.c.bf16 %v332, %v332
    %v358 = vpack.c.bf16 %v334, %v334
    %v359 = vpack.c.bf16 %v335, %v335
    %v360 = vpack.c.bf16 %v336, %v336
    %v361 = vpack.c.bf16 %v337, %v337
    %v362 = vld [vmem:[#allocation5] sm:$0xff]
    %v363 = vld [vmem:[#allocation5 + $0x8] sm:$0xff]
    %v364 = vld [vmem:[#allocation5 + $0x10] sm:$0xff]
    %v365 = vld [vmem:[#allocation5 + $0x18] sm:$0xff]
    %v366 = vld [vmem:[#allocation5 + $0x20] sm:$0xff]
    %v367 = vld [vmem:[#allocation5 + $0x28] sm:$0xff]
    %v368 = vld [vmem:[#allocation5 + $0x30] sm:$0xff]
    %v369 = vld [vmem:[#allocation5 + $0x38] sm:$0xff]
    %v370 = vld [vmem:[#allocation5 + $0x40] sm:$0xff]
    %v371 = vld [vmem:[#allocation5 + $0x48] sm:$0xff]
    %v372 = vld [vmem:[#allocation5 + $0x50] sm:$0xff]
    %v373 = vld [vmem:[#allocation5 + $0x58] sm:$0xff]
    %v374 = vld [vmem:[#allocation5 + $0x60] sm:$0xff]
    %v375 = vld [vmem:[#allocation5 + $0x68] sm:$0xff]
    %v376 = vld [vmem:[#allocation5 + $0x70] sm:$0xff]
    %v377 = vld [vmem:[#allocation5 + $0x78] sm:$0xff]
    %v378 = vld [vmem:[#allocation5 + $0x80] sm:$0xff]
    %v379 = vld [vmem:[#allocation5 + $0x88] sm:$0xff]
    %v380 = vld [vmem:[#allocation5 + $0x90] sm:$0xff]
    %v381 = vld [vmem:[#allocation5 + $0x98] sm:$0xff]
    %v382 = vld [vmem:[#allocation5 + $0xa0] sm:$0xff]
    %v383 = vld [vmem:[#allocation5 + $0xa8] sm:$0xff]
    %v384 = vld [vmem:[#allocation5 + $0xb0] sm:$0xff]
    %v385 = vld [vmem:[#allocation5 + $0xb8] sm:$0xff]
    %v386 = vld [vmem:[#allocation5 + $0xc0] sm:$0xff]
    %v387 = vld [vmem:[#allocation5 + $0xc8] sm:$0xff]
    %v388 = vld [vmem:[#allocation5 + $0xd0] sm:$0xff]
    %v389 = vld [vmem:[#allocation5 + $0xd8] sm:$0xff]
    %v390 = vld [vmem:[#allocation5 + $0xe0] sm:$0xff]
    %v391 = vld [vmem:[#allocation5 + $0xe8] sm:$0xff]
    %v392 = vld [vmem:[#allocation5 + $0xf0] sm:$0xff]
    %v393 = vld [vmem:[#allocation5 + $0xf8] sm:$0xff]
    %v394 = vld [vmem:[#allocation5 + $0x100] sm:$0xff]
    %v395 = vld [vmem:[#allocation5 + $0x108] sm:$0xff]
    %v396 = vld [vmem:[#allocation5 + $0x110] sm:$0xff]
    %v397 = vld [vmem:[#allocation5 + $0x118] sm:$0xff]
    %v398 = vld [vmem:[#allocation5 + $0x120] sm:$0xff]
    %v399 = vld [vmem:[#allocation5 + $0x128] sm:$0xff]
    %v400 = vld [vmem:[#allocation5 + $0x130] sm:$0xff]
    %v401 = vld [vmem:[#allocation5 + $0x138] sm:$0xff]
    %v402 = vld [vmem:[#allocation5 + $0x140] sm:$0xff]
    %v403 = vld [vmem:[#allocation5 + $0x148] sm:$0xff]
    %v404 = vld [vmem:[#allocation5 + $0x150] sm:$0xff]
    %v405 = vld [vmem:[#allocation5 + $0x158] sm:$0xff]
    %v406 = vld [vmem:[#allocation5 + $0x160] sm:$0xff]
    %v407 = vld [vmem:[#allocation5 + $0x168] sm:$0xff]
    %v408 = vld [vmem:[#allocation5 + $0x170] sm:$0xff]
    %v409 = vld [vmem:[#allocation5 + $0x178] sm:$0xff]
    %v410 = vld [vmem:[#allocation5 + $0x180] sm:$0xff]
    %v411 = vld [vmem:[#allocation5 + $0x188] sm:$0xff]
    %v412 = vld [vmem:[#allocation5 + $0x190] sm:$0xff]
    %v413 = vld [vmem:[#allocation5 + $0x198] sm:$0xff]
    %v414 = vld [vmem:[#allocation5 + $0x1a0] sm:$0xff]
    %v415 = vld [vmem:[#allocation5 + $0x1a8] sm:$0xff]
    %v416 = vld [vmem:[#allocation5 + $0x1b0] sm:$0xff]
    %v417 = vld [vmem:[#allocation5 + $0x1b8] sm:$0xff]
    %v418 = vld [vmem:[#allocation5 + $0x1c0] sm:$0xff]
    %v419 = vld [vmem:[#allocation5 + $0x1c8] sm:$0xff]
    %v420 = vld [vmem:[#allocation5 + $0x1d0] sm:$0xff]
    %v421 = vld [vmem:[#allocation5 + $0x1d8] sm:$0xff]
    %v422 = vld [vmem:[#allocation5 + $0x1e0] sm:$0xff]
    %v423 = vld [vmem:[#allocation5 + $0x1e8] sm:$0xff]
    %v424 = vld [vmem:[#allocation5 + $0x1f0] sm:$0xff]
    %v425 = vld [vmem:[#allocation5 + $0x1f8] sm:$0xff]
    %v426 = vld [vmem:[#allocation5 + $0x200] sm:$0xff]
    %v427 = vld [vmem:[#allocation5 + $0x208] sm:$0xff]
    %v428 = vld [vmem:[#allocation5 + $0x210] sm:$0xff]
    %v429 = vld [vmem:[#allocation5 + $0x218] sm:$0xff]
    %v430 = vld [vmem:[#allocation5 + $0x220] sm:$0xff]
    %v431 = vld [vmem:[#allocation5 + $0x228] sm:$0xff]
    %v432 = vld [vmem:[#allocation5 + $0x230] sm:$0xff]
    %v433 = vld [vmem:[#allocation5 + $0x238] sm:$0xff]
    %v434 = vld [vmem:[#allocation5 + $0x240] sm:$0xff]
    %v435 = vld [vmem:[#allocation5 + $0x248] sm:$0xff]
    %v436 = vld [vmem:[#allocation5 + $0x250] sm:$0xff]
    %v437 = vld [vmem:[#allocation5 + $0x258] sm:$0xff]
    %v438 = vld [vmem:[#allocation5 + $0x260] sm:$0xff]
    %v439 = vld [vmem:[#allocation5 + $0x268] sm:$0xff]
    %v440 = vld [vmem:[#allocation5 + $0x270] sm:$0xff]
    %v441 = vld [vmem:[#allocation5 + $0x278] sm:$0xff]
    %v442 = vld [vmem:[#allocation5 + $0x280] sm:$0xff]
    %v443 = vld [vmem:[#allocation5 + $0x288] sm:$0xff]
    %v444 = vld [vmem:[#allocation5 + $0x290] sm:$0xff]
    %v445 = vld [vmem:[#allocation5 + $0x298] sm:$0xff]
    %v446 = vld [vmem:[#allocation5 + $0x2a0] sm:$0xff]
    %v447 = vld [vmem:[#allocation5 + $0x2a8] sm:$0xff]
    %v448 = vld [vmem:[#allocation5 + $0x2b0] sm:$0xff]
    %v449 = vld [vmem:[#allocation5 + $0x2b8] sm:$0xff]
    %v450 = vld [vmem:[#allocation5 + $0x2c0] sm:$0xff]
    %v451 = vld [vmem:[#allocation5 + $0x2c8] sm:$0xff]
    %v452 = vld [vmem:[#allocation5 + $0x2d0] sm:$0xff]
    %v453 = vld [vmem:[#allocation5 + $0x2d8] sm:$0xff]
    %v454 = vld [vmem:[#allocation5 + $0x2e0] sm:$0xff]
    %v455 = vld [vmem:[#allocation5 + $0x2e8] sm:$0xff]
    %v456 = vld [vmem:[#allocation5 + $0x2f0] sm:$0xff]
    %v457 = vld [vmem:[#allocation5 + $0x2f8] sm:$0xff]
    %v458 = vld [vmem:[#allocation5 + $0x300] sm:$0xff]
    %v459 = vld [vmem:[#allocation5 + $0x308] sm:$0xff]
    %v460 = vld [vmem:[#allocation5 + $0x310] sm:$0xff]
    %v461 = vld [vmem:[#allocation5 + $0x318] sm:$0xff]
    %v462 = vld [vmem:[#allocation5 + $0x320] sm:$0xff]
    %v463 = vld [vmem:[#allocation5 + $0x328] sm:$0xff]
    %v464 = vld [vmem:[#allocation5 + $0x330] sm:$0xff]
    %v465 = vld [vmem:[#allocation5 + $0x338] sm:$0xff]
    %v466 = vld [vmem:[#allocation5 + $0x340] sm:$0xff]
    %v467 = vld [vmem:[#allocation5 + $0x348] sm:$0xff]
    %v468 = vld [vmem:[#allocation5 + $0x350] sm:$0xff]
    %v469 = vld [vmem:[#allocation5 + $0x358] sm:$0xff]
    %v470 = vld [vmem:[#allocation5 + $0x360] sm:$0xff]
    %v471 = vld [vmem:[#allocation5 + $0x368] sm:$0xff]
    %v472 = vld [vmem:[#allocation5 + $0x370] sm:$0xff]
    %v473 = vld [vmem:[#allocation5 + $0x378] sm:$0xff]
    %v474 = vld [vmem:[#allocation5 + $0x380] sm:$0xff]
    %v475 = vld [vmem:[#allocation5 + $0x388] sm:$0xff]
    %v476 = vld [vmem:[#allocation5 + $0x390] sm:$0xff]
    %v477 = vld [vmem:[#allocation5 + $0x398] sm:$0xff]
    %v478 = vld [vmem:[#allocation5 + $0x3a0] sm:$0xff]
    %v479 = vld [vmem:[#allocation5 + $0x3a8] sm:$0xff]
    %v480 = vld [vmem:[#allocation5 + $0x3b0] sm:$0xff]
    %v481 = vld [vmem:[#allocation5 + $0x3b8] sm:$0xff]
    %v482 = vld [vmem:[#allocation5 + $0x3c0] sm:$0xff]
    %v483 = vld [vmem:[#allocation5 + $0x3c8] sm:$0xff]
    %v484 = vld [vmem:[#allocation5 + $0x3d0] sm:$0xff]
    %v485 = vld [vmem:[#allocation5 + $0x3d8] sm:$0xff]
    %v486 = vld [vmem:[#allocation5 + $0x3e0] sm:$0xff]
    %v487 = vld [vmem:[#allocation5 + $0x3e8] sm:$0xff]
    %v488 = vld [vmem:[#allocation5 + $0x3f0] sm:$0xff]
    %v489 = vld [vmem:[#allocation5 + $0x3f8] sm:$0xff]
    %v490 = vld [vmem:[#allocation5 + $0x400] sm:$0xff]
    %v491 = vld [vmem:[#allocation5 + $0x408] sm:$0xff]
    %v492 = vld [vmem:[#allocation5 + $0x410] sm:$0xff]
    %v493 = vld [vmem:[#allocation5 + $0x418] sm:$0xff]
    %v494 = vld [vmem:[#allocation5 + $0x420] sm:$0xff]
    %v495 = vld [vmem:[#allocation5 + $0x428] sm:$0xff]
    %v496 = vld [vmem:[#allocation5 + $0x430] sm:$0xff]
    %v497 = vld [vmem:[#allocation5 + $0x438] sm:$0xff]
    %v498 = vld [vmem:[#allocation5 + $0x440] sm:$0xff]
    %v499 = vld [vmem:[#allocation5 + $0x448] sm:$0xff]
    %v500 = vld [vmem:[#allocation5 + $0x450] sm:$0xff]
    %v501 = vld [vmem:[#allocation5 + $0x458] sm:$0xff]
    %v502 = vld [vmem:[#allocation5 + $0x460] sm:$0xff]
    %v503 = vld [vmem:[#allocation5 + $0x468] sm:$0xff]
    %v504 = vld [vmem:[#allocation5 + $0x470] sm:$0xff]
    %v505 = vld [vmem:[#allocation5 + $0x478] sm:$0xff]
    %v506 = vld [vmem:[#allocation5 + $0x480] sm:$0xff]
    %v507 = vld [vmem:[#allocation5 + $0x488] sm:$0xff]
    %v508 = vld [vmem:[#allocation5 + $0x490] sm:$0xff]
    %v509 = vld [vmem:[#allocation5 + $0x498] sm:$0xff]
    %v510 = vld [vmem:[#allocation5 + $0x4a0] sm:$0xff]
    %v511 = vld [vmem:[#allocation5 + $0x4a8] sm:$0xff]
    %v512 = vld [vmem:[#allocation5 + $0x4b0] sm:$0xff]
    %v513 = vld [vmem:[#allocation5 + $0x4b8] sm:$0xff]
    %v514 = vld [vmem:[#allocation5 + $0x4c0] sm:$0xff]
    %v515 = vld [vmem:[#allocation5 + $0x4c8] sm:$0xff]
    %v516 = vld [vmem:[#allocation5 + $0x4d0] sm:$0xff]
    %v517 = vld [vmem:[#allocation5 + $0x4d8] sm:$0xff]
    %v518 = vld [vmem:[#allocation5 + $0x4e0] sm:$0xff]
    %v519 = vld [vmem:[#allocation5 + $0x4e8] sm:$0xff]
    %v520 = vld [vmem:[#allocation5 + $0x4f0] sm:$0xff]
    %v521 = vld [vmem:[#allocation5 + $0x4f8] sm:$0xff]
    %v522 = vld [vmem:[#allocation5 + $0x500] sm:$0xff]
    %v523 = vld [vmem:[#allocation5 + $0x508] sm:$0xff]
    %v524 = vld [vmem:[#allocation5 + $0x510] sm:$0xff]
    %v525 = vld [vmem:[#allocation5 + $0x518] sm:$0xff]
    %v526 = vld [vmem:[#allocation5 + $0x520] sm:$0xff]
    %v527 = vld [vmem:[#allocation5 + $0x528] sm:$0xff]
    %v528 = vld [vmem:[#allocation5 + $0x530] sm:$0xff]
    %v529 = vld [vmem:[#allocation5 + $0x538] sm:$0xff]
    %v530 = vld [vmem:[#allocation5 + $0x540] sm:$0xff]
    %v531 = vld [vmem:[#allocation5 + $0x548] sm:$0xff]
    %v532 = vld [vmem:[#allocation5 + $0x550] sm:$0xff]
    %v533 = vld [vmem:[#allocation5 + $0x558] sm:$0xff]
    %v534 = vld [vmem:[#allocation5 + $0x560] sm:$0xff]
    %v535 = vld [vmem:[#allocation5 + $0x568] sm:$0xff]
    %v536 = vld [vmem:[#allocation5 + $0x570] sm:$0xff]
    %v537 = vld [vmem:[#allocation5 + $0x578] sm:$0xff]
    %v538 = vld [vmem:[#allocation5 + $0x580] sm:$0xff]
    %v539 = vld [vmem:[#allocation5 + $0x588] sm:$0xff]
    %v540 = vld [vmem:[#allocation5 + $0x590] sm:$0xff]
    %v541 = vld [vmem:[#allocation5 + $0x598] sm:$0xff]
    %v542 = vld [vmem:[#allocation5 + $0x5a0] sm:$0xff]
    %v543 = vld [vmem:[#allocation5 + $0x5a8] sm:$0xff]
    %v544 = vld [vmem:[#allocation5 + $0x5b0] sm:$0xff]
    %v545 = vld [vmem:[#allocation5 + $0x5b8] sm:$0xff]
    %v546 = vld [vmem:[#allocation5 + $0x5c0] sm:$0xff]
    %v547 = vld [vmem:[#allocation5 + $0x5c8] sm:$0xff]
    %v548 = vld [vmem:[#allocation5 + $0x5d0] sm:$0xff]
    %v549 = vld [vmem:[#allocation5 + $0x5d8] sm:$0xff]
    %v550 = vld [vmem:[#allocation5 + $0x5e0] sm:$0xff]
    %v551 = vld [vmem:[#allocation5 + $0x5e8] sm:$0xff]
    %v552 = vld [vmem:[#allocation5 + $0x5f0] sm:$0xff]
    %v553 = vld [vmem:[#allocation5 + $0x5f8] sm:$0xff]
    %v554 = vld [vmem:[#allocation5 + $0x600] sm:$0xff]
    %v555 = vld [vmem:[#allocation5 + $0x608] sm:$0xff]
    %v556 = vld [vmem:[#allocation5 + $0x610] sm:$0xff]
    %v557 = vld [vmem:[#allocation5 + $0x618] sm:$0xff]
    %v558 = vld [vmem:[#allocation5 + $0x620] sm:$0xff]
    %v559 = vld [vmem:[#allocation5 + $0x628] sm:$0xff]
    %v560 = vld [vmem:[#allocation5 + $0x630] sm:$0xff]
    %v561 = vld [vmem:[#allocation5 + $0x638] sm:$0xff]
    %v562 = vld [vmem:[#allocation5 + $0x640] sm:$0xff]
    %v563 = vld [vmem:[#allocation5 + $0x648] sm:$0xff]
    %v564 = vld [vmem:[#allocation5 + $0x650] sm:$0xff]
    %v565 = vld [vmem:[#allocation5 + $0x658] sm:$0xff]
    %v566 = vld [vmem:[#allocation5 + $0x660] sm:$0xff]
    %v567 = vld [vmem:[#allocation5 + $0x668] sm:$0xff]
    %v568 = vld [vmem:[#allocation5 + $0x670] sm:$0xff]
    %v569 = vld [vmem:[#allocation5 + $0x678] sm:$0xff]
    %v570 = vld [vmem:[#allocation5 + $0x680] sm:$0xff]
    %v571 = vld [vmem:[#allocation5 + $0x688] sm:$0xff]
    %v572 = vld [vmem:[#allocation5 + $0x690] sm:$0xff]
    %v573 = vld [vmem:[#allocation5 + $0x698] sm:$0xff]
    %v574 = vld [vmem:[#allocation5 + $0x6a0] sm:$0xff]
    %v575 = vld [vmem:[#allocation5 + $0x6a8] sm:$0xff]
    %v576 = vld [vmem:[#allocation5 + $0x6b0] sm:$0xff]
    %v577 = vld [vmem:[#allocation5 + $0x6b8] sm:$0xff]
    %v578 = vld [vmem:[#allocation5 + $0x6c0] sm:$0xff]
    %v579 = vld [vmem:[#allocation5 + $0x6c8] sm:$0xff]
    %v580 = vld [vmem:[#allocation5 + $0x6d0] sm:$0xff]
    %v581 = vld [vmem:[#allocation5 + $0x6d8] sm:$0xff]
    %v582 = vld [vmem:[#allocation5 + $0x6e0] sm:$0xff]
    %v583 = vld [vmem:[#allocation5 + $0x6e8] sm:$0xff]
    %v584 = vld [vmem:[#allocation5 + $0x6f0] sm:$0xff]
    %v585 = vld [vmem:[#allocation5 + $0x6f8] sm:$0xff]
    %v586 = vld [vmem:[#allocation5 + $0x700] sm:$0xff]
    %v587 = vld [vmem:[#allocation5 + $0x708] sm:$0xff]
    %v588 = vld [vmem:[#allocation5 + $0x710] sm:$0xff]
    %v589 = vld [vmem:[#allocation5 + $0x718] sm:$0xff]
    %v590 = vld [vmem:[#allocation5 + $0x720] sm:$0xff]
    %v591 = vld [vmem:[#allocation5 + $0x728] sm:$0xff]
    %v592 = vld [vmem:[#allocation5 + $0x730] sm:$0xff]
    %v593 = vld [vmem:[#allocation5 + $0x738] sm:$0xff]
    %v594 = vld [vmem:[#allocation5 + $0x740] sm:$0xff]
    %v595 = vld [vmem:[#allocation5 + $0x748] sm:$0xff]
    %v596 = vld [vmem:[#allocation5 + $0x750] sm:$0xff]
    %v597 = vld [vmem:[#allocation5 + $0x758] sm:$0xff]
    %v598 = vld [vmem:[#allocation5 + $0x760] sm:$0xff]
    %v599 = vld [vmem:[#allocation5 + $0x768] sm:$0xff]
    %v600 = vld [vmem:[#allocation5 + $0x770] sm:$0xff]
    %v601 = vld [vmem:[#allocation5 + $0x778] sm:$0xff]
    %v602 = vld [vmem:[#allocation5 + $0x780] sm:$0xff]
    %v603 = vld [vmem:[#allocation5 + $0x788] sm:$0xff]
    %v604 = vld [vmem:[#allocation5 + $0x790] sm:$0xff]
    %v605 = vld [vmem:[#allocation5 + $0x798] sm:$0xff]
    %v606 = vld [vmem:[#allocation5 + $0x7a0] sm:$0xff]
    %v607 = vld [vmem:[#allocation5 + $0x7a8] sm:$0xff]
    %v608 = vld [vmem:[#allocation5 + $0x7b0] sm:$0xff]
    %v609 = vld [vmem:[#allocation5 + $0x7b8] sm:$0xff]
    %v610 = vld [vmem:[#allocation5 + $0x7c0] sm:$0xff]
    %v611 = vld [vmem:[#allocation5 + $0x7c8] sm:$0xff]
    %v612 = vld [vmem:[#allocation5 + $0x7d0] sm:$0xff]
    %v613 = vld [vmem:[#allocation5 + $0x7d8] sm:$0xff]
    %v614 = vld [vmem:[#allocation5 + $0x7e0] sm:$0xff]
    %v615 = vld [vmem:[#allocation5 + $0x7e8] sm:$0xff]
    %v616 = vld [vmem:[#allocation5 + $0x7f0] sm:$0xff]
    %v617 = vld [vmem:[#allocation5 + $0x7f8] sm:$0xff]
    %v618 = vld [vmem:[#allocation5 + $0x800] sm:$0xff]
    %v619 = vld [vmem:[#allocation5 + $0x808] sm:$0xff]
    %v620 = vld [vmem:[#allocation5 + $0x810] sm:$0xff]
    %v621 = vld [vmem:[#allocation5 + $0x818] sm:$0xff]
    %v622 = vld [vmem:[#allocation5 + $0x820] sm:$0xff]
    %v623 = vld [vmem:[#allocation5 + $0x828] sm:$0xff]
    %v624 = vld [vmem:[#allocation5 + $0x830] sm:$0xff]
    %v625 = vld [vmem:[#allocation5 + $0x838] sm:$0xff]
    %v626 = vld [vmem:[#allocation5 + $0x840] sm:$0xff]
    %v627 = vld [vmem:[#allocation5 + $0x848] sm:$0xff]
    %v628 = vld [vmem:[#allocation5 + $0x850] sm:$0xff]
    %v629 = vld [vmem:[#allocation5 + $0x858] sm:$0xff]
    %v630 = vld [vmem:[#allocation5 + $0x860] sm:$0xff]
    %v631 = vld [vmem:[#allocation5 + $0x868] sm:$0xff]
    %v632 = vld [vmem:[#allocation5 + $0x870] sm:$0xff]
    %v633 = vld [vmem:[#allocation5 + $0x878] sm:$0xff]
    %v634 = vld [vmem:[#allocation5 + $0x880] sm:$0xff]
    %v635 = vld [vmem:[#allocation5 + $0x888] sm:$0xff]
    %v636 = vld [vmem:[#allocation5 + $0x890] sm:$0xff]
    %v637 = vld [vmem:[#allocation5 + $0x898] sm:$0xff]
    %v638 = vld [vmem:[#allocation5 + $0x8a0] sm:$0xff]
    %v639 = vld [vmem:[#allocation5 + $0x8a8] sm:$0xff]
    %v640 = vld [vmem:[#allocation5 + $0x8b0] sm:$0xff]
    %v641 = vld [vmem:[#allocation5 + $0x8b8] sm:$0xff]
    %v642 = vld [vmem:[#allocation5 + $0x8c0] sm:$0xff]
    %v643 = vld [vmem:[#allocation5 + $0x8c8] sm:$0xff]
    %v644 = vld [vmem:[#allocation5 + $0x8d0] sm:$0xff]
    %v645 = vld [vmem:[#allocation5 + $0x8d8] sm:$0xff]
    %v646 = vld [vmem:[#allocation5 + $0x8e0] sm:$0xff]
    %v647 = vld [vmem:[#allocation5 + $0x8e8] sm:$0xff]
    %v648 = vld [vmem:[#allocation5 + $0x8f0] sm:$0xff]
    %v649 = vld [vmem:[#allocation5 + $0x8f8] sm:$0xff]
    %v650 = vld [vmem:[#allocation5 + $0x900] sm:$0xff]
    %v651 = vld [vmem:[#allocation5 + $0x908] sm:$0xff]
    %v652 = vld [vmem:[#allocation5 + $0x910] sm:$0xff]
    %v653 = vld [vmem:[#allocation5 + $0x918] sm:$0xff]
    %v654 = vld [vmem:[#allocation5 + $0x920] sm:$0xff]
    %v655 = vld [vmem:[#allocation5 + $0x928] sm:$0xff]
    %v656 = vld [vmem:[#allocation5 + $0x930] sm:$0xff]
    %v657 = vld [vmem:[#allocation5 + $0x938] sm:$0xff]
    %v658 = vld [vmem:[#allocation5 + $0x940] sm:$0xff]
    %v659 = vld [vmem:[#allocation5 + $0x948] sm:$0xff]
    %v660 = vld [vmem:[#allocation5 + $0x950] sm:$0xff]
    %v661 = vld [vmem:[#allocation5 + $0x958] sm:$0xff]
    %v662 = vld [vmem:[#allocation5 + $0x960] sm:$0xff]
    %v663 = vld [vmem:[#allocation5 + $0x968] sm:$0xff]
    %v664 = vld [vmem:[#allocation5 + $0x970] sm:$0xff]
    %v665 = vld [vmem:[#allocation5 + $0x978] sm:$0xff]
    %v666 = vld [vmem:[#allocation5 + $0x980] sm:$0xff]
    %v667 = vld [vmem:[#allocation5 + $0x988] sm:$0xff]
    %v668 = vld [vmem:[#allocation5 + $0x990] sm:$0xff]
    %v669 = vld [vmem:[#allocation5 + $0x998] sm:$0xff]
    %v670 = vld [vmem:[#allocation5 + $0x9a0] sm:$0xff]
    %v671 = vld [vmem:[#allocation5 + $0x9a8] sm:$0xff]
    %v672 = vld [vmem:[#allocation5 + $0x9b0] sm:$0xff]
    %v673 = vld [vmem:[#allocation5 + $0x9b8] sm:$0xff]
    %v674 = vld [vmem:[#allocation5 + $0x9c0] sm:$0xff]
    %v675 = vld [vmem:[#allocation5 + $0x9c8] sm:$0xff]
    %v676 = vld [vmem:[#allocation5 + $0x9d0] sm:$0xff]
    %v677 = vld [vmem:[#allocation5 + $0x9d8] sm:$0xff]
    %v678 = vld [vmem:[#allocation5 + $0x9e0] sm:$0xff]
    %v679 = vld [vmem:[#allocation5 + $0x9e8] sm:$0xff]
    %v680 = vld [vmem:[#allocation5 + $0x9f0] sm:$0xff]
    %v681 = vld [vmem:[#allocation5 + $0x9f8] sm:$0xff]
    %v682 = vld [vmem:[#allocation5 + $0xa00] sm:$0xff]
    %v683 = vld [vmem:[#allocation5 + $0xa08] sm:$0xff]
    %v684 = vld [vmem:[#allocation5 + $0xa10] sm:$0xff]
    %v685 = vld [vmem:[#allocation5 + $0xa18] sm:$0xff]
    %v686 = vld [vmem:[#allocation5 + $0xa20] sm:$0xff]
    %v687 = vld [vmem:[#allocation5 + $0xa28] sm:$0xff]
    %v688 = vld [vmem:[#allocation5 + $0xa30] sm:$0xff]
    %v689 = vld [vmem:[#allocation5 + $0xa38] sm:$0xff]
    %v690 = vld [vmem:[#allocation5 + $0xa40] sm:$0xff]
    %v691 = vld [vmem:[#allocation5 + $0xa48] sm:$0xff]
    %v692 = vld [vmem:[#allocation5 + $0xa50] sm:$0xff]
    %v693 = vld [vmem:[#allocation5 + $0xa58] sm:$0xff]
    %v694 = vld [vmem:[#allocation5 + $0xa60] sm:$0xff]
    %v695 = vld [vmem:[#allocation5 + $0xa68] sm:$0xff]
    %v696 = vld [vmem:[#allocation5 + $0xa70] sm:$0xff]
    %v697 = vld [vmem:[#allocation5 + $0xa78] sm:$0xff]
    %v698 = vld [vmem:[#allocation5 + $0xa80] sm:$0xff]
    %v699 = vld [vmem:[#allocation5 + $0xa88] sm:$0xff]
    %v700 = vld [vmem:[#allocation5 + $0xa90] sm:$0xff]
    %v701 = vld [vmem:[#allocation5 + $0xa98] sm:$0xff]
    %v702 = vld [vmem:[#allocation5 + $0xaa0] sm:$0xff]
    %v703 = vld [vmem:[#allocation5 + $0xaa8] sm:$0xff]
    %v704 = vld [vmem:[#allocation5 + $0xab0] sm:$0xff]
    %v705 = vld [vmem:[#allocation5 + $0xab8] sm:$0xff]
    %v706 = vld [vmem:[#allocation5 + $0xac0] sm:$0xff]
    %v707 = vld [vmem:[#allocation5 + $0xac8] sm:$0xff]
    %v708 = vld [vmem:[#allocation5 + $0xad0] sm:$0xff]
    %v709 = vld [vmem:[#allocation5 + $0xad8] sm:$0xff]
    %v710 = vld [vmem:[#allocation5 + $0xae0] sm:$0xff]
    %v711 = vld [vmem:[#allocation5 + $0xae8] sm:$0xff]
    %v712 = vld [vmem:[#allocation5 + $0xaf0] sm:$0xff]
    %v713 = vld [vmem:[#allocation5 + $0xaf8] sm:$0xff]
    %v714 = vld [vmem:[#allocation5 + $0xb00] sm:$0xff]
    %v715 = vld [vmem:[#allocation5 + $0xb08] sm:$0xff]
    %v716 = vld [vmem:[#allocation5 + $0xb10] sm:$0xff]
    %v717 = vld [vmem:[#allocation5 + $0xb18] sm:$0xff]
    %v718 = vld [vmem:[#allocation5 + $0xb20] sm:$0xff]
    %v719 = vld [vmem:[#allocation5 + $0xb28] sm:$0xff]
    %v720 = vld [vmem:[#allocation5 + $0xb30] sm:$0xff]
    %v721 = vld [vmem:[#allocation5 + $0xb38] sm:$0xff]
    %v722 = vld [vmem:[#allocation5 + $0xb40] sm:$0xff]
    %v723 = vld [vmem:[#allocation5 + $0xb48] sm:$0xff]
    %v724 = vld [vmem:[#allocation5 + $0xb50] sm:$0xff]
    %v725 = vld [vmem:[#allocation5 + $0xb58] sm:$0xff]
    %v726 = vld [vmem:[#allocation5 + $0xb60] sm:$0xff]
    %v727 = vld [vmem:[#allocation5 + $0xb68] sm:$0xff]
    %v728 = vld [vmem:[#allocation5 + $0xb70] sm:$0xff]
    %v729 = vld [vmem:[#allocation5 + $0xb78] sm:$0xff]
    %v730 = vld [vmem:[#allocation5 + $0xb80] sm:$0xff]
    %v731 = vld [vmem:[#allocation5 + $0xb88] sm:$0xff]
    %v732 = vld [vmem:[#allocation5 + $0xb90] sm:$0xff]
    %v733 = vld [vmem:[#allocation5 + $0xb98] sm:$0xff]
    %v734 = vld [vmem:[#allocation5 + $0xba0] sm:$0xff]
    %v735 = vld [vmem:[#allocation5 + $0xba8] sm:$0xff]
    %v736 = vld [vmem:[#allocation5 + $0xbb0] sm:$0xff]
    %v737 = vld [vmem:[#allocation5 + $0xbb8] sm:$0xff]
    %v738 = vld [vmem:[#allocation5 + $0xbc0] sm:$0xff]
    %v739 = vld [vmem:[#allocation5 + $0xbc8] sm:$0xff]
    %v740 = vld [vmem:[#allocation5 + $0xbd0] sm:$0xff]
    %v741 = vld [vmem:[#allocation5 + $0xbd8] sm:$0xff]
    %v742 = vld [vmem:[#allocation5 + $0xbe0] sm:$0xff]
    %v743 = vld [vmem:[#allocation5 + $0xbe8] sm:$0xff]
    %v744 = vld [vmem:[#allocation5 + $0xbf0] sm:$0xff]
    %v745 = vld [vmem:[#allocation5 + $0xbf8] sm:$0xff]
    %v746 = vld [vmem:[#allocation5 + $0xc00] sm:$0xff]
    %v747 = vld [vmem:[#allocation5 + $0xc08] sm:$0xff]
    %v748 = vld [vmem:[#allocation5 + $0xc10] sm:$0xff]
    %v749 = vld [vmem:[#allocation5 + $0xc18] sm:$0xff]
    %v750 = vld [vmem:[#allocation5 + $0xc20] sm:$0xff]
    %v751 = vld [vmem:[#allocation5 + $0xc28] sm:$0xff]
    %v752 = vld [vmem:[#allocation5 + $0xc30] sm:$0xff]
    %v753 = vld [vmem:[#allocation5 + $0xc38] sm:$0xff]
    %v754 = vld [vmem:[#allocation5 + $0xc40] sm:$0xff]
    %v755 = vld [vmem:[#allocation5 + $0xc48] sm:$0xff]
    %v756 = vld [vmem:[#allocation5 + $0xc50] sm:$0xff]
    %v757 = vld [vmem:[#allocation5 + $0xc58] sm:$0xff]
    %v758 = vld [vmem:[#allocation5 + $0xc60] sm:$0xff]
    %v759 = vld [vmem:[#allocation5 + $0xc68] sm:$0xff]
    %v760 = vld [vmem:[#allocation5 + $0xc70] sm:$0xff]
    %v761 = vld [vmem:[#allocation5 + $0xc78] sm:$0xff]
    %v762 = vld [vmem:[#allocation5 + $0xc80] sm:$0xff]
    %v763 = vld [vmem:[#allocation5 + $0xc88] sm:$0xff]
    %v764 = vld [vmem:[#allocation5 + $0xc90] sm:$0xff]
    %v765 = vld [vmem:[#allocation5 + $0xc98] sm:$0xff]
    %v766 = vld [vmem:[#allocation5 + $0xca0] sm:$0xff]
    %v767 = vld [vmem:[#allocation5 + $0xca8] sm:$0xff]
    %v768 = vld [vmem:[#allocation5 + $0xcb0] sm:$0xff]
    %v769 = vld [vmem:[#allocation5 + $0xcb8] sm:$0xff]
    %v770 = vld [vmem:[#allocation5 + $0xcc0] sm:$0xff]
    %v771 = vld [vmem:[#allocation5 + $0xcc8] sm:$0xff]
    %v772 = vld [vmem:[#allocation5 + $0xcd0] sm:$0xff]
    %v773 = vld [vmem:[#allocation5 + $0xcd8] sm:$0xff]
    %v774 = vld [vmem:[#allocation5 + $0xce0] sm:$0xff]
    %v775 = vld [vmem:[#allocation5 + $0xce8] sm:$0xff]
    %v776 = vld [vmem:[#allocation5 + $0xcf0] sm:$0xff]
    %v777 = vld [vmem:[#allocation5 + $0xcf8] sm:$0xff]
    %v778 = vld [vmem:[#allocation5 + $0xd00] sm:$0xff]
    %v779 = vld [vmem:[#allocation5 + $0xd08] sm:$0xff]
    %v780 = vld [vmem:[#allocation5 + $0xd10] sm:$0xff]
    %v781 = vld [vmem:[#allocation5 + $0xd18] sm:$0xff]
    %v782 = vld [vmem:[#allocation5 + $0xd20] sm:$0xff]
    %v783 = vld [vmem:[#allocation5 + $0xd28] sm:$0xff]
    %v784 = vld [vmem:[#allocation5 + $0xd30] sm:$0xff]
    %v785 = vld [vmem:[#allocation5 + $0xd38] sm:$0xff]
    %v786 = vld [vmem:[#allocation5 + $0xd40] sm:$0xff]
    %v787 = vld [vmem:[#allocation5 + $0xd48] sm:$0xff]
    %v788 = vld [vmem:[#allocation5 + $0xd50] sm:$0xff]
    %v789 = vld [vmem:[#allocation5 + $0xd58] sm:$0xff]
    %v790 = vld [vmem:[#allocation5 + $0xd60] sm:$0xff]
    %v791 = vld [vmem:[#allocation5 + $0xd68] sm:$0xff]
    %v792 = vld [vmem:[#allocation5 + $0xd70] sm:$0xff]
    %v793 = vld [vmem:[#allocation5 + $0xd78] sm:$0xff]
    %v794 = vld [vmem:[#allocation5 + $0xd80] sm:$0xff]
    %v795 = vld [vmem:[#allocation5 + $0xd88] sm:$0xff]
    %v796 = vld [vmem:[#allocation5 + $0xd90] sm:$0xff]
    %v797 = vld [vmem:[#allocation5 + $0xd98] sm:$0xff]
    %v798 = vld [vmem:[#allocation5 + $0xda0] sm:$0xff]
    %v799 = vld [vmem:[#allocation5 + $0xda8] sm:$0xff]
    %v800 = vld [vmem:[#allocation5 + $0xdb0] sm:$0xff]
    %v801 = vld [vmem:[#allocation5 + $0xdb8] sm:$0xff]
    %v802 = vld [vmem:[#allocation5 + $0xdc0] sm:$0xff]
    %v803 = vld [vmem:[#allocation5 + $0xdc8] sm:$0xff]
    %v804 = vld [vmem:[#allocation5 + $0xdd0] sm:$0xff]
    %v805 = vld [vmem:[#allocation5 + $0xdd8] sm:$0xff]
    %v806 = vld [vmem:[#allocation5 + $0xde0] sm:$0xff]
    %v807 = vld [vmem:[#allocation5 + $0xde8] sm:$0xff]
    %v808 = vld [vmem:[#allocation5 + $0xdf0] sm:$0xff]
    %v809 = vld [vmem:[#allocation5 + $0xdf8] sm:$0xff]
    %v810 = vld [vmem:[#allocation5 + $0xe00] sm:$0xff]
    %v811 = vld [vmem:[#allocation5 + $0xe08] sm:$0xff]
    %v812 = vld [vmem:[#allocation5 + $0xe10] sm:$0xff]
    %v813 = vld [vmem:[#allocation5 + $0xe18] sm:$0xff]
    %v814 = vld [vmem:[#allocation5 + $0xe20] sm:$0xff]
    %v815 = vld [vmem:[#allocation5 + $0xe28] sm:$0xff]
    %v816 = vld [vmem:[#allocation5 + $0xe30] sm:$0xff]
    %v817 = vld [vmem:[#allocation5 + $0xe38] sm:$0xff]
    %v818 = vld [vmem:[#allocation5 + $0xe40] sm:$0xff]
    %v819 = vld [vmem:[#allocation5 + $0xe48] sm:$0xff]
    %v820 = vld [vmem:[#allocation5 + $0xe50] sm:$0xff]
    %v821 = vld [vmem:[#allocation5 + $0xe58] sm:$0xff]
    %v822 = vld [vmem:[#allocation5 + $0xe60] sm:$0xff]
    %v823 = vld [vmem:[#allocation5 + $0xe68] sm:$0xff]
    %v824 = vld [vmem:[#allocation5 + $0xe70] sm:$0xff]
    %v825 = vld [vmem:[#allocation5 + $0xe78] sm:$0xff]
    %v826 = vld [vmem:[#allocation5 + $0xe80] sm:$0xff]
    %v827 = vld [vmem:[#allocation5 + $0xe88] sm:$0xff]
    %v828 = vld [vmem:[#allocation5 + $0xe90] sm:$0xff]
    %v829 = vld [vmem:[#allocation5 + $0xe98] sm:$0xff]
    %v830 = vld [vmem:[#allocation5 + $0xea0] sm:$0xff]
    %v831 = vld [vmem:[#allocation5 + $0xea8] sm:$0xff]
    %v832 = vld [vmem:[#allocation5 + $0xeb0] sm:$0xff]
    %v833 = vld [vmem:[#allocation5 + $0xeb8] sm:$0xff]
    %v834 = vld [vmem:[#allocation5 + $0xec0] sm:$0xff]
    %v835 = vld [vmem:[#allocation5 + $0xec8] sm:$0xff]
    %v836 = vld [vmem:[#allocation5 + $0xed0] sm:$0xff]
    %v837 = vld [vmem:[#allocation5 + $0xed8] sm:$0xff]
    %v838 = vld [vmem:[#allocation5 + $0xee0] sm:$0xff]
    %v839 = vld [vmem:[#allocation5 + $0xee8] sm:$0xff]
    %v840 = vld [vmem:[#allocation5 + $0xef0] sm:$0xff]
    %v841 = vld [vmem:[#allocation5 + $0xef8] sm:$0xff]
    %v842 = vld [vmem:[#allocation5 + $0xf00] sm:$0xff]
    %v843 = vld [vmem:[#allocation5 + $0xf08] sm:$0xff]
    %v844 = vld [vmem:[#allocation5 + $0xf10] sm:$0xff]
    %v845 = vld [vmem:[#allocation5 + $0xf18] sm:$0xff]
    %v846 = vld [vmem:[#allocation5 + $0xf20] sm:$0xff]
    %v847 = vld [vmem:[#allocation5 + $0xf28] sm:$0xff]
    %v848 = vld [vmem:[#allocation5 + $0xf30] sm:$0xff]
    %v849 = vld [vmem:[#allocation5 + $0xf38] sm:$0xff]
    %v850 = vld [vmem:[#allocation5 + $0xf40] sm:$0xff]
    %v851 = vld [vmem:[#allocation5 + $0xf48] sm:$0xff]
    %v852 = vld [vmem:[#allocation5 + $0xf50] sm:$0xff]
    %v853 = vld [vmem:[#allocation5 + $0xf58] sm:$0xff]
    %v854 = vld [vmem:[#allocation5 + $0xf60] sm:$0xff]
    %v855 = vld [vmem:[#allocation5 + $0xf68] sm:$0xff]
    %v856 = vld [vmem:[#allocation5 + $0xf70] sm:$0xff]
    %v857 = vld [vmem:[#allocation5 + $0xf78] sm:$0xff]
    %v858 = vld [vmem:[#allocation5 + $0xf80] sm:$0xff]
    %v859 = vld [vmem:[#allocation5 + $0xf88] sm:$0xff]
    %v860 = vld [vmem:[#allocation5 + $0xf90] sm:$0xff]
    %v861 = vld [vmem:[#allocation5 + $0xf98] sm:$0xff]
    %v862 = vld [vmem:[#allocation5 + $0xfa0] sm:$0xff]
    %v863 = vld [vmem:[#allocation5 + $0xfa8] sm:$0xff]
    %v864 = vld [vmem:[#allocation5 + $0xfb0] sm:$0xff]
    %v865 = vld [vmem:[#allocation5 + $0xfb8] sm:$0xff]
    %v866 = vld [vmem:[#allocation5 + $0xfc0] sm:$0xff]
    %v867 = vld [vmem:[#allocation5 + $0xfc8] sm:$0xff]
    %v868 = vld [vmem:[#allocation5 + $0xfd0] sm:$0xff]
    %v869 = vld [vmem:[#allocation5 + $0xfd8] sm:$0xff]
    %v870 = vld [vmem:[#allocation5 + $0xfe0] sm:$0xff]
    %v871 = vld [vmem:[#allocation5 + $0xfe8] sm:$0xff]
    %v872 = vld [vmem:[#allocation5 + $0xff0] sm:$0xff]
    %v873 = vld [vmem:[#allocation5 + $0xff8] sm:$0xff]
    %v874 = vld [vmem:[#allocation5 + $0x1000] sm:$0xff]
    %v875 = vld [vmem:[#allocation5 + $0x1008] sm:$0xff]
    %v876 = vld [vmem:[#allocation5 + $0x1010] sm:$0xff]
    %v877 = vld [vmem:[#allocation5 + $0x1018] sm:$0xff]
    %v878 = vld [vmem:[#allocation5 + $0x1020] sm:$0xff]
    %v879 = vld [vmem:[#allocation5 + $0x1028] sm:$0xff]
    %v880 = vld [vmem:[#allocation5 + $0x1030] sm:$0xff]
    %v881 = vld [vmem:[#allocation5 + $0x1038] sm:$0xff]
    %v882 = vld [vmem:[#allocation5 + $0x1040] sm:$0xff]
    %v883 = vld [vmem:[#allocation5 + $0x1048] sm:$0xff]
    %v884 = vld [vmem:[#allocation5 + $0x1050] sm:$0xff]
    %v885 = vld [vmem:[#allocation5 + $0x1058] sm:$0xff]
    %v886 = vld [vmem:[#allocation5 + $0x1060] sm:$0xff]
    %v887 = vld [vmem:[#allocation5 + $0x1068] sm:$0xff]
    %v888 = vld [vmem:[#allocation5 + $0x1070] sm:$0xff]
    %v889 = vld [vmem:[#allocation5 + $0x1078] sm:$0xff]
    %v890 = vld [vmem:[#allocation5 + $0x1080] sm:$0xff]
    %v891 = vld [vmem:[#allocation5 + $0x1088] sm:$0xff]
    %v892 = vld [vmem:[#allocation5 + $0x1090] sm:$0xff]
    %v893 = vld [vmem:[#allocation5 + $0x1098] sm:$0xff]
    %v894 = vld [vmem:[#allocation5 + $0x10a0] sm:$0xff]
    %v895 = vld [vmem:[#allocation5 + $0x10a8] sm:$0xff]
    %v896 = vld [vmem:[#allocation5 + $0x10b0] sm:$0xff]
    %v897 = vld [vmem:[#allocation5 + $0x10b8] sm:$0xff]
    %v898 = vld [vmem:[#allocation5 + $0x10c0] sm:$0xff]
    %v899 = vld [vmem:[#allocation5 + $0x10c8] sm:$0xff]
    %v900 = vld [vmem:[#allocation5 + $0x10d0] sm:$0xff]
    %v901 = vld [vmem:[#allocation5 + $0x10d8] sm:$0xff]
    %v902 = vld [vmem:[#allocation5 + $0x10e0] sm:$0xff]
    %v903 = vld [vmem:[#allocation5 + $0x10e8] sm:$0xff]
    %v904 = vld [vmem:[#allocation5 + $0x10f0] sm:$0xff]
    %v905 = vld [vmem:[#allocation5 + $0x10f8] sm:$0xff]
    %v906 = vld [vmem:[#allocation5 + $0x1100] sm:$0xff]
    %v907 = vld [vmem:[#allocation5 + $0x1108] sm:$0xff]
    %v908 = vld [vmem:[#allocation5 + $0x1110] sm:$0xff]
    %v909 = vld [vmem:[#allocation5 + $0x1118] sm:$0xff]
    %v910 = vld [vmem:[#allocation5 + $0x1120] sm:$0xff]
    %v911 = vld [vmem:[#allocation5 + $0x1128] sm:$0xff]
    %v912 = vld [vmem:[#allocation5 + $0x1130] sm:$0xff]
    %v913 = vld [vmem:[#allocation5 + $0x1138] sm:$0xff]
    %v914 = vld [vmem:[#allocation5 + $0x1140] sm:$0xff]
    %v915 = vld [vmem:[#allocation5 + $0x1148] sm:$0xff]
    %v916 = vld [vmem:[#allocation5 + $0x1150] sm:$0xff]
    %v917 = vld [vmem:[#allocation5 + $0x1158] sm:$0xff]
    %v918 = vld [vmem:[#allocation5 + $0x1160] sm:$0xff]
    %v919 = vld [vmem:[#allocation5 + $0x1168] sm:$0xff]
    %v920 = vld [vmem:[#allocation5 + $0x1170] sm:$0xff]
    %v921 = vld [vmem:[#allocation5 + $0x1178] sm:$0xff]
    %v922 = vld [vmem:[#allocation5 + $0x1180] sm:$0xff]
    %v923 = vld [vmem:[#allocation5 + $0x1188] sm:$0xff]
    %v924 = vld [vmem:[#allocation5 + $0x1190] sm:$0xff]
    %v925 = vld [vmem:[#allocation5 + $0x1198] sm:$0xff]
    %v926 = vld [vmem:[#allocation5 + $0x11a0] sm:$0xff]
    %v927 = vld [vmem:[#allocation5 + $0x11a8] sm:$0xff]
    %v928 = vld [vmem:[#allocation5 + $0x11b0] sm:$0xff]
    %v929 = vld [vmem:[#allocation5 + $0x11b8] sm:$0xff]
    %v930 = vld [vmem:[#allocation5 + $0x11c0] sm:$0xff]
    %v931 = vld [vmem:[#allocation5 + $0x11c8] sm:$0xff]
    %v932 = vld [vmem:[#allocation5 + $0x11d0] sm:$0xff]
    %v933 = vld [vmem:[#allocation5 + $0x11d8] sm:$0xff]
    %v934 = vld [vmem:[#allocation5 + $0x11e0] sm:$0xff]
    %v935 = vld [vmem:[#allocation5 + $0x11e8] sm:$0xff]
    %v936 = vld [vmem:[#allocation5 + $0x11f0] sm:$0xff]
    %v937 = vld [vmem:[#allocation5 + $0x11f8] sm:$0xff]
    %v938 = vld [vmem:[#allocation5 + $0x1200] sm:$0xff]
    %v939 = vld [vmem:[#allocation5 + $0x1208] sm:$0xff]
    %v940 = vld [vmem:[#allocation5 + $0x1210] sm:$0xff]
    %v941 = vld [vmem:[#allocation5 + $0x1218] sm:$0xff]
    %v942 = vld [vmem:[#allocation5 + $0x1220] sm:$0xff]
    %v943 = vld [vmem:[#allocation5 + $0x1228] sm:$0xff]
    %v944 = vld [vmem:[#allocation5 + $0x1230] sm:$0xff]
    %v945 = vld [vmem:[#allocation5 + $0x1238] sm:$0xff]
    %v946 = vld [vmem:[#allocation5 + $0x1240] sm:$0xff]
    %v947 = vld [vmem:[#allocation5 + $0x1248] sm:$0xff]
    %v948 = vld [vmem:[#allocation5 + $0x1250] sm:$0xff]
    %v949 = vld [vmem:[#allocation5 + $0x1258] sm:$0xff]
    %v950 = vld [vmem:[#allocation5 + $0x1260] sm:$0xff]
    %v951 = vld [vmem:[#allocation5 + $0x1268] sm:$0xff]
    %v952 = vld [vmem:[#allocation5 + $0x1270] sm:$0xff]
    %v953 = vld [vmem:[#allocation5 + $0x1278] sm:$0xff]
    %v954 = vld [vmem:[#allocation5 + $0x1280] sm:$0xff]
    %v955 = vld [vmem:[#allocation5 + $0x1288] sm:$0xff]
    %v956 = vld [vmem:[#allocation5 + $0x1290] sm:$0xff]
    %v957 = vld [vmem:[#allocation5 + $0x1298] sm:$0xff]
    %v958 = vld [vmem:[#allocation5 + $0x12a0] sm:$0xff]
    %v959 = vld [vmem:[#allocation5 + $0x12a8] sm:$0xff]
    %v960 = vld [vmem:[#allocation5 + $0x12b0] sm:$0xff]
    %v961 = vld [vmem:[#allocation5 + $0x12b8] sm:$0xff]
    %v962 = vld [vmem:[#allocation5 + $0x12c0] sm:$0xff]
    %v963 = vld [vmem:[#allocation5 + $0x12c8] sm:$0xff]
    %v964 = vld [vmem:[#allocation5 + $0x12d0] sm:$0xff]
    %v965 = vld [vmem:[#allocation5 + $0x12d8] sm:$0xff]
    %v966 = vld [vmem:[#allocation5 + $0x12e0] sm:$0xff]
    %v967 = vld [vmem:[#allocation5 + $0x12e8] sm:$0xff]
    %v968 = vld [vmem:[#allocation5 + $0x12f0] sm:$0xff]
    %v969 = vld [vmem:[#allocation5 + $0x12f8] sm:$0xff]
    %v970 = vld [vmem:[#allocation5 + $0x1300] sm:$0xff]
    %v971 = vld [vmem:[#allocation5 + $0x1308] sm:$0xff]
    %v972 = vld [vmem:[#allocation5 + $0x1310] sm:$0xff]
    %v973 = vld [vmem:[#allocation5 + $0x1318] sm:$0xff]
    %v974 = vld [vmem:[#allocation5 + $0x1320] sm:$0xff]
    %v975 = vld [vmem:[#allocation5 + $0x1328] sm:$0xff]
    %v976 = vld [vmem:[#allocation5 + $0x1330] sm:$0xff]
    %v977 = vld [vmem:[#allocation5 + $0x1338] sm:$0xff]
    %v978 = vld [vmem:[#allocation5 + $0x1340] sm:$0xff]
    %v979 = vld [vmem:[#allocation5 + $0x1348] sm:$0xff]
    %v980 = vld [vmem:[#allocation5 + $0x1350] sm:$0xff]
    %v981 = vld [vmem:[#allocation5 + $0x1358] sm:$0xff]
    %v982 = vld [vmem:[#allocation5 + $0x1360] sm:$0xff]
    %v983 = vld [vmem:[#allocation5 + $0x1368] sm:$0xff]
    %v984 = vld [vmem:[#allocation5 + $0x1370] sm:$0xff]
    %v985 = vld [vmem:[#allocation5 + $0x1378] sm:$0xff]
    %v986 = vld [vmem:[#allocation5 + $0x1380] sm:$0xff]
    %v987 = vld [vmem:[#allocation5 + $0x1388] sm:$0xff]
    %v988 = vld [vmem:[#allocation5 + $0x1390] sm:$0xff]
    %v989 = vld [vmem:[#allocation5 + $0x1398] sm:$0xff]
    %v990 = vld [vmem:[#allocation5 + $0x13a0] sm:$0xff]
    %v991 = vld [vmem:[#allocation5 + $0x13a8] sm:$0xff]
    %v992 = vld [vmem:[#allocation5 + $0x13b0] sm:$0xff]
    %v993 = vld [vmem:[#allocation5 + $0x13b8] sm:$0xff]
    %v994 = vld [vmem:[#allocation5 + $0x13c0] sm:$0xff]
    %v995 = vld [vmem:[#allocation5 + $0x13c8] sm:$0xff]
    %v996 = vld [vmem:[#allocation5 + $0x13d0] sm:$0xff]
    %v997 = vld [vmem:[#allocation5 + $0x13d8] sm:$0xff]
    %v998 = vld [vmem:[#allocation5 + $0x13e0] sm:$0xff]
    %v999 = vld [vmem:[#allocation5 + $0x13e8] sm:$0xff]
    %v1000 = vld [vmem:[#allocation5 + $0x13f0] sm:$0xff]
    %v1001 = vld [vmem:[#allocation5 + $0x13f8] sm:$0xff]
    %v1002 = vld [vmem:[#allocation5 + $0x1400] sm:$0xff]
    %v1003 = vld [vmem:[#allocation5 + $0x1408] sm:$0xff]
    %v1004 = vld [vmem:[#allocation5 + $0x1410] sm:$0xff]
    %v1005 = vld [vmem:[#allocation5 + $0x1418] sm:$0xff]
    %v1006 = vld [vmem:[#allocation5 + $0x1420] sm:$0xff]
    %v1007 = vld [vmem:[#allocation5 + $0x1428] sm:$0xff]
    %v1008 = vld [vmem:[#allocation5 + $0x1430] sm:$0xff]
    %v1009 = vld [vmem:[#allocation5 + $0x1438] sm:$0xff]
    %v1010 = vld [vmem:[#allocation5 + $0x1440] sm:$0xff]
    %v1011 = vld [vmem:[#allocation5 + $0x1448] sm:$0xff]
    %v1012 = vld [vmem:[#allocation5 + $0x1450] sm:$0xff]
    %v1013 = vld [vmem:[#allocation5 + $0x1458] sm:$0xff]
    %v1014 = vld [vmem:[#allocation5 + $0x1460] sm:$0xff]
    %v1015 = vld [vmem:[#allocation5 + $0x1468] sm:$0xff]
    %v1016 = vld [vmem:[#allocation5 + $0x1470] sm:$0xff]
    %v1017 = vld [vmem:[#allocation5 + $0x1478] sm:$0xff]
    %v1018 = vld [vmem:[#allocation5 + $0x1480] sm:$0xff]
    %v1019 = vld [vmem:[#allocation5 + $0x1488] sm:$0xff]
    %v1020 = vld [vmem:[#allocation5 + $0x1490] sm:$0xff]
    %v1021 = vld [vmem:[#allocation5 + $0x1498] sm:$0xff]
    %v1022 = vld [vmem:[#allocation5 + $0x14a0] sm:$0xff]
    %v1023 = vld [vmem:[#allocation5 + $0x14a8] sm:$0xff]
    %v1024 = vld [vmem:[#allocation5 + $0x14b0] sm:$0xff]
    %v1025 = vld [vmem:[#allocation5 + $0x14b8] sm:$0xff]
    %v1026 = vld [vmem:[#allocation5 + $0x14c0] sm:$0xff]
    %v1027 = vld [vmem:[#allocation5 + $0x14c8] sm:$0xff]
    %v1028 = vld [vmem:[#allocation5 + $0x14d0] sm:$0xff]
    %v1029 = vld [vmem:[#allocation5 + $0x14d8] sm:$0xff]
    %v1030 = vld [vmem:[#allocation5 + $0x14e0] sm:$0xff]
    %v1031 = vld [vmem:[#allocation5 + $0x14e8] sm:$0xff]
    %v1032 = vld [vmem:[#allocation5 + $0x14f0] sm:$0xff]
    %v1033 = vld [vmem:[#allocation5 + $0x14f8] sm:$0xff]
    %v1034 = vld [vmem:[#allocation5 + $0x1500] sm:$0xff]
    %v1035 = vld [vmem:[#allocation5 + $0x1508] sm:$0xff]
    %v1036 = vld [vmem:[#allocation5 + $0x1510] sm:$0xff]
    %v1037 = vld [vmem:[#allocation5 + $0x1518] sm:$0xff]
    %v1038 = vld [vmem:[#allocation5 + $0x1520] sm:$0xff]
    %v1039 = vld [vmem:[#allocation5 + $0x1528] sm:$0xff]
    %v1040 = vld [vmem:[#allocation5 + $0x1530] sm:$0xff]
    %v1041 = vld [vmem:[#allocation5 + $0x1538] sm:$0xff]
    %v1042 = vld [vmem:[#allocation5 + $0x1540] sm:$0xff]
    %v1043 = vld [vmem:[#allocation5 + $0x1548] sm:$0xff]
    %v1044 = vld [vmem:[#allocation5 + $0x1550] sm:$0xff]
    %v1045 = vld [vmem:[#allocation5 + $0x1558] sm:$0xff]
    %v1046 = vld [vmem:[#allocation5 + $0x1560] sm:$0xff]
    %v1047 = vld [vmem:[#allocation5 + $0x1568] sm:$0xff]
    %v1048 = vld [vmem:[#allocation5 + $0x1570] sm:$0xff]
    %v1049 = vld [vmem:[#allocation5 + $0x1578] sm:$0xff]
    %v1050 = vld [vmem:[#allocation5 + $0x1580] sm:$0xff]
    %v1051 = vld [vmem:[#allocation5 + $0x1588] sm:$0xff]
    %v1052 = vld [vmem:[#allocation5 + $0x1590] sm:$0xff]
    %v1053 = vld [vmem:[#allocation5 + $0x1598] sm:$0xff]
    %v1054 = vld [vmem:[#allocation5 + $0x15a0] sm:$0xff]
    %v1055 = vld [vmem:[#allocation5 + $0x15a8] sm:$0xff]
    %v1056 = vld [vmem:[#allocation5 + $0x15b0] sm:$0xff]
    %v1057 = vld [vmem:[#allocation5 + $0x15b8] sm:$0xff]
    %v1058 = vld [vmem:[#allocation5 + $0x15c0] sm:$0xff]
    %v1059 = vld [vmem:[#allocation5 + $0x15c8] sm:$0xff]
    %v1060 = vld [vmem:[#allocation5 + $0x15d0] sm:$0xff]
    %v1061 = vld [vmem:[#allocation5 + $0x15d8] sm:$0xff]
    %v1062 = vld [vmem:[#allocation5 + $0x15e0] sm:$0xff]
    %v1063 = vld [vmem:[#allocation5 + $0x15e8] sm:$0xff]
    %v1064 = vld [vmem:[#allocation5 + $0x15f0] sm:$0xff]
    %v1065 = vld [vmem:[#allocation5 + $0x15f8] sm:$0xff]
    %v1066 = vld [vmem:[#allocation5 + $0x1600] sm:$0xff]
    %v1067 = vld [vmem:[#allocation5 + $0x1608] sm:$0xff]
    %v1068 = vld [vmem:[#allocation5 + $0x1610] sm:$0xff]
    %v1069 = vld [vmem:[#allocation5 + $0x1618] sm:$0xff]
    %v1070 = vld [vmem:[#allocation5 + $0x1620] sm:$0xff]
    %v1071 = vld [vmem:[#allocation5 + $0x1628] sm:$0xff]
    %v1072 = vld [vmem:[#allocation5 + $0x1630] sm:$0xff]
    %v1073 = vld [vmem:[#allocation5 + $0x1638] sm:$0xff]
    %v1074 = vld [vmem:[#allocation5 + $0x1640] sm:$0xff]
    %v1075 = vld [vmem:[#allocation5 + $0x1648] sm:$0xff]
    %v1076 = vld [vmem:[#allocation5 + $0x1650] sm:$0xff]
    %v1077 = vld [vmem:[#allocation5 + $0x1658] sm:$0xff]
    %v1078 = vld [vmem:[#allocation5 + $0x1660] sm:$0xff]
    %v1079 = vld [vmem:[#allocation5 + $0x1668] sm:$0xff]
    %v1080 = vld [vmem:[#allocation5 + $0x1670] sm:$0xff]
    %v1081 = vld [vmem:[#allocation5 + $0x1678] sm:$0xff]
    %v1082 = vld [vmem:[#allocation5 + $0x1680] sm:$0xff]
    %v1083 = vld [vmem:[#allocation5 + $0x1688] sm:$0xff]
    %v1084 = vld [vmem:[#allocation5 + $0x1690] sm:$0xff]
    %v1085 = vld [vmem:[#allocation5 + $0x1698] sm:$0xff]
    %v1086 = vld [vmem:[#allocation5 + $0x16a0] sm:$0xff]
    %v1087 = vld [vmem:[#allocation5 + $0x16a8] sm:$0xff]
    %v1088 = vld [vmem:[#allocation5 + $0x16b0] sm:$0xff]
    %v1089 = vld [vmem:[#allocation5 + $0x16b8] sm:$0xff]
    %v1090 = vld [vmem:[#allocation5 + $0x16c0] sm:$0xff]
    %v1091 = vld [vmem:[#allocation5 + $0x16c8] sm:$0xff]
    %v1092 = vld [vmem:[#allocation5 + $0x16d0] sm:$0xff]
    %v1093 = vld [vmem:[#allocation5 + $0x16d8] sm:$0xff]
    %v1094 = vld [vmem:[#allocation5 + $0x16e0] sm:$0xff]
    %v1095 = vld [vmem:[#allocation5 + $0x16e8] sm:$0xff]
    %v1096 = vld [vmem:[#allocation5 + $0x16f0] sm:$0xff]
    %v1097 = vld [vmem:[#allocation5 + $0x16f8] sm:$0xff]
    %v1098 = vld [vmem:[#allocation5 + $0x1700] sm:$0xff]
    %v1099 = vld [vmem:[#allocation5 + $0x1708] sm:$0xff]
    %v1100 = vld [vmem:[#allocation5 + $0x1710] sm:$0xff]
    %v1101 = vld [vmem:[#allocation5 + $0x1718] sm:$0xff]
    %v1102 = vld [vmem:[#allocation5 + $0x1720] sm:$0xff]
    %v1103 = vld [vmem:[#allocation5 + $0x1728] sm:$0xff]
    %v1104 = vld [vmem:[#allocation5 + $0x1730] sm:$0xff]
    %v1105 = vld [vmem:[#allocation5 + $0x1738] sm:$0xff]
    %v1106 = vld [vmem:[#allocation5 + $0x1740] sm:$0xff]
    %v1107 = vld [vmem:[#allocation5 + $0x1748] sm:$0xff]
    %v1108 = vld [vmem:[#allocation5 + $0x1750] sm:$0xff]
    %v1109 = vld [vmem:[#allocation5 + $0x1758] sm:$0xff]
    %v1110 = vld [vmem:[#allocation5 + $0x1760] sm:$0xff]
    %v1111 = vld [vmem:[#allocation5 + $0x1768] sm:$0xff]
    %v1112 = vld [vmem:[#allocation5 + $0x1770] sm:$0xff]
    %v1113 = vld [vmem:[#allocation5 + $0x1778] sm:$0xff]
    %v1114 = vld [vmem:[#allocation5 + $0x1780] sm:$0xff]
    %v1115 = vld [vmem:[#allocation5 + $0x1788] sm:$0xff]
    %v1116 = vld [vmem:[#allocation5 + $0x1790] sm:$0xff]
    %v1117 = vld [vmem:[#allocation5 + $0x1798] sm:$0xff]
    %v1118 = vld [vmem:[#allocation5 + $0x17a0] sm:$0xff]
    %v1119 = vld [vmem:[#allocation5 + $0x17a8] sm:$0xff]
    %v1120 = vld [vmem:[#allocation5 + $0x17b0] sm:$0xff]
    %v1121 = vld [vmem:[#allocation5 + $0x17b8] sm:$0xff]
    %v1122 = vld [vmem:[#allocation5 + $0x17c0] sm:$0xff]
    %v1123 = vld [vmem:[#allocation5 + $0x17c8] sm:$0xff]
    %v1124 = vld [vmem:[#allocation5 + $0x17d0] sm:$0xff]
    %v1125 = vld [vmem:[#allocation5 + $0x17d8] sm:$0xff]
    %v1126 = vld [vmem:[#allocation5 + $0x17e0] sm:$0xff]
    %v1127 = vld [vmem:[#allocation5 + $0x17e8] sm:$0xff]
    %v1128 = vld [vmem:[#allocation5 + $0x17f0] sm:$0xff]
    %v1129 = vld [vmem:[#allocation5 + $0x17f8] sm:$0xff]
    %v1130 = vld [vmem:[#allocation7] sm:$0xff]
    %v1132 = vperm.slane %v1130, 0
    %v1133 = vperm.slane %v1130, 1
    %v1134 = vperm.slane %v1130, 2
    %v1135 = vperm.slane %v1130, 3
    %v1136 = vperm.slane %v1130, 4
    %v1137 = vperm.slane %v1130, 5
    %v1138 = vperm.slane %v1130, 6
    %v1139 = vperm.slane %v1130, 7
    %v1916 = vunpack.c.l.b16 %v362
    %v1917 = vunpack.c.h.b16 %v362
    %v1918 = vunpack.c.l.b16 %v363
    %v1919 = vunpack.c.h.b16 %v363
    %v1920 = vunpack.c.l.b16 %v364
    %v1921 = vunpack.c.h.b16 %v364
    %v1922 = vunpack.c.l.b16 %v365
    %v1923 = vunpack.c.h.b16 %v365
    %v1924 = vunpack.c.l.b16 %v366
    %v1925 = vunpack.c.h.b16 %v366
    %v1926 = vunpack.c.l.b16 %v367
    %v1927 = vunpack.c.h.b16 %v367
    %v1928 = vunpack.c.l.b16 %v368
    %v1929 = vunpack.c.h.b16 %v368
    %v1930 = vunpack.c.l.b16 %v369
    %v1931 = vunpack.c.h.b16 %v369
    %v1932 = vunpack.c.l.b16 %v370
    %v1933 = vunpack.c.h.b16 %v370
    %v1934 = vunpack.c.l.b16 %v371
    %v1935 = vunpack.c.h.b16 %v371
    %v1936 = vunpack.c.l.b16 %v372
    %v1937 = vunpack.c.h.b16 %v372
    %v1938 = vunpack.c.l.b16 %v373
    %v1939 = vunpack.c.h.b16 %v373
    %v1940 = vunpack.c.l.b16 %v374
    %v1941 = vunpack.c.h.b16 %v374
    %v1942 = vunpack.c.l.b16 %v375
    %v1943 = vunpack.c.h.b16 %v375
    %v1944 = vunpack.c.l.b16 %v376
    %v1945 = vunpack.c.h.b16 %v376
    %v1946 = vunpack.c.l.b16 %v377
    %v1947 = vunpack.c.h.b16 %v377
    %v1948 = vunpack.c.l.b16 %v378
    %v1949 = vunpack.c.h.b16 %v378
    %v1950 = vunpack.c.l.b16 %v379
    %v1951 = vunpack.c.h.b16 %v379
    %v1952 = vunpack.c.l.b16 %v380
    %v1953 = vunpack.c.h.b16 %v380
    %v1954 = vunpack.c.l.b16 %v381
    %v1955 = vunpack.c.h.b16 %v381
    %v1956 = vunpack.c.l.b16 %v382
    %v1957 = vunpack.c.h.b16 %v382
    %v1958 = vunpack.c.l.b16 %v383
    %v1959 = vunpack.c.h.b16 %v383
    %v1960 = vunpack.c.l.b16 %v384
    %v1961 = vunpack.c.h.b16 %v384
    %v1962 = vunpack.c.l.b16 %v385
    %v1963 = vunpack.c.h.b16 %v385
    %v1964 = vunpack.c.l.b16 %v386
    %v1965 = vunpack.c.h.b16 %v386
    %v1966 = vunpack.c.l.b16 %v387
    %v1967 = vunpack.c.h.b16 %v387
    %v1968 = vunpack.c.l.b16 %v388
    %v1969 = vunpack.c.h.b16 %v388
    %v1970 = vunpack.c.l.b16 %v389
    %v1971 = vunpack.c.h.b16 %v389
    %v1972 = vunpack.c.l.b16 %v390
    %v1973 = vunpack.c.h.b16 %v390
    %v1974 = vunpack.c.l.b16 %v391
    %v1975 = vunpack.c.h.b16 %v391
    %v1976 = vunpack.c.l.b16 %v392
    %v1977 = vunpack.c.h.b16 %v392
    %v1978 = vunpack.c.l.b16 %v393
    %v1979 = vunpack.c.h.b16 %v393
    %v1980 = vunpack.c.l.b16 %v394
    %v1981 = vunpack.c.h.b16 %v394
    %v1982 = vunpack.c.l.b16 %v395
    %v1983 = vunpack.c.h.b16 %v395
    %v1984 = vunpack.c.l.b16 %v396
    %v1985 = vunpack.c.h.b16 %v396
    %v1986 = vunpack.c.l.b16 %v397
    %v1987 = vunpack.c.h.b16 %v397
    %v1988 = vunpack.c.l.b16 %v398
    %v1989 = vunpack.c.h.b16 %v398
    %v1990 = vunpack.c.l.b16 %v399
    %v1991 = vunpack.c.h.b16 %v399
    %v1992 = vunpack.c.l.b16 %v400
    %v1993 = vunpack.c.h.b16 %v400
    %v1994 = vunpack.c.l.b16 %v401
    %v1995 = vunpack.c.h.b16 %v401
    %v1996 = vunpack.c.l.b16 %v402
    %v1997 = vunpack.c.h.b16 %v402
    %v1998 = vunpack.c.l.b16 %v403
    %v1999 = vunpack.c.h.b16 %v403
    %v2000 = vunpack.c.l.b16 %v404
    %v2001 = vunpack.c.h.b16 %v404
    %v2002 = vunpack.c.l.b16 %v405
    %v2003 = vunpack.c.h.b16 %v405
    %v2004 = vunpack.c.l.b16 %v406
    %v2005 = vunpack.c.h.b16 %v406
    %v2006 = vunpack.c.l.b16 %v407
    %v2007 = vunpack.c.h.b16 %v407
    %v2008 = vunpack.c.l.b16 %v408
    %v2009 = vunpack.c.h.b16 %v408
    %v2010 = vunpack.c.l.b16 %v409
    %v2011 = vunpack.c.h.b16 %v409
    %v2012 = vunpack.c.l.b16 %v410
    %v2013 = vunpack.c.h.b16 %v410
    %v2014 = vunpack.c.l.b16 %v411
    %v2015 = vunpack.c.h.b16 %v411
    %v2016 = vunpack.c.l.b16 %v412
    %v2017 = vunpack.c.h.b16 %v412
    %v2018 = vunpack.c.l.b16 %v413
    %v2019 = vunpack.c.h.b16 %v413
    %v2020 = vunpack.c.l.b16 %v414
    %v2021 = vunpack.c.h.b16 %v414
    %v2022 = vunpack.c.l.b16 %v415
    %v2023 = vunpack.c.h.b16 %v415
    %v2024 = vunpack.c.l.b16 %v416
    %v2025 = vunpack.c.h.b16 %v416
    %v2026 = vunpack.c.l.b16 %v417
    %v2027 = vunpack.c.h.b16 %v417
    %v2028 = vunpack.c.l.b16 %v418
    %v2029 = vunpack.c.h.b16 %v418
    %v2030 = vunpack.c.l.b16 %v419
    %v2031 = vunpack.c.h.b16 %v419
    %v2032 = vunpack.c.l.b16 %v420
    %v2033 = vunpack.c.h.b16 %v420
    %v2034 = vunpack.c.l.b16 %v421
    %v2035 = vunpack.c.h.b16 %v421
    %v2036 = vunpack.c.l.b16 %v422
    %v2037 = vunpack.c.h.b16 %v422
    %v2038 = vunpack.c.l.b16 %v423
    %v2039 = vunpack.c.h.b16 %v423
    %v2040 = vunpack.c.l.b16 %v424
    %v2041 = vunpack.c.h.b16 %v424
    %v2042 = vunpack.c.l.b16 %v425
    %v2043 = vunpack.c.h.b16 %v425
    %v2044 = vunpack.c.l.b16 %v426
    %v2045 = vunpack.c.h.b16 %v426
    %v2046 = vunpack.c.l.b16 %v427
    %v2047 = vunpack.c.h.b16 %v427
    %v2048 = vunpack.c.l.b16 %v428
    %v2049 = vunpack.c.h.b16 %v428
    %v2050 = vunpack.c.l.b16 %v429
    %v2051 = vunpack.c.h.b16 %v429
    %v2052 = vunpack.c.l.b16 %v430
    %v2053 = vunpack.c.h.b16 %v430
    %v2054 = vunpack.c.l.b16 %v431
    %v2055 = vunpack.c.h.b16 %v431
    %v2056 = vunpack.c.l.b16 %v432
    %v2057 = vunpack.c.h.b16 %v432
    %v2058 = vunpack.c.l.b16 %v433
    %v2059 = vunpack.c.h.b16 %v433
    %v2060 = vunpack.c.l.b16 %v434
    %v2061 = vunpack.c.h.b16 %v434
    %v2062 = vunpack.c.l.b16 %v435
    %v2063 = vunpack.c.h.b16 %v435
    %v2064 = vunpack.c.l.b16 %v436
    %v2065 = vunpack.c.h.b16 %v436
    %v2066 = vunpack.c.l.b16 %v437
    %v2067 = vunpack.c.h.b16 %v437
    %v2068 = vunpack.c.l.b16 %v438
    %v2069 = vunpack.c.h.b16 %v438
    %v2070 = vunpack.c.l.b16 %v439
    %v2071 = vunpack.c.h.b16 %v439
    %v2072 = vunpack.c.l.b16 %v440
    %v2073 = vunpack.c.h.b16 %v440
    %v2074 = vunpack.c.l.b16 %v441
    %v2075 = vunpack.c.h.b16 %v441
    %v2076 = vunpack.c.l.b16 %v442
    %v2077 = vunpack.c.h.b16 %v442
    %v2078 = vunpack.c.l.b16 %v443
    %v2079 = vunpack.c.h.b16 %v443
    %v2080 = vunpack.c.l.b16 %v444
    %v2081 = vunpack.c.h.b16 %v444
    %v2082 = vunpack.c.l.b16 %v445
    %v2083 = vunpack.c.h.b16 %v445
    %v2084 = vunpack.c.l.b16 %v446
    %v2085 = vunpack.c.h.b16 %v446
    %v2086 = vunpack.c.l.b16 %v447
    %v2087 = vunpack.c.h.b16 %v447
    %v2088 = vunpack.c.l.b16 %v448
    %v2089 = vunpack.c.h.b16 %v448
    %v2090 = vunpack.c.l.b16 %v449
    %v2091 = vunpack.c.h.b16 %v449
    %v2092 = vunpack.c.l.b16 %v450
    %v2093 = vunpack.c.h.b16 %v450
    %v2094 = vunpack.c.l.b16 %v451
    %v2095 = vunpack.c.h.b16 %v451
    %v2096 = vunpack.c.l.b16 %v452
    %v2097 = vunpack.c.h.b16 %v452
    %v2098 = vunpack.c.l.b16 %v453
    %v2099 = vunpack.c.h.b16 %v453
    %v2100 = vunpack.c.l.b16 %v454
    %v2101 = vunpack.c.h.b16 %v454
    %v2102 = vunpack.c.l.b16 %v455
    %v2103 = vunpack.c.h.b16 %v455
    %v2104 = vunpack.c.l.b16 %v456
    %v2105 = vunpack.c.h.b16 %v456
    %v2106 = vunpack.c.l.b16 %v457
    %v2107 = vunpack.c.h.b16 %v457
    %v2108 = vunpack.c.l.b16 %v458
    %v2109 = vunpack.c.h.b16 %v458
    %v2110 = vunpack.c.l.b16 %v459
    %v2111 = vunpack.c.h.b16 %v459
    %v2112 = vunpack.c.l.b16 %v460
    %v2113 = vunpack.c.h.b16 %v460
    %v2114 = vunpack.c.l.b16 %v461
    %v2115 = vunpack.c.h.b16 %v461
    %v2116 = vunpack.c.l.b16 %v462
    %v2117 = vunpack.c.h.b16 %v462
    %v2118 = vunpack.c.l.b16 %v463
    %v2119 = vunpack.c.h.b16 %v463
    %v2120 = vunpack.c.l.b16 %v464
    %v2121 = vunpack.c.h.b16 %v464
    %v2122 = vunpack.c.l.b16 %v465
    %v2123 = vunpack.c.h.b16 %v465
    %v2124 = vunpack.c.l.b16 %v466
    %v2125 = vunpack.c.h.b16 %v466
    %v2126 = vunpack.c.l.b16 %v467
    %v2127 = vunpack.c.h.b16 %v467
    %v2128 = vunpack.c.l.b16 %v468
    %v2129 = vunpack.c.h.b16 %v468
    %v2130 = vunpack.c.l.b16 %v469
    %v2131 = vunpack.c.h.b16 %v469
    %v2132 = vunpack.c.l.b16 %v470
    %v2133 = vunpack.c.h.b16 %v470
    %v2134 = vunpack.c.l.b16 %v471
    %v2135 = vunpack.c.h.b16 %v471
    %v2136 = vunpack.c.l.b16 %v472
    %v2137 = vunpack.c.h.b16 %v472
    %v2138 = vunpack.c.l.b16 %v473
    %v2139 = vunpack.c.h.b16 %v473
    %v2140 = vunpack.c.l.b16 %v474
    %v2141 = vunpack.c.h.b16 %v474
    %v2142 = vunpack.c.l.b16 %v475
    %v2143 = vunpack.c.h.b16 %v475
    %v2144 = vunpack.c.l.b16 %v476
    %v2145 = vunpack.c.h.b16 %v476
    %v2146 = vunpack.c.l.b16 %v477
    %v2147 = vunpack.c.h.b16 %v477
    %v2148 = vunpack.c.l.b16 %v478
    %v2149 = vunpack.c.h.b16 %v478
    %v2150 = vunpack.c.l.b16 %v479
    %v2151 = vunpack.c.h.b16 %v479
    %v2152 = vunpack.c.l.b16 %v480
    %v2153 = vunpack.c.h.b16 %v480
    %v2154 = vunpack.c.l.b16 %v481
    %v2155 = vunpack.c.h.b16 %v481
    %v2156 = vunpack.c.l.b16 %v482
    %v2157 = vunpack.c.h.b16 %v482
    %v2158 = vunpack.c.l.b16 %v483
    %v2159 = vunpack.c.h.b16 %v483
    %v2160 = vunpack.c.l.b16 %v484
    %v2161 = vunpack.c.h.b16 %v484
    %v2162 = vunpack.c.l.b16 %v485
    %v2163 = vunpack.c.h.b16 %v485
    %v2164 = vunpack.c.l.b16 %v486
    %v2165 = vunpack.c.h.b16 %v486
    %v2166 = vunpack.c.l.b16 %v487
    %v2167 = vunpack.c.h.b16 %v487
    %v2168 = vunpack.c.l.b16 %v488
    %v2169 = vunpack.c.h.b16 %v488
    %v2170 = vunpack.c.l.b16 %v489
    %v2171 = vunpack.c.h.b16 %v489
    %v2172 = vunpack.c.l.b16 %v490
    %v2173 = vunpack.c.h.b16 %v490
    %v2174 = vunpack.c.l.b16 %v491
    %v2175 = vunpack.c.h.b16 %v491
    %v2176 = vunpack.c.l.b16 %v492
    %v2177 = vunpack.c.h.b16 %v492
    %v2178 = vunpack.c.l.b16 %v493
    %v2179 = vunpack.c.h.b16 %v493
    %v2180 = vunpack.c.l.b16 %v494
    %v2181 = vunpack.c.h.b16 %v494
    %v2182 = vunpack.c.l.b16 %v495
    %v2183 = vunpack.c.h.b16 %v495
    %v2184 = vunpack.c.l.b16 %v496
    %v2185 = vunpack.c.h.b16 %v496
    %v2186 = vunpack.c.l.b16 %v497
    %v2187 = vunpack.c.h.b16 %v497
    %v2188 = vunpack.c.l.b16 %v498
    %v2189 = vunpack.c.h.b16 %v498
    %v2190 = vunpack.c.l.b16 %v499
    %v2191 = vunpack.c.h.b16 %v499
    %v2192 = vunpack.c.l.b16 %v500
    %v2193 = vunpack.c.h.b16 %v500
    %v2194 = vunpack.c.l.b16 %v501
    %v2195 = vunpack.c.h.b16 %v501
    %v2196 = vunpack.c.l.b16 %v502
    %v2197 = vunpack.c.h.b16 %v502
    %v2198 = vunpack.c.l.b16 %v503
    %v2199 = vunpack.c.h.b16 %v503
    %v2200 = vunpack.c.l.b16 %v504
    %v2201 = vunpack.c.h.b16 %v504
    %v2202 = vunpack.c.l.b16 %v505
    %v2203 = vunpack.c.h.b16 %v505
    %v2204 = vunpack.c.l.b16 %v506
    %v2205 = vunpack.c.h.b16 %v506
    %v2206 = vunpack.c.l.b16 %v507
    %v2207 = vunpack.c.h.b16 %v507
    %v2208 = vunpack.c.l.b16 %v508
    %v2209 = vunpack.c.h.b16 %v508
    %v2210 = vunpack.c.l.b16 %v509
    %v2211 = vunpack.c.h.b16 %v509
    %v2212 = vunpack.c.l.b16 %v510
    %v2213 = vunpack.c.h.b16 %v510
    %v2214 = vunpack.c.l.b16 %v511
    %v2215 = vunpack.c.h.b16 %v511
    %v2216 = vunpack.c.l.b16 %v512
    %v2217 = vunpack.c.h.b16 %v512
    %v2218 = vunpack.c.l.b16 %v513
    %v2219 = vunpack.c.h.b16 %v513
    %v2220 = vunpack.c.l.b16 %v514
    %v2221 = vunpack.c.h.b16 %v514
    %v2222 = vunpack.c.l.b16 %v515
    %v2223 = vunpack.c.h.b16 %v515
    %v2224 = vunpack.c.l.b16 %v516
    %v2225 = vunpack.c.h.b16 %v516
    %v2226 = vunpack.c.l.b16 %v517
    %v2227 = vunpack.c.h.b16 %v517
    %v2228 = vunpack.c.l.b16 %v518
    %v2229 = vunpack.c.h.b16 %v518
    %v2230 = vunpack.c.l.b16 %v519
    %v2231 = vunpack.c.h.b16 %v519
    %v2232 = vunpack.c.l.b16 %v520
    %v2233 = vunpack.c.h.b16 %v520
    %v2234 = vunpack.c.l.b16 %v521
    %v2235 = vunpack.c.h.b16 %v521
    %v2236 = vunpack.c.l.b16 %v522
    %v2237 = vunpack.c.h.b16 %v522
    %v2238 = vunpack.c.l.b16 %v523
    %v2239 = vunpack.c.h.b16 %v523
    %v2240 = vunpack.c.l.b16 %v524
    %v2241 = vunpack.c.h.b16 %v524
    %v2242 = vunpack.c.l.b16 %v525
    %v2243 = vunpack.c.h.b16 %v525
    %v2244 = vunpack.c.l.b16 %v526
    %v2245 = vunpack.c.h.b16 %v526
    %v2246 = vunpack.c.l.b16 %v527
    %v2247 = vunpack.c.h.b16 %v527
    %v2248 = vunpack.c.l.b16 %v528
    %v2249 = vunpack.c.h.b16 %v528
    %v2250 = vunpack.c.l.b16 %v529
    %v2251 = vunpack.c.h.b16 %v529
    %v2252 = vunpack.c.l.b16 %v530
    %v2253 = vunpack.c.h.b16 %v530
    %v2254 = vunpack.c.l.b16 %v531
    %v2255 = vunpack.c.h.b16 %v531
    %v2256 = vunpack.c.l.b16 %v532
    %v2257 = vunpack.c.h.b16 %v532
    %v2258 = vunpack.c.l.b16 %v533
    %v2259 = vunpack.c.h.b16 %v533
    %v2260 = vunpack.c.l.b16 %v534
    %v2261 = vunpack.c.h.b16 %v534
    %v2262 = vunpack.c.l.b16 %v535
    %v2263 = vunpack.c.h.b16 %v535
    %v2264 = vunpack.c.l.b16 %v536
    %v2265 = vunpack.c.h.b16 %v536
    %v2266 = vunpack.c.l.b16 %v537
    %v2267 = vunpack.c.h.b16 %v537
    %v2268 = vunpack.c.l.b16 %v538
    %v2269 = vunpack.c.h.b16 %v538
    %v2270 = vunpack.c.l.b16 %v539
    %v2271 = vunpack.c.h.b16 %v539
    %v2272 = vunpack.c.l.b16 %v540
    %v2273 = vunpack.c.h.b16 %v540
    %v2274 = vunpack.c.l.b16 %v541
    %v2275 = vunpack.c.h.b16 %v541
    %v2276 = vunpack.c.l.b16 %v542
    %v2277 = vunpack.c.h.b16 %v542
    %v2278 = vunpack.c.l.b16 %v543
    %v2279 = vunpack.c.h.b16 %v543
    %v2280 = vunpack.c.l.b16 %v544
    %v2281 = vunpack.c.h.b16 %v544
    %v2282 = vunpack.c.l.b16 %v545
    %v2283 = vunpack.c.h.b16 %v545
    %v2284 = vunpack.c.l.b16 %v546
    %v2285 = vunpack.c.h.b16 %v546
    %v2286 = vunpack.c.l.b16 %v547
    %v2287 = vunpack.c.h.b16 %v547
    %v2288 = vunpack.c.l.b16 %v548
    %v2289 = vunpack.c.h.b16 %v548
    %v2290 = vunpack.c.l.b16 %v549
    %v2291 = vunpack.c.h.b16 %v549
    %v2292 = vunpack.c.l.b16 %v550
    %v2293 = vunpack.c.h.b16 %v550
    %v2294 = vunpack.c.l.b16 %v551
    %v2295 = vunpack.c.h.b16 %v551
    %v2296 = vunpack.c.l.b16 %v552
    %v2297 = vunpack.c.h.b16 %v552
    %v2298 = vunpack.c.l.b16 %v553
    %v2299 = vunpack.c.h.b16 %v553
    %v2300 = vunpack.c.l.b16 %v554
    %v2301 = vunpack.c.h.b16 %v554
    %v2302 = vunpack.c.l.b16 %v555
    %v2303 = vunpack.c.h.b16 %v555
    %v2304 = vunpack.c.l.b16 %v556
    %v2305 = vunpack.c.h.b16 %v556
    %v2306 = vunpack.c.l.b16 %v557
    %v2307 = vunpack.c.h.b16 %v557
    %v2308 = vunpack.c.l.b16 %v558
    %v2309 = vunpack.c.h.b16 %v558
    %v2310 = vunpack.c.l.b16 %v559
    %v2311 = vunpack.c.h.b16 %v559
    %v2312 = vunpack.c.l.b16 %v560
    %v2313 = vunpack.c.h.b16 %v560
    %v2314 = vunpack.c.l.b16 %v561
    %v2315 = vunpack.c.h.b16 %v561
    %v2316 = vunpack.c.l.b16 %v562
    %v2317 = vunpack.c.h.b16 %v562
    %v2318 = vunpack.c.l.b16 %v563
    %v2319 = vunpack.c.h.b16 %v563
    %v2320 = vunpack.c.l.b16 %v564
    %v2321 = vunpack.c.h.b16 %v564
    %v2322 = vunpack.c.l.b16 %v565
    %v2323 = vunpack.c.h.b16 %v565
    %v2324 = vunpack.c.l.b16 %v566
    %v2325 = vunpack.c.h.b16 %v566
    %v2326 = vunpack.c.l.b16 %v567
    %v2327 = vunpack.c.h.b16 %v567
    %v2328 = vunpack.c.l.b16 %v568
    %v2329 = vunpack.c.h.b16 %v568
    %v2330 = vunpack.c.l.b16 %v569
    %v2331 = vunpack.c.h.b16 %v569
    %v2332 = vunpack.c.l.b16 %v570
    %v2333 = vunpack.c.h.b16 %v570
    %v2334 = vunpack.c.l.b16 %v571
    %v2335 = vunpack.c.h.b16 %v571
    %v2336 = vunpack.c.l.b16 %v572
    %v2337 = vunpack.c.h.b16 %v572
    %v2338 = vunpack.c.l.b16 %v573
    %v2339 = vunpack.c.h.b16 %v573
    %v2340 = vunpack.c.l.b16 %v574
    %v2341 = vunpack.c.h.b16 %v574
    %v2342 = vunpack.c.l.b16 %v575
    %v2343 = vunpack.c.h.b16 %v575
    %v2344 = vunpack.c.l.b16 %v576
    %v2345 = vunpack.c.h.b16 %v576
    %v2346 = vunpack.c.l.b16 %v577
    %v2347 = vunpack.c.h.b16 %v577
    %v2348 = vunpack.c.l.b16 %v578
    %v2349 = vunpack.c.h.b16 %v578
    %v2350 = vunpack.c.l.b16 %v579
    %v2351 = vunpack.c.h.b16 %v579
    %v2352 = vunpack.c.l.b16 %v580
    %v2353 = vunpack.c.h.b16 %v580
    %v2354 = vunpack.c.l.b16 %v581
    %v2355 = vunpack.c.h.b16 %v581
    %v2356 = vunpack.c.l.b16 %v582
    %v2357 = vunpack.c.h.b16 %v582
    %v2358 = vunpack.c.l.b16 %v583
    %v2359 = vunpack.c.h.b16 %v583
    %v2360 = vunpack.c.l.b16 %v584
    %v2361 = vunpack.c.h.b16 %v584
    %v2362 = vunpack.c.l.b16 %v585
    %v2363 = vunpack.c.h.b16 %v585
    %v2364 = vunpack.c.l.b16 %v586
    %v2365 = vunpack.c.h.b16 %v586
    %v2366 = vunpack.c.l.b16 %v587
    %v2367 = vunpack.c.h.b16 %v587
    %v2368 = vunpack.c.l.b16 %v588
    %v2369 = vunpack.c.h.b16 %v588
    %v2370 = vunpack.c.l.b16 %v589
    %v2371 = vunpack.c.h.b16 %v589
    %v2372 = vunpack.c.l.b16 %v590
    %v2373 = vunpack.c.h.b16 %v590
    %v2374 = vunpack.c.l.b16 %v591
    %v2375 = vunpack.c.h.b16 %v591
    %v2376 = vunpack.c.l.b16 %v592
    %v2377 = vunpack.c.h.b16 %v592
    %v2378 = vunpack.c.l.b16 %v593
    %v2379 = vunpack.c.h.b16 %v593
    %v2380 = vunpack.c.l.b16 %v594
    %v2381 = vunpack.c.h.b16 %v594
    %v2382 = vunpack.c.l.b16 %v595
    %v2383 = vunpack.c.h.b16 %v595
    %v2384 = vunpack.c.l.b16 %v596
    %v2385 = vunpack.c.h.b16 %v596
    %v2386 = vunpack.c.l.b16 %v597
    %v2387 = vunpack.c.h.b16 %v597
    %v2388 = vunpack.c.l.b16 %v598
    %v2389 = vunpack.c.h.b16 %v598
    %v2390 = vunpack.c.l.b16 %v599
    %v2391 = vunpack.c.h.b16 %v599
    %v2392 = vunpack.c.l.b16 %v600
    %v2393 = vunpack.c.h.b16 %v600
    %v2394 = vunpack.c.l.b16 %v601
    %v2395 = vunpack.c.h.b16 %v601
    %v2396 = vunpack.c.l.b16 %v602
    %v2397 = vunpack.c.h.b16 %v602
    %v2398 = vunpack.c.l.b16 %v603
    %v2399 = vunpack.c.h.b16 %v603
    %v2400 = vunpack.c.l.b16 %v604
    %v2401 = vunpack.c.h.b16 %v604
    %v2402 = vunpack.c.l.b16 %v605
    %v2403 = vunpack.c.h.b16 %v605
    %v2404 = vunpack.c.l.b16 %v606
    %v2405 = vunpack.c.h.b16 %v606
    %v2406 = vunpack.c.l.b16 %v607
    %v2407 = vunpack.c.h.b16 %v607
    %v2408 = vunpack.c.l.b16 %v608
    %v2409 = vunpack.c.h.b16 %v608
    %v2410 = vunpack.c.l.b16 %v609
    %v2411 = vunpack.c.h.b16 %v609
    %v2412 = vunpack.c.l.b16 %v610
    %v2413 = vunpack.c.h.b16 %v610
    %v2414 = vunpack.c.l.b16 %v611
    %v2415 = vunpack.c.h.b16 %v611
    %v2416 = vunpack.c.l.b16 %v612
    %v2417 = vunpack.c.h.b16 %v612
    %v2418 = vunpack.c.l.b16 %v613
    %v2419 = vunpack.c.h.b16 %v613
    %v2420 = vunpack.c.l.b16 %v614
    %v2421 = vunpack.c.h.b16 %v614
    %v2422 = vunpack.c.l.b16 %v615
    %v2423 = vunpack.c.h.b16 %v615
    %v2424 = vunpack.c.l.b16 %v616
    %v2425 = vunpack.c.h.b16 %v616
    %v2426 = vunpack.c.l.b16 %v617
    %v2427 = vunpack.c.h.b16 %v617
    %v2428 = vunpack.c.l.b16 %v618
    %v2429 = vunpack.c.h.b16 %v618
    %v2430 = vunpack.c.l.b16 %v619
    %v2431 = vunpack.c.h.b16 %v619
    %v2432 = vunpack.c.l.b16 %v620
    %v2433 = vunpack.c.h.b16 %v620
    %v2434 = vunpack.c.l.b16 %v621
    %v2435 = vunpack.c.h.b16 %v621
    %v2436 = vunpack.c.l.b16 %v622
    %v2437 = vunpack.c.h.b16 %v622
    %v2438 = vunpack.c.l.b16 %v623
    %v2439 = vunpack.c.h.b16 %v623
    %v2440 = vunpack.c.l.b16 %v624
    %v2441 = vunpack.c.h.b16 %v624
    %v2442 = vunpack.c.l.b16 %v625
    %v2443 = vunpack.c.h.b16 %v625
    %v2444 = vunpack.c.l.b16 %v626
    %v2445 = vunpack.c.h.b16 %v626
    %v2446 = vunpack.c.l.b16 %v627
    %v2447 = vunpack.c.h.b16 %v627
    %v2448 = vunpack.c.l.b16 %v628
    %v2449 = vunpack.c.h.b16 %v628
    %v2450 = vunpack.c.l.b16 %v629
    %v2451 = vunpack.c.h.b16 %v629
    %v2452 = vunpack.c.l.b16 %v630
    %v2453 = vunpack.c.h.b16 %v630
    %v2454 = vunpack.c.l.b16 %v631
    %v2455 = vunpack.c.h.b16 %v631
    %v2456 = vunpack.c.l.b16 %v632
    %v2457 = vunpack.c.h.b16 %v632
    %v2458 = vunpack.c.l.b16 %v633
    %v2459 = vunpack.c.h.b16 %v633
    %v2460 = vunpack.c.l.b16 %v634
    %v2461 = vunpack.c.h.b16 %v634
    %v2462 = vunpack.c.l.b16 %v635
    %v2463 = vunpack.c.h.b16 %v635
    %v2464 = vunpack.c.l.b16 %v636
    %v2465 = vunpack.c.h.b16 %v636
    %v2466 = vunpack.c.l.b16 %v637
    %v2467 = vunpack.c.h.b16 %v637
    %v2468 = vunpack.c.l.b16 %v638
    %v2469 = vunpack.c.h.b16 %v638
    %v2470 = vunpack.c.l.b16 %v639
    %v2471 = vunpack.c.h.b16 %v639
    %v2472 = vunpack.c.l.b16 %v640
    %v2473 = vunpack.c.h.b16 %v640
    %v2474 = vunpack.c.l.b16 %v641
    %v2475 = vunpack.c.h.b16 %v641
    %v2476 = vunpack.c.l.b16 %v642
    %v2477 = vunpack.c.h.b16 %v642
    %v2478 = vunpack.c.l.b16 %v643
    %v2479 = vunpack.c.h.b16 %v643
    %v2480 = vunpack.c.l.b16 %v644
    %v2481 = vunpack.c.h.b16 %v644
    %v2482 = vunpack.c.l.b16 %v645
    %v2483 = vunpack.c.h.b16 %v645
    %v2484 = vunpack.c.l.b16 %v646
    %v2485 = vunpack.c.h.b16 %v646
    %v2486 = vunpack.c.l.b16 %v647
    %v2487 = vunpack.c.h.b16 %v647
    %v2488 = vunpack.c.l.b16 %v648
    %v2489 = vunpack.c.h.b16 %v648
    %v2490 = vunpack.c.l.b16 %v649
    %v2491 = vunpack.c.h.b16 %v649
    %v2492 = vunpack.c.l.b16 %v650
    %v2493 = vunpack.c.h.b16 %v650
    %v2494 = vunpack.c.l.b16 %v651
    %v2495 = vunpack.c.h.b16 %v651
    %v2496 = vunpack.c.l.b16 %v652
    %v2497 = vunpack.c.h.b16 %v652
    %v2498 = vunpack.c.l.b16 %v653
    %v2499 = vunpack.c.h.b16 %v653
    %v2500 = vunpack.c.l.b16 %v654
    %v2501 = vunpack.c.h.b16 %v654
    %v2502 = vunpack.c.l.b16 %v655
    %v2503 = vunpack.c.h.b16 %v655
    %v2504 = vunpack.c.l.b16 %v656
    %v2505 = vunpack.c.h.b16 %v656
    %v2506 = vunpack.c.l.b16 %v657
    %v2507 = vunpack.c.h.b16 %v657
    %v2508 = vunpack.c.l.b16 %v658
    %v2509 = vunpack.c.h.b16 %v658
    %v2510 = vunpack.c.l.b16 %v659
    %v2511 = vunpack.c.h.b16 %v659
    %v2512 = vunpack.c.l.b16 %v660
    %v2513 = vunpack.c.h.b16 %v660
    %v2514 = vunpack.c.l.b16 %v661
    %v2515 = vunpack.c.h.b16 %v661
    %v2516 = vunpack.c.l.b16 %v662
    %v2517 = vunpack.c.h.b16 %v662
    %v2518 = vunpack.c.l.b16 %v663
    %v2519 = vunpack.c.h.b16 %v663
    %v2520 = vunpack.c.l.b16 %v664
    %v2521 = vunpack.c.h.b16 %v664
    %v2522 = vunpack.c.l.b16 %v665
    %v2523 = vunpack.c.h.b16 %v665
    %v2524 = vunpack.c.l.b16 %v666
    %v2525 = vunpack.c.h.b16 %v666
    %v2526 = vunpack.c.l.b16 %v667
    %v2527 = vunpack.c.h.b16 %v667
    %v2528 = vunpack.c.l.b16 %v668
    %v2529 = vunpack.c.h.b16 %v668
    %v2530 = vunpack.c.l.b16 %v669
    %v2531 = vunpack.c.h.b16 %v669
    %v2532 = vunpack.c.l.b16 %v670
    %v2533 = vunpack.c.h.b16 %v670
    %v2534 = vunpack.c.l.b16 %v671
    %v2535 = vunpack.c.h.b16 %v671
    %v2536 = vunpack.c.l.b16 %v672
    %v2537 = vunpack.c.h.b16 %v672
    %v2538 = vunpack.c.l.b16 %v673
    %v2539 = vunpack.c.h.b16 %v673
    %v2540 = vunpack.c.l.b16 %v674
    %v2541 = vunpack.c.h.b16 %v674
    %v2542 = vunpack.c.l.b16 %v675
    %v2543 = vunpack.c.h.b16 %v675
    %v2544 = vunpack.c.l.b16 %v676
    %v2545 = vunpack.c.h.b16 %v676
    %v2546 = vunpack.c.l.b16 %v677
    %v2547 = vunpack.c.h.b16 %v677
    %v2548 = vunpack.c.l.b16 %v678
    %v2549 = vunpack.c.h.b16 %v678
    %v2550 = vunpack.c.l.b16 %v679
    %v2551 = vunpack.c.h.b16 %v679
    %v2552 = vunpack.c.l.b16 %v680
    %v2553 = vunpack.c.h.b16 %v680
    %v2554 = vunpack.c.l.b16 %v681
    %v2555 = vunpack.c.h.b16 %v681
    %v2556 = vunpack.c.l.b16 %v682
    %v2557 = vunpack.c.h.b16 %v682
    %v2558 = vunpack.c.l.b16 %v683
    %v2559 = vunpack.c.h.b16 %v683
    %v2560 = vunpack.c.l.b16 %v684
    %v2561 = vunpack.c.h.b16 %v684
    %v2562 = vunpack.c.l.b16 %v685
    %v2563 = vunpack.c.h.b16 %v685
    %v2564 = vunpack.c.l.b16 %v686
    %v2565 = vunpack.c.h.b16 %v686
    %v2566 = vunpack.c.l.b16 %v687
    %v2567 = vunpack.c.h.b16 %v687
    %v2568 = vunpack.c.l.b16 %v688
    %v2569 = vunpack.c.h.b16 %v688
    %v2570 = vunpack.c.l.b16 %v689
    %v2571 = vunpack.c.h.b16 %v689
    %v2572 = vunpack.c.l.b16 %v690
    %v2573 = vunpack.c.h.b16 %v690
    %v2574 = vunpack.c.l.b16 %v691
    %v2575 = vunpack.c.h.b16 %v691
    %v2576 = vunpack.c.l.b16 %v692
    %v2577 = vunpack.c.h.b16 %v692
    %v2578 = vunpack.c.l.b16 %v693
    %v2579 = vunpack.c.h.b16 %v693
    %v2580 = vunpack.c.l.b16 %v694
    %v2581 = vunpack.c.h.b16 %v694
    %v2582 = vunpack.c.l.b16 %v695
    %v2583 = vunpack.c.h.b16 %v695
    %v2584 = vunpack.c.l.b16 %v696
    %v2585 = vunpack.c.h.b16 %v696
    %v2586 = vunpack.c.l.b16 %v697
    %v2587 = vunpack.c.h.b16 %v697
    %v2588 = vunpack.c.l.b16 %v698
    %v2589 = vunpack.c.h.b16 %v698
    %v2590 = vunpack.c.l.b16 %v699
    %v2591 = vunpack.c.h.b16 %v699
    %v2592 = vunpack.c.l.b16 %v700
    %v2593 = vunpack.c.h.b16 %v700
    %v2594 = vunpack.c.l.b16 %v701
    %v2595 = vunpack.c.h.b16 %v701
    %v2596 = vunpack.c.l.b16 %v702
    %v2597 = vunpack.c.h.b16 %v702
    %v2598 = vunpack.c.l.b16 %v703
    %v2599 = vunpack.c.h.b16 %v703
    %v2600 = vunpack.c.l.b16 %v704
    %v2601 = vunpack.c.h.b16 %v704
    %v2602 = vunpack.c.l.b16 %v705
    %v2603 = vunpack.c.h.b16 %v705
    %v2604 = vunpack.c.l.b16 %v706
    %v2605 = vunpack.c.h.b16 %v706
    %v2606 = vunpack.c.l.b16 %v707
    %v2607 = vunpack.c.h.b16 %v707
    %v2608 = vunpack.c.l.b16 %v708
    %v2609 = vunpack.c.h.b16 %v708
    %v2610 = vunpack.c.l.b16 %v709
    %v2611 = vunpack.c.h.b16 %v709
    %v2612 = vunpack.c.l.b16 %v710
    %v2613 = vunpack.c.h.b16 %v710
    %v2614 = vunpack.c.l.b16 %v711
    %v2615 = vunpack.c.h.b16 %v711
    %v2616 = vunpack.c.l.b16 %v712
    %v2617 = vunpack.c.h.b16 %v712
    %v2618 = vunpack.c.l.b16 %v713
    %v2619 = vunpack.c.h.b16 %v713
    %v2620 = vunpack.c.l.b16 %v714
    %v2621 = vunpack.c.h.b16 %v714
    %v2622 = vunpack.c.l.b16 %v715
    %v2623 = vunpack.c.h.b16 %v715
    %v2624 = vunpack.c.l.b16 %v716
    %v2625 = vunpack.c.h.b16 %v716
    %v2626 = vunpack.c.l.b16 %v717
    %v2627 = vunpack.c.h.b16 %v717
    %v2628 = vunpack.c.l.b16 %v718
    %v2629 = vunpack.c.h.b16 %v718
    %v2630 = vunpack.c.l.b16 %v719
    %v2631 = vunpack.c.h.b16 %v719
    %v2632 = vunpack.c.l.b16 %v720
    %v2633 = vunpack.c.h.b16 %v720
    %v2634 = vunpack.c.l.b16 %v721
    %v2635 = vunpack.c.h.b16 %v721
    %v2636 = vunpack.c.l.b16 %v722
    %v2637 = vunpack.c.h.b16 %v722
    %v2638 = vunpack.c.l.b16 %v723
    %v2639 = vunpack.c.h.b16 %v723
    %v2640 = vunpack.c.l.b16 %v724
    %v2641 = vunpack.c.h.b16 %v724
    %v2642 = vunpack.c.l.b16 %v725
    %v2643 = vunpack.c.h.b16 %v725
    %v2644 = vunpack.c.l.b16 %v726
    %v2645 = vunpack.c.h.b16 %v726
    %v2646 = vunpack.c.l.b16 %v727
    %v2647 = vunpack.c.h.b16 %v727
    %v2648 = vunpack.c.l.b16 %v728
    %v2649 = vunpack.c.h.b16 %v728
    %v2650 = vunpack.c.l.b16 %v729
    %v2651 = vunpack.c.h.b16 %v729
    %v2652 = vunpack.c.l.b16 %v730
    %v2653 = vunpack.c.h.b16 %v730
    %v2654 = vunpack.c.l.b16 %v731
    %v2655 = vunpack.c.h.b16 %v731
    %v2656 = vunpack.c.l.b16 %v732
    %v2657 = vunpack.c.h.b16 %v732
    %v2658 = vunpack.c.l.b16 %v733
    %v2659 = vunpack.c.h.b16 %v733
    %v2660 = vunpack.c.l.b16 %v734
    %v2661 = vunpack.c.h.b16 %v734
    %v2662 = vunpack.c.l.b16 %v735
    %v2663 = vunpack.c.h.b16 %v735
    %v2664 = vunpack.c.l.b16 %v736
    %v2665 = vunpack.c.h.b16 %v736
    %v2666 = vunpack.c.l.b16 %v737
    %v2667 = vunpack.c.h.b16 %v737
    %v2668 = vunpack.c.l.b16 %v738
    %v2669 = vunpack.c.h.b16 %v738
    %v2670 = vunpack.c.l.b16 %v739
    %v2671 = vunpack.c.h.b16 %v739
    %v2672 = vunpack.c.l.b16 %v740
    %v2673 = vunpack.c.h.b16 %v740
    %v2674 = vunpack.c.l.b16 %v741
    %v2675 = vunpack.c.h.b16 %v741
    %v2676 = vunpack.c.l.b16 %v742
    %v2677 = vunpack.c.h.b16 %v742
    %v2678 = vunpack.c.l.b16 %v743
    %v2679 = vunpack.c.h.b16 %v743
    %v2680 = vunpack.c.l.b16 %v744
    %v2681 = vunpack.c.h.b16 %v744
    %v2682 = vunpack.c.l.b16 %v745
    %v2683 = vunpack.c.h.b16 %v745
    %v2684 = vunpack.c.l.b16 %v746
    %v2685 = vunpack.c.h.b16 %v746
    %v2686 = vunpack.c.l.b16 %v747
    %v2687 = vunpack.c.h.b16 %v747
    %v2688 = vunpack.c.l.b16 %v748
    %v2689 = vunpack.c.h.b16 %v748
    %v2690 = vunpack.c.l.b16 %v749
    %v2691 = vunpack.c.h.b16 %v749
    %v2692 = vunpack.c.l.b16 %v750
    %v2693 = vunpack.c.h.b16 %v750
    %v2694 = vunpack.c.l.b16 %v751
    %v2695 = vunpack.c.h.b16 %v751
    %v2696 = vunpack.c.l.b16 %v752
    %v2697 = vunpack.c.h.b16 %v752
    %v2698 = vunpack.c.l.b16 %v753
    %v2699 = vunpack.c.h.b16 %v753
    %v2700 = vunpack.c.l.b16 %v754
    %v2701 = vunpack.c.h.b16 %v754
    %v2702 = vunpack.c.l.b16 %v755
    %v2703 = vunpack.c.h.b16 %v755
    %v2704 = vunpack.c.l.b16 %v756
    %v2705 = vunpack.c.h.b16 %v756
    %v2706 = vunpack.c.l.b16 %v757
    %v2707 = vunpack.c.h.b16 %v757
    %v2708 = vunpack.c.l.b16 %v758
    %v2709 = vunpack.c.h.b16 %v758
    %v2710 = vunpack.c.l.b16 %v759
    %v2711 = vunpack.c.h.b16 %v759
    %v2712 = vunpack.c.l.b16 %v760
    %v2713 = vunpack.c.h.b16 %v760
    %v2714 = vunpack.c.l.b16 %v761
    %v2715 = vunpack.c.h.b16 %v761
    %v2716 = vunpack.c.l.b16 %v762
    %v2717 = vunpack.c.h.b16 %v762
    %v2718 = vunpack.c.l.b16 %v763
    %v2719 = vunpack.c.h.b16 %v763
    %v2720 = vunpack.c.l.b16 %v764
    %v2721 = vunpack.c.h.b16 %v764
    %v2722 = vunpack.c.l.b16 %v765
    %v2723 = vunpack.c.h.b16 %v765
    %v2724 = vunpack.c.l.b16 %v766
    %v2725 = vunpack.c.h.b16 %v766
    %v2726 = vunpack.c.l.b16 %v767
    %v2727 = vunpack.c.h.b16 %v767
    %v2728 = vunpack.c.l.b16 %v768
    %v2729 = vunpack.c.h.b16 %v768
    %v2730 = vunpack.c.l.b16 %v769
    %v2731 = vunpack.c.h.b16 %v769
    %v2732 = vunpack.c.l.b16 %v770
    %v2733 = vunpack.c.h.b16 %v770
    %v2734 = vunpack.c.l.b16 %v771
    %v2735 = vunpack.c.h.b16 %v771
    %v2736 = vunpack.c.l.b16 %v772
    %v2737 = vunpack.c.h.b16 %v772
    %v2738 = vunpack.c.l.b16 %v773
    %v2739 = vunpack.c.h.b16 %v773
    %v2740 = vunpack.c.l.b16 %v774
    %v2741 = vunpack.c.h.b16 %v774
    %v2742 = vunpack.c.l.b16 %v775
    %v2743 = vunpack.c.h.b16 %v775
    %v2744 = vunpack.c.l.b16 %v776
    %v2745 = vunpack.c.h.b16 %v776
    %v2746 = vunpack.c.l.b16 %v777
    %v2747 = vunpack.c.h.b16 %v777
    %v2748 = vunpack.c.l.b16 %v778
    %v2749 = vunpack.c.h.b16 %v778
    %v2750 = vunpack.c.l.b16 %v779
    %v2751 = vunpack.c.h.b16 %v779
    %v2752 = vunpack.c.l.b16 %v780
    %v2753 = vunpack.c.h.b16 %v780
    %v2754 = vunpack.c.l.b16 %v781
    %v2755 = vunpack.c.h.b16 %v781
    %v2756 = vunpack.c.l.b16 %v782
    %v2757 = vunpack.c.h.b16 %v782
    %v2758 = vunpack.c.l.b16 %v783
    %v2759 = vunpack.c.h.b16 %v783
    %v2760 = vunpack.c.l.b16 %v784
    %v2761 = vunpack.c.h.b16 %v784
    %v2762 = vunpack.c.l.b16 %v785
    %v2763 = vunpack.c.h.b16 %v785
    %v2764 = vunpack.c.l.b16 %v786
    %v2765 = vunpack.c.h.b16 %v786
    %v2766 = vunpack.c.l.b16 %v787
    %v2767 = vunpack.c.h.b16 %v787
    %v2768 = vunpack.c.l.b16 %v788
    %v2769 = vunpack.c.h.b16 %v788
    %v2770 = vunpack.c.l.b16 %v789
    %v2771 = vunpack.c.h.b16 %v789
    %v2772 = vunpack.c.l.b16 %v790
    %v2773 = vunpack.c.h.b16 %v790
    %v2774 = vunpack.c.l.b16 %v791
    %v2775 = vunpack.c.h.b16 %v791
    %v2776 = vunpack.c.l.b16 %v792
    %v2777 = vunpack.c.h.b16 %v792
    %v2778 = vunpack.c.l.b16 %v793
    %v2779 = vunpack.c.h.b16 %v793
    %v2780 = vunpack.c.l.b16 %v794
    %v2781 = vunpack.c.h.b16 %v794
    %v2782 = vunpack.c.l.b16 %v795
    %v2783 = vunpack.c.h.b16 %v795
    %v2784 = vunpack.c.l.b16 %v796
    %v2785 = vunpack.c.h.b16 %v796
    %v2786 = vunpack.c.l.b16 %v797
    %v2787 = vunpack.c.h.b16 %v797
    %v2788 = vunpack.c.l.b16 %v798
    %v2789 = vunpack.c.h.b16 %v798
    %v2790 = vunpack.c.l.b16 %v799
    %v2791 = vunpack.c.h.b16 %v799
    %v2792 = vunpack.c.l.b16 %v800
    %v2793 = vunpack.c.h.b16 %v800
    %v2794 = vunpack.c.l.b16 %v801
    %v2795 = vunpack.c.h.b16 %v801
    %v2796 = vunpack.c.l.b16 %v802
    %v2797 = vunpack.c.h.b16 %v802
    %v2798 = vunpack.c.l.b16 %v803
    %v2799 = vunpack.c.h.b16 %v803
    %v2800 = vunpack.c.l.b16 %v804
    %v2801 = vunpack.c.h.b16 %v804
    %v2802 = vunpack.c.l.b16 %v805
    %v2803 = vunpack.c.h.b16 %v805
    %v2804 = vunpack.c.l.b16 %v806
    %v2805 = vunpack.c.h.b16 %v806
    %v2806 = vunpack.c.l.b16 %v807
    %v2807 = vunpack.c.h.b16 %v807
    %v2808 = vunpack.c.l.b16 %v808
    %v2809 = vunpack.c.h.b16 %v808
    %v2810 = vunpack.c.l.b16 %v809
    %v2811 = vunpack.c.h.b16 %v809
    %v2812 = vunpack.c.l.b16 %v810
    %v2813 = vunpack.c.h.b16 %v810
    %v2814 = vunpack.c.l.b16 %v811
    %v2815 = vunpack.c.h.b16 %v811
    %v2816 = vunpack.c.l.b16 %v812
    %v2817 = vunpack.c.h.b16 %v812
    %v2818 = vunpack.c.l.b16 %v813
    %v2819 = vunpack.c.h.b16 %v813
    %v2820 = vunpack.c.l.b16 %v814
    %v2821 = vunpack.c.h.b16 %v814
    %v2822 = vunpack.c.l.b16 %v815
    %v2823 = vunpack.c.h.b16 %v815
    %v2824 = vunpack.c.l.b16 %v816
    %v2825 = vunpack.c.h.b16 %v816
    %v2826 = vunpack.c.l.b16 %v817
    %v2827 = vunpack.c.h.b16 %v817
    %v2828 = vunpack.c.l.b16 %v818
    %v2829 = vunpack.c.h.b16 %v818
    %v2830 = vunpack.c.l.b16 %v819
    %v2831 = vunpack.c.h.b16 %v819
    %v2832 = vunpack.c.l.b16 %v820
    %v2833 = vunpack.c.h.b16 %v820
    %v2834 = vunpack.c.l.b16 %v821
    %v2835 = vunpack.c.h.b16 %v821
    %v2836 = vunpack.c.l.b16 %v822
    %v2837 = vunpack.c.h.b16 %v822
    %v2838 = vunpack.c.l.b16 %v823
    %v2839 = vunpack.c.h.b16 %v823
    %v2840 = vunpack.c.l.b16 %v824
    %v2841 = vunpack.c.h.b16 %v824
    %v2842 = vunpack.c.l.b16 %v825
    %v2843 = vunpack.c.h.b16 %v825
    %v2844 = vunpack.c.l.b16 %v826
    %v2845 = vunpack.c.h.b16 %v826
    %v2846 = vunpack.c.l.b16 %v827
    %v2847 = vunpack.c.h.b16 %v827
    %v2848 = vunpack.c.l.b16 %v828
    %v2849 = vunpack.c.h.b16 %v828
    %v2850 = vunpack.c.l.b16 %v829
    %v2851 = vunpack.c.h.b16 %v829
    %v2852 = vunpack.c.l.b16 %v830
    %v2853 = vunpack.c.h.b16 %v830
    %v2854 = vunpack.c.l.b16 %v831
    %v2855 = vunpack.c.h.b16 %v831
    %v2856 = vunpack.c.l.b16 %v832
    %v2857 = vunpack.c.h.b16 %v832
    %v2858 = vunpack.c.l.b16 %v833
    %v2859 = vunpack.c.h.b16 %v833
    %v2860 = vunpack.c.l.b16 %v834
    %v2861 = vunpack.c.h.b16 %v834
    %v2862 = vunpack.c.l.b16 %v835
    %v2863 = vunpack.c.h.b16 %v835
    %v2864 = vunpack.c.l.b16 %v836
    %v2865 = vunpack.c.h.b16 %v836
    %v2866 = vunpack.c.l.b16 %v837
    %v2867 = vunpack.c.h.b16 %v837
    %v2868 = vunpack.c.l.b16 %v838
    %v2869 = vunpack.c.h.b16 %v838
    %v2870 = vunpack.c.l.b16 %v839
    %v2871 = vunpack.c.h.b16 %v839
    %v2872 = vunpack.c.l.b16 %v840
    %v2873 = vunpack.c.h.b16 %v840
    %v2874 = vunpack.c.l.b16 %v841
    %v2875 = vunpack.c.h.b16 %v841
    %v2876 = vunpack.c.l.b16 %v842
    %v2877 = vunpack.c.h.b16 %v842
    %v2878 = vunpack.c.l.b16 %v843
    %v2879 = vunpack.c.h.b16 %v843
    %v2880 = vunpack.c.l.b16 %v844
    %v2881 = vunpack.c.h.b16 %v844
    %v2882 = vunpack.c.l.b16 %v845
    %v2883 = vunpack.c.h.b16 %v845
    %v2884 = vunpack.c.l.b16 %v846
    %v2885 = vunpack.c.h.b16 %v846
    %v2886 = vunpack.c.l.b16 %v847
    %v2887 = vunpack.c.h.b16 %v847
    %v2888 = vunpack.c.l.b16 %v848
    %v2889 = vunpack.c.h.b16 %v848
    %v2890 = vunpack.c.l.b16 %v849
    %v2891 = vunpack.c.h.b16 %v849
    %v2892 = vunpack.c.l.b16 %v850
    %v2893 = vunpack.c.h.b16 %v850
    %v2894 = vunpack.c.l.b16 %v851
    %v2895 = vunpack.c.h.b16 %v851
    %v2896 = vunpack.c.l.b16 %v852
    %v2897 = vunpack.c.h.b16 %v852
    %v2898 = vunpack.c.l.b16 %v853
    %v2899 = vunpack.c.h.b16 %v853
    %v2900 = vunpack.c.l.b16 %v854
    %v2901 = vunpack.c.h.b16 %v854
    %v2902 = vunpack.c.l.b16 %v855
    %v2903 = vunpack.c.h.b16 %v855
    %v2904 = vunpack.c.l.b16 %v856
    %v2905 = vunpack.c.h.b16 %v856
    %v2906 = vunpack.c.l.b16 %v857
    %v2907 = vunpack.c.h.b16 %v857
    %v2908 = vunpack.c.l.b16 %v858
    %v2909 = vunpack.c.h.b16 %v858
    %v2910 = vunpack.c.l.b16 %v859
    %v2911 = vunpack.c.h.b16 %v859
    %v2912 = vunpack.c.l.b16 %v860
    %v2913 = vunpack.c.h.b16 %v860
    %v2914 = vunpack.c.l.b16 %v861
    %v2915 = vunpack.c.h.b16 %v861
    %v2916 = vunpack.c.l.b16 %v862
    %v2917 = vunpack.c.h.b16 %v862
    %v2918 = vunpack.c.l.b16 %v863
    %v2919 = vunpack.c.h.b16 %v863
    %v2920 = vunpack.c.l.b16 %v864
    %v2921 = vunpack.c.h.b16 %v864
    %v2922 = vunpack.c.l.b16 %v865
    %v2923 = vunpack.c.h.b16 %v865
    %v2924 = vunpack.c.l.b16 %v866
    %v2925 = vunpack.c.h.b16 %v866
    %v2926 = vunpack.c.l.b16 %v867
    %v2927 = vunpack.c.h.b16 %v867
    %v2928 = vunpack.c.l.b16 %v868
    %v2929 = vunpack.c.h.b16 %v868
    %v2930 = vunpack.c.l.b16 %v869
    %v2931 = vunpack.c.h.b16 %v869
    %v2932 = vunpack.c.l.b16 %v870
    %v2933 = vunpack.c.h.b16 %v870
    %v2934 = vunpack.c.l.b16 %v871
    %v2935 = vunpack.c.h.b16 %v871
    %v2936 = vunpack.c.l.b16 %v872
    %v2937 = vunpack.c.h.b16 %v872
    %v2938 = vunpack.c.l.b16 %v873
    %v2939 = vunpack.c.h.b16 %v873
    %v2940 = vunpack.c.l.b16 %v874
    %v2941 = vunpack.c.h.b16 %v874
    %v2942 = vunpack.c.l.b16 %v875
    %v2943 = vunpack.c.h.b16 %v875
    %v2944 = vunpack.c.l.b16 %v876
    %v2945 = vunpack.c.h.b16 %v876
    %v2946 = vunpack.c.l.b16 %v877
    %v2947 = vunpack.c.h.b16 %v877
    %v2948 = vunpack.c.l.b16 %v878
    %v2949 = vunpack.c.h.b16 %v878
    %v2950 = vunpack.c.l.b16 %v879
    %v2951 = vunpack.c.h.b16 %v879
    %v2952 = vunpack.c.l.b16 %v880
    %v2953 = vunpack.c.h.b16 %v880
    %v2954 = vunpack.c.l.b16 %v881
    %v2955 = vunpack.c.h.b16 %v881
    %v2956 = vunpack.c.l.b16 %v882
    %v2957 = vunpack.c.h.b16 %v882
    %v2958 = vunpack.c.l.b16 %v883
    %v2959 = vunpack.c.h.b16 %v883
    %v2960 = vunpack.c.l.b16 %v884
    %v2961 = vunpack.c.h.b16 %v884
    %v2962 = vunpack.c.l.b16 %v885
    %v2963 = vunpack.c.h.b16 %v885
    %v2964 = vunpack.c.l.b16 %v886
    %v2965 = vunpack.c.h.b16 %v886
    %v2966 = vunpack.c.l.b16 %v887
    %v2967 = vunpack.c.h.b16 %v887
    %v2968 = vunpack.c.l.b16 %v888
    %v2969 = vunpack.c.h.b16 %v888
    %v2970 = vunpack.c.l.b16 %v889
    %v2971 = vunpack.c.h.b16 %v889
    %v2972 = vunpack.c.l.b16 %v890
    %v2973 = vunpack.c.h.b16 %v890
    %v2974 = vunpack.c.l.b16 %v891
    %v2975 = vunpack.c.h.b16 %v891
    %v2976 = vunpack.c.l.b16 %v892
    %v2977 = vunpack.c.h.b16 %v892
    %v2978 = vunpack.c.l.b16 %v893
    %v2979 = vunpack.c.h.b16 %v893
    %v2980 = vunpack.c.l.b16 %v894
    %v2981 = vunpack.c.h.b16 %v894
    %v2982 = vunpack.c.l.b16 %v895
    %v2983 = vunpack.c.h.b16 %v895
    %v2984 = vunpack.c.l.b16 %v896
    %v2985 = vunpack.c.h.b16 %v896
    %v2986 = vunpack.c.l.b16 %v897
    %v2987 = vunpack.c.h.b16 %v897
    %v2988 = vunpack.c.l.b16 %v898
    %v2989 = vunpack.c.h.b16 %v898
    %v2990 = vunpack.c.l.b16 %v899
    %v2991 = vunpack.c.h.b16 %v899
    %v2992 = vunpack.c.l.b16 %v900
    %v2993 = vunpack.c.h.b16 %v900
    %v2994 = vunpack.c.l.b16 %v901
    %v2995 = vunpack.c.h.b16 %v901
    %v2996 = vunpack.c.l.b16 %v902
    %v2997 = vunpack.c.h.b16 %v902
    %v2998 = vunpack.c.l.b16 %v903
    %v2999 = vunpack.c.h.b16 %v903
    %v3000 = vunpack.c.l.b16 %v904
    %v3001 = vunpack.c.h.b16 %v904
    %v3002 = vunpack.c.l.b16 %v905
    %v3003 = vunpack.c.h.b16 %v905
    %v3004 = vunpack.c.l.b16 %v906
    %v3005 = vunpack.c.h.b16 %v906
    %v3006 = vunpack.c.l.b16 %v907
    %v3007 = vunpack.c.h.b16 %v907
    %v3008 = vunpack.c.l.b16 %v908
    %v3009 = vunpack.c.h.b16 %v908
    %v3010 = vunpack.c.l.b16 %v909
    %v3011 = vunpack.c.h.b16 %v909
    %v3012 = vunpack.c.l.b16 %v910
    %v3013 = vunpack.c.h.b16 %v910
    %v3014 = vunpack.c.l.b16 %v911
    %v3015 = vunpack.c.h.b16 %v911
    %v3016 = vunpack.c.l.b16 %v912
    %v3017 = vunpack.c.h.b16 %v912
    %v3018 = vunpack.c.l.b16 %v913
    %v3019 = vunpack.c.h.b16 %v913
    %v3020 = vunpack.c.l.b16 %v914
    %v3021 = vunpack.c.h.b16 %v914
    %v3022 = vunpack.c.l.b16 %v915
    %v3023 = vunpack.c.h.b16 %v915
    %v3024 = vunpack.c.l.b16 %v916
    %v3025 = vunpack.c.h.b16 %v916
    %v3026 = vunpack.c.l.b16 %v917
    %v3027 = vunpack.c.h.b16 %v917
    %v3028 = vunpack.c.l.b16 %v918
    %v3029 = vunpack.c.h.b16 %v918
    %v3030 = vunpack.c.l.b16 %v919
    %v3031 = vunpack.c.h.b16 %v919
    %v3032 = vunpack.c.l.b16 %v920
    %v3033 = vunpack.c.h.b16 %v920
    %v3034 = vunpack.c.l.b16 %v921
    %v3035 = vunpack.c.h.b16 %v921
    %v3036 = vunpack.c.l.b16 %v922
    %v3037 = vunpack.c.h.b16 %v922
    %v3038 = vunpack.c.l.b16 %v923
    %v3039 = vunpack.c.h.b16 %v923
    %v3040 = vunpack.c.l.b16 %v924
    %v3041 = vunpack.c.h.b16 %v924
    %v3042 = vunpack.c.l.b16 %v925
    %v3043 = vunpack.c.h.b16 %v925
    %v3044 = vunpack.c.l.b16 %v926
    %v3045 = vunpack.c.h.b16 %v926
    %v3046 = vunpack.c.l.b16 %v927
    %v3047 = vunpack.c.h.b16 %v927
    %v3048 = vunpack.c.l.b16 %v928
    %v3049 = vunpack.c.h.b16 %v928
    %v3050 = vunpack.c.l.b16 %v929
    %v3051 = vunpack.c.h.b16 %v929
    %v3052 = vunpack.c.l.b16 %v930
    %v3053 = vunpack.c.h.b16 %v930
    %v3054 = vunpack.c.l.b16 %v931
    %v3055 = vunpack.c.h.b16 %v931
    %v3056 = vunpack.c.l.b16 %v932
    %v3057 = vunpack.c.h.b16 %v932
    %v3058 = vunpack.c.l.b16 %v933
    %v3059 = vunpack.c.h.b16 %v933
    %v3060 = vunpack.c.l.b16 %v934
    %v3061 = vunpack.c.h.b16 %v934
    %v3062 = vunpack.c.l.b16 %v935
    %v3063 = vunpack.c.h.b16 %v935
    %v3064 = vunpack.c.l.b16 %v936
    %v3065 = vunpack.c.h.b16 %v936
    %v3066 = vunpack.c.l.b16 %v937
    %v3067 = vunpack.c.h.b16 %v937
    %v3068 = vunpack.c.l.b16 %v938
    %v3069 = vunpack.c.h.b16 %v938
    %v3070 = vunpack.c.l.b16 %v939
    %v3071 = vunpack.c.h.b16 %v939
    %v3072 = vunpack.c.l.b16 %v940
    %v3073 = vunpack.c.h.b16 %v940
    %v3074 = vunpack.c.l.b16 %v941
    %v3075 = vunpack.c.h.b16 %v941
    %v3076 = vunpack.c.l.b16 %v942
    %v3077 = vunpack.c.h.b16 %v942
    %v3078 = vunpack.c.l.b16 %v943
    %v3079 = vunpack.c.h.b16 %v943
    %v3080 = vunpack.c.l.b16 %v944
    %v3081 = vunpack.c.h.b16 %v944
    %v3082 = vunpack.c.l.b16 %v945
    %v3083 = vunpack.c.h.b16 %v945
    %v3084 = vunpack.c.l.b16 %v946
    %v3085 = vunpack.c.h.b16 %v946
    %v3086 = vunpack.c.l.b16 %v947
    %v3087 = vunpack.c.h.b16 %v947
    %v3088 = vunpack.c.l.b16 %v948
    %v3089 = vunpack.c.h.b16 %v948
    %v3090 = vunpack.c.l.b16 %v949
    %v3091 = vunpack.c.h.b16 %v949
    %v3092 = vunpack.c.l.b16 %v950
    %v3093 = vunpack.c.h.b16 %v950
    %v3094 = vunpack.c.l.b16 %v951
    %v3095 = vunpack.c.h.b16 %v951
    %v3096 = vunpack.c.l.b16 %v952
    %v3097 = vunpack.c.h.b16 %v952
    %v3098 = vunpack.c.l.b16 %v953
    %v3099 = vunpack.c.h.b16 %v953
    %v3100 = vunpack.c.l.b16 %v954
    %v3101 = vunpack.c.h.b16 %v954
    %v3102 = vunpack.c.l.b16 %v955
    %v3103 = vunpack.c.h.b16 %v955
    %v3104 = vunpack.c.l.b16 %v956
    %v3105 = vunpack.c.h.b16 %v956
    %v3106 = vunpack.c.l.b16 %v957
    %v3107 = vunpack.c.h.b16 %v957
    %v3108 = vunpack.c.l.b16 %v958
    %v3109 = vunpack.c.h.b16 %v958
    %v3110 = vunpack.c.l.b16 %v959
    %v3111 = vunpack.c.h.b16 %v959
    %v3112 = vunpack.c.l.b16 %v960
    %v3113 = vunpack.c.h.b16 %v960
    %v3114 = vunpack.c.l.b16 %v961
    %v3115 = vunpack.c.h.b16 %v961
    %v3116 = vunpack.c.l.b16 %v962
    %v3117 = vunpack.c.h.b16 %v962
    %v3118 = vunpack.c.l.b16 %v963
    %v3119 = vunpack.c.h.b16 %v963
    %v3120 = vunpack.c.l.b16 %v964
    %v3121 = vunpack.c.h.b16 %v964
    %v3122 = vunpack.c.l.b16 %v965
    %v3123 = vunpack.c.h.b16 %v965
    %v3124 = vunpack.c.l.b16 %v966
    %v3125 = vunpack.c.h.b16 %v966
    %v3126 = vunpack.c.l.b16 %v967
    %v3127 = vunpack.c.h.b16 %v967
    %v3128 = vunpack.c.l.b16 %v968
    %v3129 = vunpack.c.h.b16 %v968
    %v3130 = vunpack.c.l.b16 %v969
    %v3131 = vunpack.c.h.b16 %v969
    %v3132 = vunpack.c.l.b16 %v970
    %v3133 = vunpack.c.h.b16 %v970
    %v3134 = vunpack.c.l.b16 %v971
    %v3135 = vunpack.c.h.b16 %v971
    %v3136 = vunpack.c.l.b16 %v972
    %v3137 = vunpack.c.h.b16 %v972
    %v3138 = vunpack.c.l.b16 %v973
    %v3139 = vunpack.c.h.b16 %v973
    %v3140 = vunpack.c.l.b16 %v974
    %v3141 = vunpack.c.h.b16 %v974
    %v3142 = vunpack.c.l.b16 %v975
    %v3143 = vunpack.c.h.b16 %v975
    %v3144 = vunpack.c.l.b16 %v976
    %v3145 = vunpack.c.h.b16 %v976
    %v3146 = vunpack.c.l.b16 %v977
    %v3147 = vunpack.c.h.b16 %v977
    %v3148 = vunpack.c.l.b16 %v978
    %v3149 = vunpack.c.h.b16 %v978
    %v3150 = vunpack.c.l.b16 %v979
    %v3151 = vunpack.c.h.b16 %v979
    %v3152 = vunpack.c.l.b16 %v980
    %v3153 = vunpack.c.h.b16 %v980
    %v3154 = vunpack.c.l.b16 %v981
    %v3155 = vunpack.c.h.b16 %v981
    %v3156 = vunpack.c.l.b16 %v982
    %v3157 = vunpack.c.h.b16 %v982
    %v3158 = vunpack.c.l.b16 %v983
    %v3159 = vunpack.c.h.b16 %v983
    %v3160 = vunpack.c.l.b16 %v984
    %v3161 = vunpack.c.h.b16 %v984
    %v3162 = vunpack.c.l.b16 %v985
    %v3163 = vunpack.c.h.b16 %v985
    %v3164 = vunpack.c.l.b16 %v986
    %v3165 = vunpack.c.h.b16 %v986
    %v3166 = vunpack.c.l.b16 %v987
    %v3167 = vunpack.c.h.b16 %v987
    %v3168 = vunpack.c.l.b16 %v988
    %v3169 = vunpack.c.h.b16 %v988
    %v3170 = vunpack.c.l.b16 %v989
    %v3171 = vunpack.c.h.b16 %v989
    %v3172 = vunpack.c.l.b16 %v990
    %v3173 = vunpack.c.h.b16 %v990
    %v3174 = vunpack.c.l.b16 %v991
    %v3175 = vunpack.c.h.b16 %v991
    %v3176 = vunpack.c.l.b16 %v992
    %v3177 = vunpack.c.h.b16 %v992
    %v3178 = vunpack.c.l.b16 %v993
    %v3179 = vunpack.c.h.b16 %v993
    %v3180 = vunpack.c.l.b16 %v994
    %v3181 = vunpack.c.h.b16 %v994
    %v3182 = vunpack.c.l.b16 %v995
    %v3183 = vunpack.c.h.b16 %v995
    %v3184 = vunpack.c.l.b16 %v996
    %v3185 = vunpack.c.h.b16 %v996
    %v3186 = vunpack.c.l.b16 %v997
    %v3187 = vunpack.c.h.b16 %v997
    %v3188 = vunpack.c.l.b16 %v998
    %v3189 = vunpack.c.h.b16 %v998
    %v3190 = vunpack.c.l.b16 %v999
    %v3191 = vunpack.c.h.b16 %v999
    %v3192 = vunpack.c.l.b16 %v1000
    %v3193 = vunpack.c.h.b16 %v1000
    %v3194 = vunpack.c.l.b16 %v1001
    %v3195 = vunpack.c.h.b16 %v1001
    %v3196 = vunpack.c.l.b16 %v1002
    %v3197 = vunpack.c.h.b16 %v1002
    %v3198 = vunpack.c.l.b16 %v1003
    %v3199 = vunpack.c.h.b16 %v1003
    %v3200 = vunpack.c.l.b16 %v1004
    %v3201 = vunpack.c.h.b16 %v1004
    %v3202 = vunpack.c.l.b16 %v1005
    %v3203 = vunpack.c.h.b16 %v1005
    %v3204 = vunpack.c.l.b16 %v1006
    %v3205 = vunpack.c.h.b16 %v1006
    %v3206 = vunpack.c.l.b16 %v1007
    %v3207 = vunpack.c.h.b16 %v1007
    %v3208 = vunpack.c.l.b16 %v1008
    %v3209 = vunpack.c.h.b16 %v1008
    %v3210 = vunpack.c.l.b16 %v1009
    %v3211 = vunpack.c.h.b16 %v1009
    %v3212 = vunpack.c.l.b16 %v1010
    %v3213 = vunpack.c.h.b16 %v1010
    %v3214 = vunpack.c.l.b16 %v1011
    %v3215 = vunpack.c.h.b16 %v1011
    %v3216 = vunpack.c.l.b16 %v1012
    %v3217 = vunpack.c.h.b16 %v1012
    %v3218 = vunpack.c.l.b16 %v1013
    %v3219 = vunpack.c.h.b16 %v1013
    %v3220 = vunpack.c.l.b16 %v1014
    %v3221 = vunpack.c.h.b16 %v1014
    %v3222 = vunpack.c.l.b16 %v1015
    %v3223 = vunpack.c.h.b16 %v1015
    %v3224 = vunpack.c.l.b16 %v1016
    %v3225 = vunpack.c.h.b16 %v1016
    %v3226 = vunpack.c.l.b16 %v1017
    %v3227 = vunpack.c.h.b16 %v1017
    %v3228 = vunpack.c.l.b16 %v1018
    %v3229 = vunpack.c.h.b16 %v1018
    %v3230 = vunpack.c.l.b16 %v1019
    %v3231 = vunpack.c.h.b16 %v1019
    %v3232 = vunpack.c.l.b16 %v1020
    %v3233 = vunpack.c.h.b16 %v1020
    %v3234 = vunpack.c.l.b16 %v1021
    %v3235 = vunpack.c.h.b16 %v1021
    %v3236 = vunpack.c.l.b16 %v1022
    %v3237 = vunpack.c.h.b16 %v1022
    %v3238 = vunpack.c.l.b16 %v1023
    %v3239 = vunpack.c.h.b16 %v1023
    %v3240 = vunpack.c.l.b16 %v1024
    %v3241 = vunpack.c.h.b16 %v1024
    %v3242 = vunpack.c.l.b16 %v1025
    %v3243 = vunpack.c.h.b16 %v1025
    %v3244 = vunpack.c.l.b16 %v1026
    %v3245 = vunpack.c.h.b16 %v1026
    %v3246 = vunpack.c.l.b16 %v1027
    %v3247 = vunpack.c.h.b16 %v1027
    %v3248 = vunpack.c.l.b16 %v1028
    %v3249 = vunpack.c.h.b16 %v1028
    %v3250 = vunpack.c.l.b16 %v1029
    %v3251 = vunpack.c.h.b16 %v1029
    %v3252 = vunpack.c.l.b16 %v1030
    %v3253 = vunpack.c.h.b16 %v1030
    %v3254 = vunpack.c.l.b16 %v1031
    %v3255 = vunpack.c.h.b16 %v1031
    %v3256 = vunpack.c.l.b16 %v1032
    %v3257 = vunpack.c.h.b16 %v1032
    %v3258 = vunpack.c.l.b16 %v1033
    %v3259 = vunpack.c.h.b16 %v1033
    %v3260 = vunpack.c.l.b16 %v1034
    %v3261 = vunpack.c.h.b16 %v1034
    %v3262 = vunpack.c.l.b16 %v1035
    %v3263 = vunpack.c.h.b16 %v1035
    %v3264 = vunpack.c.l.b16 %v1036
    %v3265 = vunpack.c.h.b16 %v1036
    %v3266 = vunpack.c.l.b16 %v1037
    %v3267 = vunpack.c.h.b16 %v1037
    %v3268 = vunpack.c.l.b16 %v1038
    %v3269 = vunpack.c.h.b16 %v1038
    %v3270 = vunpack.c.l.b16 %v1039
    %v3271 = vunpack.c.h.b16 %v1039
    %v3272 = vunpack.c.l.b16 %v1040
    %v3273 = vunpack.c.h.b16 %v1040
    %v3274 = vunpack.c.l.b16 %v1041
    %v3275 = vunpack.c.h.b16 %v1041
    %v3276 = vunpack.c.l.b16 %v1042
    %v3277 = vunpack.c.h.b16 %v1042
    %v3278 = vunpack.c.l.b16 %v1043
    %v3279 = vunpack.c.h.b16 %v1043
    %v3280 = vunpack.c.l.b16 %v1044
    %v3281 = vunpack.c.h.b16 %v1044
    %v3282 = vunpack.c.l.b16 %v1045
    %v3283 = vunpack.c.h.b16 %v1045
    %v3284 = vunpack.c.l.b16 %v1046
    %v3285 = vunpack.c.h.b16 %v1046
    %v3286 = vunpack.c.l.b16 %v1047
    %v3287 = vunpack.c.h.b16 %v1047
    %v3288 = vunpack.c.l.b16 %v1048
    %v3289 = vunpack.c.h.b16 %v1048
    %v3290 = vunpack.c.l.b16 %v1049
    %v3291 = vunpack.c.h.b16 %v1049
    %v3292 = vunpack.c.l.b16 %v1050
    %v3293 = vunpack.c.h.b16 %v1050
    %v3294 = vunpack.c.l.b16 %v1051
    %v3295 = vunpack.c.h.b16 %v1051
    %v3296 = vunpack.c.l.b16 %v1052
    %v3297 = vunpack.c.h.b16 %v1052
    %v3298 = vunpack.c.l.b16 %v1053
    %v3299 = vunpack.c.h.b16 %v1053
    %v3300 = vunpack.c.l.b16 %v1054
    %v3301 = vunpack.c.h.b16 %v1054
    %v3302 = vunpack.c.l.b16 %v1055
    %v3303 = vunpack.c.h.b16 %v1055
    %v3304 = vunpack.c.l.b16 %v1056
    %v3305 = vunpack.c.h.b16 %v1056
    %v3306 = vunpack.c.l.b16 %v1057
    %v3307 = vunpack.c.h.b16 %v1057
    %v3308 = vunpack.c.l.b16 %v1058
    %v3309 = vunpack.c.h.b16 %v1058
    %v3310 = vunpack.c.l.b16 %v1059
    %v3311 = vunpack.c.h.b16 %v1059
    %v3312 = vunpack.c.l.b16 %v1060
    %v3313 = vunpack.c.h.b16 %v1060
    %v3314 = vunpack.c.l.b16 %v1061
    %v3315 = vunpack.c.h.b16 %v1061
    %v3316 = vunpack.c.l.b16 %v1062
    %v3317 = vunpack.c.h.b16 %v1062
    %v3318 = vunpack.c.l.b16 %v1063
    %v3319 = vunpack.c.h.b16 %v1063
    %v3320 = vunpack.c.l.b16 %v1064
    %v3321 = vunpack.c.h.b16 %v1064
    %v3322 = vunpack.c.l.b16 %v1065
    %v3323 = vunpack.c.h.b16 %v1065
    %v3324 = vunpack.c.l.b16 %v1066
    %v3325 = vunpack.c.h.b16 %v1066
    %v3326 = vunpack.c.l.b16 %v1067
    %v3327 = vunpack.c.h.b16 %v1067
    %v3328 = vunpack.c.l.b16 %v1068
    %v3329 = vunpack.c.h.b16 %v1068
    %v3330 = vunpack.c.l.b16 %v1069
    %v3331 = vunpack.c.h.b16 %v1069
    %v3332 = vunpack.c.l.b16 %v1070
    %v3333 = vunpack.c.h.b16 %v1070
    %v3334 = vunpack.c.l.b16 %v1071
    %v3335 = vunpack.c.h.b16 %v1071
    %v3336 = vunpack.c.l.b16 %v1072
    %v3337 = vunpack.c.h.b16 %v1072
    %v3338 = vunpack.c.l.b16 %v1073
    %v3339 = vunpack.c.h.b16 %v1073
    %v3340 = vunpack.c.l.b16 %v1074
    %v3341 = vunpack.c.h.b16 %v1074
    %v3342 = vunpack.c.l.b16 %v1075
    %v3343 = vunpack.c.h.b16 %v1075
    %v3344 = vunpack.c.l.b16 %v1076
    %v3345 = vunpack.c.h.b16 %v1076
    %v3346 = vunpack.c.l.b16 %v1077
    %v3347 = vunpack.c.h.b16 %v1077
    %v3348 = vunpack.c.l.b16 %v1078
    %v3349 = vunpack.c.h.b16 %v1078
    %v3350 = vunpack.c.l.b16 %v1079
    %v3351 = vunpack.c.h.b16 %v1079
    %v3352 = vunpack.c.l.b16 %v1080
    %v3353 = vunpack.c.h.b16 %v1080
    %v3354 = vunpack.c.l.b16 %v1081
    %v3355 = vunpack.c.h.b16 %v1081
    %v3356 = vunpack.c.l.b16 %v1082
    %v3357 = vunpack.c.h.b16 %v1082
    %v3358 = vunpack.c.l.b16 %v1083
    %v3359 = vunpack.c.h.b16 %v1083
    %v3360 = vunpack.c.l.b16 %v1084
    %v3361 = vunpack.c.h.b16 %v1084
    %v3362 = vunpack.c.l.b16 %v1085
    %v3363 = vunpack.c.h.b16 %v1085
    %v3364 = vunpack.c.l.b16 %v1086
    %v3365 = vunpack.c.h.b16 %v1086
    %v3366 = vunpack.c.l.b16 %v1087
    %v3367 = vunpack.c.h.b16 %v1087
    %v3368 = vunpack.c.l.b16 %v1088
    %v3369 = vunpack.c.h.b16 %v1088
    %v3370 = vunpack.c.l.b16 %v1089
    %v3371 = vunpack.c.h.b16 %v1089
    %v3372 = vunpack.c.l.b16 %v1090
    %v3373 = vunpack.c.h.b16 %v1090
    %v3374 = vunpack.c.l.b16 %v1091
    %v3375 = vunpack.c.h.b16 %v1091
    %v3376 = vunpack.c.l.b16 %v1092
    %v3377 = vunpack.c.h.b16 %v1092
    %v3378 = vunpack.c.l.b16 %v1093
    %v3379 = vunpack.c.h.b16 %v1093
    %v3380 = vunpack.c.l.b16 %v1094
    %v3381 = vunpack.c.h.b16 %v1094
    %v3382 = vunpack.c.l.b16 %v1095
    %v3383 = vunpack.c.h.b16 %v1095
    %v3384 = vunpack.c.l.b16 %v1096
    %v3385 = vunpack.c.h.b16 %v1096
    %v3386 = vunpack.c.l.b16 %v1097
    %v3387 = vunpack.c.h.b16 %v1097
    %v3388 = vunpack.c.l.b16 %v1098
    %v3389 = vunpack.c.h.b16 %v1098
    %v3390 = vunpack.c.l.b16 %v1099
    %v3391 = vunpack.c.h.b16 %v1099
    %v3392 = vunpack.c.l.b16 %v1100
    %v3393 = vunpack.c.h.b16 %v1100
    %v3394 = vunpack.c.l.b16 %v1101
    %v3395 = vunpack.c.h.b16 %v1101
    %v3396 = vunpack.c.l.b16 %v1102
    %v3397 = vunpack.c.h.b16 %v1102
    %v3398 = vunpack.c.l.b16 %v1103
    %v3399 = vunpack.c.h.b16 %v1103
    %v3400 = vunpack.c.l.b16 %v1104
    %v3401 = vunpack.c.h.b16 %v1104
    %v3402 = vunpack.c.l.b16 %v1105
    %v3403 = vunpack.c.h.b16 %v1105
    %v3404 = vunpack.c.l.b16 %v1106
    %v3405 = vunpack.c.h.b16 %v1106
    %v3406 = vunpack.c.l.b16 %v1107
    %v3407 = vunpack.c.h.b16 %v1107
    %v3408 = vunpack.c.l.b16 %v1108
    %v3409 = vunpack.c.h.b16 %v1108
    %v3410 = vunpack.c.l.b16 %v1109
    %v3411 = vunpack.c.h.b16 %v1109
    %v3412 = vunpack.c.l.b16 %v1110
    %v3413 = vunpack.c.h.b16 %v1110
    %v3414 = vunpack.c.l.b16 %v1111
    %v3415 = vunpack.c.h.b16 %v1111
    %v3416 = vunpack.c.l.b16 %v1112
    %v3417 = vunpack.c.h.b16 %v1112
    %v3418 = vunpack.c.l.b16 %v1113
    %v3419 = vunpack.c.h.b16 %v1113
    %v3420 = vunpack.c.l.b16 %v1114
    %v3421 = vunpack.c.h.b16 %v1114
    %v3422 = vunpack.c.l.b16 %v1115
    %v3423 = vunpack.c.h.b16 %v1115
    %v3424 = vunpack.c.l.b16 %v1116
    %v3425 = vunpack.c.h.b16 %v1116
    %v3426 = vunpack.c.l.b16 %v1117
    %v3427 = vunpack.c.h.b16 %v1117
    %v3428 = vunpack.c.l.b16 %v1118
    %v3429 = vunpack.c.h.b16 %v1118
    %v3430 = vunpack.c.l.b16 %v1119
    %v3431 = vunpack.c.h.b16 %v1119
    %v3432 = vunpack.c.l.b16 %v1120
    %v3433 = vunpack.c.h.b16 %v1120
    %v3434 = vunpack.c.l.b16 %v1121
    %v3435 = vunpack.c.h.b16 %v1121
    %v3436 = vunpack.c.l.b16 %v1122
    %v3437 = vunpack.c.h.b16 %v1122
    %v3438 = vunpack.c.l.b16 %v1123
    %v3439 = vunpack.c.h.b16 %v1123
    %v3440 = vunpack.c.l.b16 %v1124
    %v3441 = vunpack.c.h.b16 %v1124
    %v3442 = vunpack.c.l.b16 %v1125
    %v3443 = vunpack.c.h.b16 %v1125
    %v3444 = vunpack.c.l.b16 %v1126
    %v3445 = vunpack.c.h.b16 %v1126
    %v3446 = vunpack.c.l.b16 %v1127
    %v3447 = vunpack.c.h.b16 %v1127
    %v3448 = vunpack.c.l.b16 %v1128
    %v3449 = vunpack.c.h.b16 %v1128
    %v3450 = vunpack.c.l.b16 %v1129
    %v3451 = vunpack.c.h.b16 %v1129
    %v3452 = vpack.c.b16 %v1924, %v1916
    %v3453 = vpack.c.b16 %v1925, %v1917
    %v3454 = vpack.c.b16 %v1926, %v1918
    %v3455 = vpack.c.b16 %v1927, %v1919
    %v3456 = vpack.c.b16 %v1928, %v1920
    %v3457 = vpack.c.b16 %v1929, %v1921
    %v3458 = vpack.c.b16 %v1930, %v1922
    %v3459 = vpack.c.b16 %v1931, %v1923
    %v3460 = vpack.c.b16 %v1940, %v1932
    %v3461 = vpack.c.b16 %v1941, %v1933
    %v3462 = vpack.c.b16 %v1942, %v1934
    %v3463 = vpack.c.b16 %v1943, %v1935
    %v3464 = vpack.c.b16 %v1944, %v1936
    %v3465 = vpack.c.b16 %v1945, %v1937
    %v3466 = vpack.c.b16 %v1946, %v1938
    %v3467 = vpack.c.b16 %v1947, %v1939
    %v3468 = vpack.c.b16 %v1956, %v1948
    %v3469 = vpack.c.b16 %v1957, %v1949
    %v3470 = vpack.c.b16 %v1958, %v1950
    %v3471 = vpack.c.b16 %v1959, %v1951
    %v3472 = vpack.c.b16 %v1960, %v1952
    %v3473 = vpack.c.b16 %v1961, %v1953
    %v3474 = vpack.c.b16 %v1962, %v1954
    %v3475 = vpack.c.b16 %v1963, %v1955
    %v3476 = vpack.c.b16 %v1972, %v1964
    %v3477 = vpack.c.b16 %v1973, %v1965
    %v3478 = vpack.c.b16 %v1974, %v1966
    %v3479 = vpack.c.b16 %v1975, %v1967
    %v3480 = vpack.c.b16 %v1976, %v1968
    %v3481 = vpack.c.b16 %v1977, %v1969
    %v3482 = vpack.c.b16 %v1978, %v1970
    %v3483 = vpack.c.b16 %v1979, %v1971
    %v3484 = vpack.c.b16 %v1988, %v1980
    %v3485 = vpack.c.b16 %v1989, %v1981
    %v3486 = vpack.c.b16 %v1990, %v1982
    %v3487 = vpack.c.b16 %v1991, %v1983
    %v3488 = vpack.c.b16 %v1992, %v1984
    %v3489 = vpack.c.b16 %v1993, %v1985
    %v3490 = vpack.c.b16 %v1994, %v1986
    %v3491 = vpack.c.b16 %v1995, %v1987
    %v3492 = vpack.c.b16 %v2004, %v1996
    %v3493 = vpack.c.b16 %v2005, %v1997
    %v3494 = vpack.c.b16 %v2006, %v1998
    %v3495 = vpack.c.b16 %v2007, %v1999
    %v3496 = vpack.c.b16 %v2008, %v2000
    %v3497 = vpack.c.b16 %v2009, %v2001
    %v3498 = vpack.c.b16 %v2010, %v2002
    %v3499 = vpack.c.b16 %v2011, %v2003
    %v3500 = vpack.c.b16 %v2020, %v2012
    %v3501 = vpack.c.b16 %v2021, %v2013
    %v3502 = vpack.c.b16 %v2022, %v2014
    %v3503 = vpack.c.b16 %v2023, %v2015
    %v3504 = vpack.c.b16 %v2024, %v2016
    %v3505 = vpack.c.b16 %v2025, %v2017
    %v3506 = vpack.c.b16 %v2026, %v2018
    %v3507 = vpack.c.b16 %v2027, %v2019
    %v3508 = vpack.c.b16 %v2036, %v2028
    %v3509 = vpack.c.b16 %v2037, %v2029
    %v3510 = vpack.c.b16 %v2038, %v2030
    %v3511 = vpack.c.b16 %v2039, %v2031
    %v3512 = vpack.c.b16 %v2040, %v2032
    %v3513 = vpack.c.b16 %v2041, %v2033
    %v3514 = vpack.c.b16 %v2042, %v2034
    %v3515 = vpack.c.b16 %v2043, %v2035
    %v3516 = vpack.c.b16 %v2052, %v2044
    %v3517 = vpack.c.b16 %v2053, %v2045
    %v3518 = vpack.c.b16 %v2054, %v2046
    %v3519 = vpack.c.b16 %v2055, %v2047
    %v3520 = vpack.c.b16 %v2056, %v2048
    %v3521 = vpack.c.b16 %v2057, %v2049
    %v3522 = vpack.c.b16 %v2058, %v2050
    %v3523 = vpack.c.b16 %v2059, %v2051
    %v3524 = vpack.c.b16 %v2068, %v2060
    %v3525 = vpack.c.b16 %v2069, %v2061
    %v3526 = vpack.c.b16 %v2070, %v2062
    %v3527 = vpack.c.b16 %v2071, %v2063
    %v3528 = vpack.c.b16 %v2072, %v2064
    %v3529 = vpack.c.b16 %v2073, %v2065
    %v3530 = vpack.c.b16 %v2074, %v2066
    %v3531 = vpack.c.b16 %v2075, %v2067
    %v3532 = vpack.c.b16 %v2084, %v2076
    %v3533 = vpack.c.b16 %v2085, %v2077
    %v3534 = vpack.c.b16 %v2086, %v2078
    %v3535 = vpack.c.b16 %v2087, %v2079
    %v3536 = vpack.c.b16 %v2088, %v2080
    %v3537 = vpack.c.b16 %v2089, %v2081
    %v3538 = vpack.c.b16 %v2090, %v2082
    %v3539 = vpack.c.b16 %v2091, %v2083
    %v3540 = vpack.c.b16 %v2100, %v2092
    %v3541 = vpack.c.b16 %v2101, %v2093
    %v3542 = vpack.c.b16 %v2102, %v2094
    %v3543 = vpack.c.b16 %v2103, %v2095
    %v3544 = vpack.c.b16 %v2104, %v2096
    %v3545 = vpack.c.b16 %v2105, %v2097
    %v3546 = vpack.c.b16 %v2106, %v2098
    %v3547 = vpack.c.b16 %v2107, %v2099
    %v3548 = vpack.c.b16 %v2116, %v2108
    %v3549 = vpack.c.b16 %v2117, %v2109
    %v3550 = vpack.c.b16 %v2118, %v2110
    %v3551 = vpack.c.b16 %v2119, %v2111
    %v3552 = vpack.c.b16 %v2120, %v2112
    %v3553 = vpack.c.b16 %v2121, %v2113
    %v3554 = vpack.c.b16 %v2122, %v2114
    %v3555 = vpack.c.b16 %v2123, %v2115
    %v3556 = vpack.c.b16 %v2132, %v2124
    %v3557 = vpack.c.b16 %v2133, %v2125
    %v3558 = vpack.c.b16 %v2134, %v2126
    %v3559 = vpack.c.b16 %v2135, %v2127
    %v3560 = vpack.c.b16 %v2136, %v2128
    %v3561 = vpack.c.b16 %v2137, %v2129
    %v3562 = vpack.c.b16 %v2138, %v2130
    %v3563 = vpack.c.b16 %v2139, %v2131
    %v3564 = vpack.c.b16 %v2148, %v2140
    %v3565 = vpack.c.b16 %v2149, %v2141
    %v3566 = vpack.c.b16 %v2150, %v2142
    %v3567 = vpack.c.b16 %v2151, %v2143
    %v3568 = vpack.c.b16 %v2152, %v2144
    %v3569 = vpack.c.b16 %v2153, %v2145
    %v3570 = vpack.c.b16 %v2154, %v2146
    %v3571 = vpack.c.b16 %v2155, %v2147
    %v3572 = vpack.c.b16 %v2164, %v2156
    %v3573 = vpack.c.b16 %v2165, %v2157
    %v3574 = vpack.c.b16 %v2166, %v2158
    %v3575 = vpack.c.b16 %v2167, %v2159
    %v3576 = vpack.c.b16 %v2168, %v2160
    %v3577 = vpack.c.b16 %v2169, %v2161
    %v3578 = vpack.c.b16 %v2170, %v2162
    %v3579 = vpack.c.b16 %v2171, %v2163
    %v3580 = vpack.c.b16 %v2180, %v2172
    %v3581 = vpack.c.b16 %v2181, %v2173
    %v3582 = vpack.c.b16 %v2182, %v2174
    %v3583 = vpack.c.b16 %v2183, %v2175
    %v3584 = vpack.c.b16 %v2184, %v2176
    %v3585 = vpack.c.b16 %v2185, %v2177
    %v3586 = vpack.c.b16 %v2186, %v2178
    %v3587 = vpack.c.b16 %v2187, %v2179
    %v3588 = vpack.c.b16 %v2196, %v2188
    %v3589 = vpack.c.b16 %v2197, %v2189
    %v3590 = vpack.c.b16 %v2198, %v2190
    %v3591 = vpack.c.b16 %v2199, %v2191
    %v3592 = vpack.c.b16 %v2200, %v2192
    %v3593 = vpack.c.b16 %v2201, %v2193
    %v3594 = vpack.c.b16 %v2202, %v2194
    %v3595 = vpack.c.b16 %v2203, %v2195
    %v3596 = vpack.c.b16 %v2212, %v2204
    %v3597 = vpack.c.b16 %v2213, %v2205
    %v3598 = vpack.c.b16 %v2214, %v2206
    %v3599 = vpack.c.b16 %v2215, %v2207
    %v3600 = vpack.c.b16 %v2216, %v2208
    %v3601 = vpack.c.b16 %v2217, %v2209
    %v3602 = vpack.c.b16 %v2218, %v2210
    %v3603 = vpack.c.b16 %v2219, %v2211
    %v3604 = vpack.c.b16 %v2228, %v2220
    %v3605 = vpack.c.b16 %v2229, %v2221
    %v3606 = vpack.c.b16 %v2230, %v2222
    %v3607 = vpack.c.b16 %v2231, %v2223
    %v3608 = vpack.c.b16 %v2232, %v2224
    %v3609 = vpack.c.b16 %v2233, %v2225
    %v3610 = vpack.c.b16 %v2234, %v2226
    %v3611 = vpack.c.b16 %v2235, %v2227
    %v3612 = vpack.c.b16 %v2244, %v2236
    %v3613 = vpack.c.b16 %v2245, %v2237
    %v3614 = vpack.c.b16 %v2246, %v2238
    %v3615 = vpack.c.b16 %v2247, %v2239
    %v3616 = vpack.c.b16 %v2248, %v2240
    %v3617 = vpack.c.b16 %v2249, %v2241
    %v3618 = vpack.c.b16 %v2250, %v2242
    %v3619 = vpack.c.b16 %v2251, %v2243
    %v3620 = vpack.c.b16 %v2260, %v2252
    %v3621 = vpack.c.b16 %v2261, %v2253
    %v3622 = vpack.c.b16 %v2262, %v2254
    %v3623 = vpack.c.b16 %v2263, %v2255
    %v3624 = vpack.c.b16 %v2264, %v2256
    %v3625 = vpack.c.b16 %v2265, %v2257
    %v3626 = vpack.c.b16 %v2266, %v2258
    %v3627 = vpack.c.b16 %v2267, %v2259
    %v3628 = vpack.c.b16 %v2276, %v2268
    %v3629 = vpack.c.b16 %v2277, %v2269
    %v3630 = vpack.c.b16 %v2278, %v2270
    %v3631 = vpack.c.b16 %v2279, %v2271
    %v3632 = vpack.c.b16 %v2280, %v2272
    %v3633 = vpack.c.b16 %v2281, %v2273
    %v3634 = vpack.c.b16 %v2282, %v2274
    %v3635 = vpack.c.b16 %v2283, %v2275
    %v3636 = vpack.c.b16 %v2292, %v2284
    %v3637 = vpack.c.b16 %v2293, %v2285
    %v3638 = vpack.c.b16 %v2294, %v2286
    %v3639 = vpack.c.b16 %v2295, %v2287
    %v3640 = vpack.c.b16 %v2296, %v2288
    %v3641 = vpack.c.b16 %v2297, %v2289
    %v3642 = vpack.c.b16 %v2298, %v2290
    %v3643 = vpack.c.b16 %v2299, %v2291
    %v3644 = vpack.c.b16 %v2308, %v2300
    %v3645 = vpack.c.b16 %v2309, %v2301
    %v3646 = vpack.c.b16 %v2310, %v2302
    %v3647 = vpack.c.b16 %v2311, %v2303
    %v3648 = vpack.c.b16 %v2312, %v2304
    %v3649 = vpack.c.b16 %v2313, %v2305
    %v3650 = vpack.c.b16 %v2314, %v2306
    %v3651 = vpack.c.b16 %v2315, %v2307
    %v3652 = vpack.c.b16 %v2324, %v2316
    %v3653 = vpack.c.b16 %v2325, %v2317
    %v3654 = vpack.c.b16 %v2326, %v2318
    %v3655 = vpack.c.b16 %v2327, %v2319
    %v3656 = vpack.c.b16 %v2328, %v2320
    %v3657 = vpack.c.b16 %v2329, %v2321
    %v3658 = vpack.c.b16 %v2330, %v2322
    %v3659 = vpack.c.b16 %v2331, %v2323
    %v3660 = vpack.c.b16 %v2340, %v2332
    %v3661 = vpack.c.b16 %v2341, %v2333
    %v3662 = vpack.c.b16 %v2342, %v2334
    %v3663 = vpack.c.b16 %v2343, %v2335
    %v3664 = vpack.c.b16 %v2344, %v2336
    %v3665 = vpack.c.b16 %v2345, %v2337
    %v3666 = vpack.c.b16 %v2346, %v2338
    %v3667 = vpack.c.b16 %v2347, %v2339
    %v3668 = vpack.c.b16 %v2356, %v2348
    %v3669 = vpack.c.b16 %v2357, %v2349
    %v3670 = vpack.c.b16 %v2358, %v2350
    %v3671 = vpack.c.b16 %v2359, %v2351
    %v3672 = vpack.c.b16 %v2360, %v2352
    %v3673 = vpack.c.b16 %v2361, %v2353
    %v3674 = vpack.c.b16 %v2362, %v2354
    %v3675 = vpack.c.b16 %v2363, %v2355
    %v3676 = vpack.c.b16 %v2372, %v2364
    %v3677 = vpack.c.b16 %v2373, %v2365
    %v3678 = vpack.c.b16 %v2374, %v2366
    %v3679 = vpack.c.b16 %v2375, %v2367
    %v3680 = vpack.c.b16 %v2376, %v2368
    %v3681 = vpack.c.b16 %v2377, %v2369
    %v3682 = vpack.c.b16 %v2378, %v2370
    %v3683 = vpack.c.b16 %v2379, %v2371
    %v3684 = vpack.c.b16 %v2388, %v2380
    %v3685 = vpack.c.b16 %v2389, %v2381
    %v3686 = vpack.c.b16 %v2390, %v2382
    %v3687 = vpack.c.b16 %v2391, %v2383
    %v3688 = vpack.c.b16 %v2392, %v2384
    %v3689 = vpack.c.b16 %v2393, %v2385
    %v3690 = vpack.c.b16 %v2394, %v2386
    %v3691 = vpack.c.b16 %v2395, %v2387
    %v3692 = vpack.c.b16 %v2404, %v2396
    %v3693 = vpack.c.b16 %v2405, %v2397
    %v3694 = vpack.c.b16 %v2406, %v2398
    %v3695 = vpack.c.b16 %v2407, %v2399
    %v3696 = vpack.c.b16 %v2408, %v2400
    %v3697 = vpack.c.b16 %v2409, %v2401
    %v3698 = vpack.c.b16 %v2410, %v2402
    %v3699 = vpack.c.b16 %v2411, %v2403
    %v3700 = vpack.c.b16 %v2420, %v2412
    %v3701 = vpack.c.b16 %v2421, %v2413
    %v3702 = vpack.c.b16 %v2422, %v2414
    %v3703 = vpack.c.b16 %v2423, %v2415
    %v3704 = vpack.c.b16 %v2424, %v2416
    %v3705 = vpack.c.b16 %v2425, %v2417
    %v3706 = vpack.c.b16 %v2426, %v2418
    %v3707 = vpack.c.b16 %v2427, %v2419
    %v3708 = vpack.c.b16 %v2436, %v2428
    %v3709 = vpack.c.b16 %v2437, %v2429
    %v3710 = vpack.c.b16 %v2438, %v2430
    %v3711 = vpack.c.b16 %v2439, %v2431
    %v3712 = vpack.c.b16 %v2440, %v2432
    %v3713 = vpack.c.b16 %v2441, %v2433
    %v3714 = vpack.c.b16 %v2442, %v2434
    %v3715 = vpack.c.b16 %v2443, %v2435
    %v3716 = vpack.c.b16 %v2452, %v2444
    %v3717 = vpack.c.b16 %v2453, %v2445
    %v3718 = vpack.c.b16 %v2454, %v2446
    %v3719 = vpack.c.b16 %v2455, %v2447
    %v3720 = vpack.c.b16 %v2456, %v2448
    %v3721 = vpack.c.b16 %v2457, %v2449
    %v3722 = vpack.c.b16 %v2458, %v2450
    %v3723 = vpack.c.b16 %v2459, %v2451
    %v3724 = vpack.c.b16 %v2468, %v2460
    %v3725 = vpack.c.b16 %v2469, %v2461
    %v3726 = vpack.c.b16 %v2470, %v2462
    %v3727 = vpack.c.b16 %v2471, %v2463
    %v3728 = vpack.c.b16 %v2472, %v2464
    %v3729 = vpack.c.b16 %v2473, %v2465
    %v3730 = vpack.c.b16 %v2474, %v2466
    %v3731 = vpack.c.b16 %v2475, %v2467
    %v3732 = vpack.c.b16 %v2484, %v2476
    %v3733 = vpack.c.b16 %v2485, %v2477
    %v3734 = vpack.c.b16 %v2486, %v2478
    %v3735 = vpack.c.b16 %v2487, %v2479
    %v3736 = vpack.c.b16 %v2488, %v2480
    %v3737 = vpack.c.b16 %v2489, %v2481
    %v3738 = vpack.c.b16 %v2490, %v2482
    %v3739 = vpack.c.b16 %v2491, %v2483
    %v3740 = vpack.c.b16 %v2500, %v2492
    %v3741 = vpack.c.b16 %v2501, %v2493
    %v3742 = vpack.c.b16 %v2502, %v2494
    %v3743 = vpack.c.b16 %v2503, %v2495
    %v3744 = vpack.c.b16 %v2504, %v2496
    %v3745 = vpack.c.b16 %v2505, %v2497
    %v3746 = vpack.c.b16 %v2506, %v2498
    %v3747 = vpack.c.b16 %v2507, %v2499
    %v3748 = vpack.c.b16 %v2516, %v2508
    %v3749 = vpack.c.b16 %v2517, %v2509
    %v3750 = vpack.c.b16 %v2518, %v2510
    %v3751 = vpack.c.b16 %v2519, %v2511
    %v3752 = vpack.c.b16 %v2520, %v2512
    %v3753 = vpack.c.b16 %v2521, %v2513
    %v3754 = vpack.c.b16 %v2522, %v2514
    %v3755 = vpack.c.b16 %v2523, %v2515
    %v3756 = vpack.c.b16 %v2532, %v2524
    %v3757 = vpack.c.b16 %v2533, %v2525
    %v3758 = vpack.c.b16 %v2534, %v2526
    %v3759 = vpack.c.b16 %v2535, %v2527
    %v3760 = vpack.c.b16 %v2536, %v2528
    %v3761 = vpack.c.b16 %v2537, %v2529
    %v3762 = vpack.c.b16 %v2538, %v2530
    %v3763 = vpack.c.b16 %v2539, %v2531
    %v3764 = vpack.c.b16 %v2548, %v2540
    %v3765 = vpack.c.b16 %v2549, %v2541
    %v3766 = vpack.c.b16 %v2550, %v2542
    %v3767 = vpack.c.b16 %v2551, %v2543
    %v3768 = vpack.c.b16 %v2552, %v2544
    %v3769 = vpack.c.b16 %v2553, %v2545
    %v3770 = vpack.c.b16 %v2554, %v2546
    %v3771 = vpack.c.b16 %v2555, %v2547
    %v3772 = vpack.c.b16 %v2564, %v2556
    %v3773 = vpack.c.b16 %v2565, %v2557
    %v3774 = vpack.c.b16 %v2566, %v2558
    %v3775 = vpack.c.b16 %v2567, %v2559
    %v3776 = vpack.c.b16 %v2568, %v2560
    %v3777 = vpack.c.b16 %v2569, %v2561
    %v3778 = vpack.c.b16 %v2570, %v2562
    %v3779 = vpack.c.b16 %v2571, %v2563
    %v3780 = vpack.c.b16 %v2580, %v2572
    %v3781 = vpack.c.b16 %v2581, %v2573
    %v3782 = vpack.c.b16 %v2582, %v2574
    %v3783 = vpack.c.b16 %v2583, %v2575
    %v3784 = vpack.c.b16 %v2584, %v2576
    %v3785 = vpack.c.b16 %v2585, %v2577
    %v3786 = vpack.c.b16 %v2586, %v2578
    %v3787 = vpack.c.b16 %v2587, %v2579
    %v3788 = vpack.c.b16 %v2596, %v2588
    %v3789 = vpack.c.b16 %v2597, %v2589
    %v3790 = vpack.c.b16 %v2598, %v2590
    %v3791 = vpack.c.b16 %v2599, %v2591
    %v3792 = vpack.c.b16 %v2600, %v2592
    %v3793 = vpack.c.b16 %v2601, %v2593
    %v3794 = vpack.c.b16 %v2602, %v2594
    %v3795 = vpack.c.b16 %v2603, %v2595
    %v3796 = vpack.c.b16 %v2612, %v2604
    %v3797 = vpack.c.b16 %v2613, %v2605
    %v3798 = vpack.c.b16 %v2614, %v2606
    %v3799 = vpack.c.b16 %v2615, %v2607
    %v3800 = vpack.c.b16 %v2616, %v2608
    %v3801 = vpack.c.b16 %v2617, %v2609
    %v3802 = vpack.c.b16 %v2618, %v2610
    %v3803 = vpack.c.b16 %v2619, %v2611
    %v3804 = vpack.c.b16 %v2628, %v2620
    %v3805 = vpack.c.b16 %v2629, %v2621
    %v3806 = vpack.c.b16 %v2630, %v2622
    %v3807 = vpack.c.b16 %v2631, %v2623
    %v3808 = vpack.c.b16 %v2632, %v2624
    %v3809 = vpack.c.b16 %v2633, %v2625
    %v3810 = vpack.c.b16 %v2634, %v2626
    %v3811 = vpack.c.b16 %v2635, %v2627
    %v3812 = vpack.c.b16 %v2644, %v2636
    %v3813 = vpack.c.b16 %v2645, %v2637
    %v3814 = vpack.c.b16 %v2646, %v2638
    %v3815 = vpack.c.b16 %v2647, %v2639
    %v3816 = vpack.c.b16 %v2648, %v2640
    %v3817 = vpack.c.b16 %v2649, %v2641
    %v3818 = vpack.c.b16 %v2650, %v2642
    %v3819 = vpack.c.b16 %v2651, %v2643
    %v3820 = vpack.c.b16 %v2660, %v2652
    %v3821 = vpack.c.b16 %v2661, %v2653
    %v3822 = vpack.c.b16 %v2662, %v2654
    %v3823 = vpack.c.b16 %v2663, %v2655
    %v3824 = vpack.c.b16 %v2664, %v2656
    %v3825 = vpack.c.b16 %v2665, %v2657
    %v3826 = vpack.c.b16 %v2666, %v2658
    %v3827 = vpack.c.b16 %v2667, %v2659
    %v3828 = vpack.c.b16 %v2676, %v2668
    %v3829 = vpack.c.b16 %v2677, %v2669
    %v3830 = vpack.c.b16 %v2678, %v2670
    %v3831 = vpack.c.b16 %v2679, %v2671
    %v3832 = vpack.c.b16 %v2680, %v2672
    %v3833 = vpack.c.b16 %v2681, %v2673
    %v3834 = vpack.c.b16 %v2682, %v2674
    %v3835 = vpack.c.b16 %v2683, %v2675
    %v3836 = vpack.c.b16 %v2692, %v2684
    %v3837 = vpack.c.b16 %v2693, %v2685
    %v3838 = vpack.c.b16 %v2694, %v2686
    %v3839 = vpack.c.b16 %v2695, %v2687
    %v3840 = vpack.c.b16 %v2696, %v2688
    %v3841 = vpack.c.b16 %v2697, %v2689
    %v3842 = vpack.c.b16 %v2698, %v2690
    %v3843 = vpack.c.b16 %v2699, %v2691
    %v3844 = vpack.c.b16 %v2708, %v2700
    %v3845 = vpack.c.b16 %v2709, %v2701
    %v3846 = vpack.c.b16 %v2710, %v2702
    %v3847 = vpack.c.b16 %v2711, %v2703
    %v3848 = vpack.c.b16 %v2712, %v2704
    %v3849 = vpack.c.b16 %v2713, %v2705
    %v3850 = vpack.c.b16 %v2714, %v2706
    %v3851 = vpack.c.b16 %v2715, %v2707
    %v3852 = vpack.c.b16 %v2724, %v2716
    %v3853 = vpack.c.b16 %v2725, %v2717
    %v3854 = vpack.c.b16 %v2726, %v2718
    %v3855 = vpack.c.b16 %v2727, %v2719
    %v3856 = vpack.c.b16 %v2728, %v2720
    %v3857 = vpack.c.b16 %v2729, %v2721
    %v3858 = vpack.c.b16 %v2730, %v2722
    %v3859 = vpack.c.b16 %v2731, %v2723
    %v3860 = vpack.c.b16 %v2740, %v2732
    %v3861 = vpack.c.b16 %v2741, %v2733
    %v3862 = vpack.c.b16 %v2742, %v2734
    %v3863 = vpack.c.b16 %v2743, %v2735
    %v3864 = vpack.c.b16 %v2744, %v2736
    %v3865 = vpack.c.b16 %v2745, %v2737
    %v3866 = vpack.c.b16 %v2746, %v2738
    %v3867 = vpack.c.b16 %v2747, %v2739
    %v3868 = vpack.c.b16 %v2756, %v2748
    %v3869 = vpack.c.b16 %v2757, %v2749
    %v3870 = vpack.c.b16 %v2758, %v2750
    %v3871 = vpack.c.b16 %v2759, %v2751
    %v3872 = vpack.c.b16 %v2760, %v2752
    %v3873 = vpack.c.b16 %v2761, %v2753
    %v3874 = vpack.c.b16 %v2762, %v2754
    %v3875 = vpack.c.b16 %v2763, %v2755
    %v3876 = vpack.c.b16 %v2772, %v2764
    %v3877 = vpack.c.b16 %v2773, %v2765
    %v3878 = vpack.c.b16 %v2774, %v2766
    %v3879 = vpack.c.b16 %v2775, %v2767
    %v3880 = vpack.c.b16 %v2776, %v2768
    %v3881 = vpack.c.b16 %v2777, %v2769
    %v3882 = vpack.c.b16 %v2778, %v2770
    %v3883 = vpack.c.b16 %v2779, %v2771
    %v3884 = vpack.c.b16 %v2788, %v2780
    %v3885 = vpack.c.b16 %v2789, %v2781
    %v3886 = vpack.c.b16 %v2790, %v2782
    %v3887 = vpack.c.b16 %v2791, %v2783
    %v3888 = vpack.c.b16 %v2792, %v2784
    %v3889 = vpack.c.b16 %v2793, %v2785
    %v3890 = vpack.c.b16 %v2794, %v2786
    %v3891 = vpack.c.b16 %v2795, %v2787
    %v3892 = vpack.c.b16 %v2804, %v2796
    %v3893 = vpack.c.b16 %v2805, %v2797
    %v3894 = vpack.c.b16 %v2806, %v2798
    %v3895 = vpack.c.b16 %v2807, %v2799
    %v3896 = vpack.c.b16 %v2808, %v2800
    %v3897 = vpack.c.b16 %v2809, %v2801
    %v3898 = vpack.c.b16 %v2810, %v2802
    %v3899 = vpack.c.b16 %v2811, %v2803
    %v3900 = vpack.c.b16 %v2820, %v2812
    %v3901 = vpack.c.b16 %v2821, %v2813
    %v3902 = vpack.c.b16 %v2822, %v2814
    %v3903 = vpack.c.b16 %v2823, %v2815
    %v3904 = vpack.c.b16 %v2824, %v2816
    %v3905 = vpack.c.b16 %v2825, %v2817
    %v3906 = vpack.c.b16 %v2826, %v2818
    %v3907 = vpack.c.b16 %v2827, %v2819
    %v3908 = vpack.c.b16 %v2836, %v2828
    %v3909 = vpack.c.b16 %v2837, %v2829
    %v3910 = vpack.c.b16 %v2838, %v2830
    %v3911 = vpack.c.b16 %v2839, %v2831
    %v3912 = vpack.c.b16 %v2840, %v2832
    %v3913 = vpack.c.b16 %v2841, %v2833
    %v3914 = vpack.c.b16 %v2842, %v2834
    %v3915 = vpack.c.b16 %v2843, %v2835
    %v3916 = vpack.c.b16 %v2852, %v2844
    %v3917 = vpack.c.b16 %v2853, %v2845
    %v3918 = vpack.c.b16 %v2854, %v2846
    %v3919 = vpack.c.b16 %v2855, %v2847
    %v3920 = vpack.c.b16 %v2856, %v2848
    %v3921 = vpack.c.b16 %v2857, %v2849
    %v3922 = vpack.c.b16 %v2858, %v2850
    %v3923 = vpack.c.b16 %v2859, %v2851
    %v3924 = vpack.c.b16 %v2868, %v2860
    %v3925 = vpack.c.b16 %v2869, %v2861
    %v3926 = vpack.c.b16 %v2870, %v2862
    %v3927 = vpack.c.b16 %v2871, %v2863
    %v3928 = vpack.c.b16 %v2872, %v2864
    %v3929 = vpack.c.b16 %v2873, %v2865
    %v3930 = vpack.c.b16 %v2874, %v2866
    %v3931 = vpack.c.b16 %v2875, %v2867
    %v3932 = vpack.c.b16 %v2884, %v2876
    %v3933 = vpack.c.b16 %v2885, %v2877
    %v3934 = vpack.c.b16 %v2886, %v2878
    %v3935 = vpack.c.b16 %v2887, %v2879
    %v3936 = vpack.c.b16 %v2888, %v2880
    %v3937 = vpack.c.b16 %v2889, %v2881
    %v3938 = vpack.c.b16 %v2890, %v2882
    %v3939 = vpack.c.b16 %v2891, %v2883
    %v3940 = vpack.c.b16 %v2900, %v2892
    %v3941 = vpack.c.b16 %v2901, %v2893
    %v3942 = vpack.c.b16 %v2902, %v2894
    %v3943 = vpack.c.b16 %v2903, %v2895
    %v3944 = vpack.c.b16 %v2904, %v2896
    %v3945 = vpack.c.b16 %v2905, %v2897
    %v3946 = vpack.c.b16 %v2906, %v2898
    %v3947 = vpack.c.b16 %v2907, %v2899
    %v3948 = vpack.c.b16 %v2916, %v2908
    %v3949 = vpack.c.b16 %v2917, %v2909
    %v3950 = vpack.c.b16 %v2918, %v2910
    %v3951 = vpack.c.b16 %v2919, %v2911
    %v3952 = vpack.c.b16 %v2920, %v2912
    %v3953 = vpack.c.b16 %v2921, %v2913
    %v3954 = vpack.c.b16 %v2922, %v2914
    %v3955 = vpack.c.b16 %v2923, %v2915
    %v3956 = vpack.c.b16 %v2932, %v2924
    %v3957 = vpack.c.b16 %v2933, %v2925
    %v3958 = vpack.c.b16 %v2934, %v2926
    %v3959 = vpack.c.b16 %v2935, %v2927
    %v3960 = vpack.c.b16 %v2936, %v2928
    %v3961 = vpack.c.b16 %v2937, %v2929
    %v3962 = vpack.c.b16 %v2938, %v2930
    %v3963 = vpack.c.b16 %v2939, %v2931
    %v3964 = vpack.c.b16 %v2948, %v2940
    %v3965 = vpack.c.b16 %v2949, %v2941
    %v3966 = vpack.c.b16 %v2950, %v2942
    %v3967 = vpack.c.b16 %v2951, %v2943
    %v3968 = vpack.c.b16 %v2952, %v2944
    %v3969 = vpack.c.b16 %v2953, %v2945
    %v3970 = vpack.c.b16 %v2954, %v2946
    %v3971 = vpack.c.b16 %v2955, %v2947
    %v3972 = vpack.c.b16 %v2964, %v2956
    %v3973 = vpack.c.b16 %v2965, %v2957
    %v3974 = vpack.c.b16 %v2966, %v2958
    %v3975 = vpack.c.b16 %v2967, %v2959
    %v3976 = vpack.c.b16 %v2968, %v2960
    %v3977 = vpack.c.b16 %v2969, %v2961
    %v3978 = vpack.c.b16 %v2970, %v2962
    %v3979 = vpack.c.b16 %v2971, %v2963
    %v3980 = vpack.c.b16 %v2980, %v2972
    %v3981 = vpack.c.b16 %v2981, %v2973
    %v3982 = vpack.c.b16 %v2982, %v2974
    %v3983 = vpack.c.b16 %v2983, %v2975
    %v3984 = vpack.c.b16 %v2984, %v2976
    %v3985 = vpack.c.b16 %v2985, %v2977
    %v3986 = vpack.c.b16 %v2986, %v2978
    %v3987 = vpack.c.b16 %v2987, %v2979
    %v3988 = vpack.c.b16 %v2996, %v2988
    %v3989 = vpack.c.b16 %v2997, %v2989
    %v3990 = vpack.c.b16 %v2998, %v2990
    %v3991 = vpack.c.b16 %v2999, %v2991
    %v3992 = vpack.c.b16 %v3000, %v2992
    %v3993 = vpack.c.b16 %v3001, %v2993
    %v3994 = vpack.c.b16 %v3002, %v2994
    %v3995 = vpack.c.b16 %v3003, %v2995
    %v3996 = vpack.c.b16 %v3012, %v3004
    %v3997 = vpack.c.b16 %v3013, %v3005
    %v3998 = vpack.c.b16 %v3014, %v3006
    %v3999 = vpack.c.b16 %v3015, %v3007
    %v4000 = vpack.c.b16 %v3016, %v3008
    %v4001 = vpack.c.b16 %v3017, %v3009
    %v4002 = vpack.c.b16 %v3018, %v3010
    %v4003 = vpack.c.b16 %v3019, %v3011
    %v4004 = vpack.c.b16 %v3028, %v3020
    %v4005 = vpack.c.b16 %v3029, %v3021
    %v4006 = vpack.c.b16 %v3030, %v3022
    %v4007 = vpack.c.b16 %v3031, %v3023
    %v4008 = vpack.c.b16 %v3032, %v3024
    %v4009 = vpack.c.b16 %v3033, %v3025
    %v4010 = vpack.c.b16 %v3034, %v3026
    %v4011 = vpack.c.b16 %v3035, %v3027
    %v4012 = vpack.c.b16 %v3044, %v3036
    %v4013 = vpack.c.b16 %v3045, %v3037
    %v4014 = vpack.c.b16 %v3046, %v3038
    %v4015 = vpack.c.b16 %v3047, %v3039
    %v4016 = vpack.c.b16 %v3048, %v3040
    %v4017 = vpack.c.b16 %v3049, %v3041
    %v4018 = vpack.c.b16 %v3050, %v3042
    %v4019 = vpack.c.b16 %v3051, %v3043
    %v4020 = vpack.c.b16 %v3060, %v3052
    %v4021 = vpack.c.b16 %v3061, %v3053
    %v4022 = vpack.c.b16 %v3062, %v3054
    %v4023 = vpack.c.b16 %v3063, %v3055
    %v4024 = vpack.c.b16 %v3064, %v3056
    %v4025 = vpack.c.b16 %v3065, %v3057
    %v4026 = vpack.c.b16 %v3066, %v3058
    %v4027 = vpack.c.b16 %v3067, %v3059
    %v4028 = vpack.c.b16 %v3076, %v3068
    %v4029 = vpack.c.b16 %v3077, %v3069
    %v4030 = vpack.c.b16 %v3078, %v3070
    %v4031 = vpack.c.b16 %v3079, %v3071
    %v4032 = vpack.c.b16 %v3080, %v3072
    %v4033 = vpack.c.b16 %v3081, %v3073
    %v4034 = vpack.c.b16 %v3082, %v3074
    %v4035 = vpack.c.b16 %v3083, %v3075
    %v4036 = vpack.c.b16 %v3092, %v3084
    %v4037 = vpack.c.b16 %v3093, %v3085
    %v4038 = vpack.c.b16 %v3094, %v3086
    %v4039 = vpack.c.b16 %v3095, %v3087
    %v4040 = vpack.c.b16 %v3096, %v3088
    %v4041 = vpack.c.b16 %v3097, %v3089
    %v4042 = vpack.c.b16 %v3098, %v3090
    %v4043 = vpack.c.b16 %v3099, %v3091
    %v4044 = vpack.c.b16 %v3108, %v3100
    %v4045 = vpack.c.b16 %v3109, %v3101
    %v4046 = vpack.c.b16 %v3110, %v3102
    %v4047 = vpack.c.b16 %v3111, %v3103
    %v4048 = vpack.c.b16 %v3112, %v3104
    %v4049 = vpack.c.b16 %v3113, %v3105
    %v4050 = vpack.c.b16 %v3114, %v3106
    %v4051 = vpack.c.b16 %v3115, %v3107
    %v4052 = vpack.c.b16 %v3124, %v3116
    %v4053 = vpack.c.b16 %v3125, %v3117
    %v4054 = vpack.c.b16 %v3126, %v3118
    %v4055 = vpack.c.b16 %v3127, %v3119
    %v4056 = vpack.c.b16 %v3128, %v3120
    %v4057 = vpack.c.b16 %v3129, %v3121
    %v4058 = vpack.c.b16 %v3130, %v3122
    %v4059 = vpack.c.b16 %v3131, %v3123
    %v4060 = vpack.c.b16 %v3140, %v3132
    %v4061 = vpack.c.b16 %v3141, %v3133
    %v4062 = vpack.c.b16 %v3142, %v3134
    %v4063 = vpack.c.b16 %v3143, %v3135
    %v4064 = vpack.c.b16 %v3144, %v3136
    %v4065 = vpack.c.b16 %v3145, %v3137
    %v4066 = vpack.c.b16 %v3146, %v3138
    %v4067 = vpack.c.b16 %v3147, %v3139
    %v4068 = vpack.c.b16 %v3156, %v3148
    %v4069 = vpack.c.b16 %v3157, %v3149
    %v4070 = vpack.c.b16 %v3158, %v3150
    %v4071 = vpack.c.b16 %v3159, %v3151
    %v4072 = vpack.c.b16 %v3160, %v3152
    %v4073 = vpack.c.b16 %v3161, %v3153
    %v4074 = vpack.c.b16 %v3162, %v3154
    %v4075 = vpack.c.b16 %v3163, %v3155
    %v4076 = vpack.c.b16 %v3172, %v3164
    %v4077 = vpack.c.b16 %v3173, %v3165
    %v4078 = vpack.c.b16 %v3174, %v3166
    %v4079 = vpack.c.b16 %v3175, %v3167
    %v4080 = vpack.c.b16 %v3176, %v3168
    %v4081 = vpack.c.b16 %v3177, %v3169
    %v4082 = vpack.c.b16 %v3178, %v3170
    %v4083 = vpack.c.b16 %v3179, %v3171
    %v4084 = vpack.c.b16 %v3188, %v3180
    %v4085 = vpack.c.b16 %v3189, %v3181
    %v4086 = vpack.c.b16 %v3190, %v3182
    %v4087 = vpack.c.b16 %v3191, %v3183
    %v4088 = vpack.c.b16 %v3192, %v3184
    %v4089 = vpack.c.b16 %v3193, %v3185
    %v4090 = vpack.c.b16 %v3194, %v3186
    %v4091 = vpack.c.b16 %v3195, %v3187
    %v4092 = vpack.c.b16 %v3204, %v3196
    %v4093 = vpack.c.b16 %v3205, %v3197
    %v4094 = vpack.c.b16 %v3206, %v3198
    %v4095 = vpack.c.b16 %v3207, %v3199
    %v4096 = vpack.c.b16 %v3208, %v3200
    %v4097 = vpack.c.b16 %v3209, %v3201
    %v4098 = vpack.c.b16 %v3210, %v3202
    %v4099 = vpack.c.b16 %v3211, %v3203
    %v4100 = vpack.c.b16 %v3220, %v3212
    %v4101 = vpack.c.b16 %v3221, %v3213
    %v4102 = vpack.c.b16 %v3222, %v3214
    %v4103 = vpack.c.b16 %v3223, %v3215
    %v4104 = vpack.c.b16 %v3224, %v3216
    %v4105 = vpack.c.b16 %v3225, %v3217
    %v4106 = vpack.c.b16 %v3226, %v3218
    %v4107 = vpack.c.b16 %v3227, %v3219
    %v4108 = vpack.c.b16 %v3236, %v3228
    %v4109 = vpack.c.b16 %v3237, %v3229
    %v4110 = vpack.c.b16 %v3238, %v3230
    %v4111 = vpack.c.b16 %v3239, %v3231
    %v4112 = vpack.c.b16 %v3240, %v3232
    %v4113 = vpack.c.b16 %v3241, %v3233
    %v4114 = vpack.c.b16 %v3242, %v3234
    %v4115 = vpack.c.b16 %v3243, %v3235
    %v4116 = vpack.c.b16 %v3252, %v3244
    %v4117 = vpack.c.b16 %v3253, %v3245
    %v4118 = vpack.c.b16 %v3254, %v3246
    %v4119 = vpack.c.b16 %v3255, %v3247
    %v4120 = vpack.c.b16 %v3256, %v3248
    %v4121 = vpack.c.b16 %v3257, %v3249
    %v4122 = vpack.c.b16 %v3258, %v3250
    %v4123 = vpack.c.b16 %v3259, %v3251
    %v4124 = vpack.c.b16 %v3268, %v3260
    %v4125 = vpack.c.b16 %v3269, %v3261
    %v4126 = vpack.c.b16 %v3270, %v3262
    %v4127 = vpack.c.b16 %v3271, %v3263
    %v4128 = vpack.c.b16 %v3272, %v3264
    %v4129 = vpack.c.b16 %v3273, %v3265
    %v4130 = vpack.c.b16 %v3274, %v3266
    %v4131 = vpack.c.b16 %v3275, %v3267
    %v4132 = vpack.c.b16 %v3284, %v3276
    %v4133 = vpack.c.b16 %v3285, %v3277
    %v4134 = vpack.c.b16 %v3286, %v3278
    %v4135 = vpack.c.b16 %v3287, %v3279
    %v4136 = vpack.c.b16 %v3288, %v3280
    %v4137 = vpack.c.b16 %v3289, %v3281
    %v4138 = vpack.c.b16 %v3290, %v3282
    %v4139 = vpack.c.b16 %v3291, %v3283
    %v4140 = vpack.c.b16 %v3300, %v3292
    %v4141 = vpack.c.b16 %v3301, %v3293
    %v4142 = vpack.c.b16 %v3302, %v3294
    %v4143 = vpack.c.b16 %v3303, %v3295
    %v4144 = vpack.c.b16 %v3304, %v3296
    %v4145 = vpack.c.b16 %v3305, %v3297
    %v4146 = vpack.c.b16 %v3306, %v3298
    %v4147 = vpack.c.b16 %v3307, %v3299
    %v4148 = vpack.c.b16 %v3316, %v3308
    %v4149 = vpack.c.b16 %v3317, %v3309
    %v4150 = vpack.c.b16 %v3318, %v3310
    %v4151 = vpack.c.b16 %v3319, %v3311
    %v4152 = vpack.c.b16 %v3320, %v3312
    %v4153 = vpack.c.b16 %v3321, %v3313
    %v4154 = vpack.c.b16 %v3322, %v3314
    %v4155 = vpack.c.b16 %v3323, %v3315
    %v4156 = vpack.c.b16 %v3332, %v3324
    %v4157 = vpack.c.b16 %v3333, %v3325
    %v4158 = vpack.c.b16 %v3334, %v3326
    %v4159 = vpack.c.b16 %v3335, %v3327
    %v4160 = vpack.c.b16 %v3336, %v3328
    %v4161 = vpack.c.b16 %v3337, %v3329
    %v4162 = vpack.c.b16 %v3338, %v3330
    %v4163 = vpack.c.b16 %v3339, %v3331
    %v4164 = vpack.c.b16 %v3348, %v3340
    %v4165 = vpack.c.b16 %v3349, %v3341
    %v4166 = vpack.c.b16 %v3350, %v3342
    %v4167 = vpack.c.b16 %v3351, %v3343
    %v4168 = vpack.c.b16 %v3352, %v3344
    %v4169 = vpack.c.b16 %v3353, %v3345
    %v4170 = vpack.c.b16 %v3354, %v3346
    %v4171 = vpack.c.b16 %v3355, %v3347
    %v4172 = vpack.c.b16 %v3364, %v3356
    %v4173 = vpack.c.b16 %v3365, %v3357
    %v4174 = vpack.c.b16 %v3366, %v3358
    %v4175 = vpack.c.b16 %v3367, %v3359
    %v4176 = vpack.c.b16 %v3368, %v3360
    %v4177 = vpack.c.b16 %v3369, %v3361
    %v4178 = vpack.c.b16 %v3370, %v3362
    %v4179 = vpack.c.b16 %v3371, %v3363
    %v4180 = vpack.c.b16 %v3380, %v3372
    %v4181 = vpack.c.b16 %v3381, %v3373
    %v4182 = vpack.c.b16 %v3382, %v3374
    %v4183 = vpack.c.b16 %v3383, %v3375
    %v4184 = vpack.c.b16 %v3384, %v3376
    %v4185 = vpack.c.b16 %v3385, %v3377
    %v4186 = vpack.c.b16 %v3386, %v3378
    %v4187 = vpack.c.b16 %v3387, %v3379
    %v4188 = vpack.c.b16 %v3396, %v3388
    %v4189 = vpack.c.b16 %v3397, %v3389
    %v4190 = vpack.c.b16 %v3398, %v3390
    %v4191 = vpack.c.b16 %v3399, %v3391
    %v4192 = vpack.c.b16 %v3400, %v3392
    %v4193 = vpack.c.b16 %v3401, %v3393
    %v4194 = vpack.c.b16 %v3402, %v3394
    %v4195 = vpack.c.b16 %v3403, %v3395
    %v4196 = vpack.c.b16 %v3412, %v3404
    %v4197 = vpack.c.b16 %v3413, %v3405
    %v4198 = vpack.c.b16 %v3414, %v3406
    %v4199 = vpack.c.b16 %v3415, %v3407
    %v4200 = vpack.c.b16 %v3416, %v3408
    %v4201 = vpack.c.b16 %v3417, %v3409
    %v4202 = vpack.c.b16 %v3418, %v3410
    %v4203 = vpack.c.b16 %v3419, %v3411
    %v4204 = vpack.c.b16 %v3428, %v3420
    %v4205 = vpack.c.b16 %v3429, %v3421
    %v4206 = vpack.c.b16 %v3430, %v3422
    %v4207 = vpack.c.b16 %v3431, %v3423
    %v4208 = vpack.c.b16 %v3432, %v3424
    %v4209 = vpack.c.b16 %v3433, %v3425
    %v4210 = vpack.c.b16 %v3434, %v3426
    %v4211 = vpack.c.b16 %v3435, %v3427
    %v4212 = vpack.c.b16 %v3444, %v3436
    %v4213 = vpack.c.b16 %v3445, %v3437
    %v4214 = vpack.c.b16 %v3446, %v3438
    %v4215 = vpack.c.b16 %v3447, %v3439
    %v4216 = vpack.c.b16 %v3448, %v3440
    %v4217 = vpack.c.b16 %v3449, %v3441
    %v4218 = vpack.c.b16 %v3450, %v3442
    %v4219 = vpack.c.b16 %v3451, %v3443
    %4988 = vmatpush.bf16.msra.mxu0 %v3508
    %4989 = vmatpush.bf16.msra.mxu0 %v3500
    %4990 = vmatpush.bf16.msra.mxu0 %v3492
    %4991 = vmatpush.bf16.msra.mxu0 %v3484
    %4992 = vmatpush.bf16.msra.mxu0 %v3476
    %4993 = vmatpush.bf16.msra.mxu0 %v3468
    %4994 = vmatpush.bf16.msra.mxu0 %v3460
    %4995 = vmatpush.bf16.msra.mxu0 %v3452
    %4996 = vmatmul.bf16.gmra.mxu0 %v350
    %v4997 = vpop.f32.mrf.mxu0
    %v4998 = vadd.f32 %v1132, %v4997
    %v4999 = vpop.f32.mrf.mxu0
    %5000 = vdwg.mxu0
    %5001 = vmatpush.bf16.msra.mxu0 %v3572
    %5002 = vmatpush.bf16.msra.mxu0 %v3564
    %5003 = vmatpush.bf16.msra.mxu0 %v3556
    %5004 = vmatpush.bf16.msra.mxu0 %v3548
    %5005 = vmatpush.bf16.msra.mxu0 %v3540
    %5006 = vmatpush.bf16.msra.mxu0 %v3532
    %5007 = vmatpush.bf16.msra.mxu0 %v3524
    %5008 = vmatpush.bf16.msra.mxu0 %v3516
    %5009 = vmatmul.bf16.gmra.mxu0 %v351
    %v5010 = vpop.f32.mrf.mxu0
    %v5011 = vadd.f32 %v4998, %v5010
    %v5012 = vpop.f32.mrf.mxu0
    %5013 = vdwg.mxu0
    %5014 = vmatpush.bf16.msra.mxu0 %v3636
    %5015 = vmatpush.bf16.msra.mxu0 %v3628
    %5016 = vmatpush.bf16.msra.mxu0 %v3620
    %5017 = vmatpush.bf16.msra.mxu0 %v3612
    %5018 = vmatpush.bf16.msra.mxu0 %v3604
    %5019 = vmatpush.bf16.msra.mxu0 %v3596
    %5020 = vmatpush.bf16.msra.mxu0 %v3588
    %5021 = vmatpush.bf16.msra.mxu0 %v3580
    %5022 = vmatmul.bf16.gmra.mxu0 %v352
    %v5023 = vpop.f32.mrf.mxu0
    %v5024 = vadd.f32 %v5011, %v5023
    %v5025 = vpop.f32.mrf.mxu0
    %5026 = vdwg.mxu0
    %5027 = vmatpush.bf16.msra.mxu0 %v3700
    %5028 = vmatpush.bf16.msra.mxu0 %v3692
    %5029 = vmatpush.bf16.msra.mxu0 %v3684
    %5030 = vmatpush.bf16.msra.mxu0 %v3676
    %5031 = vmatpush.bf16.msra.mxu0 %v3668
    %5032 = vmatpush.bf16.msra.mxu0 %v3660
    %5033 = vmatpush.bf16.msra.mxu0 %v3652
    %5034 = vmatpush.bf16.msra.mxu0 %v3644
    %5035 = vmatmul.bf16.gmra.mxu0 %v353
    %v5036 = vpop.f32.mrf.mxu0
    %v5037 = vadd.f32 %v5024, %v5036
    %v5038 = vpop.f32.mrf.mxu0
    %5039 = vdwg.mxu0
    %5040 = vmatpush.bf16.msra.mxu0 %v3764
    %5041 = vmatpush.bf16.msra.mxu0 %v3756
    %5042 = vmatpush.bf16.msra.mxu0 %v3748
    %5043 = vmatpush.bf16.msra.mxu0 %v3740
    %5044 = vmatpush.bf16.msra.mxu0 %v3732
    %5045 = vmatpush.bf16.msra.mxu0 %v3724
    %5046 = vmatpush.bf16.msra.mxu0 %v3716
    %5047 = vmatpush.bf16.msra.mxu0 %v3708
    %5048 = vmatmul.bf16.gmra.mxu0 %v354
    %v5049 = vpop.f32.mrf.mxu0
    %v5050 = vadd.f32 %v5037, %v5049
    %v5051 = vpop.f32.mrf.mxu0
    %5052 = vdwg.mxu0
    %5053 = vmatpush.bf16.msra.mxu0 %v3828
    %5054 = vmatpush.bf16.msra.mxu0 %v3820
    %5055 = vmatpush.bf16.msra.mxu0 %v3812
    %5056 = vmatpush.bf16.msra.mxu0 %v3804
    %5057 = vmatpush.bf16.msra.mxu0 %v3796
    %5058 = vmatpush.bf16.msra.mxu0 %v3788
    %5059 = vmatpush.bf16.msra.mxu0 %v3780
    %5060 = vmatpush.bf16.msra.mxu0 %v3772
    %5061 = vmatmul.bf16.gmra.mxu0 %v355
    %v5062 = vpop.f32.mrf.mxu0
    %v5063 = vadd.f32 %v5050, %v5062
    %v5064 = vpop.f32.mrf.mxu0
    %5065 = vdwg.mxu0
    %5066 = vmatpush.bf16.msra.mxu0 %v3892
    %5067 = vmatpush.bf16.msra.mxu0 %v3884
    %5068 = vmatpush.bf16.msra.mxu0 %v3876
    %5069 = vmatpush.bf16.msra.mxu0 %v3868
    %5070 = vmatpush.bf16.msra.mxu0 %v3860
    %5071 = vmatpush.bf16.msra.mxu0 %v3852
    %5072 = vmatpush.bf16.msra.mxu0 %v3844
    %5073 = vmatpush.bf16.msra.mxu0 %v3836
    %5074 = vmatmul.bf16.gmra.mxu0 %v356
    %v5075 = vpop.f32.mrf.mxu0
    %v5076 = vadd.f32 %v5063, %v5075
    %v5077 = vpop.f32.mrf.mxu0
    %5078 = vdwg.mxu0
    %5079 = vmatpush.bf16.msra.mxu0 %v3956
    %5080 = vmatpush.bf16.msra.mxu0 %v3948
    %5081 = vmatpush.bf16.msra.mxu0 %v3940
    %5082 = vmatpush.bf16.msra.mxu0 %v3932
    %5083 = vmatpush.bf16.msra.mxu0 %v3924
    %5084 = vmatpush.bf16.msra.mxu0 %v3916
    %5085 = vmatpush.bf16.msra.mxu0 %v3908
    %5086 = vmatpush.bf16.msra.mxu0 %v3900
    %5087 = vmatmul.bf16.gmra.mxu0 %v357
    %v5088 = vpop.f32.mrf.mxu0
    %v5089 = vadd.f32 %v5076, %v5088
    %v5090 = vpop.f32.mrf.mxu0
    %5091 = vdwg.mxu0
    %5092 = vmatpush.bf16.msra.mxu0 %v4020
    %5093 = vmatpush.bf16.msra.mxu0 %v4012
    %5094 = vmatpush.bf16.msra.mxu0 %v4004
    %5095 = vmatpush.bf16.msra.mxu0 %v3996
    %5096 = vmatpush.bf16.msra.mxu0 %v3988
    %5097 = vmatpush.bf16.msra.mxu0 %v3980
    %5098 = vmatpush.bf16.msra.mxu0 %v3972
    %5099 = vmatpush.bf16.msra.mxu0 %v3964
    %5100 = vmatmul.bf16.gmra.mxu0 %v358
    %v5101 = vpop.f32.mrf.mxu0
    %v5102 = vadd.f32 %v5089, %v5101
    %v5103 = vpop.f32.mrf.mxu0
    %5104 = vdwg.mxu0
    %5105 = vmatpush.bf16.msra.mxu0 %v4084
    %5106 = vmatpush.bf16.msra.mxu0 %v4076
    %5107 = vmatpush.bf16.msra.mxu0 %v4068
    %5108 = vmatpush.bf16.msra.mxu0 %v4060
    %5109 = vmatpush.bf16.msra.mxu0 %v4052
    %5110 = vmatpush.bf16.msra.mxu0 %v4044
    %5111 = vmatpush.bf16.msra.mxu0 %v4036
    %5112 = vmatpush.bf16.msra.mxu0 %v4028
    %5113 = vmatmul.bf16.gmra.mxu0 %v359
    %v5114 = vpop.f32.mrf.mxu0
    %v5115 = vadd.f32 %v5102, %v5114
    %v5116 = vpop.f32.mrf.mxu0
    %5117 = vdwg.mxu0
    %5118 = vmatpush.bf16.msra.mxu0 %v4148
    %5119 = vmatpush.bf16.msra.mxu0 %v4140
    %5120 = vmatpush.bf16.msra.mxu0 %v4132
    %5121 = vmatpush.bf16.msra.mxu0 %v4124
    %5122 = vmatpush.bf16.msra.mxu0 %v4116
    %5123 = vmatpush.bf16.msra.mxu0 %v4108
    %5124 = vmatpush.bf16.msra.mxu0 %v4100
    %5125 = vmatpush.bf16.msra.mxu0 %v4092
    %5126 = vmatmul.bf16.gmra.mxu0 %v360
    %v5127 = vpop.f32.mrf.mxu0
    %v5128 = vadd.f32 %v5115, %v5127
    %v5129 = vpop.f32.mrf.mxu0
    %5130 = vdwg.mxu0
    %5131 = vmatpush.bf16.msra.mxu0 %v4212
    %5132 = vmatpush.bf16.msra.mxu0 %v4204
    %5133 = vmatpush.bf16.msra.mxu0 %v4196
    %5134 = vmatpush.bf16.msra.mxu0 %v4188
    %5135 = vmatpush.bf16.msra.mxu0 %v4180
    %5136 = vmatpush.bf16.msra.mxu0 %v4172
    %5137 = vmatpush.bf16.msra.mxu0 %v4164
    %5138 = vmatpush.bf16.msra.mxu0 %v4156
    %5139 = vmatmul.bf16.gmra.mxu0 %v361
    %v5140 = vpop.f32.mrf.mxu0
    %v5141 = vadd.f32 %v5128, %v5140
    %v5142 = vpop.f32.mrf.mxu0
    %5143 = vdwg.mxu0
    %5144 = vmatpush.bf16.msra.mxu0 %v3509
    %5145 = vmatpush.bf16.msra.mxu0 %v3501
    %5146 = vmatpush.bf16.msra.mxu0 %v3493
    %5147 = vmatpush.bf16.msra.mxu0 %v3485
    %5148 = vmatpush.bf16.msra.mxu0 %v3477
    %5149 = vmatpush.bf16.msra.mxu0 %v3469
    %5150 = vmatpush.bf16.msra.mxu0 %v3461
    %5151 = vmatpush.bf16.msra.mxu0 %v3453
    %5152 = vmatmul.bf16.gmra.mxu0 %v350
    %v5153 = vpop.f32.mrf.mxu0
    %v5154 = vadd.f32 %v1133, %v5153
    %v5155 = vpop.f32.mrf.mxu0
    %5156 = vdwg.mxu0
    %5157 = vmatpush.bf16.msra.mxu0 %v3573
    %5158 = vmatpush.bf16.msra.mxu0 %v3565
    %5159 = vmatpush.bf16.msra.mxu0 %v3557
    %5160 = vmatpush.bf16.msra.mxu0 %v3549
    %5161 = vmatpush.bf16.msra.mxu0 %v3541
    %5162 = vmatpush.bf16.msra.mxu0 %v3533
    %5163 = vmatpush.bf16.msra.mxu0 %v3525
    %5164 = vmatpush.bf16.msra.mxu0 %v3517
    %5165 = vmatmul.bf16.gmra.mxu0 %v351
    %v5166 = vpop.f32.mrf.mxu0
    %v5167 = vadd.f32 %v5154, %v5166
    %v5168 = vpop.f32.mrf.mxu0
    %5169 = vdwg.mxu0
    %5170 = vmatpush.bf16.msra.mxu0 %v3637
    %5171 = vmatpush.bf16.msra.mxu0 %v3629
    %5172 = vmatpush.bf16.msra.mxu0 %v3621
    %5173 = vmatpush.bf16.msra.mxu0 %v3613
    %5174 = vmatpush.bf16.msra.mxu0 %v3605
    %5175 = vmatpush.bf16.msra.mxu0 %v3597
    %5176 = vmatpush.bf16.msra.mxu0 %v3589
    %5177 = vmatpush.bf16.msra.mxu0 %v3581
    %5178 = vmatmul.bf16.gmra.mxu0 %v352
    %v5179 = vpop.f32.mrf.mxu0
    %v5180 = vadd.f32 %v5167, %v5179
    %v5181 = vpop.f32.mrf.mxu0
    %5182 = vdwg.mxu0
    %5183 = vmatpush.bf16.msra.mxu0 %v3701
    %5184 = vmatpush.bf16.msra.mxu0 %v3693
    %5185 = vmatpush.bf16.msra.mxu0 %v3685
    %5186 = vmatpush.bf16.msra.mxu0 %v3677
    %5187 = vmatpush.bf16.msra.mxu0 %v3669
    %5188 = vmatpush.bf16.msra.mxu0 %v3661
    %5189 = vmatpush.bf16.msra.mxu0 %v3653
    %5190 = vmatpush.bf16.msra.mxu0 %v3645
    %5191 = vmatmul.bf16.gmra.mxu0 %v353
    %v5192 = vpop.f32.mrf.mxu0
    %v5193 = vadd.f32 %v5180, %v5192
    %v5194 = vpop.f32.mrf.mxu0
    %5195 = vdwg.mxu0
    %5196 = vmatpush.bf16.msra.mxu0 %v3765
    %5197 = vmatpush.bf16.msra.mxu0 %v3757
    %5198 = vmatpush.bf16.msra.mxu0 %v3749
    %5199 = vmatpush.bf16.msra.mxu0 %v3741
    %5200 = vmatpush.bf16.msra.mxu0 %v3733
    %5201 = vmatpush.bf16.msra.mxu0 %v3725
    %5202 = vmatpush.bf16.msra.mxu0 %v3717
    %5203 = vmatpush.bf16.msra.mxu0 %v3709
    %5204 = vmatmul.bf16.gmra.mxu0 %v354
    %v5205 = vpop.f32.mrf.mxu0
    %v5206 = vadd.f32 %v5193, %v5205
    %v5207 = vpop.f32.mrf.mxu0
    %5208 = vdwg.mxu0
    %5209 = vmatpush.bf16.msra.mxu0 %v3829
    %5210 = vmatpush.bf16.msra.mxu0 %v3821
    %5211 = vmatpush.bf16.msra.mxu0 %v3813
    %5212 = vmatpush.bf16.msra.mxu0 %v3805
    %5213 = vmatpush.bf16.msra.mxu0 %v3797
    %5214 = vmatpush.bf16.msra.mxu0 %v3789
    %5215 = vmatpush.bf16.msra.mxu0 %v3781
    %5216 = vmatpush.bf16.msra.mxu0 %v3773
    %5217 = vmatmul.bf16.gmra.mxu0 %v355
    %v5218 = vpop.f32.mrf.mxu0
    %v5219 = vadd.f32 %v5206, %v5218
    %v5220 = vpop.f32.mrf.mxu0
    %5221 = vdwg.mxu0
    %5222 = vmatpush.bf16.msra.mxu0 %v3893
    %5223 = vmatpush.bf16.msra.mxu0 %v3885
    %5224 = vmatpush.bf16.msra.mxu0 %v3877
    %5225 = vmatpush.bf16.msra.mxu0 %v3869
    %5226 = vmatpush.bf16.msra.mxu0 %v3861
    %5227 = vmatpush.bf16.msra.mxu0 %v3853
    %5228 = vmatpush.bf16.msra.mxu0 %v3845
    %5229 = vmatpush.bf16.msra.mxu0 %v3837
    %5230 = vmatmul.bf16.gmra.mxu0 %v356
    %v5231 = vpop.f32.mrf.mxu0
    %v5232 = vadd.f32 %v5219, %v5231
    %v5233 = vpop.f32.mrf.mxu0
    %5234 = vdwg.mxu0
    %5235 = vmatpush.bf16.msra.mxu0 %v3957
    %5236 = vmatpush.bf16.msra.mxu0 %v3949
    %5237 = vmatpush.bf16.msra.mxu0 %v3941
    %5238 = vmatpush.bf16.msra.mxu0 %v3933
    %5239 = vmatpush.bf16.msra.mxu0 %v3925
    %5240 = vmatpush.bf16.msra.mxu0 %v3917
    %5241 = vmatpush.bf16.msra.mxu0 %v3909
    %5242 = vmatpush.bf16.msra.mxu0 %v3901
    %5243 = vmatmul.bf16.gmra.mxu0 %v357
    %v5244 = vpop.f32.mrf.mxu0
    %v5245 = vadd.f32 %v5232, %v5244
    %v5246 = vpop.f32.mrf.mxu0
    %5247 = vdwg.mxu0
    %5248 = vmatpush.bf16.msra.mxu0 %v4021
    %5249 = vmatpush.bf16.msra.mxu0 %v4013
    %5250 = vmatpush.bf16.msra.mxu0 %v4005
    %5251 = vmatpush.bf16.msra.mxu0 %v3997
    %5252 = vmatpush.bf16.msra.mxu0 %v3989
    %5253 = vmatpush.bf16.msra.mxu0 %v3981
    %5254 = vmatpush.bf16.msra.mxu0 %v3973
    %5255 = vmatpush.bf16.msra.mxu0 %v3965
    %5256 = vmatmul.bf16.gmra.mxu0 %v358
    %v5257 = vpop.f32.mrf.mxu0
    %v5258 = vadd.f32 %v5245, %v5257
    %v5259 = vpop.f32.mrf.mxu0
    %5260 = vdwg.mxu0
    %5261 = vmatpush.bf16.msra.mxu0 %v4085
    %5262 = vmatpush.bf16.msra.mxu0 %v4077
    %5263 = vmatpush.bf16.msra.mxu0 %v4069
    %5264 = vmatpush.bf16.msra.mxu0 %v4061
    %5265 = vmatpush.bf16.msra.mxu0 %v4053
    %5266 = vmatpush.bf16.msra.mxu0 %v4045
    %5267 = vmatpush.bf16.msra.mxu0 %v4037
    %5268 = vmatpush.bf16.msra.mxu0 %v4029
    %5269 = vmatmul.bf16.gmra.mxu0 %v359
    %v5270 = vpop.f32.mrf.mxu0
    %v5271 = vadd.f32 %v5258, %v5270
    %v5272 = vpop.f32.mrf.mxu0
    %5273 = vdwg.mxu0
    %5274 = vmatpush.bf16.msra.mxu0 %v4149
    %5275 = vmatpush.bf16.msra.mxu0 %v4141
    %5276 = vmatpush.bf16.msra.mxu0 %v4133
    %5277 = vmatpush.bf16.msra.mxu0 %v4125
    %5278 = vmatpush.bf16.msra.mxu0 %v4117
    %5279 = vmatpush.bf16.msra.mxu0 %v4109
    %5280 = vmatpush.bf16.msra.mxu0 %v4101
    %5281 = vmatpush.bf16.msra.mxu0 %v4093
    %5282 = vmatmul.bf16.gmra.mxu0 %v360
    %v5283 = vpop.f32.mrf.mxu0
    %v5284 = vadd.f32 %v5271, %v5283
    %v5285 = vpop.f32.mrf.mxu0
    %5286 = vdwg.mxu0
    %5287 = vmatpush.bf16.msra.mxu0 %v4213
    %5288 = vmatpush.bf16.msra.mxu0 %v4205
    %5289 = vmatpush.bf16.msra.mxu0 %v4197
    %5290 = vmatpush.bf16.msra.mxu0 %v4189
    %5291 = vmatpush.bf16.msra.mxu0 %v4181
    %5292 = vmatpush.bf16.msra.mxu0 %v4173
    %5293 = vmatpush.bf16.msra.mxu0 %v4165
    %5294 = vmatpush.bf16.msra.mxu0 %v4157
    %5295 = vmatmul.bf16.gmra.mxu0 %v361
    %v5296 = vpop.f32.mrf.mxu0
    %v5297 = vadd.f32 %v5284, %v5296
    %v5298 = vpop.f32.mrf.mxu0
    %5299 = vdwg.mxu0
    %5300 = vmatpush.bf16.msra.mxu0 %v3510
    %5301 = vmatpush.bf16.msra.mxu0 %v3502
    %5302 = vmatpush.bf16.msra.mxu0 %v3494
    %5303 = vmatpush.bf16.msra.mxu0 %v3486
    %5304 = vmatpush.bf16.msra.mxu0 %v3478
    %5305 = vmatpush.bf16.msra.mxu0 %v3470
    %5306 = vmatpush.bf16.msra.mxu0 %v3462
    %5307 = vmatpush.bf16.msra.mxu0 %v3454
    %5308 = vmatmul.bf16.gmra.mxu0 %v350
    %v5309 = vpop.f32.mrf.mxu0
    %v5310 = vadd.f32 %v1134, %v5309
    %v5311 = vpop.f32.mrf.mxu0
    %5312 = vdwg.mxu0
    %5313 = vmatpush.bf16.msra.mxu0 %v3574
    %5314 = vmatpush.bf16.msra.mxu0 %v3566
    %5315 = vmatpush.bf16.msra.mxu0 %v3558
    %5316 = vmatpush.bf16.msra.mxu0 %v3550
    %5317 = vmatpush.bf16.msra.mxu0 %v3542
    %5318 = vmatpush.bf16.msra.mxu0 %v3534
    %5319 = vmatpush.bf16.msra.mxu0 %v3526
    %5320 = vmatpush.bf16.msra.mxu0 %v3518
    %5321 = vmatmul.bf16.gmra.mxu0 %v351
    %v5322 = vpop.f32.mrf.mxu0
    %v5323 = vadd.f32 %v5310, %v5322
    %v5324 = vpop.f32.mrf.mxu0
    %5325 = vdwg.mxu0
    %5326 = vmatpush.bf16.msra.mxu0 %v3638
    %5327 = vmatpush.bf16.msra.mxu0 %v3630
    %5328 = vmatpush.bf16.msra.mxu0 %v3622
    %5329 = vmatpush.bf16.msra.mxu0 %v3614
    %5330 = vmatpush.bf16.msra.mxu0 %v3606
    %5331 = vmatpush.bf16.msra.mxu0 %v3598
    %5332 = vmatpush.bf16.msra.mxu0 %v3590
    %5333 = vmatpush.bf16.msra.mxu0 %v3582
    %5334 = vmatmul.bf16.gmra.mxu0 %v352
    %v5335 = vpop.f32.mrf.mxu0
    %v5336 = vadd.f32 %v5323, %v5335
    %v5337 = vpop.f32.mrf.mxu0
    %5338 = vdwg.mxu0
    %5339 = vmatpush.bf16.msra.mxu0 %v3702
    %5340 = vmatpush.bf16.msra.mxu0 %v3694
    %5341 = vmatpush.bf16.msra.mxu0 %v3686
    %5342 = vmatpush.bf16.msra.mxu0 %v3678
    %5343 = vmatpush.bf16.msra.mxu0 %v3670
    %5344 = vmatpush.bf16.msra.mxu0 %v3662
    %5345 = vmatpush.bf16.msra.mxu0 %v3654
    %5346 = vmatpush.bf16.msra.mxu0 %v3646
    %5347 = vmatmul.bf16.gmra.mxu0 %v353
    %v5348 = vpop.f32.mrf.mxu0
    %v5349 = vadd.f32 %v5336, %v5348
    %v5350 = vpop.f32.mrf.mxu0
    %5351 = vdwg.mxu0
    %5352 = vmatpush.bf16.msra.mxu0 %v3766
    %5353 = vmatpush.bf16.msra.mxu0 %v3758
    %5354 = vmatpush.bf16.msra.mxu0 %v3750
    %5355 = vmatpush.bf16.msra.mxu0 %v3742
    %5356 = vmatpush.bf16.msra.mxu0 %v3734
    %5357 = vmatpush.bf16.msra.mxu0 %v3726
    %5358 = vmatpush.bf16.msra.mxu0 %v3718
    %5359 = vmatpush.bf16.msra.mxu0 %v3710
    %5360 = vmatmul.bf16.gmra.mxu0 %v354
    %v5361 = vpop.f32.mrf.mxu0
    %v5362 = vadd.f32 %v5349, %v5361
    %v5363 = vpop.f32.mrf.mxu0
    %5364 = vdwg.mxu0
    %5365 = vmatpush.bf16.msra.mxu0 %v3830
    %5366 = vmatpush.bf16.msra.mxu0 %v3822
    %5367 = vmatpush.bf16.msra.mxu0 %v3814
    %5368 = vmatpush.bf16.msra.mxu0 %v3806
    %5369 = vmatpush.bf16.msra.mxu0 %v3798
    %5370 = vmatpush.bf16.msra.mxu0 %v3790
    %5371 = vmatpush.bf16.msra.mxu0 %v3782
    %5372 = vmatpush.bf16.msra.mxu0 %v3774
    %5373 = vmatmul.bf16.gmra.mxu0 %v355
    %v5374 = vpop.f32.mrf.mxu0
    %v5375 = vadd.f32 %v5362, %v5374
    %v5376 = vpop.f32.mrf.mxu0
    %5377 = vdwg.mxu0
    %5378 = vmatpush.bf16.msra.mxu0 %v3894
    %5379 = vmatpush.bf16.msra.mxu0 %v3886
    %5380 = vmatpush.bf16.msra.mxu0 %v3878
    %5381 = vmatpush.bf16.msra.mxu0 %v3870
    %5382 = vmatpush.bf16.msra.mxu0 %v3862
    %5383 = vmatpush.bf16.msra.mxu0 %v3854
    %5384 = vmatpush.bf16.msra.mxu0 %v3846
    %5385 = vmatpush.bf16.msra.mxu0 %v3838
    %5386 = vmatmul.bf16.gmra.mxu0 %v356
    %v5387 = vpop.f32.mrf.mxu0
    %v5388 = vadd.f32 %v5375, %v5387
    %v5389 = vpop.f32.mrf.mxu0
    %5390 = vdwg.mxu0
    %5391 = vmatpush.bf16.msra.mxu0 %v3958
    %5392 = vmatpush.bf16.msra.mxu0 %v3950
    %5393 = vmatpush.bf16.msra.mxu0 %v3942
    %5394 = vmatpush.bf16.msra.mxu0 %v3934
    %5395 = vmatpush.bf16.msra.mxu0 %v3926
    %5396 = vmatpush.bf16.msra.mxu0 %v3918
    %5397 = vmatpush.bf16.msra.mxu0 %v3910
    %5398 = vmatpush.bf16.msra.mxu0 %v3902
    %5399 = vmatmul.bf16.gmra.mxu0 %v357
    %v5400 = vpop.f32.mrf.mxu0
    %v5401 = vadd.f32 %v5388, %v5400
    %v5402 = vpop.f32.mrf.mxu0
    %5403 = vdwg.mxu0
    %5404 = vmatpush.bf16.msra.mxu0 %v4022
    %5405 = vmatpush.bf16.msra.mxu0 %v4014
    %5406 = vmatpush.bf16.msra.mxu0 %v4006
    %5407 = vmatpush.bf16.msra.mxu0 %v3998
    %5408 = vmatpush.bf16.msra.mxu0 %v3990
    %5409 = vmatpush.bf16.msra.mxu0 %v3982
    %5410 = vmatpush.bf16.msra.mxu0 %v3974
    %5411 = vmatpush.bf16.msra.mxu0 %v3966
    %5412 = vmatmul.bf16.gmra.mxu0 %v358
    %v5413 = vpop.f32.mrf.mxu0
    %v5414 = vadd.f32 %v5401, %v5413
    %v5415 = vpop.f32.mrf.mxu0
    %5416 = vdwg.mxu0
    %5417 = vmatpush.bf16.msra.mxu0 %v4086
    %5418 = vmatpush.bf16.msra.mxu0 %v4078
    %5419 = vmatpush.bf16.msra.mxu0 %v4070
    %5420 = vmatpush.bf16.msra.mxu0 %v4062
    %5421 = vmatpush.bf16.msra.mxu0 %v4054
    %5422 = vmatpush.bf16.msra.mxu0 %v4046
    %5423 = vmatpush.bf16.msra.mxu0 %v4038
    %5424 = vmatpush.bf16.msra.mxu0 %v4030
    %5425 = vmatmul.bf16.gmra.mxu0 %v359
    %v5426 = vpop.f32.mrf.mxu0
    %v5427 = vadd.f32 %v5414, %v5426
    %v5428 = vpop.f32.mrf.mxu0
    %5429 = vdwg.mxu0
    %5430 = vmatpush.bf16.msra.mxu0 %v4150
    %5431 = vmatpush.bf16.msra.mxu0 %v4142
    %5432 = vmatpush.bf16.msra.mxu0 %v4134
    %5433 = vmatpush.bf16.msra.mxu0 %v4126
    %5434 = vmatpush.bf16.msra.mxu0 %v4118
    %5435 = vmatpush.bf16.msra.mxu0 %v4110
    %5436 = vmatpush.bf16.msra.mxu0 %v4102
    %5437 = vmatpush.bf16.msra.mxu0 %v4094
    %5438 = vmatmul.bf16.gmra.mxu0 %v360
    %v5439 = vpop.f32.mrf.mxu0
    %v5440 = vadd.f32 %v5427, %v5439
    %v5441 = vpop.f32.mrf.mxu0
    %5442 = vdwg.mxu0
    %5443 = vmatpush.bf16.msra.mxu0 %v4214
    %5444 = vmatpush.bf16.msra.mxu0 %v4206
    %5445 = vmatpush.bf16.msra.mxu0 %v4198
    %5446 = vmatpush.bf16.msra.mxu0 %v4190
    %5447 = vmatpush.bf16.msra.mxu0 %v4182
    %5448 = vmatpush.bf16.msra.mxu0 %v4174
    %5449 = vmatpush.bf16.msra.mxu0 %v4166
    %5450 = vmatpush.bf16.msra.mxu0 %v4158
    %5451 = vmatmul.bf16.gmra.mxu0 %v361
    %v5452 = vpop.f32.mrf.mxu0
    %v5453 = vadd.f32 %v5440, %v5452
    %v5454 = vpop.f32.mrf.mxu0
    %5455 = vdwg.mxu0
    %5456 = vmatpush.bf16.msra.mxu0 %v3511
    %5457 = vmatpush.bf16.msra.mxu0 %v3503
    %5458 = vmatpush.bf16.msra.mxu0 %v3495
    %5459 = vmatpush.bf16.msra.mxu0 %v3487
    %5460 = vmatpush.bf16.msra.mxu0 %v3479
    %5461 = vmatpush.bf16.msra.mxu0 %v3471
    %5462 = vmatpush.bf16.msra.mxu0 %v3463
    %5463 = vmatpush.bf16.msra.mxu0 %v3455
    %5464 = vmatmul.bf16.gmra.mxu0 %v350
    %v5465 = vpop.f32.mrf.mxu0
    %v5466 = vadd.f32 %v1135, %v5465
    %v5467 = vpop.f32.mrf.mxu0
    %5468 = vdwg.mxu0
    %5469 = vmatpush.bf16.msra.mxu0 %v3575
    %5470 = vmatpush.bf16.msra.mxu0 %v3567
    %5471 = vmatpush.bf16.msra.mxu0 %v3559
    %5472 = vmatpush.bf16.msra.mxu0 %v3551
    %5473 = vmatpush.bf16.msra.mxu0 %v3543
    %5474 = vmatpush.bf16.msra.mxu0 %v3535
    %5475 = vmatpush.bf16.msra.mxu0 %v3527
    %5476 = vmatpush.bf16.msra.mxu0 %v3519
    %5477 = vmatmul.bf16.gmra.mxu0 %v351
    %v5478 = vpop.f32.mrf.mxu0
    %v5479 = vadd.f32 %v5466, %v5478
    %v5480 = vpop.f32.mrf.mxu0
    %5481 = vdwg.mxu0
    %5482 = vmatpush.bf16.msra.mxu0 %v3639
    %5483 = vmatpush.bf16.msra.mxu0 %v3631
    %5484 = vmatpush.bf16.msra.mxu0 %v3623
    %5485 = vmatpush.bf16.msra.mxu0 %v3615
    %5486 = vmatpush.bf16.msra.mxu0 %v3607
    %5487 = vmatpush.bf16.msra.mxu0 %v3599
    %5488 = vmatpush.bf16.msra.mxu0 %v3591
    %5489 = vmatpush.bf16.msra.mxu0 %v3583
    %5490 = vmatmul.bf16.gmra.mxu0 %v352
    %v5491 = vpop.f32.mrf.mxu0
    %v5492 = vadd.f32 %v5479, %v5491
    %v5493 = vpop.f32.mrf.mxu0
    %5494 = vdwg.mxu0
    %5495 = vmatpush.bf16.msra.mxu0 %v3703
    %5496 = vmatpush.bf16.msra.mxu0 %v3695
    %5497 = vmatpush.bf16.msra.mxu0 %v3687
    %5498 = vmatpush.bf16.msra.mxu0 %v3679
    %5499 = vmatpush.bf16.msra.mxu0 %v3671
    %5500 = vmatpush.bf16.msra.mxu0 %v3663
    %5501 = vmatpush.bf16.msra.mxu0 %v3655
    %5502 = vmatpush.bf16.msra.mxu0 %v3647
    %5503 = vmatmul.bf16.gmra.mxu0 %v353
    %v5504 = vpop.f32.mrf.mxu0
    %v5505 = vadd.f32 %v5492, %v5504
    %v5506 = vpop.f32.mrf.mxu0
    %5507 = vdwg.mxu0
    %5508 = vmatpush.bf16.msra.mxu0 %v3767
    %5509 = vmatpush.bf16.msra.mxu0 %v3759
    %5510 = vmatpush.bf16.msra.mxu0 %v3751
    %5511 = vmatpush.bf16.msra.mxu0 %v3743
    %5512 = vmatpush.bf16.msra.mxu0 %v3735
    %5513 = vmatpush.bf16.msra.mxu0 %v3727
    %5514 = vmatpush.bf16.msra.mxu0 %v3719
    %5515 = vmatpush.bf16.msra.mxu0 %v3711
    %5516 = vmatmul.bf16.gmra.mxu0 %v354
    %v5517 = vpop.f32.mrf.mxu0
    %v5518 = vadd.f32 %v5505, %v5517
    %v5519 = vpop.f32.mrf.mxu0
    %5520 = vdwg.mxu0
    %5521 = vmatpush.bf16.msra.mxu0 %v3831
    %5522 = vmatpush.bf16.msra.mxu0 %v3823
    %5523 = vmatpush.bf16.msra.mxu0 %v3815
    %5524 = vmatpush.bf16.msra.mxu0 %v3807
    %5525 = vmatpush.bf16.msra.mxu0 %v3799
    %5526 = vmatpush.bf16.msra.mxu0 %v3791
    %5527 = vmatpush.bf16.msra.mxu0 %v3783
    %5528 = vmatpush.bf16.msra.mxu0 %v3775
    %5529 = vmatmul.bf16.gmra.mxu0 %v355
    %v5530 = vpop.f32.mrf.mxu0
    %v5531 = vadd.f32 %v5518, %v5530
    %v5532 = vpop.f32.mrf.mxu0
    %5533 = vdwg.mxu0
    %5534 = vmatpush.bf16.msra.mxu0 %v3895
    %5535 = vmatpush.bf16.msra.mxu0 %v3887
    %5536 = vmatpush.bf16.msra.mxu0 %v3879
    %5537 = vmatpush.bf16.msra.mxu0 %v3871
    %5538 = vmatpush.bf16.msra.mxu0 %v3863
    %5539 = vmatpush.bf16.msra.mxu0 %v3855
    %5540 = vmatpush.bf16.msra.mxu0 %v3847
    %5541 = vmatpush.bf16.msra.mxu0 %v3839
    %5542 = vmatmul.bf16.gmra.mxu0 %v356
    %v5543 = vpop.f32.mrf.mxu0
    %v5544 = vadd.f32 %v5531, %v5543
    %v5545 = vpop.f32.mrf.mxu0
    %5546 = vdwg.mxu0
    %5547 = vmatpush.bf16.msra.mxu0 %v3959
    %5548 = vmatpush.bf16.msra.mxu0 %v3951
    %5549 = vmatpush.bf16.msra.mxu0 %v3943
    %5550 = vmatpush.bf16.msra.mxu0 %v3935
    %5551 = vmatpush.bf16.msra.mxu0 %v3927
    %5552 = vmatpush.bf16.msra.mxu0 %v3919
    %5553 = vmatpush.bf16.msra.mxu0 %v3911
    %5554 = vmatpush.bf16.msra.mxu0 %v3903
    %5555 = vmatmul.bf16.gmra.mxu0 %v357
    %v5556 = vpop.f32.mrf.mxu0
    %v5557 = vadd.f32 %v5544, %v5556
    %v5558 = vpop.f32.mrf.mxu0
    %5559 = vdwg.mxu0
    %5560 = vmatpush.bf16.msra.mxu0 %v4023
    %5561 = vmatpush.bf16.msra.mxu0 %v4015
    %5562 = vmatpush.bf16.msra.mxu0 %v4007
    %5563 = vmatpush.bf16.msra.mxu0 %v3999
    %5564 = vmatpush.bf16.msra.mxu0 %v3991
    %5565 = vmatpush.bf16.msra.mxu0 %v3983
    %5566 = vmatpush.bf16.msra.mxu0 %v3975
    %5567 = vmatpush.bf16.msra.mxu0 %v3967
    %5568 = vmatmul.bf16.gmra.mxu0 %v358
    %v5569 = vpop.f32.mrf.mxu0
    %v5570 = vadd.f32 %v5557, %v5569
    %v5571 = vpop.f32.mrf.mxu0
    %5572 = vdwg.mxu0
    %5573 = vmatpush.bf16.msra.mxu0 %v4087
    %5574 = vmatpush.bf16.msra.mxu0 %v4079
    %5575 = vmatpush.bf16.msra.mxu0 %v4071
    %5576 = vmatpush.bf16.msra.mxu0 %v4063
    %5577 = vmatpush.bf16.msra.mxu0 %v4055
    %5578 = vmatpush.bf16.msra.mxu0 %v4047
    %5579 = vmatpush.bf16.msra.mxu0 %v4039
    %5580 = vmatpush.bf16.msra.mxu0 %v4031
    %5581 = vmatmul.bf16.gmra.mxu0 %v359
    %v5582 = vpop.f32.mrf.mxu0
    %v5583 = vadd.f32 %v5570, %v5582
    %v5584 = vpop.f32.mrf.mxu0
    %5585 = vdwg.mxu0
    %5586 = vmatpush.bf16.msra.mxu0 %v4151
    %5587 = vmatpush.bf16.msra.mxu0 %v4143
    %5588 = vmatpush.bf16.msra.mxu0 %v4135
    %5589 = vmatpush.bf16.msra.mxu0 %v4127
    %5590 = vmatpush.bf16.msra.mxu0 %v4119
    %5591 = vmatpush.bf16.msra.mxu0 %v4111
    %5592 = vmatpush.bf16.msra.mxu0 %v4103
    %5593 = vmatpush.bf16.msra.mxu0 %v4095
    %5594 = vmatmul.bf16.gmra.mxu0 %v360
    %v5595 = vpop.f32.mrf.mxu0
    %v5596 = vadd.f32 %v5583, %v5595
    %v5597 = vpop.f32.mrf.mxu0
    %5598 = vdwg.mxu0
    %5599 = vmatpush.bf16.msra.mxu0 %v4215
    %5600 = vmatpush.bf16.msra.mxu0 %v4207
    %5601 = vmatpush.bf16.msra.mxu0 %v4199
    %5602 = vmatpush.bf16.msra.mxu0 %v4191
    %5603 = vmatpush.bf16.msra.mxu0 %v4183
    %5604 = vmatpush.bf16.msra.mxu0 %v4175
    %5605 = vmatpush.bf16.msra.mxu0 %v4167
    %5606 = vmatpush.bf16.msra.mxu0 %v4159
    %5607 = vmatmul.bf16.gmra.mxu0 %v361
    %v5608 = vpop.f32.mrf.mxu0
    %v5609 = vadd.f32 %v5596, %v5608
    %v5610 = vpop.f32.mrf.mxu0
    %5611 = vdwg.mxu0
    %5612 = vmatpush.bf16.msra.mxu0 %v3512
    %5613 = vmatpush.bf16.msra.mxu0 %v3504
    %5614 = vmatpush.bf16.msra.mxu0 %v3496
    %5615 = vmatpush.bf16.msra.mxu0 %v3488
    %5616 = vmatpush.bf16.msra.mxu0 %v3480
    %5617 = vmatpush.bf16.msra.mxu0 %v3472
    %5618 = vmatpush.bf16.msra.mxu0 %v3464
    %5619 = vmatpush.bf16.msra.mxu0 %v3456
    %5620 = vmatmul.bf16.gmra.mxu0 %v350
    %v5621 = vpop.f32.mrf.mxu0
    %v5622 = vadd.f32 %v1136, %v5621
    %v5623 = vpop.f32.mrf.mxu0
    %5624 = vdwg.mxu0
    %5625 = vmatpush.bf16.msra.mxu0 %v3576
    %5626 = vmatpush.bf16.msra.mxu0 %v3568
    %5627 = vmatpush.bf16.msra.mxu0 %v3560
    %5628 = vmatpush.bf16.msra.mxu0 %v3552
    %5629 = vmatpush.bf16.msra.mxu0 %v3544
    %5630 = vmatpush.bf16.msra.mxu0 %v3536
    %5631 = vmatpush.bf16.msra.mxu0 %v3528
    %5632 = vmatpush.bf16.msra.mxu0 %v3520
    %5633 = vmatmul.bf16.gmra.mxu0 %v351
    %v5634 = vpop.f32.mrf.mxu0
    %v5635 = vadd.f32 %v5622, %v5634
    %v5636 = vpop.f32.mrf.mxu0
    %5637 = vdwg.mxu0
    %5638 = vmatpush.bf16.msra.mxu0 %v3640
    %5639 = vmatpush.bf16.msra.mxu0 %v3632
    %5640 = vmatpush.bf16.msra.mxu0 %v3624
    %5641 = vmatpush.bf16.msra.mxu0 %v3616
    %5642 = vmatpush.bf16.msra.mxu0 %v3608
    %5643 = vmatpush.bf16.msra.mxu0 %v3600
    %5644 = vmatpush.bf16.msra.mxu0 %v3592
    %5645 = vmatpush.bf16.msra.mxu0 %v3584
    %5646 = vmatmul.bf16.gmra.mxu0 %v352
    %v5647 = vpop.f32.mrf.mxu0
    %v5648 = vadd.f32 %v5635, %v5647
    %v5649 = vpop.f32.mrf.mxu0
    %5650 = vdwg.mxu0
    %5651 = vmatpush.bf16.msra.mxu0 %v3704
    %5652 = vmatpush.bf16.msra.mxu0 %v3696
    %5653 = vmatpush.bf16.msra.mxu0 %v3688
    %5654 = vmatpush.bf16.msra.mxu0 %v3680
    %5655 = vmatpush.bf16.msra.mxu0 %v3672
    %5656 = vmatpush.bf16.msra.mxu0 %v3664
    %5657 = vmatpush.bf16.msra.mxu0 %v3656
    %5658 = vmatpush.bf16.msra.mxu0 %v3648
    %5659 = vmatmul.bf16.gmra.mxu0 %v353
    %v5660 = vpop.f32.mrf.mxu0
    %v5661 = vadd.f32 %v5648, %v5660
    %v5662 = vpop.f32.mrf.mxu0
    %5663 = vdwg.mxu0
    %5664 = vmatpush.bf16.msra.mxu0 %v3768
    %5665 = vmatpush.bf16.msra.mxu0 %v3760
    %5666 = vmatpush.bf16.msra.mxu0 %v3752
    %5667 = vmatpush.bf16.msra.mxu0 %v3744
    %5668 = vmatpush.bf16.msra.mxu0 %v3736
    %5669 = vmatpush.bf16.msra.mxu0 %v3728
    %5670 = vmatpush.bf16.msra.mxu0 %v3720
    %5671 = vmatpush.bf16.msra.mxu0 %v3712
    %5672 = vmatmul.bf16.gmra.mxu0 %v354
    %v5673 = vpop.f32.mrf.mxu0
    %v5674 = vadd.f32 %v5661, %v5673
    %v5675 = vpop.f32.mrf.mxu0
    %5676 = vdwg.mxu0
    %5677 = vmatpush.bf16.msra.mxu0 %v3832
    %5678 = vmatpush.bf16.msra.mxu0 %v3824
    %5679 = vmatpush.bf16.msra.mxu0 %v3816
    %5680 = vmatpush.bf16.msra.mxu0 %v3808
    %5681 = vmatpush.bf16.msra.mxu0 %v3800
    %5682 = vmatpush.bf16.msra.mxu0 %v3792
    %5683 = vmatpush.bf16.msra.mxu0 %v3784
    %5684 = vmatpush.bf16.msra.mxu0 %v3776
    %5685 = vmatmul.bf16.gmra.mxu0 %v355
    %v5686 = vpop.f32.mrf.mxu0
    %v5687 = vadd.f32 %v5674, %v5686
    %v5688 = vpop.f32.mrf.mxu0
    %5689 = vdwg.mxu0
    %5690 = vmatpush.bf16.msra.mxu0 %v3896
    %5691 = vmatpush.bf16.msra.mxu0 %v3888
    %5692 = vmatpush.bf16.msra.mxu0 %v3880
    %5693 = vmatpush.bf16.msra.mxu0 %v3872
    %5694 = vmatpush.bf16.msra.mxu0 %v3864
    %5695 = vmatpush.bf16.msra.mxu0 %v3856
    %5696 = vmatpush.bf16.msra.mxu0 %v3848
    %5697 = vmatpush.bf16.msra.mxu0 %v3840
    %5698 = vmatmul.bf16.gmra.mxu0 %v356
    %v5699 = vpop.f32.mrf.mxu0
    %v5700 = vadd.f32 %v5687, %v5699
    %v5701 = vpop.f32.mrf.mxu0
    %5702 = vdwg.mxu0
    %5703 = vmatpush.bf16.msra.mxu0 %v3960
    %5704 = vmatpush.bf16.msra.mxu0 %v3952
    %5705 = vmatpush.bf16.msra.mxu0 %v3944
    %5706 = vmatpush.bf16.msra.mxu0 %v3936
    %5707 = vmatpush.bf16.msra.mxu0 %v3928
    %5708 = vmatpush.bf16.msra.mxu0 %v3920
    %5709 = vmatpush.bf16.msra.mxu0 %v3912
    %5710 = vmatpush.bf16.msra.mxu0 %v3904
    %5711 = vmatmul.bf16.gmra.mxu0 %v357
    %v5712 = vpop.f32.mrf.mxu0
    %v5713 = vadd.f32 %v5700, %v5712
    %v5714 = vpop.f32.mrf.mxu0
    %5715 = vdwg.mxu0
    %5716 = vmatpush.bf16.msra.mxu0 %v4024
    %5717 = vmatpush.bf16.msra.mxu0 %v4016
    %5718 = vmatpush.bf16.msra.mxu0 %v4008
    %5719 = vmatpush.bf16.msra.mxu0 %v4000
    %5720 = vmatpush.bf16.msra.mxu0 %v3992
    %5721 = vmatpush.bf16.msra.mxu0 %v3984
    %5722 = vmatpush.bf16.msra.mxu0 %v3976
    %5723 = vmatpush.bf16.msra.mxu0 %v3968
    %5724 = vmatmul.bf16.gmra.mxu0 %v358
    %v5725 = vpop.f32.mrf.mxu0
    %v5726 = vadd.f32 %v5713, %v5725
    %v5727 = vpop.f32.mrf.mxu0
    %5728 = vdwg.mxu0
    %5729 = vmatpush.bf16.msra.mxu0 %v4088
    %5730 = vmatpush.bf16.msra.mxu0 %v4080
    %5731 = vmatpush.bf16.msra.mxu0 %v4072
    %5732 = vmatpush.bf16.msra.mxu0 %v4064
    %5733 = vmatpush.bf16.msra.mxu0 %v4056
    %5734 = vmatpush.bf16.msra.mxu0 %v4048
    %5735 = vmatpush.bf16.msra.mxu0 %v4040
    %5736 = vmatpush.bf16.msra.mxu0 %v4032
    %5737 = vmatmul.bf16.gmra.mxu0 %v359
    %v5738 = vpop.f32.mrf.mxu0
    %v5739 = vadd.f32 %v5726, %v5738
    %v5740 = vpop.f32.mrf.mxu0
    %5741 = vdwg.mxu0
    %5742 = vmatpush.bf16.msra.mxu0 %v4152
    %5743 = vmatpush.bf16.msra.mxu0 %v4144
    %5744 = vmatpush.bf16.msra.mxu0 %v4136
    %5745 = vmatpush.bf16.msra.mxu0 %v4128
    %5746 = vmatpush.bf16.msra.mxu0 %v4120
    %5747 = vmatpush.bf16.msra.mxu0 %v4112
    %5748 = vmatpush.bf16.msra.mxu0 %v4104
    %5749 = vmatpush.bf16.msra.mxu0 %v4096
    %5750 = vmatmul.bf16.gmra.mxu0 %v360
    %v5751 = vpop.f32.mrf.mxu0
    %v5752 = vadd.f32 %v5739, %v5751
    %v5753 = vpop.f32.mrf.mxu0
    %5754 = vdwg.mxu0
    %5755 = vmatpush.bf16.msra.mxu0 %v4216
    %5756 = vmatpush.bf16.msra.mxu0 %v4208
    %5757 = vmatpush.bf16.msra.mxu0 %v4200
    %5758 = vmatpush.bf16.msra.mxu0 %v4192
    %5759 = vmatpush.bf16.msra.mxu0 %v4184
    %5760 = vmatpush.bf16.msra.mxu0 %v4176
    %5761 = vmatpush.bf16.msra.mxu0 %v4168
    %5762 = vmatpush.bf16.msra.mxu0 %v4160
    %5763 = vmatmul.bf16.gmra.mxu0 %v361
    %v5764 = vpop.f32.mrf.mxu0
    %v5765 = vadd.f32 %v5752, %v5764
    %v5766 = vpop.f32.mrf.mxu0
    %5767 = vdwg.mxu0
    %5768 = vmatpush.bf16.msra.mxu0 %v3513
    %5769 = vmatpush.bf16.msra.mxu0 %v3505
    %5770 = vmatpush.bf16.msra.mxu0 %v3497
    %5771 = vmatpush.bf16.msra.mxu0 %v3489
    %5772 = vmatpush.bf16.msra.mxu0 %v3481
    %5773 = vmatpush.bf16.msra.mxu0 %v3473
    %5774 = vmatpush.bf16.msra.mxu0 %v3465
    %5775 = vmatpush.bf16.msra.mxu0 %v3457
    %5776 = vmatmul.bf16.gmra.mxu0 %v350
    %v5777 = vpop.f32.mrf.mxu0
    %v5778 = vadd.f32 %v1137, %v5777
    %v5779 = vpop.f32.mrf.mxu0
    %5780 = vdwg.mxu0
    %5781 = vmatpush.bf16.msra.mxu0 %v3577
    %5782 = vmatpush.bf16.msra.mxu0 %v3569
    %5783 = vmatpush.bf16.msra.mxu0 %v3561
    %5784 = vmatpush.bf16.msra.mxu0 %v3553
    %5785 = vmatpush.bf16.msra.mxu0 %v3545
    %5786 = vmatpush.bf16.msra.mxu0 %v3537
    %5787 = vmatpush.bf16.msra.mxu0 %v3529
    %5788 = vmatpush.bf16.msra.mxu0 %v3521
    %5789 = vmatmul.bf16.gmra.mxu0 %v351
    %v5790 = vpop.f32.mrf.mxu0
    %v5791 = vadd.f32 %v5778, %v5790
    %v5792 = vpop.f32.mrf.mxu0
    %5793 = vdwg.mxu0
    %5794 = vmatpush.bf16.msra.mxu0 %v3641
    %5795 = vmatpush.bf16.msra.mxu0 %v3633
    %5796 = vmatpush.bf16.msra.mxu0 %v3625
    %5797 = vmatpush.bf16.msra.mxu0 %v3617
    %5798 = vmatpush.bf16.msra.mxu0 %v3609
    %5799 = vmatpush.bf16.msra.mxu0 %v3601
    %5800 = vmatpush.bf16.msra.mxu0 %v3593
    %5801 = vmatpush.bf16.msra.mxu0 %v3585
    %5802 = vmatmul.bf16.gmra.mxu0 %v352
    %v5803 = vpop.f32.mrf.mxu0
    %v5804 = vadd.f32 %v5791, %v5803
    %v5805 = vpop.f32.mrf.mxu0
    %5806 = vdwg.mxu0
    %5807 = vmatpush.bf16.msra.mxu0 %v3705
    %5808 = vmatpush.bf16.msra.mxu0 %v3697
    %5809 = vmatpush.bf16.msra.mxu0 %v3689
    %5810 = vmatpush.bf16.msra.mxu0 %v3681
    %5811 = vmatpush.bf16.msra.mxu0 %v3673
    %5812 = vmatpush.bf16.msra.mxu0 %v3665
    %5813 = vmatpush.bf16.msra.mxu0 %v3657
    %5814 = vmatpush.bf16.msra.mxu0 %v3649
    %5815 = vmatmul.bf16.gmra.mxu0 %v353
    %v5816 = vpop.f32.mrf.mxu0
    %v5817 = vadd.f32 %v5804, %v5816
    %v5818 = vpop.f32.mrf.mxu0
    %5819 = vdwg.mxu0
    %5820 = vmatpush.bf16.msra.mxu0 %v3769
    %5821 = vmatpush.bf16.msra.mxu0 %v3761
    %5822 = vmatpush.bf16.msra.mxu0 %v3753
    %5823 = vmatpush.bf16.msra.mxu0 %v3745
    %5824 = vmatpush.bf16.msra.mxu0 %v3737
    %5825 = vmatpush.bf16.msra.mxu0 %v3729
    %5826 = vmatpush.bf16.msra.mxu0 %v3721
    %5827 = vmatpush.bf16.msra.mxu0 %v3713
    %5828 = vmatmul.bf16.gmra.mxu0 %v354
    %v5829 = vpop.f32.mrf.mxu0
    %v5830 = vadd.f32 %v5817, %v5829
    %v5831 = vpop.f32.mrf.mxu0
    %5832 = vdwg.mxu0
    %5833 = vmatpush.bf16.msra.mxu0 %v3833
    %5834 = vmatpush.bf16.msra.mxu0 %v3825
    %5835 = vmatpush.bf16.msra.mxu0 %v3817
    %5836 = vmatpush.bf16.msra.mxu0 %v3809
    %5837 = vmatpush.bf16.msra.mxu0 %v3801
    %5838 = vmatpush.bf16.msra.mxu0 %v3793
    %5839 = vmatpush.bf16.msra.mxu0 %v3785
    %5840 = vmatpush.bf16.msra.mxu0 %v3777
    %5841 = vmatmul.bf16.gmra.mxu0 %v355
    %v5842 = vpop.f32.mrf.mxu0
    %v5843 = vadd.f32 %v5830, %v5842
    %v5844 = vpop.f32.mrf.mxu0
    %5845 = vdwg.mxu0
    %5846 = vmatpush.bf16.msra.mxu0 %v3897
    %5847 = vmatpush.bf16.msra.mxu0 %v3889
    %5848 = vmatpush.bf16.msra.mxu0 %v3881
    %5849 = vmatpush.bf16.msra.mxu0 %v3873
    %5850 = vmatpush.bf16.msra.mxu0 %v3865
    %5851 = vmatpush.bf16.msra.mxu0 %v3857
    %5852 = vmatpush.bf16.msra.mxu0 %v3849
    %5853 = vmatpush.bf16.msra.mxu0 %v3841
    %5854 = vmatmul.bf16.gmra.mxu0 %v356
    %v5855 = vpop.f32.mrf.mxu0
    %v5856 = vadd.f32 %v5843, %v5855
    %v5857 = vpop.f32.mrf.mxu0
    %5858 = vdwg.mxu0
    %5859 = vmatpush.bf16.msra.mxu0 %v3961
    %5860 = vmatpush.bf16.msra.mxu0 %v3953
    %5861 = vmatpush.bf16.msra.mxu0 %v3945
    %5862 = vmatpush.bf16.msra.mxu0 %v3937
    %5863 = vmatpush.bf16.msra.mxu0 %v3929
    %5864 = vmatpush.bf16.msra.mxu0 %v3921
    %5865 = vmatpush.bf16.msra.mxu0 %v3913
    %5866 = vmatpush.bf16.msra.mxu0 %v3905
    %5867 = vmatmul.bf16.gmra.mxu0 %v357
    %v5868 = vpop.f32.mrf.mxu0
    %v5869 = vadd.f32 %v5856, %v5868
    %v5870 = vpop.f32.mrf.mxu0
    %5871 = vdwg.mxu0
    %5872 = vmatpush.bf16.msra.mxu0 %v4025
    %5873 = vmatpush.bf16.msra.mxu0 %v4017
    %5874 = vmatpush.bf16.msra.mxu0 %v4009
    %5875 = vmatpush.bf16.msra.mxu0 %v4001
    %5876 = vmatpush.bf16.msra.mxu0 %v3993
    %5877 = vmatpush.bf16.msra.mxu0 %v3985
    %5878 = vmatpush.bf16.msra.mxu0 %v3977
    %5879 = vmatpush.bf16.msra.mxu0 %v3969
    %5880 = vmatmul.bf16.gmra.mxu0 %v358
    %v5881 = vpop.f32.mrf.mxu0
    %v5882 = vadd.f32 %v5869, %v5881
    %v5883 = vpop.f32.mrf.mxu0
    %5884 = vdwg.mxu0
    %5885 = vmatpush.bf16.msra.mxu0 %v4089
    %5886 = vmatpush.bf16.msra.mxu0 %v4081
    %5887 = vmatpush.bf16.msra.mxu0 %v4073
    %5888 = vmatpush.bf16.msra.mxu0 %v4065
    %5889 = vmatpush.bf16.msra.mxu0 %v4057
    %5890 = vmatpush.bf16.msra.mxu0 %v4049
    %5891 = vmatpush.bf16.msra.mxu0 %v4041
    %5892 = vmatpush.bf16.msra.mxu0 %v4033
    %5893 = vmatmul.bf16.gmra.mxu0 %v359
    %v5894 = vpop.f32.mrf.mxu0
    %v5895 = vadd.f32 %v5882, %v5894
    %v5896 = vpop.f32.mrf.mxu0
    %5897 = vdwg.mxu0
    %5898 = vmatpush.bf16.msra.mxu0 %v4153
    %5899 = vmatpush.bf16.msra.mxu0 %v4145
    %5900 = vmatpush.bf16.msra.mxu0 %v4137
    %5901 = vmatpush.bf16.msra.mxu0 %v4129
    %5902 = vmatpush.bf16.msra.mxu0 %v4121
    %5903 = vmatpush.bf16.msra.mxu0 %v4113
    %5904 = vmatpush.bf16.msra.mxu0 %v4105
    %5905 = vmatpush.bf16.msra.mxu0 %v4097
    %5906 = vmatmul.bf16.gmra.mxu0 %v360
    %v5907 = vpop.f32.mrf.mxu0
    %v5908 = vadd.f32 %v5895, %v5907
    %v5909 = vpop.f32.mrf.mxu0
    %5910 = vdwg.mxu0
    %5911 = vmatpush.bf16.msra.mxu0 %v4217
    %5912 = vmatpush.bf16.msra.mxu0 %v4209
    %5913 = vmatpush.bf16.msra.mxu0 %v4201
    %5914 = vmatpush.bf16.msra.mxu0 %v4193
    %5915 = vmatpush.bf16.msra.mxu0 %v4185
    %5916 = vmatpush.bf16.msra.mxu0 %v4177
    %5917 = vmatpush.bf16.msra.mxu0 %v4169
    %5918 = vmatpush.bf16.msra.mxu0 %v4161
    %5919 = vmatmul.bf16.gmra.mxu0 %v361
    %v5920 = vpop.f32.mrf.mxu0
    %v5921 = vadd.f32 %v5908, %v5920
    %v5922 = vpop.f32.mrf.mxu0
    %5923 = vdwg.mxu0
    %5924 = vmatpush.bf16.msra.mxu0 %v3514
    %5925 = vmatpush.bf16.msra.mxu0 %v3506
    %5926 = vmatpush.bf16.msra.mxu0 %v3498
    %5927 = vmatpush.bf16.msra.mxu0 %v3490
    %5928 = vmatpush.bf16.msra.mxu0 %v3482
    %5929 = vmatpush.bf16.msra.mxu0 %v3474
    %5930 = vmatpush.bf16.msra.mxu0 %v3466
    %5931 = vmatpush.bf16.msra.mxu0 %v3458
    %5932 = vmatmul.bf16.gmra.mxu0 %v350
    %v5933 = vpop.f32.mrf.mxu0
    %v5934 = vadd.f32 %v1138, %v5933
    %v5935 = vpop.f32.mrf.mxu0
    %5936 = vdwg.mxu0
    %5937 = vmatpush.bf16.msra.mxu0 %v3578
    %5938 = vmatpush.bf16.msra.mxu0 %v3570
    %5939 = vmatpush.bf16.msra.mxu0 %v3562
    %5940 = vmatpush.bf16.msra.mxu0 %v3554
    %5941 = vmatpush.bf16.msra.mxu0 %v3546
    %5942 = vmatpush.bf16.msra.mxu0 %v3538
    %5943 = vmatpush.bf16.msra.mxu0 %v3530
    %5944 = vmatpush.bf16.msra.mxu0 %v3522
    %5945 = vmatmul.bf16.gmra.mxu0 %v351
    %v5946 = vpop.f32.mrf.mxu0
    %v5947 = vadd.f32 %v5934, %v5946
    %v5948 = vpop.f32.mrf.mxu0
    %5949 = vdwg.mxu0
    %5950 = vmatpush.bf16.msra.mxu0 %v3642
    %5951 = vmatpush.bf16.msra.mxu0 %v3634
    %5952 = vmatpush.bf16.msra.mxu0 %v3626
    %5953 = vmatpush.bf16.msra.mxu0 %v3618
    %5954 = vmatpush.bf16.msra.mxu0 %v3610
    %5955 = vmatpush.bf16.msra.mxu0 %v3602
    %5956 = vmatpush.bf16.msra.mxu0 %v3594
    %5957 = vmatpush.bf16.msra.mxu0 %v3586
    %5958 = vmatmul.bf16.gmra.mxu0 %v352
    %v5959 = vpop.f32.mrf.mxu0
    %v5960 = vadd.f32 %v5947, %v5959
    %v5961 = vpop.f32.mrf.mxu0
    %5962 = vdwg.mxu0
    %5963 = vmatpush.bf16.msra.mxu0 %v3706
    %5964 = vmatpush.bf16.msra.mxu0 %v3698
    %5965 = vmatpush.bf16.msra.mxu0 %v3690
    %5966 = vmatpush.bf16.msra.mxu0 %v3682
    %5967 = vmatpush.bf16.msra.mxu0 %v3674
    %5968 = vmatpush.bf16.msra.mxu0 %v3666
    %5969 = vmatpush.bf16.msra.mxu0 %v3658
    %5970 = vmatpush.bf16.msra.mxu0 %v3650
    %5971 = vmatmul.bf16.gmra.mxu0 %v353
    %v5972 = vpop.f32.mrf.mxu0
    %v5973 = vadd.f32 %v5960, %v5972
    %v5974 = vpop.f32.mrf.mxu0
    %5975 = vdwg.mxu0
    %5976 = vmatpush.bf16.msra.mxu0 %v3770
    %5977 = vmatpush.bf16.msra.mxu0 %v3762
    %5978 = vmatpush.bf16.msra.mxu0 %v3754
    %5979 = vmatpush.bf16.msra.mxu0 %v3746
    %5980 = vmatpush.bf16.msra.mxu0 %v3738
    %5981 = vmatpush.bf16.msra.mxu0 %v3730
    %5982 = vmatpush.bf16.msra.mxu0 %v3722
    %5983 = vmatpush.bf16.msra.mxu0 %v3714
    %5984 = vmatmul.bf16.gmra.mxu0 %v354
    %v5985 = vpop.f32.mrf.mxu0
    %v5986 = vadd.f32 %v5973, %v5985
    %v5987 = vpop.f32.mrf.mxu0
    %5988 = vdwg.mxu0
    %5989 = vmatpush.bf16.msra.mxu0 %v3834
    %5990 = vmatpush.bf16.msra.mxu0 %v3826
    %5991 = vmatpush.bf16.msra.mxu0 %v3818
    %5992 = vmatpush.bf16.msra.mxu0 %v3810
    %5993 = vmatpush.bf16.msra.mxu0 %v3802
    %5994 = vmatpush.bf16.msra.mxu0 %v3794
    %5995 = vmatpush.bf16.msra.mxu0 %v3786
    %5996 = vmatpush.bf16.msra.mxu0 %v3778
    %5997 = vmatmul.bf16.gmra.mxu0 %v355
    %v5998 = vpop.f32.mrf.mxu0
    %v5999 = vadd.f32 %v5986, %v5998
    %v6000 = vpop.f32.mrf.mxu0
    %6001 = vdwg.mxu0
    %6002 = vmatpush.bf16.msra.mxu0 %v3898
    %6003 = vmatpush.bf16.msra.mxu0 %v3890
    %6004 = vmatpush.bf16.msra.mxu0 %v3882
    %6005 = vmatpush.bf16.msra.mxu0 %v3874
    %6006 = vmatpush.bf16.msra.mxu0 %v3866
    %6007 = vmatpush.bf16.msra.mxu0 %v3858
    %6008 = vmatpush.bf16.msra.mxu0 %v3850
    %6009 = vmatpush.bf16.msra.mxu0 %v3842
    %6010 = vmatmul.bf16.gmra.mxu0 %v356
    %v6011 = vpop.f32.mrf.mxu0
    %v6012 = vadd.f32 %v5999, %v6011
    %v6013 = vpop.f32.mrf.mxu0
    %6014 = vdwg.mxu0
    %6015 = vmatpush.bf16.msra.mxu0 %v3962
    %6016 = vmatpush.bf16.msra.mxu0 %v3954
    %6017 = vmatpush.bf16.msra.mxu0 %v3946
    %6018 = vmatpush.bf16.msra.mxu0 %v3938
    %6019 = vmatpush.bf16.msra.mxu0 %v3930
    %6020 = vmatpush.bf16.msra.mxu0 %v3922
    %6021 = vmatpush.bf16.msra.mxu0 %v3914
    %6022 = vmatpush.bf16.msra.mxu0 %v3906
    %6023 = vmatmul.bf16.gmra.mxu0 %v357
    %v6024 = vpop.f32.mrf.mxu0
    %v6025 = vadd.f32 %v6012, %v6024
    %v6026 = vpop.f32.mrf.mxu0
    %6027 = vdwg.mxu0
    %6028 = vmatpush.bf16.msra.mxu0 %v4026
    %6029 = vmatpush.bf16.msra.mxu0 %v4018
    %6030 = vmatpush.bf16.msra.mxu0 %v4010
    %6031 = vmatpush.bf16.msra.mxu0 %v4002
    %6032 = vmatpush.bf16.msra.mxu0 %v3994
    %6033 = vmatpush.bf16.msra.mxu0 %v3986
    %6034 = vmatpush.bf16.msra.mxu0 %v3978
    %6035 = vmatpush.bf16.msra.mxu0 %v3970
    %6036 = vmatmul.bf16.gmra.mxu0 %v358
    %v6037 = vpop.f32.mrf.mxu0
    %v6038 = vadd.f32 %v6025, %v6037
    %v6039 = vpop.f32.mrf.mxu0
    %6040 = vdwg.mxu0
    %6041 = vmatpush.bf16.msra.mxu0 %v4090
    %6042 = vmatpush.bf16.msra.mxu0 %v4082
    %6043 = vmatpush.bf16.msra.mxu0 %v4074
    %6044 = vmatpush.bf16.msra.mxu0 %v4066
    %6045 = vmatpush.bf16.msra.mxu0 %v4058
    %6046 = vmatpush.bf16.msra.mxu0 %v4050
    %6047 = vmatpush.bf16.msra.mxu0 %v4042
    %6048 = vmatpush.bf16.msra.mxu0 %v4034
    %6049 = vmatmul.bf16.gmra.mxu0 %v359
    %v6050 = vpop.f32.mrf.mxu0
    %v6051 = vadd.f32 %v6038, %v6050
    %v6052 = vpop.f32.mrf.mxu0
    %6053 = vdwg.mxu0
    %6054 = vmatpush.bf16.msra.mxu0 %v4154
    %6055 = vmatpush.bf16.msra.mxu0 %v4146
    %6056 = vmatpush.bf16.msra.mxu0 %v4138
    %6057 = vmatpush.bf16.msra.mxu0 %v4130
    %6058 = vmatpush.bf16.msra.mxu0 %v4122
    %6059 = vmatpush.bf16.msra.mxu0 %v4114
    %6060 = vmatpush.bf16.msra.mxu0 %v4106
    %6061 = vmatpush.bf16.msra.mxu0 %v4098
    %6062 = vmatmul.bf16.gmra.mxu0 %v360
    %v6063 = vpop.f32.mrf.mxu0
    %v6064 = vadd.f32 %v6051, %v6063
    %v6065 = vpop.f32.mrf.mxu0
    %6066 = vdwg.mxu0
    %6067 = vmatpush.bf16.msra.mxu0 %v4218
    %6068 = vmatpush.bf16.msra.mxu0 %v4210
    %6069 = vmatpush.bf16.msra.mxu0 %v4202
    %6070 = vmatpush.bf16.msra.mxu0 %v4194
    %6071 = vmatpush.bf16.msra.mxu0 %v4186
    %6072 = vmatpush.bf16.msra.mxu0 %v4178
    %6073 = vmatpush.bf16.msra.mxu0 %v4170
    %6074 = vmatpush.bf16.msra.mxu0 %v4162
    %6075 = vmatmul.bf16.gmra.mxu0 %v361
    %v6076 = vpop.f32.mrf.mxu0
    %v6077 = vadd.f32 %v6064, %v6076
    %v6078 = vpop.f32.mrf.mxu0
    %6079 = vdwg.mxu0
    %6080 = vmatpush.bf16.msra.mxu0 %v3515
    %6081 = vmatpush.bf16.msra.mxu0 %v3507
    %6082 = vmatpush.bf16.msra.mxu0 %v3499
    %6083 = vmatpush.bf16.msra.mxu0 %v3491
    %6084 = vmatpush.bf16.msra.mxu0 %v3483
    %6085 = vmatpush.bf16.msra.mxu0 %v3475
    %6086 = vmatpush.bf16.msra.mxu0 %v3467
    %6087 = vmatpush.bf16.msra.mxu0 %v3459
    %6088 = vmatmul.bf16.gmra.mxu0 %v350
    %v6089 = vpop.f32.mrf.mxu0
    %v6090 = vadd.f32 %v1139, %v6089
    %v6091 = vpop.f32.mrf.mxu0
    %6092 = vdwg.mxu0
    %6093 = vmatpush.bf16.msra.mxu0 %v3579
    %6094 = vmatpush.bf16.msra.mxu0 %v3571
    %6095 = vmatpush.bf16.msra.mxu0 %v3563
    %6096 = vmatpush.bf16.msra.mxu0 %v3555
    %6097 = vmatpush.bf16.msra.mxu0 %v3547
    %6098 = vmatpush.bf16.msra.mxu0 %v3539
    %6099 = vmatpush.bf16.msra.mxu0 %v3531
    %6100 = vmatpush.bf16.msra.mxu0 %v3523
    %6101 = vmatmul.bf16.gmra.mxu0 %v351
    %v6102 = vpop.f32.mrf.mxu0
    %v6103 = vadd.f32 %v6090, %v6102
    %v6104 = vpop.f32.mrf.mxu0
    %6105 = vdwg.mxu0
    %6106 = vmatpush.bf16.msra.mxu0 %v3643
    %6107 = vmatpush.bf16.msra.mxu0 %v3635
    %6108 = vmatpush.bf16.msra.mxu0 %v3627
    %6109 = vmatpush.bf16.msra.mxu0 %v3619
    %6110 = vmatpush.bf16.msra.mxu0 %v3611
    %6111 = vmatpush.bf16.msra.mxu0 %v3603
    %6112 = vmatpush.bf16.msra.mxu0 %v3595
    %6113 = vmatpush.bf16.msra.mxu0 %v3587
    %6114 = vmatmul.bf16.gmra.mxu0 %v352
    %v6115 = vpop.f32.mrf.mxu0
    %v6116 = vadd.f32 %v6103, %v6115
    %v6117 = vpop.f32.mrf.mxu0
    %6118 = vdwg.mxu0
    %6119 = vmatpush.bf16.msra.mxu0 %v3707
    %6120 = vmatpush.bf16.msra.mxu0 %v3699
    %6121 = vmatpush.bf16.msra.mxu0 %v3691
    %6122 = vmatpush.bf16.msra.mxu0 %v3683
    %6123 = vmatpush.bf16.msra.mxu0 %v3675
    %6124 = vmatpush.bf16.msra.mxu0 %v3667
    %6125 = vmatpush.bf16.msra.mxu0 %v3659
    %6126 = vmatpush.bf16.msra.mxu0 %v3651
    %6127 = vmatmul.bf16.gmra.mxu0 %v353
    %v6128 = vpop.f32.mrf.mxu0
    %v6129 = vadd.f32 %v6116, %v6128
    %v6130 = vpop.f32.mrf.mxu0
    %6131 = vdwg.mxu0
    %6132 = vmatpush.bf16.msra.mxu0 %v3771
    %6133 = vmatpush.bf16.msra.mxu0 %v3763
    %6134 = vmatpush.bf16.msra.mxu0 %v3755
    %6135 = vmatpush.bf16.msra.mxu0 %v3747
    %6136 = vmatpush.bf16.msra.mxu0 %v3739
    %6137 = vmatpush.bf16.msra.mxu0 %v3731
    %6138 = vmatpush.bf16.msra.mxu0 %v3723
    %6139 = vmatpush.bf16.msra.mxu0 %v3715
    %6140 = vmatmul.bf16.gmra.mxu0 %v354
    %v6141 = vpop.f32.mrf.mxu0
    %v6142 = vadd.f32 %v6129, %v6141
    %v6143 = vpop.f32.mrf.mxu0
    %6144 = vdwg.mxu0
    %6145 = vmatpush.bf16.msra.mxu0 %v3835
    %6146 = vmatpush.bf16.msra.mxu0 %v3827
    %6147 = vmatpush.bf16.msra.mxu0 %v3819
    %6148 = vmatpush.bf16.msra.mxu0 %v3811
    %6149 = vmatpush.bf16.msra.mxu0 %v3803
    %6150 = vmatpush.bf16.msra.mxu0 %v3795
    %6151 = vmatpush.bf16.msra.mxu0 %v3787
    %6152 = vmatpush.bf16.msra.mxu0 %v3779
    %6153 = vmatmul.bf16.gmra.mxu0 %v355
    %v6154 = vpop.f32.mrf.mxu0
    %v6155 = vadd.f32 %v6142, %v6154
    %v6156 = vpop.f32.mrf.mxu0
    %6157 = vdwg.mxu0
    %6158 = vmatpush.bf16.msra.mxu0 %v3899
    %6159 = vmatpush.bf16.msra.mxu0 %v3891
    %6160 = vmatpush.bf16.msra.mxu0 %v3883
    %6161 = vmatpush.bf16.msra.mxu0 %v3875
    %6162 = vmatpush.bf16.msra.mxu0 %v3867
    %6163 = vmatpush.bf16.msra.mxu0 %v3859
    %6164 = vmatpush.bf16.msra.mxu0 %v3851
    %6165 = vmatpush.bf16.msra.mxu0 %v3843
    %6166 = vmatmul.bf16.gmra.mxu0 %v356
    %v6167 = vpop.f32.mrf.mxu0
    %v6168 = vadd.f32 %v6155, %v6167
    %v6169 = vpop.f32.mrf.mxu0
    %6170 = vdwg.mxu0
    %6171 = vmatpush.bf16.msra.mxu0 %v3963
    %6172 = vmatpush.bf16.msra.mxu0 %v3955
    %6173 = vmatpush.bf16.msra.mxu0 %v3947
    %6174 = vmatpush.bf16.msra.mxu0 %v3939
    %6175 = vmatpush.bf16.msra.mxu0 %v3931
    %6176 = vmatpush.bf16.msra.mxu0 %v3923
    %6177 = vmatpush.bf16.msra.mxu0 %v3915
    %6178 = vmatpush.bf16.msra.mxu0 %v3907
    %6179 = vmatmul.bf16.gmra.mxu0 %v357
    %v6180 = vpop.f32.mrf.mxu0
    %v6181 = vadd.f32 %v6168, %v6180
    %v6182 = vpop.f32.mrf.mxu0
    %6183 = vdwg.mxu0
    %6184 = vmatpush.bf16.msra.mxu0 %v4027
    %6185 = vmatpush.bf16.msra.mxu0 %v4019
    %6186 = vmatpush.bf16.msra.mxu0 %v4011
    %6187 = vmatpush.bf16.msra.mxu0 %v4003
    %6188 = vmatpush.bf16.msra.mxu0 %v3995
    %6189 = vmatpush.bf16.msra.mxu0 %v3987
    %6190 = vmatpush.bf16.msra.mxu0 %v3979
    %6191 = vmatpush.bf16.msra.mxu0 %v3971
    %6192 = vmatmul.bf16.gmra.mxu0 %v358
    %v6193 = vpop.f32.mrf.mxu0
    %v6194 = vadd.f32 %v6181, %v6193
    %v6195 = vpop.f32.mrf.mxu0
    %6196 = vdwg.mxu0
    %6197 = vmatpush.bf16.msra.mxu0 %v4091
    %6198 = vmatpush.bf16.msra.mxu0 %v4083
    %6199 = vmatpush.bf16.msra.mxu0 %v4075
    %6200 = vmatpush.bf16.msra.mxu0 %v4067
    %6201 = vmatpush.bf16.msra.mxu0 %v4059
    %6202 = vmatpush.bf16.msra.mxu0 %v4051
    %6203 = vmatpush.bf16.msra.mxu0 %v4043
    %6204 = vmatpush.bf16.msra.mxu0 %v4035
    %6205 = vmatmul.bf16.gmra.mxu0 %v359
    %v6206 = vpop.f32.mrf.mxu0
    %v6207 = vadd.f32 %v6194, %v6206
    %v6208 = vpop.f32.mrf.mxu0
    %6209 = vdwg.mxu0
    %6210 = vmatpush.bf16.msra.mxu0 %v4155
    %6211 = vmatpush.bf16.msra.mxu0 %v4147
    %6212 = vmatpush.bf16.msra.mxu0 %v4139
    %6213 = vmatpush.bf16.msra.mxu0 %v4131
    %6214 = vmatpush.bf16.msra.mxu0 %v4123
    %6215 = vmatpush.bf16.msra.mxu0 %v4115
    %6216 = vmatpush.bf16.msra.mxu0 %v4107
    %6217 = vmatpush.bf16.msra.mxu0 %v4099
    %6218 = vmatmul.bf16.gmra.mxu0 %v360
    %v6219 = vpop.f32.mrf.mxu0
    %v6220 = vadd.f32 %v6207, %v6219
    %v6221 = vpop.f32.mrf.mxu0
    %6222 = vdwg.mxu0
    %6223 = vmatpush.bf16.msra.mxu0 %v4219
    %6224 = vmatpush.bf16.msra.mxu0 %v4211
    %6225 = vmatpush.bf16.msra.mxu0 %v4203
    %6226 = vmatpush.bf16.msra.mxu0 %v4195
    %6227 = vmatpush.bf16.msra.mxu0 %v4187
    %6228 = vmatpush.bf16.msra.mxu0 %v4179
    %6229 = vmatpush.bf16.msra.mxu0 %v4171
    %6230 = vmatpush.bf16.msra.mxu0 %v4163
    %6231 = vmatmul.bf16.gmra.mxu0 %v361
    %v6232 = vpop.f32.mrf.mxu0
    %v6233 = vadd.f32 %v6220, %v6232
    %v6234 = vpop.f32.mrf.mxu0
    %6235 = vdwg.mxu0
    %v6236 = vmax.f32 %v5141, 0.0
    %v6237 = vmax.f32 %v5297, 0.0
    %v6238 = vmax.f32 %v5453, 0.0
    %v6239 = vmax.f32 %v5609, 0.0
    %v6240 = vmax.f32 %v5765, 0.0
    %v6241 = vmax.f32 %v5921, 0.0
    %v6242 = vmax.f32 %v6077, 0.0
    %v6243 = vmax.f32 %v6233, 0.0
    %v6244 = vpack.c.bf16 %v6236, %v6236
    %v6245 = vpack.c.bf16 %v6237, %v6237
    %v6246 = vpack.c.bf16 %v6238, %v6238
    %v6247 = vpack.c.bf16 %v6239, %v6239
    %v6248 = vpack.c.bf16 %v6240, %v6240
    %v6249 = vpack.c.bf16 %v6241, %v6241
    %v6250 = vpack.c.bf16 %v6242, %v6242
    %v6251 = vpack.c.bf16 %v6243, %v6243
    %v6252 = vld [vmem:[#allocation8] sm:$0xf]
    %v6253 = vld [vmem:[#allocation8 + $0x4] sm:$0xf]
    %v6254 = vld [vmem:[#allocation8 + $0x8] sm:$0xf]
    %v6255 = vld [vmem:[#allocation8 + $0xc] sm:$0xf]
    %v6256 = vld [vmem:[#allocation8 + $0x10] sm:$0xf]
    %v6257 = vld [vmem:[#allocation8 + $0x14] sm:$0xf]
    %v6258 = vld [vmem:[#allocation8 + $0x18] sm:$0xf]
    %v6259 = vld [vmem:[#allocation8 + $0x1c] sm:$0xf]
    %v6260 = vld [vmem:[#allocation8 + $0x20] sm:$0xf]
    %v6261 = vld [vmem:[#allocation8 + $0x24] sm:$0xf]
    %v6262 = vld [vmem:[#allocation8 + $0x28] sm:$0xf]
    %v6263 = vld [vmem:[#allocation8 + $0x2c] sm:$0xf]
    %v6264 = vld [vmem:[#allocation8 + $0x30] sm:$0xf]
    %v6265 = vld [vmem:[#allocation8 + $0x34] sm:$0xf]
    %v6266 = vld [vmem:[#allocation8 + $0x38] sm:$0xf]
    %v6267 = vld [vmem:[#allocation8 + $0x3c] sm:$0xf]
    %v6268 = vld [vmem:[#allocation8 + $0x40] sm:$0xf]
    %v6269 = vld [vmem:[#allocation8 + $0x44] sm:$0xf]
    %v6270 = vld [vmem:[#allocation8 + $0x48] sm:$0xf]
    %v6271 = vld [vmem:[#allocation8 + $0x4c] sm:$0xf]
    %v6272 = vld [vmem:[#allocation8 + $0x50] sm:$0xf]
    %v6273 = vld [vmem:[#allocation8 + $0x54] sm:$0xf]
    %v6274 = vld [vmem:[#allocation8 + $0x58] sm:$0xf]
    %v6275 = vld [vmem:[#allocation8 + $0x5c] sm:$0xf]
    %v6276 = vld [vmem:[#allocation8 + $0x60] sm:$0xf]
    %v6277 = vld [vmem:[#allocation8 + $0x64] sm:$0xf]
    %v6278 = vld [vmem:[#allocation8 + $0x68] sm:$0xf]
    %v6279 = vld [vmem:[#allocation8 + $0x6c] sm:$0xf]
    %v6280 = vld [vmem:[#allocation8 + $0x70] sm:$0xf]
    %v6281 = vld [vmem:[#allocation8 + $0x74] sm:$0xf]
    %v6282 = vld [vmem:[#allocation8 + $0x78] sm:$0xf]
    %v6283 = vld [vmem:[#allocation8 + $0x7c] sm:$0xf]
    %v6284 = vld [vmem:[#allocation8 + $0x80] sm:$0xf]
    %v6285 = vld [vmem:[#allocation8 + $0x84] sm:$0xf]
    %v6286 = vld [vmem:[#allocation8 + $0x88] sm:$0xf]
    %v6287 = vld [vmem:[#allocation8 + $0x8c] sm:$0xf]
    %v6288 = vld [vmem:[#allocation8 + $0x90] sm:$0xf]
    %v6289 = vld [vmem:[#allocation8 + $0x94] sm:$0xf]
    %v6290 = vld [vmem:[#allocation8 + $0x98] sm:$0xf]
    %v6291 = vld [vmem:[#allocation8 + $0x9c] sm:$0xf]
    %v6292 = vld [vmem:[#allocation8 + $0xa0] sm:$0xf]
    %v6293 = vld [vmem:[#allocation8 + $0xa4] sm:$0xf]
    %v6294 = vld [vmem:[#allocation8 + $0xa8] sm:$0xf]
    %v6295 = vld [vmem:[#allocation8 + $0xac] sm:$0xf]
    %v6296 = vld [vmem:[#allocation8 + $0xb0] sm:$0xf]
    %v6297 = vld [vmem:[#allocation8 + $0xb4] sm:$0xf]
    %v6298 = vld [vmem:[#allocation8 + $0xb8] sm:$0xf]
    %v6299 = vld [vmem:[#allocation8 + $0xbc] sm:$0xf]
    %v6300 = vld [vmem:[#allocation8 + $0xc0] sm:$0xf]
    %v6301 = vld [vmem:[#allocation8 + $0xc4] sm:$0xf]
    %v6302 = vld [vmem:[#allocation8 + $0xc8] sm:$0xf]
    %v6303 = vld [vmem:[#allocation8 + $0xcc] sm:$0xf]
    %v6304 = vld [vmem:[#allocation8 + $0xd0] sm:$0xf]
    %v6305 = vld [vmem:[#allocation8 + $0xd4] sm:$0xf]
    %v6306 = vld [vmem:[#allocation8 + $0xd8] sm:$0xf]
    %v6307 = vld [vmem:[#allocation8 + $0xdc] sm:$0xf]
    %v6308 = vld [vmem:[#allocation8 + $0xe0] sm:$0xf]
    %v6309 = vld [vmem:[#allocation8 + $0xe4] sm:$0xf]
    %v6310 = vld [vmem:[#allocation8 + $0xe8] sm:$0xf]
    %v6311 = vld [vmem:[#allocation8 + $0xec] sm:$0xf]
    %v6312 = vld [vmem:[#allocation8 + $0xf0] sm:$0xf]
    %v6313 = vld [vmem:[#allocation8 + $0xf4] sm:$0xf]
    %v6314 = vld [vmem:[#allocation8 + $0xf8] sm:$0xf]
    %v6315 = vld [vmem:[#allocation8 + $0xfc] sm:$0xf]
    %v6316 = vld [vmem:[#allocation8 + $0x100] sm:$0xf]
    %v6317 = vld [vmem:[#allocation8 + $0x104] sm:$0xf]
    %v6318 = vld [vmem:[#allocation8 + $0x108] sm:$0xf]
    %v6319 = vld [vmem:[#allocation8 + $0x10c] sm:$0xf]
    %v6320 = vld [vmem:[#allocation8 + $0x110] sm:$0xf]
    %v6321 = vld [vmem:[#allocation8 + $0x114] sm:$0xf]
    %v6322 = vld [vmem:[#allocation8 + $0x118] sm:$0xf]
    %v6323 = vld [vmem:[#allocation8 + $0x11c] sm:$0xf]
    %v6324 = vld [vmem:[#allocation8 + $0x120] sm:$0xf]
    %v6325 = vld [vmem:[#allocation8 + $0x124] sm:$0xf]
    %v6326 = vld [vmem:[#allocation8 + $0x128] sm:$0xf]
    %v6327 = vld [vmem:[#allocation8 + $0x12c] sm:$0xf]
    %v6328 = vld [vmem:[#allocation8 + $0x130] sm:$0xf]
    %v6329 = vld [vmem:[#allocation8 + $0x134] sm:$0xf]
    %v6330 = vld [vmem:[#allocation8 + $0x138] sm:$0xf]
    %v6331 = vld [vmem:[#allocation8 + $0x13c] sm:$0xf]
    %v6332 = vld [vmem:[#allocation8 + $0x140] sm:$0xf]
    %v6333 = vld [vmem:[#allocation8 + $0x144] sm:$0xf]
    %v6334 = vld [vmem:[#allocation8 + $0x148] sm:$0xf]
    %v6335 = vld [vmem:[#allocation8 + $0x14c] sm:$0xf]
    %v6336 = vld [vmem:[#allocation8 + $0x150] sm:$0xf]
    %v6337 = vld [vmem:[#allocation8 + $0x154] sm:$0xf]
    %v6338 = vld [vmem:[#allocation8 + $0x158] sm:$0xf]
    %v6339 = vld [vmem:[#allocation8 + $0x15c] sm:$0xf]
    %v6340 = vld [vmem:[#allocation8 + $0x160] sm:$0xf]
    %v6341 = vld [vmem:[#allocation8 + $0x164] sm:$0xf]
    %v6342 = vld [vmem:[#allocation8 + $0x168] sm:$0xf]
    %v6343 = vld [vmem:[#allocation8 + $0x16c] sm:$0xf]
    %v6344 = vld [vmem:[#allocation8 + $0x170] sm:$0xf]
    %v6345 = vld [vmem:[#allocation8 + $0x174] sm:$0xf]
    %v6346 = vld [vmem:[#allocation8 + $0x178] sm:$0xf]
    %v6347 = vld [vmem:[#allocation8 + $0x17c] sm:$0xf]
    %v6348 = vld [vmem:[#allocation8 + $0x180] sm:$0xf]
    %v6349 = vld [vmem:[#allocation8 + $0x184] sm:$0xf]
    %v6350 = vld [vmem:[#allocation8 + $0x188] sm:$0xf]
    %v6351 = vld [vmem:[#allocation8 + $0x18c] sm:$0xf]
    %v6352 = vld [vmem:[#allocation8 + $0x190] sm:$0xf]
    %v6353 = vld [vmem:[#allocation8 + $0x194] sm:$0xf]
    %v6354 = vld [vmem:[#allocation8 + $0x198] sm:$0xf]
    %v6355 = vld [vmem:[#allocation8 + $0x19c] sm:$0xf]
    %v6356 = vld [vmem:[#allocation8 + $0x1a0] sm:$0xf]
    %v6357 = vld [vmem:[#allocation8 + $0x1a4] sm:$0xf]
    %v6358 = vld [vmem:[#allocation8 + $0x1a8] sm:$0xf]
    %v6359 = vld [vmem:[#allocation8 + $0x1ac] sm:$0xf]
    %v6360 = vld [vmem:[#allocation8 + $0x1b0] sm:$0xf]
    %v6361 = vld [vmem:[#allocation8 + $0x1b4] sm:$0xf]
    %v6362 = vld [vmem:[#allocation8 + $0x1b8] sm:$0xf]
    %v6363 = vld [vmem:[#allocation8 + $0x1bc] sm:$0xf]
    %v6364 = vld [vmem:[#allocation8 + $0x1c0] sm:$0xf]
    %v6365 = vld [vmem:[#allocation8 + $0x1c4] sm:$0xf]
    %v6366 = vld [vmem:[#allocation8 + $0x1c8] sm:$0xf]
    %v6367 = vld [vmem:[#allocation8 + $0x1cc] sm:$0xf]
    %v6368 = vld [vmem:[#allocation8 + $0x1d0] sm:$0xf]
    %v6369 = vld [vmem:[#allocation8 + $0x1d4] sm:$0xf]
    %v6370 = vld [vmem:[#allocation8 + $0x1d8] sm:$0xf]
    %v6371 = vld [vmem:[#allocation8 + $0x1dc] sm:$0xf]
    %v6372 = vld [vmem:[#allocation8 + $0x1e0] sm:$0xf]
    %v6373 = vld [vmem:[#allocation8 + $0x1e4] sm:$0xf]
    %v6374 = vld [vmem:[#allocation8 + $0x1e8] sm:$0xf]
    %v6375 = vld [vmem:[#allocation8 + $0x1ec] sm:$0xf]
    %v6376 = vld [vmem:[#allocation8 + $0x1f0] sm:$0xf]
    %v6377 = vld [vmem:[#allocation8 + $0x1f4] sm:$0xf]
    %v6378 = vld [vmem:[#allocation8 + $0x1f8] sm:$0xf]
    %v6379 = vld [vmem:[#allocation8 + $0x1fc] sm:$0xf]
    %v6380 = vld [vmem:[#allocation10] sm:$0x1]
    %v6382 = vperm.slane %v6380, 0
    %v6512 = vunpack.c.l.b16 %v6252
    %v6513 = vunpack.c.l.b16 %v6253
    %v6514 = vunpack.c.l.b16 %v6254
    %v6515 = vunpack.c.l.b16 %v6255
    %v6516 = vunpack.c.l.b16 %v6256
    %v6517 = vunpack.c.l.b16 %v6257
    %v6518 = vunpack.c.l.b16 %v6258
    %v6519 = vunpack.c.l.b16 %v6259
    %v6520 = vunpack.c.l.b16 %v6260
    %v6521 = vunpack.c.l.b16 %v6261
    %v6522 = vunpack.c.l.b16 %v6262
    %v6523 = vunpack.c.l.b16 %v6263
    %v6524 = vunpack.c.l.b16 %v6264
    %v6525 = vunpack.c.l.b16 %v6265
    %v6526 = vunpack.c.l.b16 %v6266
    %v6527 = vunpack.c.l.b16 %v6267
    %v6528 = vunpack.c.l.b16 %v6268
    %v6529 = vunpack.c.l.b16 %v6269
    %v6530 = vunpack.c.l.b16 %v6270
    %v6531 = vunpack.c.l.b16 %v6271
    %v6532 = vunpack.c.l.b16 %v6272
    %v6533 = vunpack.c.l.b16 %v6273
    %v6534 = vunpack.c.l.b16 %v6274
    %v6535 = vunpack.c.l.b16 %v6275
    %v6536 = vunpack.c.l.b16 %v6276
    %v6537 = vunpack.c.l.b16 %v6277
    %v6538 = vunpack.c.l.b16 %v6278
    %v6539 = vunpack.c.l.b16 %v6279
    %v6540 = vunpack.c.l.b16 %v6280
    %v6541 = vunpack.c.l.b16 %v6281
    %v6542 = vunpack.c.l.b16 %v6282
    %v6543 = vunpack.c.l.b16 %v6283
    %v6544 = vunpack.c.l.b16 %v6284
    %v6545 = vunpack.c.l.b16 %v6285
    %v6546 = vunpack.c.l.b16 %v6286
    %v6547 = vunpack.c.l.b16 %v6287
    %v6548 = vunpack.c.l.b16 %v6288
    %v6549 = vunpack.c.l.b16 %v6289
    %v6550 = vunpack.c.l.b16 %v6290
    %v6551 = vunpack.c.l.b16 %v6291
    %v6552 = vunpack.c.l.b16 %v6292
    %v6553 = vunpack.c.l.b16 %v6293
    %v6554 = vunpack.c.l.b16 %v6294
    %v6555 = vunpack.c.l.b16 %v6295
    %v6556 = vunpack.c.l.b16 %v6296
    %v6557 = vunpack.c.l.b16 %v6297
    %v6558 = vunpack.c.l.b16 %v6298
    %v6559 = vunpack.c.l.b16 %v6299
    %v6560 = vunpack.c.l.b16 %v6300
    %v6561 = vunpack.c.l.b16 %v6301
    %v6562 = vunpack.c.l.b16 %v6302
    %v6563 = vunpack.c.l.b16 %v6303
    %v6564 = vunpack.c.l.b16 %v6304
    %v6565 = vunpack.c.l.b16 %v6305
    %v6566 = vunpack.c.l.b16 %v6306
    %v6567 = vunpack.c.l.b16 %v6307
    %v6568 = vunpack.c.l.b16 %v6308
    %v6569 = vunpack.c.l.b16 %v6309
    %v6570 = vunpack.c.l.b16 %v6310
    %v6571 = vunpack.c.l.b16 %v6311
    %v6572 = vunpack.c.l.b16 %v6312
    %v6573 = vunpack.c.l.b16 %v6313
    %v6574 = vunpack.c.l.b16 %v6314
    %v6575 = vunpack.c.l.b16 %v6315
    %v6576 = vunpack.c.l.b16 %v6316
    %v6577 = vunpack.c.l.b16 %v6317
    %v6578 = vunpack.c.l.b16 %v6318
    %v6579 = vunpack.c.l.b16 %v6319
    %v6580 = vunpack.c.l.b16 %v6320
    %v6581 = vunpack.c.l.b16 %v6321
    %v6582 = vunpack.c.l.b16 %v6322
    %v6583 = vunpack.c.l.b16 %v6323
    %v6584 = vunpack.c.l.b16 %v6324
    %v6585 = vunpack.c.l.b16 %v6325
    %v6586 = vunpack.c.l.b16 %v6326
    %v6587 = vunpack.c.l.b16 %v6327
    %v6588 = vunpack.c.l.b16 %v6328
    %v6589 = vunpack.c.l.b16 %v6329
    %v6590 = vunpack.c.l.b16 %v6330
    %v6591 = vunpack.c.l.b16 %v6331
    %v6592 = vunpack.c.l.b16 %v6332
    %v6593 = vunpack.c.l.b16 %v6333
    %v6594 = vunpack.c.l.b16 %v6334
    %v6595 = vunpack.c.l.b16 %v6335
    %v6596 = vunpack.c.l.b16 %v6336
    %v6597 = vunpack.c.l.b16 %v6337
    %v6598 = vunpack.c.l.b16 %v6338
    %v6599 = vunpack.c.l.b16 %v6339
    %v6600 = vunpack.c.l.b16 %v6340
    %v6601 = vunpack.c.l.b16 %v6341
    %v6602 = vunpack.c.l.b16 %v6342
    %v6603 = vunpack.c.l.b16 %v6343
    %v6604 = vunpack.c.l.b16 %v6344
    %v6605 = vunpack.c.l.b16 %v6345
    %v6606 = vunpack.c.l.b16 %v6346
    %v6607 = vunpack.c.l.b16 %v6347
    %v6608 = vunpack.c.l.b16 %v6348
    %v6609 = vunpack.c.l.b16 %v6349
    %v6610 = vunpack.c.l.b16 %v6350
    %v6611 = vunpack.c.l.b16 %v6351
    %v6612 = vunpack.c.l.b16 %v6352
    %v6613 = vunpack.c.l.b16 %v6353
    %v6614 = vunpack.c.l.b16 %v6354
    %v6615 = vunpack.c.l.b16 %v6355
    %v6616 = vunpack.c.l.b16 %v6356
    %v6617 = vunpack.c.l.b16 %v6357
    %v6618 = vunpack.c.l.b16 %v6358
    %v6619 = vunpack.c.l.b16 %v6359
    %v6620 = vunpack.c.l.b16 %v6360
    %v6621 = vunpack.c.l.b16 %v6361
    %v6622 = vunpack.c.l.b16 %v6362
    %v6623 = vunpack.c.l.b16 %v6363
    %v6624 = vunpack.c.l.b16 %v6364
    %v6625 = vunpack.c.l.b16 %v6365
    %v6626 = vunpack.c.l.b16 %v6366
    %v6627 = vunpack.c.l.b16 %v6367
    %v6628 = vunpack.c.l.b16 %v6368
    %v6629 = vunpack.c.l.b16 %v6369
    %v6630 = vunpack.c.l.b16 %v6370
    %v6631 = vunpack.c.l.b16 %v6371
    %v6632 = vunpack.c.l.b16 %v6372
    %v6633 = vunpack.c.l.b16 %v6373
    %v6634 = vunpack.c.l.b16 %v6374
    %v6635 = vunpack.c.l.b16 %v6375
    %v6636 = vunpack.c.l.b16 %v6376
    %v6637 = vunpack.c.l.b16 %v6377
    %v6638 = vunpack.c.l.b16 %v6378
    %v6639 = vunpack.c.l.b16 %v6379
    %v6640 = vpack.c.b16 %v6513, %v6512
    %v6641 = vpack.c.b16 %v6515, %v6514
    %v6642 = vpack.c.b16 %v6517, %v6516
    %v6643 = vpack.c.b16 %v6519, %v6518
    %v6644 = vpack.c.b16 %v6521, %v6520
    %v6645 = vpack.c.b16 %v6523, %v6522
    %v6646 = vpack.c.b16 %v6525, %v6524
    %v6647 = vpack.c.b16 %v6527, %v6526
    %v6648 = vpack.c.b16 %v6529, %v6528
    %v6649 = vpack.c.b16 %v6531, %v6530
    %v6650 = vpack.c.b16 %v6533, %v6532
    %v6651 = vpack.c.b16 %v6535, %v6534
    %v6652 = vpack.c.b16 %v6537, %v6536
    %v6653 = vpack.c.b16 %v6539, %v6538
    %v6654 = vpack.c.b16 %v6541, %v6540
    %v6655 = vpack.c.b16 %v6543, %v6542
    %v6656 = vpack.c.b16 %v6545, %v6544
    %v6657 = vpack.c.b16 %v6547, %v6546
    %v6658 = vpack.c.b16 %v6549, %v6548
    %v6659 = vpack.c.b16 %v6551, %v6550
    %v6660 = vpack.c.b16 %v6553, %v6552
    %v6661 = vpack.c.b16 %v6555, %v6554
    %v6662 = vpack.c.b16 %v6557, %v6556
    %v6663 = vpack.c.b16 %v6559, %v6558
    %v6664 = vpack.c.b16 %v6561, %v6560
    %v6665 = vpack.c.b16 %v6563, %v6562
    %v6666 = vpack.c.b16 %v6565, %v6564
    %v6667 = vpack.c.b16 %v6567, %v6566
    %v6668 = vpack.c.b16 %v6569, %v6568
    %v6669 = vpack.c.b16 %v6571, %v6570
    %v6670 = vpack.c.b16 %v6573, %v6572
    %v6671 = vpack.c.b16 %v6575, %v6574
    %v6672 = vpack.c.b16 %v6577, %v6576
    %v6673 = vpack.c.b16 %v6579, %v6578
    %v6674 = vpack.c.b16 %v6581, %v6580
    %v6675 = vpack.c.b16 %v6583, %v6582
    %v6676 = vpack.c.b16 %v6585, %v6584
    %v6677 = vpack.c.b16 %v6587, %v6586
    %v6678 = vpack.c.b16 %v6589, %v6588
    %v6679 = vpack.c.b16 %v6591, %v6590
    %v6680 = vpack.c.b16 %v6593, %v6592
    %v6681 = vpack.c.b16 %v6595, %v6594
    %v6682 = vpack.c.b16 %v6597, %v6596
    %v6683 = vpack.c.b16 %v6599, %v6598
    %v6684 = vpack.c.b16 %v6601, %v6600
    %v6685 = vpack.c.b16 %v6603, %v6602
    %v6686 = vpack.c.b16 %v6605, %v6604
    %v6687 = vpack.c.b16 %v6607, %v6606
    %v6688 = vpack.c.b16 %v6609, %v6608
    %v6689 = vpack.c.b16 %v6611, %v6610
    %v6690 = vpack.c.b16 %v6613, %v6612
    %v6691 = vpack.c.b16 %v6615, %v6614
    %v6692 = vpack.c.b16 %v6617, %v6616
    %v6693 = vpack.c.b16 %v6619, %v6618
    %v6694 = vpack.c.b16 %v6621, %v6620
    %v6695 = vpack.c.b16 %v6623, %v6622
    %v6696 = vpack.c.b16 %v6625, %v6624
    %v6697 = vpack.c.b16 %v6627, %v6626
    %v6698 = vpack.c.b16 %v6629, %v6628
    %v6699 = vpack.c.b16 %v6631, %v6630
    %v6700 = vpack.c.b16 %v6633, %v6632
    %v6701 = vpack.c.b16 %v6635, %v6634
    %v6702 = vpack.c.b16 %v6637, %v6636
    %v6703 = vpack.c.b16 %v6639, %v6638
    %6768 = vmatpush.bf16.msra.mxu0 %v6647
    %6769 = vmatpush.bf16.msra.mxu0 %v6646
    %6770 = vmatpush.bf16.msra.mxu0 %v6645
    %6771 = vmatpush.bf16.msra.mxu0 %v6644
    %6772 = vmatpush.bf16.msra.mxu0 %v6643
    %6773 = vmatpush.bf16.msra.mxu0 %v6642
    %6774 = vmatpush.bf16.msra.mxu0 %v6641
    %6775 = vmatpush.bf16.msra.mxu0 %v6640
    %6776 = vmatmul.bf16.gmra.mxu0 %v6244
    %v6777 = vpop.f32.mrf.mxu0
    %v6778 = vadd.f32 %v6382, %v6777
    %v6779 = vpop.f32.mrf.mxu0
    %6780 = vdwg.mxu0
    %6781 = vmatpush.bf16.msra.mxu0 %v6655
    %6782 = vmatpush.bf16.msra.mxu0 %v6654
    %6783 = vmatpush.bf16.msra.mxu0 %v6653
    %6784 = vmatpush.bf16.msra.mxu0 %v6652
    %6785 = vmatpush.bf16.msra.mxu0 %v6651
    %6786 = vmatpush.bf16.msra.mxu0 %v6650
    %6787 = vmatpush.bf16.msra.mxu0 %v6649
    %6788 = vmatpush.bf16.msra.mxu0 %v6648
    %6789 = vmatmul.bf16.gmra.mxu0 %v6245
    %v6790 = vpop.f32.mrf.mxu0
    %v6791 = vadd.f32 %v6778, %v6790
    %v6792 = vpop.f32.mrf.mxu0
    %6793 = vdwg.mxu0
    %6794 = vmatpush.bf16.msra.mxu0 %v6663
    %6795 = vmatpush.bf16.msra.mxu0 %v6662
    %6796 = vmatpush.bf16.msra.mxu0 %v6661
    %6797 = vmatpush.bf16.msra.mxu0 %v6660
    %6798 = vmatpush.bf16.msra.mxu0 %v6659
    %6799 = vmatpush.bf16.msra.mxu0 %v6658
    %6800 = vmatpush.bf16.msra.mxu0 %v6657
    %6801 = vmatpush.bf16.msra.mxu0 %v6656
    %6802 = vmatmul.bf16.gmra.mxu0 %v6246
    %v6803 = vpop.f32.mrf.mxu0
    %v6804 = vadd.f32 %v6791, %v6803
    %v6805 = vpop.f32.mrf.mxu0
    %6806 = vdwg.mxu0
    %6807 = vmatpush.bf16.msra.mxu0 %v6671
    %6808 = vmatpush.bf16.msra.mxu0 %v6670
    %6809 = vmatpush.bf16.msra.mxu0 %v6669
    %6810 = vmatpush.bf16.msra.mxu0 %v6668
    %6811 = vmatpush.bf16.msra.mxu0 %v6667
    %6812 = vmatpush.bf16.msra.mxu0 %v6666
    %6813 = vmatpush.bf16.msra.mxu0 %v6665
    %6814 = vmatpush.bf16.msra.mxu0 %v6664
    %6815 = vmatmul.bf16.gmra.mxu0 %v6247
    %v6816 = vpop.f32.mrf.mxu0
    %v6817 = vadd.f32 %v6804, %v6816
    %v6818 = vpop.f32.mrf.mxu0
    %6819 = vdwg.mxu0
    %6820 = vmatpush.bf16.msra.mxu0 %v6679
    %6821 = vmatpush.bf16.msra.mxu0 %v6678
    %6822 = vmatpush.bf16.msra.mxu0 %v6677
    %6823 = vmatpush.bf16.msra.mxu0 %v6676
    %6824 = vmatpush.bf16.msra.mxu0 %v6675
    %6825 = vmatpush.bf16.msra.mxu0 %v6674
    %6826 = vmatpush.bf16.msra.mxu0 %v6673
    %6827 = vmatpush.bf16.msra.mxu0 %v6672
    %6828 = vmatmul.bf16.gmra.mxu0 %v6248
    %v6829 = vpop.f32.mrf.mxu0
    %v6830 = vadd.f32 %v6817, %v6829
    %v6831 = vpop.f32.mrf.mxu0
    %6832 = vdwg.mxu0
    %6833 = vmatpush.bf16.msra.mxu0 %v6687
    %6834 = vmatpush.bf16.msra.mxu0 %v6686
    %6835 = vmatpush.bf16.msra.mxu0 %v6685
    %6836 = vmatpush.bf16.msra.mxu0 %v6684
    %6837 = vmatpush.bf16.msra.mxu0 %v6683
    %6838 = vmatpush.bf16.msra.mxu0 %v6682
    %6839 = vmatpush.bf16.msra.mxu0 %v6681
    %6840 = vmatpush.bf16.msra.mxu0 %v6680
    %6841 = vmatmul.bf16.gmra.mxu0 %v6249
    %v6842 = vpop.f32.mrf.mxu0
    %v6843 = vadd.f32 %v6830, %v6842
    %v6844 = vpop.f32.mrf.mxu0
    %6845 = vdwg.mxu0
    %6846 = vmatpush.bf16.msra.mxu0 %v6695
    %6847 = vmatpush.bf16.msra.mxu0 %v6694
    %6848 = vmatpush.bf16.msra.mxu0 %v6693
    %6849 = vmatpush.bf16.msra.mxu0 %v6692
    %6850 = vmatpush.bf16.msra.mxu0 %v6691
    %6851 = vmatpush.bf16.msra.mxu0 %v6690
    %6852 = vmatpush.bf16.msra.mxu0 %v6689
    %6853 = vmatpush.bf16.msra.mxu0 %v6688
    %6854 = vmatmul.bf16.gmra.mxu0 %v6250
    %v6855 = vpop.f32.mrf.mxu0
    %v6856 = vadd.f32 %v6843, %v6855
    %v6857 = vpop.f32.mrf.mxu0
    %6858 = vdwg.mxu0
    %6859 = vmatpush.bf16.msra.mxu0 %v6703
    %6860 = vmatpush.bf16.msra.mxu0 %v6702
    %6861 = vmatpush.bf16.msra.mxu0 %v6701
    %6862 = vmatpush.bf16.msra.mxu0 %v6700
    %6863 = vmatpush.bf16.msra.mxu0 %v6699
    %6864 = vmatpush.bf16.msra.mxu0 %v6698
    %6865 = vmatpush.bf16.msra.mxu0 %v6697
    %6866 = vmatpush.bf16.msra.mxu0 %v6696
    %6867 = vmatmul.bf16.gmra.mxu0 %v6251
    %v6868 = vpop.f32.mrf.mxu0
    %v6869 = vadd.f32 %v6856, %v6868
    %v6870 = vpop.f32.mrf.mxu0
    %6871 = vdwg.mxu0
    %v6872 = vmax.f32 %v6869, 0.0
    %v6873 = vpack.c.bf16 %v6872, %v6872
    %v6874 = vld [vmem:[#allocation11] sm:$0xff]
    %v6875 = vld [vmem:[#allocation11 + $0x8] sm:$0xff]
    %v6876 = vld [vmem:[#allocation11 + $0x10] sm:$0xff]
    %v6877 = vld [vmem:[#allocation11 + $0x18] sm:$0xff]
    %v6878 = vld [vmem:[#allocation11 + $0x20] sm:$0xff]
    %v6879 = vld [vmem:[#allocation11 + $0x28] sm:$0xff]
    %v6880 = vld [vmem:[#allocation11 + $0x30] sm:$0xff]
    %v6881 = vld [vmem:[#allocation11 + $0x38] sm:$0xff]
    %v6882 = vld [vmem:[#allocation11 + $0x40] sm:$0xff]
    %v6883 = vld [vmem:[#allocation11 + $0x48] sm:$0xff]
    %v6884 = vld [vmem:[#allocation11 + $0x50] sm:$0xff]
    %v6885 = vld [vmem:[#allocation11 + $0x58] sm:$0xff]
    %v6886 = vld [vmem:[#allocation11 + $0x60] sm:$0xff]
    %v6887 = vld [vmem:[#allocation11 + $0x68] sm:$0xff]
    %v6888 = vld [vmem:[#allocation11 + $0x70] sm:$0xff]
    %v6889 = vld [vmem:[#allocation11 + $0x78] sm:$0xff]
    %v6890 = vld [vmem:[#allocation11 + $0x80] sm:$0xff]
    %v6891 = vld [vmem:[#allocation11 + $0x88] sm:$0xff]
    %v6892 = vld [vmem:[#allocation11 + $0x90] sm:$0xff]
    %v6893 = vld [vmem:[#allocation11 + $0x98] sm:$0xff]
    %v6894 = vld [vmem:[#allocation11 + $0xa0] sm:$0xff]
    %v6895 = vld [vmem:[#allocation11 + $0xa8] sm:$0xff]
    %v6896 = vld [vmem:[#allocation11 + $0xb0] sm:$0xff]
    %v6897 = vld [vmem:[#allocation11 + $0xb8] sm:$0xff]
    %v6898 = vld [vmem:[#allocation11 + $0xc0] sm:$0xff]
    %v6899 = vld [vmem:[#allocation11 + $0xc8] sm:$0xff]
    %v6900 = vld [vmem:[#allocation11 + $0xd0] sm:$0xff]
    %v6901 = vld [vmem:[#allocation11 + $0xd8] sm:$0xff]
    %v6902 = vld [vmem:[#allocation11 + $0xe0] sm:$0xff]
    %v6903 = vld [vmem:[#allocation11 + $0xe8] sm:$0xff]
    %v6904 = vld [vmem:[#allocation11 + $0xf0] sm:$0xff]
    %v6905 = vld [vmem:[#allocation11 + $0xf8] sm:$0xff]
    %v6906 = vld [vmem:[#allocation11 + $0x100] sm:$0xff]
    %v6907 = vld [vmem:[#allocation11 + $0x108] sm:$0xff]
    %v6908 = vld [vmem:[#allocation11 + $0x110] sm:$0xff]
    %v6909 = vld [vmem:[#allocation11 + $0x118] sm:$0xff]
    %v6910 = vld [vmem:[#allocation11 + $0x120] sm:$0xff]
    %v6911 = vld [vmem:[#allocation11 + $0x128] sm:$0xff]
    %v6912 = vld [vmem:[#allocation11 + $0x130] sm:$0xff]
    %v6913 = vld [vmem:[#allocation11 + $0x138] sm:$0xff]
    %v6914 = vld [vmem:[#allocation11 + $0x140] sm:$0xff]
    %v6915 = vld [vmem:[#allocation11 + $0x148] sm:$0xff]
    %v6916 = vld [vmem:[#allocation11 + $0x150] sm:$0xff]
    %v6917 = vld [vmem:[#allocation11 + $0x158] sm:$0xff]
    %v6918 = vld [vmem:[#allocation11 + $0x160] sm:$0xff]
    %v6919 = vld [vmem:[#allocation11 + $0x168] sm:$0xff]
    %v6920 = vld [vmem:[#allocation11 + $0x170] sm:$0xff]
    %v6921 = vld [vmem:[#allocation11 + $0x178] sm:$0xff]
    %v6922 = vld [vmem:[#allocation11 + $0x180] sm:$0xff]
    %v6923 = vld [vmem:[#allocation11 + $0x188] sm:$0xff]
    %v6924 = vld [vmem:[#allocation11 + $0x190] sm:$0xff]
    %v6925 = vld [vmem:[#allocation11 + $0x198] sm:$0xff]
    %v6926 = vld [vmem:[#allocation11 + $0x1a0] sm:$0xff]
    %v6927 = vld [vmem:[#allocation11 + $0x1a8] sm:$0xff]
    %v6928 = vld [vmem:[#allocation11 + $0x1b0] sm:$0xff]
    %v6929 = vld [vmem:[#allocation11 + $0x1b8] sm:$0xff]
    %v6930 = vld [vmem:[#allocation11 + $0x1c0] sm:$0xff]
    %v6931 = vld [vmem:[#allocation11 + $0x1c8] sm:$0xff]
    %v6932 = vld [vmem:[#allocation11 + $0x1d0] sm:$0xff]
    %v6933 = vld [vmem:[#allocation11 + $0x1d8] sm:$0xff]
    %v6934 = vld [vmem:[#allocation11 + $0x1e0] sm:$0xff]
    %v6935 = vld [vmem:[#allocation11 + $0x1e8] sm:$0xff]
    %v6936 = vld [vmem:[#allocation11 + $0x1f0] sm:$0xff]
    %v6937 = vld [vmem:[#allocation11 + $0x1f8] sm:$0xff]
    %v6938 = vld [vmem:[#allocation13] sm:$0xff]
    %v6940 = vperm.slane %v6938, 0
    %v6941 = vperm.slane %v6938, 1
    %v6942 = vperm.slane %v6938, 2
    %v6943 = vperm.slane %v6938, 3
    %v6944 = vperm.slane %v6938, 4
    %v6945 = vperm.slane %v6938, 5
    %v6946 = vperm.slane %v6938, 6
    %v6947 = vperm.slane %v6938, 7
    %v7020 = vunpack.c.l.b16 %v6874
    %v7021 = vunpack.c.h.b16 %v6874
    %v7022 = vunpack.c.l.b16 %v6875
    %v7023 = vunpack.c.h.b16 %v6875
    %v7024 = vunpack.c.l.b16 %v6876
    %v7025 = vunpack.c.h.b16 %v6876
    %v7026 = vunpack.c.l.b16 %v6877
    %v7027 = vunpack.c.h.b16 %v6877
    %v7028 = vunpack.c.l.b16 %v6878
    %v7029 = vunpack.c.h.b16 %v6878
    %v7030 = vunpack.c.l.b16 %v6879
    %v7031 = vunpack.c.h.b16 %v6879
    %v7032 = vunpack.c.l.b16 %v6880
    %v7033 = vunpack.c.h.b16 %v6880
    %v7034 = vunpack.c.l.b16 %v6881
    %v7035 = vunpack.c.h.b16 %v6881
    %v7036 = vunpack.c.l.b16 %v6882
    %v7037 = vunpack.c.h.b16 %v6882
    %v7038 = vunpack.c.l.b16 %v6883
    %v7039 = vunpack.c.h.b16 %v6883
    %v7040 = vunpack.c.l.b16 %v6884
    %v7041 = vunpack.c.h.b16 %v6884
    %v7042 = vunpack.c.l.b16 %v6885
    %v7043 = vunpack.c.h.b16 %v6885
    %v7044 = vunpack.c.l.b16 %v6886
    %v7045 = vunpack.c.h.b16 %v6886
    %v7046 = vunpack.c.l.b16 %v6887
    %v7047 = vunpack.c.h.b16 %v6887
    %v7048 = vunpack.c.l.b16 %v6888
    %v7049 = vunpack.c.h.b16 %v6888
    %v7050 = vunpack.c.l.b16 %v6889
    %v7051 = vunpack.c.h.b16 %v6889
    %v7052 = vunpack.c.l.b16 %v6890
    %v7053 = vunpack.c.h.b16 %v6890
    %v7054 = vunpack.c.l.b16 %v6891
    %v7055 = vunpack.c.h.b16 %v6891
    %v7056 = vunpack.c.l.b16 %v6892
    %v7057 = vunpack.c.h.b16 %v6892
    %v7058 = vunpack.c.l.b16 %v6893
    %v7059 = vunpack.c.h.b16 %v6893
    %v7060 = vunpack.c.l.b16 %v6894
    %v7061 = vunpack.c.h.b16 %v6894
    %v7062 = vunpack.c.l.b16 %v6895
    %v7063 = vunpack.c.h.b16 %v6895
    %v7064 = vunpack.c.l.b16 %v6896
    %v7065 = vunpack.c.h.b16 %v6896
    %v7066 = vunpack.c.l.b16 %v6897
    %v7067 = vunpack.c.h.b16 %v6897
    %v7068 = vunpack.c.l.b16 %v6898
    %v7069 = vunpack.c.h.b16 %v6898
    %v7070 = vunpack.c.l.b16 %v6899
    %v7071 = vunpack.c.h.b16 %v6899
    %v7072 = vunpack.c.l.b16 %v6900
    %v7073 = vunpack.c.h.b16 %v6900
    %v7074 = vunpack.c.l.b16 %v6901
    %v7075 = vunpack.c.h.b16 %v6901
    %v7076 = vunpack.c.l.b16 %v6902
    %v7077 = vunpack.c.h.b16 %v6902
    %v7078 = vunpack.c.l.b16 %v6903
    %v7079 = vunpack.c.h.b16 %v6903
    %v7080 = vunpack.c.l.b16 %v6904
    %v7081 = vunpack.c.h.b16 %v6904
    %v7082 = vunpack.c.l.b16 %v6905
    %v7083 = vunpack.c.h.b16 %v6905
    %v7084 = vunpack.c.l.b16 %v6906
    %v7085 = vunpack.c.h.b16 %v6906
    %v7086 = vunpack.c.l.b16 %v6907
    %v7087 = vunpack.c.h.b16 %v6907
    %v7088 = vunpack.c.l.b16 %v6908
    %v7089 = vunpack.c.h.b16 %v6908
    %v7090 = vunpack.c.l.b16 %v6909
    %v7091 = vunpack.c.h.b16 %v6909
    %v7092 = vunpack.c.l.b16 %v6910
    %v7093 = vunpack.c.h.b16 %v6910
    %v7094 = vunpack.c.l.b16 %v6911
    %v7095 = vunpack.c.h.b16 %v6911
    %v7096 = vunpack.c.l.b16 %v6912
    %v7097 = vunpack.c.h.b16 %v6912
    %v7098 = vunpack.c.l.b16 %v6913
    %v7099 = vunpack.c.h.b16 %v6913
    %v7100 = vunpack.c.l.b16 %v6914
    %v7101 = vunpack.c.h.b16 %v6914
    %v7102 = vunpack.c.l.b16 %v6915
    %v7103 = vunpack.c.h.b16 %v6915
    %v7104 = vunpack.c.l.b16 %v6916
    %v7105 = vunpack.c.h.b16 %v6916
    %v7106 = vunpack.c.l.b16 %v6917
    %v7107 = vunpack.c.h.b16 %v6917
    %v7108 = vunpack.c.l.b16 %v6918
    %v7109 = vunpack.c.h.b16 %v6918
    %v7110 = vunpack.c.l.b16 %v6919
    %v7111 = vunpack.c.h.b16 %v6919
    %v7112 = vunpack.c.l.b16 %v6920
    %v7113 = vunpack.c.h.b16 %v6920
    %v7114 = vunpack.c.l.b16 %v6921
    %v7115 = vunpack.c.h.b16 %v6921
    %v7116 = vunpack.c.l.b16 %v6922
    %v7117 = vunpack.c.h.b16 %v6922
    %v7118 = vunpack.c.l.b16 %v6923
    %v7119 = vunpack.c.h.b16 %v6923
    %v7120 = vunpack.c.l.b16 %v6924
    %v7121 = vunpack.c.h.b16 %v6924
    %v7122 = vunpack.c.l.b16 %v6925
    %v7123 = vunpack.c.h.b16 %v6925
    %v7124 = vunpack.c.l.b16 %v6926
    %v7125 = vunpack.c.h.b16 %v6926
    %v7126 = vunpack.c.l.b16 %v6927
    %v7127 = vunpack.c.h.b16 %v6927
    %v7128 = vunpack.c.l.b16 %v6928
    %v7129 = vunpack.c.h.b16 %v6928
    %v7130 = vunpack.c.l.b16 %v6929
    %v7131 = vunpack.c.h.b16 %v6929
    %v7132 = vunpack.c.l.b16 %v6930
    %v7133 = vunpack.c.h.b16 %v6930
    %v7134 = vunpack.c.l.b16 %v6931
    %v7135 = vunpack.c.h.b16 %v6931
    %v7136 = vunpack.c.l.b16 %v6932
    %v7137 = vunpack.c.h.b16 %v6932
    %v7138 = vunpack.c.l.b16 %v6933
    %v7139 = vunpack.c.h.b16 %v6933
    %v7140 = vunpack.c.l.b16 %v6934
    %v7141 = vunpack.c.h.b16 %v6934
    %v7142 = vunpack.c.l.b16 %v6935
    %v7143 = vunpack.c.h.b16 %v6935
    %v7144 = vunpack.c.l.b16 %v6936
    %v7145 = vunpack.c.h.b16 %v6936
    %v7146 = vunpack.c.l.b16 %v6937
    %v7147 = vunpack.c.h.b16 %v6937
    %v7148 = vpack.c.b16 %v7028, %v7020
    %v7149 = vpack.c.b16 %v7029, %v7021
    %v7150 = vpack.c.b16 %v7030, %v7022
    %v7151 = vpack.c.b16 %v7031, %v7023
    %v7152 = vpack.c.b16 %v7032, %v7024
    %v7153 = vpack.c.b16 %v7033, %v7025
    %v7154 = vpack.c.b16 %v7034, %v7026
    %v7155 = vpack.c.b16 %v7035, %v7027
    %v7156 = vpack.c.b16 %v7044, %v7036
    %v7157 = vpack.c.b16 %v7045, %v7037
    %v7158 = vpack.c.b16 %v7046, %v7038
    %v7159 = vpack.c.b16 %v7047, %v7039
    %v7160 = vpack.c.b16 %v7048, %v7040
    %v7161 = vpack.c.b16 %v7049, %v7041
    %v7162 = vpack.c.b16 %v7050, %v7042
    %v7163 = vpack.c.b16 %v7051, %v7043
    %v7164 = vpack.c.b16 %v7060, %v7052
    %v7165 = vpack.c.b16 %v7061, %v7053
    %v7166 = vpack.c.b16 %v7062, %v7054
    %v7167 = vpack.c.b16 %v7063, %v7055
    %v7168 = vpack.c.b16 %v7064, %v7056
    %v7169 = vpack.c.b16 %v7065, %v7057
    %v7170 = vpack.c.b16 %v7066, %v7058
    %v7171 = vpack.c.b16 %v7067, %v7059
    %v7172 = vpack.c.b16 %v7076, %v7068
    %v7173 = vpack.c.b16 %v7077, %v7069
    %v7174 = vpack.c.b16 %v7078, %v7070
    %v7175 = vpack.c.b16 %v7079, %v7071
    %v7176 = vpack.c.b16 %v7080, %v7072
    %v7177 = vpack.c.b16 %v7081, %v7073
    %v7178 = vpack.c.b16 %v7082, %v7074
    %v7179 = vpack.c.b16 %v7083, %v7075
    %v7180 = vpack.c.b16 %v7092, %v7084
    %v7181 = vpack.c.b16 %v7093, %v7085
    %v7182 = vpack.c.b16 %v7094, %v7086
    %v7183 = vpack.c.b16 %v7095, %v7087
    %v7184 = vpack.c.b16 %v7096, %v7088
    %v7185 = vpack.c.b16 %v7097, %v7089
    %v7186 = vpack.c.b16 %v7098, %v7090
    %v7187 = vpack.c.b16 %v7099, %v7091
    %v7188 = vpack.c.b16 %v7108, %v7100
    %v7189 = vpack.c.b16 %v7109, %v7101
    %v7190 = vpack.c.b16 %v7110, %v7102
    %v7191 = vpack.c.b16 %v7111, %v7103
    %v7192 = vpack.c.b16 %v7112, %v7104
    %v7193 = vpack.c.b16 %v7113, %v7105
    %v7194 = vpack.c.b16 %v7114, %v7106
    %v7195 = vpack.c.b16 %v7115, %v7107
    %v7196 = vpack.c.b16 %v7124, %v7116
    %v7197 = vpack.c.b16 %v7125, %v7117
    %v7198 = vpack.c.b16 %v7126, %v7118
    %v7199 = vpack.c.b16 %v7127, %v7119
    %v7200 = vpack.c.b16 %v7128, %v7120
    %v7201 = vpack.c.b16 %v7129, %v7121
    %v7202 = vpack.c.b16 %v7130, %v7122
    %v7203 = vpack.c.b16 %v7131, %v7123
    %v7204 = vpack.c.b16 %v7140, %v7132
    %v7205 = vpack.c.b16 %v7141, %v7133
    %v7206 = vpack.c.b16 %v7142, %v7134
    %v7207 = vpack.c.b16 %v7143, %v7135
    %v7208 = vpack.c.b16 %v7144, %v7136
    %v7209 = vpack.c.b16 %v7145, %v7137
    %v7210 = vpack.c.b16 %v7146, %v7138
    %v7211 = vpack.c.b16 %v7147, %v7139
    %7276 = vmatpush.bf16.msra.mxu0 %v7204
    %7277 = vmatpush.bf16.msra.mxu0 %v7196
    %7278 = vmatpush.bf16.msra.mxu0 %v7188
    %7279 = vmatpush.bf16.msra.mxu0 %v7180
    %7280 = vmatpush.bf16.msra.mxu0 %v7172
    %7281 = vmatpush.bf16.msra.mxu0 %v7164
    %7282 = vmatpush.bf16.msra.mxu0 %v7156
    %7283 = vmatpush.bf16.msra.mxu0 %v7148
    %7284 = vmatmul.bf16.gmra.mxu0 %v6873
    %v7285 = vpop.f32.mrf.mxu0
    %v7286 = vadd.f32 %v6940, %v7285
    %v7287 = vpop.f32.mrf.mxu0
    %7288 = vdwg.mxu0
    %7289 = vmatpush.bf16.msra.mxu0 %v7205
    %7290 = vmatpush.bf16.msra.mxu0 %v7197
    %7291 = vmatpush.bf16.msra.mxu0 %v7189
    %7292 = vmatpush.bf16.msra.mxu0 %v7181
    %7293 = vmatpush.bf16.msra.mxu0 %v7173
    %7294 = vmatpush.bf16.msra.mxu0 %v7165
    %7295 = vmatpush.bf16.msra.mxu0 %v7157
    %7296 = vmatpush.bf16.msra.mxu0 %v7149
    %7297 = vmatmul.bf16.gmra.mxu0 %v6873
    %v7298 = vpop.f32.mrf.mxu0
    %v7299 = vadd.f32 %v6941, %v7298
    %v7300 = vpop.f32.mrf.mxu0
    %7301 = vdwg.mxu0
    %7302 = vmatpush.bf16.msra.mxu0 %v7206
    %7303 = vmatpush.bf16.msra.mxu0 %v7198
    %7304 = vmatpush.bf16.msra.mxu0 %v7190
    %7305 = vmatpush.bf16.msra.mxu0 %v7182
    %7306 = vmatpush.bf16.msra.mxu0 %v7174
    %7307 = vmatpush.bf16.msra.mxu0 %v7166
    %7308 = vmatpush.bf16.msra.mxu0 %v7158
    %7309 = vmatpush.bf16.msra.mxu0 %v7150
    %7310 = vmatmul.bf16.gmra.mxu0 %v6873
    %v7311 = vpop.f32.mrf.mxu0
    %v7312 = vadd.f32 %v6942, %v7311
    %v7313 = vpop.f32.mrf.mxu0
    %7314 = vdwg.mxu0
    %7315 = vmatpush.bf16.msra.mxu0 %v7207
    %7316 = vmatpush.bf16.msra.mxu0 %v7199
    %7317 = vmatpush.bf16.msra.mxu0 %v7191
    %7318 = vmatpush.bf16.msra.mxu0 %v7183
    %7319 = vmatpush.bf16.msra.mxu0 %v7175
    %7320 = vmatpush.bf16.msra.mxu0 %v7167
    %7321 = vmatpush.bf16.msra.mxu0 %v7159
    %7322 = vmatpush.bf16.msra.mxu0 %v7151
    %7323 = vmatmul.bf16.gmra.mxu0 %v6873
    %v7324 = vpop.f32.mrf.mxu0
    %v7325 = vadd.f32 %v6943, %v7324
    %v7326 = vpop.f32.mrf.mxu0
    %7327 = vdwg.mxu0
    %7328 = vmatpush.bf16.msra.mxu0 %v7208
    %7329 = vmatpush.bf16.msra.mxu0 %v7200
    %7330 = vmatpush.bf16.msra.mxu0 %v7192
    %7331 = vmatpush.bf16.msra.mxu0 %v7184
    %7332 = vmatpush.bf16.msra.mxu0 %v7176
    %7333 = vmatpush.bf16.msra.mxu0 %v7168
    %7334 = vmatpush.bf16.msra.mxu0 %v7160
    %7335 = vmatpush.bf16.msra.mxu0 %v7152
    %7336 = vmatmul.bf16.gmra.mxu0 %v6873
    %v7337 = vpop.f32.mrf.mxu0
    %v7338 = vadd.f32 %v6944, %v7337
    %v7339 = vpop.f32.mrf.mxu0
    %7340 = vdwg.mxu0
    %7341 = vmatpush.bf16.msra.mxu0 %v7209
    %7342 = vmatpush.bf16.msra.mxu0 %v7201
    %7343 = vmatpush.bf16.msra.mxu0 %v7193
    %7344 = vmatpush.bf16.msra.mxu0 %v7185
    %7345 = vmatpush.bf16.msra.mxu0 %v7177
    %7346 = vmatpush.bf16.msra.mxu0 %v7169
    %7347 = vmatpush.bf16.msra.mxu0 %v7161
    %7348 = vmatpush.bf16.msra.mxu0 %v7153
    %7349 = vmatmul.bf16.gmra.mxu0 %v6873
    %v7350 = vpop.f32.mrf.mxu0
    %v7351 = vadd.f32 %v6945, %v7350
    %v7352 = vpop.f32.mrf.mxu0
    %7353 = vdwg.mxu0
    %7354 = vmatpush.bf16.msra.mxu0 %v7210
    %7355 = vmatpush.bf16.msra.mxu0 %v7202
    %7356 = vmatpush.bf16.msra.mxu0 %v7194
    %7357 = vmatpush.bf16.msra.mxu0 %v7186
    %7358 = vmatpush.bf16.msra.mxu0 %v7178
    %7359 = vmatpush.bf16.msra.mxu0 %v7170
    %7360 = vmatpush.bf16.msra.mxu0 %v7162
    %7361 = vmatpush.bf16.msra.mxu0 %v7154
    %7362 = vmatmul.bf16.gmra.mxu0 %v6873
    %v7363 = vpop.f32.mrf.mxu0
    %v7364 = vadd.f32 %v6946, %v7363
    %v7365 = vpop.f32.mrf.mxu0
    %7366 = vdwg.mxu0
    %7367 = vmatpush.bf16.msra.mxu0 %v7211
    %7368 = vmatpush.bf16.msra.mxu0 %v7203
    %7369 = vmatpush.bf16.msra.mxu0 %v7195
    %7370 = vmatpush.bf16.msra.mxu0 %v7187
    %7371 = vmatpush.bf16.msra.mxu0 %v7179
    %7372 = vmatpush.bf16.msra.mxu0 %v7171
    %7373 = vmatpush.bf16.msra.mxu0 %v7163
    %7374 = vmatpush.bf16.msra.mxu0 %v7155
    %7375 = vmatmul.bf16.gmra.mxu0 %v6873
    %v7376 = vpop.f32.mrf.mxu0
    %v7377 = vadd.f32 %v6947, %v7376
    %v7378 = vpop.f32.mrf.mxu0
    %7379 = vdwg.mxu0
    %v7380 = vmax.f32 %v7286, 0.0
    %v7381 = vmax.f32 %v7299, 0.0
    %v7382 = vmax.f32 %v7312, 0.0
    %v7383 = vmax.f32 %v7325, 0.0
    %v7384 = vmax.f32 %v7338, 0.0
    %v7385 = vmax.f32 %v7351, 0.0
    %v7386 = vmax.f32 %v7364, 0.0
    %v7387 = vmax.f32 %v7377, 0.0
    %v7388 = vpack.c.bf16 %v7380, %v7380
    %v7389 = vpack.c.bf16 %v7381, %v7381
    %v7390 = vpack.c.bf16 %v7382, %v7382
    %v7391 = vpack.c.bf16 %v7383, %v7383
    %v7392 = vpack.c.bf16 %v7384, %v7384
    %v7393 = vpack.c.bf16 %v7385, %v7385
    %v7394 = vpack.c.bf16 %v7386, %v7386
    %v7395 = vpack.c.bf16 %v7387, %v7387
    %v7396 = vld [vmem:[#allocation14] sm:$0xff]
    %v7397 = vld [vmem:[#allocation14 + $0x8] sm:$0xff]
    %v7398 = vld [vmem:[#allocation14 + $0x10] sm:$0xff]
    %v7399 = vld [vmem:[#allocation14 + $0x18] sm:$0xff]
    %v7400 = vld [vmem:[#allocation14 + $0x20] sm:$0xff]
    %v7401 = vld [vmem:[#allocation14 + $0x28] sm:$0xff]
    %v7402 = vld [vmem:[#allocation14 + $0x30] sm:$0xff]
    %v7403 = vld [vmem:[#allocation14 + $0x38] sm:$0xff]
    %v7404 = vld [vmem:[#allocation14 + $0x40] sm:$0xff]
    %v7405 = vld [vmem:[#allocation14 + $0x48] sm:$0xff]
    %v7406 = vld [vmem:[#allocation14 + $0x50] sm:$0xff]
    %v7407 = vld [vmem:[#allocation14 + $0x58] sm:$0xff]
    %v7408 = vld [vmem:[#allocation14 + $0x60] sm:$0xff]
    %v7409 = vld [vmem:[#allocation14 + $0x68] sm:$0xff]
    %v7410 = vld [vmem:[#allocation14 + $0x70] sm:$0xff]
    %v7411 = vld [vmem:[#allocation14 + $0x78] sm:$0xff]
    %v7412 = vld [vmem:[#allocation14 + $0x80] sm:$0xff]
    %v7413 = vld [vmem:[#allocation14 + $0x88] sm:$0xff]
    %v7414 = vld [vmem:[#allocation14 + $0x90] sm:$0xff]
    %v7415 = vld [vmem:[#allocation14 + $0x98] sm:$0xff]
    %v7416 = vld [vmem:[#allocation14 + $0xa0] sm:$0xff]
    %v7417 = vld [vmem:[#allocation14 + $0xa8] sm:$0xff]
    %v7418 = vld [vmem:[#allocation14 + $0xb0] sm:$0xff]
    %v7419 = vld [vmem:[#allocation14 + $0xb8] sm:$0xff]
    %v7420 = vld [vmem:[#allocation14 + $0xc0] sm:$0xff]
    %v7421 = vld [vmem:[#allocation14 + $0xc8] sm:$0xff]
    %v7422 = vld [vmem:[#allocation14 + $0xd0] sm:$0xff]
    %v7423 = vld [vmem:[#allocation14 + $0xd8] sm:$0xff]
    %v7424 = vld [vmem:[#allocation14 + $0xe0] sm:$0xff]
    %v7425 = vld [vmem:[#allocation14 + $0xe8] sm:$0xff]
    %v7426 = vld [vmem:[#allocation14 + $0xf0] sm:$0xff]
    %v7427 = vld [vmem:[#allocation14 + $0xf8] sm:$0xff]
    %v7428 = vld [vmem:[#allocation14 + $0x100] sm:$0xff]
    %v7429 = vld [vmem:[#allocation14 + $0x108] sm:$0xff]
    %v7430 = vld [vmem:[#allocation14 + $0x110] sm:$0xff]
    %v7431 = vld [vmem:[#allocation14 + $0x118] sm:$0xff]
    %v7432 = vld [vmem:[#allocation14 + $0x120] sm:$0xff]
    %v7433 = vld [vmem:[#allocation14 + $0x128] sm:$0xff]
    %v7434 = vld [vmem:[#allocation14 + $0x130] sm:$0xff]
    %v7435 = vld [vmem:[#allocation14 + $0x138] sm:$0xff]
    %v7436 = vld [vmem:[#allocation14 + $0x140] sm:$0xff]
    %v7437 = vld [vmem:[#allocation14 + $0x148] sm:$0xff]
    %v7438 = vld [vmem:[#allocation14 + $0x150] sm:$0xff]
    %v7439 = vld [vmem:[#allocation14 + $0x158] sm:$0xff]
    %v7440 = vld [vmem:[#allocation14 + $0x160] sm:$0xff]
    %v7441 = vld [vmem:[#allocation14 + $0x168] sm:$0xff]
    %v7442 = vld [vmem:[#allocation14 + $0x170] sm:$0xff]
    %v7443 = vld [vmem:[#allocation14 + $0x178] sm:$0xff]
    %v7444 = vld [vmem:[#allocation14 + $0x180] sm:$0xff]
    %v7445 = vld [vmem:[#allocation14 + $0x188] sm:$0xff]
    %v7446 = vld [vmem:[#allocation14 + $0x190] sm:$0xff]
    %v7447 = vld [vmem:[#allocation14 + $0x198] sm:$0xff]
    %v7448 = vld [vmem:[#allocation14 + $0x1a0] sm:$0xff]
    %v7449 = vld [vmem:[#allocation14 + $0x1a8] sm:$0xff]
    %v7450 = vld [vmem:[#allocation14 + $0x1b0] sm:$0xff]
    %v7451 = vld [vmem:[#allocation14 + $0x1b8] sm:$0xff]
    %v7452 = vld [vmem:[#allocation14 + $0x1c0] sm:$0xff]
    %v7453 = vld [vmem:[#allocation14 + $0x1c8] sm:$0xff]
    %v7454 = vld [vmem:[#allocation14 + $0x1d0] sm:$0xff]
    %v7455 = vld [vmem:[#allocation14 + $0x1d8] sm:$0xff]
    %v7456 = vld [vmem:[#allocation14 + $0x1e0] sm:$0xff]
    %v7457 = vld [vmem:[#allocation14 + $0x1e8] sm:$0xff]
    %v7458 = vld [vmem:[#allocation14 + $0x1f0] sm:$0xff]
    %v7459 = vld [vmem:[#allocation14 + $0x1f8] sm:$0xff]
    %v7460 = vld [vmem:[#allocation14 + $0x200] sm:$0xff]
    %v7461 = vld [vmem:[#allocation14 + $0x208] sm:$0xff]
    %v7462 = vld [vmem:[#allocation14 + $0x210] sm:$0xff]
    %v7463 = vld [vmem:[#allocation14 + $0x218] sm:$0xff]
    %v7464 = vld [vmem:[#allocation14 + $0x220] sm:$0xff]
    %v7465 = vld [vmem:[#allocation14 + $0x228] sm:$0xff]
    %v7466 = vld [vmem:[#allocation14 + $0x230] sm:$0xff]
    %v7467 = vld [vmem:[#allocation14 + $0x238] sm:$0xff]
    %v7468 = vld [vmem:[#allocation14 + $0x240] sm:$0xff]
    %v7469 = vld [vmem:[#allocation14 + $0x248] sm:$0xff]
    %v7470 = vld [vmem:[#allocation14 + $0x250] sm:$0xff]
    %v7471 = vld [vmem:[#allocation14 + $0x258] sm:$0xff]
    %v7472 = vld [vmem:[#allocation14 + $0x260] sm:$0xff]
    %v7473 = vld [vmem:[#allocation14 + $0x268] sm:$0xff]
    %v7474 = vld [vmem:[#allocation14 + $0x270] sm:$0xff]
    %v7475 = vld [vmem:[#allocation14 + $0x278] sm:$0xff]
    %v7476 = vld [vmem:[#allocation14 + $0x280] sm:$0xff]
    %v7477 = vld [vmem:[#allocation14 + $0x288] sm:$0xff]
    %v7478 = vld [vmem:[#allocation14 + $0x290] sm:$0xff]
    %v7479 = vld [vmem:[#allocation14 + $0x298] sm:$0xff]
    %v7480 = vld [vmem:[#allocation14 + $0x2a0] sm:$0xff]
    %v7481 = vld [vmem:[#allocation14 + $0x2a8] sm:$0xff]
    %v7482 = vld [vmem:[#allocation14 + $0x2b0] sm:$0xff]
    %v7483 = vld [vmem:[#allocation14 + $0x2b8] sm:$0xff]
    %v7484 = vld [vmem:[#allocation14 + $0x2c0] sm:$0xff]
    %v7485 = vld [vmem:[#allocation14 + $0x2c8] sm:$0xff]
    %v7486 = vld [vmem:[#allocation14 + $0x2d0] sm:$0xff]
    %v7487 = vld [vmem:[#allocation14 + $0x2d8] sm:$0xff]
    %v7488 = vld [vmem:[#allocation14 + $0x2e0] sm:$0xff]
    %v7489 = vld [vmem:[#allocation14 + $0x2e8] sm:$0xff]
    %v7490 = vld [vmem:[#allocation14 + $0x2f0] sm:$0xff]
    %v7491 = vld [vmem:[#allocation14 + $0x2f8] sm:$0xff]
    %v7492 = vld [vmem:[#allocation14 + $0x300] sm:$0xff]
    %v7493 = vld [vmem:[#allocation14 + $0x308] sm:$0xff]
    %v7494 = vld [vmem:[#allocation14 + $0x310] sm:$0xff]
    %v7495 = vld [vmem:[#allocation14 + $0x318] sm:$0xff]
    %v7496 = vld [vmem:[#allocation14 + $0x320] sm:$0xff]
    %v7497 = vld [vmem:[#allocation14 + $0x328] sm:$0xff]
    %v7498 = vld [vmem:[#allocation14 + $0x330] sm:$0xff]
    %v7499 = vld [vmem:[#allocation14 + $0x338] sm:$0xff]
    %v7500 = vld [vmem:[#allocation14 + $0x340] sm:$0xff]
    %v7501 = vld [vmem:[#allocation14 + $0x348] sm:$0xff]
    %v7502 = vld [vmem:[#allocation14 + $0x350] sm:$0xff]
    %v7503 = vld [vmem:[#allocation14 + $0x358] sm:$0xff]
    %v7504 = vld [vmem:[#allocation14 + $0x360] sm:$0xff]
    %v7505 = vld [vmem:[#allocation14 + $0x368] sm:$0xff]
    %v7506 = vld [vmem:[#allocation14 + $0x370] sm:$0xff]
    %v7507 = vld [vmem:[#allocation14 + $0x378] sm:$0xff]
    %v7508 = vld [vmem:[#allocation14 + $0x380] sm:$0xff]
    %v7509 = vld [vmem:[#allocation14 + $0x388] sm:$0xff]
    %v7510 = vld [vmem:[#allocation14 + $0x390] sm:$0xff]
    %v7511 = vld [vmem:[#allocation14 + $0x398] sm:$0xff]
    %v7512 = vld [vmem:[#allocation14 + $0x3a0] sm:$0xff]
    %v7513 = vld [vmem:[#allocation14 + $0x3a8] sm:$0xff]
    %v7514 = vld [vmem:[#allocation14 + $0x3b0] sm:$0xff]
    %v7515 = vld [vmem:[#allocation14 + $0x3b8] sm:$0xff]
    %v7516 = vld [vmem:[#allocation14 + $0x3c0] sm:$0xff]
    %v7517 = vld [vmem:[#allocation14 + $0x3c8] sm:$0xff]
    %v7518 = vld [vmem:[#allocation14 + $0x3d0] sm:$0xff]
    %v7519 = vld [vmem:[#allocation14 + $0x3d8] sm:$0xff]
    %v7520 = vld [vmem:[#allocation14 + $0x3e0] sm:$0xff]
    %v7521 = vld [vmem:[#allocation14 + $0x3e8] sm:$0xff]
    %v7522 = vld [vmem:[#allocation14 + $0x3f0] sm:$0xff]
    %v7523 = vld [vmem:[#allocation14 + $0x3f8] sm:$0xff]
    %v7524 = vld [vmem:[#allocation16] sm:$0x3]
    %v7526 = vperm.slane %v7524, 0
    %v7527 = vperm.slane %v7524, 1
    %v7658 = vunpack.c.l.b16 %v7396
    %v7659 = vunpack.c.h.b16 %v7396
    %v7660 = vunpack.c.l.b16 %v7397
    %v7661 = vunpack.c.h.b16 %v7397
    %v7662 = vunpack.c.l.b16 %v7398
    %v7663 = vunpack.c.h.b16 %v7398
    %v7664 = vunpack.c.l.b16 %v7399
    %v7665 = vunpack.c.h.b16 %v7399
    %v7666 = vunpack.c.l.b16 %v7400
    %v7667 = vunpack.c.h.b16 %v7400
    %v7668 = vunpack.c.l.b16 %v7401
    %v7669 = vunpack.c.h.b16 %v7401
    %v7670 = vunpack.c.l.b16 %v7402
    %v7671 = vunpack.c.h.b16 %v7402
    %v7672 = vunpack.c.l.b16 %v7403
    %v7673 = vunpack.c.h.b16 %v7403
    %v7674 = vunpack.c.l.b16 %v7404
    %v7675 = vunpack.c.h.b16 %v7404
    %v7676 = vunpack.c.l.b16 %v7405
    %v7677 = vunpack.c.h.b16 %v7405
    %v7678 = vunpack.c.l.b16 %v7406
    %v7679 = vunpack.c.h.b16 %v7406
    %v7680 = vunpack.c.l.b16 %v7407
    %v7681 = vunpack.c.h.b16 %v7407
    %v7682 = vunpack.c.l.b16 %v7408
    %v7683 = vunpack.c.h.b16 %v7408
    %v7684 = vunpack.c.l.b16 %v7409
    %v7685 = vunpack.c.h.b16 %v7409
    %v7686 = vunpack.c.l.b16 %v7410
    %v7687 = vunpack.c.h.b16 %v7410
    %v7688 = vunpack.c.l.b16 %v7411
    %v7689 = vunpack.c.h.b16 %v7411
    %v7690 = vunpack.c.l.b16 %v7412
    %v7691 = vunpack.c.h.b16 %v7412
    %v7692 = vunpack.c.l.b16 %v7413
    %v7693 = vunpack.c.h.b16 %v7413
    %v7694 = vunpack.c.l.b16 %v7414
    %v7695 = vunpack.c.h.b16 %v7414
    %v7696 = vunpack.c.l.b16 %v7415
    %v7697 = vunpack.c.h.b16 %v7415
    %v7698 = vunpack.c.l.b16 %v7416
    %v7699 = vunpack.c.h.b16 %v7416
    %v7700 = vunpack.c.l.b16 %v7417
    %v7701 = vunpack.c.h.b16 %v7417
    %v7702 = vunpack.c.l.b16 %v7418
    %v7703 = vunpack.c.h.b16 %v7418
    %v7704 = vunpack.c.l.b16 %v7419
    %v7705 = vunpack.c.h.b16 %v7419
    %v7706 = vunpack.c.l.b16 %v7420
    %v7707 = vunpack.c.h.b16 %v7420
    %v7708 = vunpack.c.l.b16 %v7421
    %v7709 = vunpack.c.h.b16 %v7421
    %v7710 = vunpack.c.l.b16 %v7422
    %v7711 = vunpack.c.h.b16 %v7422
    %v7712 = vunpack.c.l.b16 %v7423
    %v7713 = vunpack.c.h.b16 %v7423
    %v7714 = vunpack.c.l.b16 %v7424
    %v7715 = vunpack.c.h.b16 %v7424
    %v7716 = vunpack.c.l.b16 %v7425
    %v7717 = vunpack.c.h.b16 %v7425
    %v7718 = vunpack.c.l.b16 %v7426
    %v7719 = vunpack.c.h.b16 %v7426
    %v7720 = vunpack.c.l.b16 %v7427
    %v7721 = vunpack.c.h.b16 %v7427
    %v7722 = vunpack.c.l.b16 %v7428
    %v7723 = vunpack.c.h.b16 %v7428
    %v7724 = vunpack.c.l.b16 %v7429
    %v7725 = vunpack.c.h.b16 %v7429
    %v7726 = vunpack.c.l.b16 %v7430
    %v7727 = vunpack.c.h.b16 %v7430
    %v7728 = vunpack.c.l.b16 %v7431
    %v7729 = vunpack.c.h.b16 %v7431
    %v7730 = vunpack.c.l.b16 %v7432
    %v7731 = vunpack.c.h.b16 %v7432
    %v7732 = vunpack.c.l.b16 %v7433
    %v7733 = vunpack.c.h.b16 %v7433
    %v7734 = vunpack.c.l.b16 %v7434
    %v7735 = vunpack.c.h.b16 %v7434
    %v7736 = vunpack.c.l.b16 %v7435
    %v7737 = vunpack.c.h.b16 %v7435
    %v7738 = vunpack.c.l.b16 %v7436
    %v7739 = vunpack.c.h.b16 %v7436
    %v7740 = vunpack.c.l.b16 %v7437
    %v7741 = vunpack.c.h.b16 %v7437
    %v7742 = vunpack.c.l.b16 %v7438
    %v7743 = vunpack.c.h.b16 %v7438
    %v7744 = vunpack.c.l.b16 %v7439
    %v7745 = vunpack.c.h.b16 %v7439
    %v7746 = vunpack.c.l.b16 %v7440
    %v7747 = vunpack.c.h.b16 %v7440
    %v7748 = vunpack.c.l.b16 %v7441
    %v7749 = vunpack.c.h.b16 %v7441
    %v7750 = vunpack.c.l.b16 %v7442
    %v7751 = vunpack.c.h.b16 %v7442
    %v7752 = vunpack.c.l.b16 %v7443
    %v7753 = vunpack.c.h.b16 %v7443
    %v7754 = vunpack.c.l.b16 %v7444
    %v7755 = vunpack.c.h.b16 %v7444
    %v7756 = vunpack.c.l.b16 %v7445
    %v7757 = vunpack.c.h.b16 %v7445
    %v7758 = vunpack.c.l.b16 %v7446
    %v7759 = vunpack.c.h.b16 %v7446
    %v7760 = vunpack.c.l.b16 %v7447
    %v7761 = vunpack.c.h.b16 %v7447
    %v7762 = vunpack.c.l.b16 %v7448
    %v7763 = vunpack.c.h.b16 %v7448
    %v7764 = vunpack.c.l.b16 %v7449
    %v7765 = vunpack.c.h.b16 %v7449
    %v7766 = vunpack.c.l.b16 %v7450
    %v7767 = vunpack.c.h.b16 %v7450
    %v7768 = vunpack.c.l.b16 %v7451
    %v7769 = vunpack.c.h.b16 %v7451
    %v7770 = vunpack.c.l.b16 %v7452
    %v7771 = vunpack.c.h.b16 %v7452
    %v7772 = vunpack.c.l.b16 %v7453
    %v7773 = vunpack.c.h.b16 %v7453
    %v7774 = vunpack.c.l.b16 %v7454
    %v7775 = vunpack.c.h.b16 %v7454
    %v7776 = vunpack.c.l.b16 %v7455
    %v7777 = vunpack.c.h.b16 %v7455
    %v7778 = vunpack.c.l.b16 %v7456
    %v7779 = vunpack.c.h.b16 %v7456
    %v7780 = vunpack.c.l.b16 %v7457
    %v7781 = vunpack.c.h.b16 %v7457
    %v7782 = vunpack.c.l.b16 %v7458
    %v7783 = vunpack.c.h.b16 %v7458
    %v7784 = vunpack.c.l.b16 %v7459
    %v7785 = vunpack.c.h.b16 %v7459
    %v7786 = vunpack.c.l.b16 %v7460
    %v7787 = vunpack.c.h.b16 %v7460
    %v7788 = vunpack.c.l.b16 %v7461
    %v7789 = vunpack.c.h.b16 %v7461
    %v7790 = vunpack.c.l.b16 %v7462
    %v7791 = vunpack.c.h.b16 %v7462
    %v7792 = vunpack.c.l.b16 %v7463
    %v7793 = vunpack.c.h.b16 %v7463
    %v7794 = vunpack.c.l.b16 %v7464
    %v7795 = vunpack.c.h.b16 %v7464
    %v7796 = vunpack.c.l.b16 %v7465
    %v7797 = vunpack.c.h.b16 %v7465
    %v7798 = vunpack.c.l.b16 %v7466
    %v7799 = vunpack.c.h.b16 %v7466
    %v7800 = vunpack.c.l.b16 %v7467
    %v7801 = vunpack.c.h.b16 %v7467
    %v7802 = vunpack.c.l.b16 %v7468
    %v7803 = vunpack.c.h.b16 %v7468
    %v7804 = vunpack.c.l.b16 %v7469
    %v7805 = vunpack.c.h.b16 %v7469
    %v7806 = vunpack.c.l.b16 %v7470
    %v7807 = vunpack.c.h.b16 %v7470
    %v7808 = vunpack.c.l.b16 %v7471
    %v7809 = vunpack.c.h.b16 %v7471
    %v7810 = vunpack.c.l.b16 %v7472
    %v7811 = vunpack.c.h.b16 %v7472
    %v7812 = vunpack.c.l.b16 %v7473
    %v7813 = vunpack.c.h.b16 %v7473
    %v7814 = vunpack.c.l.b16 %v7474
    %v7815 = vunpack.c.h.b16 %v7474
    %v7816 = vunpack.c.l.b16 %v7475
    %v7817 = vunpack.c.h.b16 %v7475
    %v7818 = vunpack.c.l.b16 %v7476
    %v7819 = vunpack.c.h.b16 %v7476
    %v7820 = vunpack.c.l.b16 %v7477
    %v7821 = vunpack.c.h.b16 %v7477
    %v7822 = vunpack.c.l.b16 %v7478
    %v7823 = vunpack.c.h.b16 %v7478
    %v7824 = vunpack.c.l.b16 %v7479
    %v7825 = vunpack.c.h.b16 %v7479
    %v7826 = vunpack.c.l.b16 %v7480
    %v7827 = vunpack.c.h.b16 %v7480
    %v7828 = vunpack.c.l.b16 %v7481
    %v7829 = vunpack.c.h.b16 %v7481
    %v7830 = vunpack.c.l.b16 %v7482
    %v7831 = vunpack.c.h.b16 %v7482
    %v7832 = vunpack.c.l.b16 %v7483
    %v7833 = vunpack.c.h.b16 %v7483
    %v7834 = vunpack.c.l.b16 %v7484
    %v7835 = vunpack.c.h.b16 %v7484
    %v7836 = vunpack.c.l.b16 %v7485
    %v7837 = vunpack.c.h.b16 %v7485
    %v7838 = vunpack.c.l.b16 %v7486
    %v7839 = vunpack.c.h.b16 %v7486
    %v7840 = vunpack.c.l.b16 %v7487
    %v7841 = vunpack.c.h.b16 %v7487
    %v7842 = vunpack.c.l.b16 %v7488
    %v7843 = vunpack.c.h.b16 %v7488
    %v7844 = vunpack.c.l.b16 %v7489
    %v7845 = vunpack.c.h.b16 %v7489
    %v7846 = vunpack.c.l.b16 %v7490
    %v7847 = vunpack.c.h.b16 %v7490
    %v7848 = vunpack.c.l.b16 %v7491
    %v7849 = vunpack.c.h.b16 %v7491
    %v7850 = vunpack.c.l.b16 %v7492
    %v7851 = vunpack.c.h.b16 %v7492
    %v7852 = vunpack.c.l.b16 %v7493
    %v7853 = vunpack.c.h.b16 %v7493
    %v7854 = vunpack.c.l.b16 %v7494
    %v7855 = vunpack.c.h.b16 %v7494
    %v7856 = vunpack.c.l.b16 %v7495
    %v7857 = vunpack.c.h.b16 %v7495
    %v7858 = vunpack.c.l.b16 %v7496
    %v7859 = vunpack.c.h.b16 %v7496
    %v7860 = vunpack.c.l.b16 %v7497
    %v7861 = vunpack.c.h.b16 %v7497
    %v7862 = vunpack.c.l.b16 %v7498
    %v7863 = vunpack.c.h.b16 %v7498
    %v7864 = vunpack.c.l.b16 %v7499
    %v7865 = vunpack.c.h.b16 %v7499
    %v7866 = vunpack.c.l.b16 %v7500
    %v7867 = vunpack.c.h.b16 %v7500
    %v7868 = vunpack.c.l.b16 %v7501
    %v7869 = vunpack.c.h.b16 %v7501
    %v7870 = vunpack.c.l.b16 %v7502
    %v7871 = vunpack.c.h.b16 %v7502
    %v7872 = vunpack.c.l.b16 %v7503
    %v7873 = vunpack.c.h.b16 %v7503
    %v7874 = vunpack.c.l.b16 %v7504
    %v7875 = vunpack.c.h.b16 %v7504
    %v7876 = vunpack.c.l.b16 %v7505
    %v7877 = vunpack.c.h.b16 %v7505
    %v7878 = vunpack.c.l.b16 %v7506
    %v7879 = vunpack.c.h.b16 %v7506
    %v7880 = vunpack.c.l.b16 %v7507
    %v7881 = vunpack.c.h.b16 %v7507
    %v7882 = vunpack.c.l.b16 %v7508
    %v7883 = vunpack.c.h.b16 %v7508
    %v7884 = vunpack.c.l.b16 %v7509
    %v7885 = vunpack.c.h.b16 %v7509
    %v7886 = vunpack.c.l.b16 %v7510
    %v7887 = vunpack.c.h.b16 %v7510
    %v7888 = vunpack.c.l.b16 %v7511
    %v7889 = vunpack.c.h.b16 %v7511
    %v7890 = vunpack.c.l.b16 %v7512
    %v7891 = vunpack.c.h.b16 %v7512
    %v7892 = vunpack.c.l.b16 %v7513
    %v7893 = vunpack.c.h.b16 %v7513
    %v7894 = vunpack.c.l.b16 %v7514
    %v7895 = vunpack.c.h.b16 %v7514
    %v7896 = vunpack.c.l.b16 %v7515
    %v7897 = vunpack.c.h.b16 %v7515
    %v7898 = vunpack.c.l.b16 %v7516
    %v7899 = vunpack.c.h.b16 %v7516
    %v7900 = vunpack.c.l.b16 %v7517
    %v7901 = vunpack.c.h.b16 %v7517
    %v7902 = vunpack.c.l.b16 %v7518
    %v7903 = vunpack.c.h.b16 %v7518
    %v7904 = vunpack.c.l.b16 %v7519
    %v7905 = vunpack.c.h.b16 %v7519
    %v7906 = vunpack.c.l.b16 %v7520
    %v7907 = vunpack.c.h.b16 %v7520
    %v7908 = vunpack.c.l.b16 %v7521
    %v7909 = vunpack.c.h.b16 %v7521
    %v7910 = vunpack.c.l.b16 %v7522
    %v7911 = vunpack.c.h.b16 %v7522
    %v7912 = vunpack.c.l.b16 %v7523
    %v7913 = vunpack.c.h.b16 %v7523
    %v7914 = vpack.c.b16 %v7660, %v7658
    %v7915 = vpack.c.b16 %v7661, %v7659
    %v7916 = vpack.c.b16 %v7664, %v7662
    %v7917 = vpack.c.b16 %v7665, %v7663
    %v7918 = vpack.c.b16 %v7668, %v7666
    %v7919 = vpack.c.b16 %v7669, %v7667
    %v7920 = vpack.c.b16 %v7672, %v7670
    %v7921 = vpack.c.b16 %v7673, %v7671
    %v7922 = vpack.c.b16 %v7676, %v7674
    %v7923 = vpack.c.b16 %v7677, %v7675
    %v7924 = vpack.c.b16 %v7680, %v7678
    %v7925 = vpack.c.b16 %v7681, %v7679
    %v7926 = vpack.c.b16 %v7684, %v7682
    %v7927 = vpack.c.b16 %v7685, %v7683
    %v7928 = vpack.c.b16 %v7688, %v7686
    %v7929 = vpack.c.b16 %v7689, %v7687
    %v7930 = vpack.c.b16 %v7692, %v7690
    %v7931 = vpack.c.b16 %v7693, %v7691
    %v7932 = vpack.c.b16 %v7696, %v7694
    %v7933 = vpack.c.b16 %v7697, %v7695
    %v7934 = vpack.c.b16 %v7700, %v7698
    %v7935 = vpack.c.b16 %v7701, %v7699
    %v7936 = vpack.c.b16 %v7704, %v7702
    %v7937 = vpack.c.b16 %v7705, %v7703
    %v7938 = vpack.c.b16 %v7708, %v7706
    %v7939 = vpack.c.b16 %v7709, %v7707
    %v7940 = vpack.c.b16 %v7712, %v7710
    %v7941 = vpack.c.b16 %v7713, %v7711
    %v7942 = vpack.c.b16 %v7716, %v7714
    %v7943 = vpack.c.b16 %v7717, %v7715
    %v7944 = vpack.c.b16 %v7720, %v7718
    %v7945 = vpack.c.b16 %v7721, %v7719
    %v7946 = vpack.c.b16 %v7724, %v7722
    %v7947 = vpack.c.b16 %v7725, %v7723
    %v7948 = vpack.c.b16 %v7728, %v7726
    %v7949 = vpack.c.b16 %v7729, %v7727
    %v7950 = vpack.c.b16 %v7732, %v7730
    %v7951 = vpack.c.b16 %v7733, %v7731
    %v7952 = vpack.c.b16 %v7736, %v7734
    %v7953 = vpack.c.b16 %v7737, %v7735
    %v7954 = vpack.c.b16 %v7740, %v7738
    %v7955 = vpack.c.b16 %v7741, %v7739
    %v7956 = vpack.c.b16 %v7744, %v7742
    %v7957 = vpack.c.b16 %v7745, %v7743
    %v7958 = vpack.c.b16 %v7748, %v7746
    %v7959 = vpack.c.b16 %v7749, %v7747
    %v7960 = vpack.c.b16 %v7752, %v7750
    %v7961 = vpack.c.b16 %v7753, %v7751
    %v7962 = vpack.c.b16 %v7756, %v7754
    %v7963 = vpack.c.b16 %v7757, %v7755
    %v7964 = vpack.c.b16 %v7760, %v7758
    %v7965 = vpack.c.b16 %v7761, %v7759
    %v7966 = vpack.c.b16 %v7764, %v7762
    %v7967 = vpack.c.b16 %v7765, %v7763
    %v7968 = vpack.c.b16 %v7768, %v7766
    %v7969 = vpack.c.b16 %v7769, %v7767
    %v7970 = vpack.c.b16 %v7772, %v7770
    %v7971 = vpack.c.b16 %v7773, %v7771
    %v7972 = vpack.c.b16 %v7776, %v7774
    %v7973 = vpack.c.b16 %v7777, %v7775
    %v7974 = vpack.c.b16 %v7780, %v7778
    %v7975 = vpack.c.b16 %v7781, %v7779
    %v7976 = vpack.c.b16 %v7784, %v7782
    %v7977 = vpack.c.b16 %v7785, %v7783
    %v7978 = vpack.c.b16 %v7788, %v7786
    %v7979 = vpack.c.b16 %v7789, %v7787
    %v7980 = vpack.c.b16 %v7792, %v7790
    %v7981 = vpack.c.b16 %v7793, %v7791
    %v7982 = vpack.c.b16 %v7796, %v7794
    %v7983 = vpack.c.b16 %v7797, %v7795
    %v7984 = vpack.c.b16 %v7800, %v7798
    %v7985 = vpack.c.b16 %v7801, %v7799
    %v7986 = vpack.c.b16 %v7804, %v7802
    %v7987 = vpack.c.b16 %v7805, %v7803
    %v7988 = vpack.c.b16 %v7808, %v7806
    %v7989 = vpack.c.b16 %v7809, %v7807
    %v7990 = vpack.c.b16 %v7812, %v7810
    %v7991 = vpack.c.b16 %v7813, %v7811
    %v7992 = vpack.c.b16 %v7816, %v7814
    %v7993 = vpack.c.b16 %v7817, %v7815
    %v7994 = vpack.c.b16 %v7820, %v7818
    %v7995 = vpack.c.b16 %v7821, %v7819
    %v7996 = vpack.c.b16 %v7824, %v7822
    %v7997 = vpack.c.b16 %v7825, %v7823
    %v7998 = vpack.c.b16 %v7828, %v7826
    %v7999 = vpack.c.b16 %v7829, %v7827
    %v8000 = vpack.c.b16 %v7832, %v7830
    %v8001 = vpack.c.b16 %v7833, %v7831
    %v8002 = vpack.c.b16 %v7836, %v7834
    %v8003 = vpack.c.b16 %v7837, %v7835
    %v8004 = vpack.c.b16 %v7840, %v7838
    %v8005 = vpack.c.b16 %v7841, %v7839
    %v8006 = vpack.c.b16 %v7844, %v7842
    %v8007 = vpack.c.b16 %v7845, %v7843
    %v8008 = vpack.c.b16 %v7848, %v7846
    %v8009 = vpack.c.b16 %v7849, %v7847
    %v8010 = vpack.c.b16 %v7852, %v7850
    %v8011 = vpack.c.b16 %v7853, %v7851
    %v8012 = vpack.c.b16 %v7856, %v7854
    %v8013 = vpack.c.b16 %v7857, %v7855
    %v8014 = vpack.c.b16 %v7860, %v7858
    %v8015 = vpack.c.b16 %v7861, %v7859
    %v8016 = vpack.c.b16 %v7864, %v7862
    %v8017 = vpack.c.b16 %v7865, %v7863
    %v8018 = vpack.c.b16 %v7868, %v7866
    %v8019 = vpack.c.b16 %v7869, %v7867
    %v8020 = vpack.c.b16 %v7872, %v7870
    %v8021 = vpack.c.b16 %v7873, %v7871
    %v8022 = vpack.c.b16 %v7876, %v7874
    %v8023 = vpack.c.b16 %v7877, %v7875
    %v8024 = vpack.c.b16 %v7880, %v7878
    %v8025 = vpack.c.b16 %v7881, %v7879
    %v8026 = vpack.c.b16 %v7884, %v7882
    %v8027 = vpack.c.b16 %v7885, %v7883
    %v8028 = vpack.c.b16 %v7888, %v7886
    %v8029 = vpack.c.b16 %v7889, %v7887
    %v8030 = vpack.c.b16 %v7892, %v7890
    %v8031 = vpack.c.b16 %v7893, %v7891
    %v8032 = vpack.c.b16 %v7896, %v7894
    %v8033 = vpack.c.b16 %v7897, %v7895
    %v8034 = vpack.c.b16 %v7900, %v7898
    %v8035 = vpack.c.b16 %v7901, %v7899
    %v8036 = vpack.c.b16 %v7904, %v7902
    %v8037 = vpack.c.b16 %v7905, %v7903
    %v8038 = vpack.c.b16 %v7908, %v7906
    %v8039 = vpack.c.b16 %v7909, %v7907
    %v8040 = vpack.c.b16 %v7912, %v7910
    %v8041 = vpack.c.b16 %v7913, %v7911
    %8170 = vmatpush.bf16.msra.mxu0 %v7928
    %8171 = vmatpush.bf16.msra.mxu0 %v7926
    %8172 = vmatpush.bf16.msra.mxu0 %v7924
    %8173 = vmatpush.bf16.msra.mxu0 %v7922
    %8174 = vmatpush.bf16.msra.mxu0 %v7920
    %8175 = vmatpush.bf16.msra.mxu0 %v7918
    %8176 = vmatpush.bf16.msra.mxu0 %v7916
    %8177 = vmatpush.bf16.msra.mxu0 %v7914
    %8178 = vmatmul.bf16.gmra.mxu0 %v7388
    %v8179 = vpop.f32.mrf.mxu0
    %v8180 = vadd.f32 %v7526, %v8179
    %v8181 = vpop.f32.mrf.mxu0
    %8182 = vdwg.mxu0
    %8183 = vmatpush.bf16.msra.mxu0 %v7944
    %8184 = vmatpush.bf16.msra.mxu0 %v7942
    %8185 = vmatpush.bf16.msra.mxu0 %v7940
    %8186 = vmatpush.bf16.msra.mxu0 %v7938
    %8187 = vmatpush.bf16.msra.mxu0 %v7936
    %8188 = vmatpush.bf16.msra.mxu0 %v7934
    %8189 = vmatpush.bf16.msra.mxu0 %v7932
    %8190 = vmatpush.bf16.msra.mxu0 %v7930
    %8191 = vmatmul.bf16.gmra.mxu0 %v7389
    %v8192 = vpop.f32.mrf.mxu0
    %v8193 = vadd.f32 %v8180, %v8192
    %v8194 = vpop.f32.mrf.mxu0
    %8195 = vdwg.mxu0
    %8196 = vmatpush.bf16.msra.mxu0 %v7960
    %8197 = vmatpush.bf16.msra.mxu0 %v7958
    %8198 = vmatpush.bf16.msra.mxu0 %v7956
    %8199 = vmatpush.bf16.msra.mxu0 %v7954
    %8200 = vmatpush.bf16.msra.mxu0 %v7952
    %8201 = vmatpush.bf16.msra.mxu0 %v7950
    %8202 = vmatpush.bf16.msra.mxu0 %v7948
    %8203 = vmatpush.bf16.msra.mxu0 %v7946
    %8204 = vmatmul.bf16.gmra.mxu0 %v7390
    %v8205 = vpop.f32.mrf.mxu0
    %v8206 = vadd.f32 %v8193, %v8205
    %v8207 = vpop.f32.mrf.mxu0
    %8208 = vdwg.mxu0
    %8209 = vmatpush.bf16.msra.mxu0 %v7976
    %8210 = vmatpush.bf16.msra.mxu0 %v7974
    %8211 = vmatpush.bf16.msra.mxu0 %v7972
    %8212 = vmatpush.bf16.msra.mxu0 %v7970
    %8213 = vmatpush.bf16.msra.mxu0 %v7968
    %8214 = vmatpush.bf16.msra.mxu0 %v7966
    %8215 = vmatpush.bf16.msra.mxu0 %v7964
    %8216 = vmatpush.bf16.msra.mxu0 %v7962
    %8217 = vmatmul.bf16.gmra.mxu0 %v7391
    %v8218 = vpop.f32.mrf.mxu0
    %v8219 = vadd.f32 %v8206, %v8218
    %v8220 = vpop.f32.mrf.mxu0
    %8221 = vdwg.mxu0
    %8222 = vmatpush.bf16.msra.mxu0 %v7992
    %8223 = vmatpush.bf16.msra.mxu0 %v7990
    %8224 = vmatpush.bf16.msra.mxu0 %v7988
    %8225 = vmatpush.bf16.msra.mxu0 %v7986
    %8226 = vmatpush.bf16.msra.mxu0 %v7984
    %8227 = vmatpush.bf16.msra.mxu0 %v7982
    %8228 = vmatpush.bf16.msra.mxu0 %v7980
    %8229 = vmatpush.bf16.msra.mxu0 %v7978
    %8230 = vmatmul.bf16.gmra.mxu0 %v7392
    %v8231 = vpop.f32.mrf.mxu0
    %v8232 = vadd.f32 %v8219, %v8231
    %v8233 = vpop.f32.mrf.mxu0
    %8234 = vdwg.mxu0
    %8235 = vmatpush.bf16.msra.mxu0 %v8008
    %8236 = vmatpush.bf16.msra.mxu0 %v8006
    %8237 = vmatpush.bf16.msra.mxu0 %v8004
    %8238 = vmatpush.bf16.msra.mxu0 %v8002
    %8239 = vmatpush.bf16.msra.mxu0 %v8000
    %8240 = vmatpush.bf16.msra.mxu0 %v7998
    %8241 = vmatpush.bf16.msra.mxu0 %v7996
    %8242 = vmatpush.bf16.msra.mxu0 %v7994
    %8243 = vmatmul.bf16.gmra.mxu0 %v7393
    %v8244 = vpop.f32.mrf.mxu0
    %v8245 = vadd.f32 %v8232, %v8244
    %v8246 = vpop.f32.mrf.mxu0
    %8247 = vdwg.mxu0
    %8248 = vmatpush.bf16.msra.mxu0 %v8024
    %8249 = vmatpush.bf16.msra.mxu0 %v8022
    %8250 = vmatpush.bf16.msra.mxu0 %v8020
    %8251 = vmatpush.bf16.msra.mxu0 %v8018
    %8252 = vmatpush.bf16.msra.mxu0 %v8016
    %8253 = vmatpush.bf16.msra.mxu0 %v8014
    %8254 = vmatpush.bf16.msra.mxu0 %v8012
    %8255 = vmatpush.bf16.msra.mxu0 %v8010
    %8256 = vmatmul.bf16.gmra.mxu0 %v7394
    %v8257 = vpop.f32.mrf.mxu0
    %v8258 = vadd.f32 %v8245, %v8257
    %v8259 = vpop.f32.mrf.mxu0
    %8260 = vdwg.mxu0
    %8261 = vmatpush.bf16.msra.mxu0 %v8040
    %8262 = vmatpush.bf16.msra.mxu0 %v8038
    %8263 = vmatpush.bf16.msra.mxu0 %v8036
    %8264 = vmatpush.bf16.msra.mxu0 %v8034
    %8265 = vmatpush.bf16.msra.mxu0 %v8032
    %8266 = vmatpush.bf16.msra.mxu0 %v8030
    %8267 = vmatpush.bf16.msra.mxu0 %v8028
    %8268 = vmatpush.bf16.msra.mxu0 %v8026
    %8269 = vmatmul.bf16.gmra.mxu0 %v7395
    %v8270 = vpop.f32.mrf.mxu0
    %v8271 = vadd.f32 %v8258, %v8270
    %v8272 = vpop.f32.mrf.mxu0
    %8273 = vdwg.mxu0
    %8274 = vmatpush.bf16.msra.mxu0 %v7929
    %8275 = vmatpush.bf16.msra.mxu0 %v7927
    %8276 = vmatpush.bf16.msra.mxu0 %v7925
    %8277 = vmatpush.bf16.msra.mxu0 %v7923
    %8278 = vmatpush.bf16.msra.mxu0 %v7921
    %8279 = vmatpush.bf16.msra.mxu0 %v7919
    %8280 = vmatpush.bf16.msra.mxu0 %v7917
    %8281 = vmatpush.bf16.msra.mxu0 %v7915
    %8282 = vmatmul.bf16.gmra.mxu0 %v7388
    %v8283 = vpop.f32.mrf.mxu0
    %v8284 = vadd.f32 %v7527, %v8283
    %v8285 = vpop.f32.mrf.mxu0
    %8286 = vdwg.mxu0
    %8287 = vmatpush.bf16.msra.mxu0 %v7945
    %8288 = vmatpush.bf16.msra.mxu0 %v7943
    %8289 = vmatpush.bf16.msra.mxu0 %v7941
    %8290 = vmatpush.bf16.msra.mxu0 %v7939
    %8291 = vmatpush.bf16.msra.mxu0 %v7937
    %8292 = vmatpush.bf16.msra.mxu0 %v7935
    %8293 = vmatpush.bf16.msra.mxu0 %v7933
    %8294 = vmatpush.bf16.msra.mxu0 %v7931
    %8295 = vmatmul.bf16.gmra.mxu0 %v7389
    %v8296 = vpop.f32.mrf.mxu0
    %v8297 = vadd.f32 %v8284, %v8296
    %v8298 = vpop.f32.mrf.mxu0
    %8299 = vdwg.mxu0
    %8300 = vmatpush.bf16.msra.mxu0 %v7961
    %8301 = vmatpush.bf16.msra.mxu0 %v7959
    %8302 = vmatpush.bf16.msra.mxu0 %v7957
    %8303 = vmatpush.bf16.msra.mxu0 %v7955
    %8304 = vmatpush.bf16.msra.mxu0 %v7953
    %8305 = vmatpush.bf16.msra.mxu0 %v7951
    %8306 = vmatpush.bf16.msra.mxu0 %v7949
    %8307 = vmatpush.bf16.msra.mxu0 %v7947
    %8308 = vmatmul.bf16.gmra.mxu0 %v7390
    %v8309 = vpop.f32.mrf.mxu0
    %v8310 = vadd.f32 %v8297, %v8309
    %v8311 = vpop.f32.mrf.mxu0
    %8312 = vdwg.mxu0
    %8313 = vmatpush.bf16.msra.mxu0 %v7977
    %8314 = vmatpush.bf16.msra.mxu0 %v7975
    %8315 = vmatpush.bf16.msra.mxu0 %v7973
    %8316 = vmatpush.bf16.msra.mxu0 %v7971
    %8317 = vmatpush.bf16.msra.mxu0 %v7969
    %8318 = vmatpush.bf16.msra.mxu0 %v7967
    %8319 = vmatpush.bf16.msra.mxu0 %v7965
    %8320 = vmatpush.bf16.msra.mxu0 %v7963
    %8321 = vmatmul.bf16.gmra.mxu0 %v7391
    %v8322 = vpop.f32.mrf.mxu0
    %v8323 = vadd.f32 %v8310, %v8322
    %v8324 = vpop.f32.mrf.mxu0
    %8325 = vdwg.mxu0
    %8326 = vmatpush.bf16.msra.mxu0 %v7993
    %8327 = vmatpush.bf16.msra.mxu0 %v7991
    %8328 = vmatpush.bf16.msra.mxu0 %v7989
    %8329 = vmatpush.bf16.msra.mxu0 %v7987
    %8330 = vmatpush.bf16.msra.mxu0 %v7985
    %8331 = vmatpush.bf16.msra.mxu0 %v7983
    %8332 = vmatpush.bf16.msra.mxu0 %v7981
    %8333 = vmatpush.bf16.msra.mxu0 %v7979
    %8334 = vmatmul.bf16.gmra.mxu0 %v7392
    %v8335 = vpop.f32.mrf.mxu0
    %v8336 = vadd.f32 %v8323, %v8335
    %v8337 = vpop.f32.mrf.mxu0
    %8338 = vdwg.mxu0
    %8339 = vmatpush.bf16.msra.mxu0 %v8009
    %8340 = vmatpush.bf16.msra.mxu0 %v8007
    %8341 = vmatpush.bf16.msra.mxu0 %v8005
    %8342 = vmatpush.bf16.msra.mxu0 %v8003
    %8343 = vmatpush.bf16.msra.mxu0 %v8001
    %8344 = vmatpush.bf16.msra.mxu0 %v7999
    %8345 = vmatpush.bf16.msra.mxu0 %v7997
    %8346 = vmatpush.bf16.msra.mxu0 %v7995
    %8347 = vmatmul.bf16.gmra.mxu0 %v7393
    %v8348 = vpop.f32.mrf.mxu0
    %v8349 = vadd.f32 %v8336, %v8348
    %v8350 = vpop.f32.mrf.mxu0
    %8351 = vdwg.mxu0
    %8352 = vmatpush.bf16.msra.mxu0 %v8025
    %8353 = vmatpush.bf16.msra.mxu0 %v8023
    %8354 = vmatpush.bf16.msra.mxu0 %v8021
    %8355 = vmatpush.bf16.msra.mxu0 %v8019
    %8356 = vmatpush.bf16.msra.mxu0 %v8017
    %8357 = vmatpush.bf16.msra.mxu0 %v8015
    %8358 = vmatpush.bf16.msra.mxu0 %v8013
    %8359 = vmatpush.bf16.msra.mxu0 %v8011
    %8360 = vmatmul.bf16.gmra.mxu0 %v7394
    %v8361 = vpop.f32.mrf.mxu0
    %v8362 = vadd.f32 %v8349, %v8361
    %v8363 = vpop.f32.mrf.mxu0
    %8364 = vdwg.mxu0
    %8365 = vmatpush.bf16.msra.mxu0 %v8041
    %8366 = vmatpush.bf16.msra.mxu0 %v8039
    %8367 = vmatpush.bf16.msra.mxu0 %v8037
    %8368 = vmatpush.bf16.msra.mxu0 %v8035
    %8369 = vmatpush.bf16.msra.mxu0 %v8033
    %8370 = vmatpush.bf16.msra.mxu0 %v8031
    %8371 = vmatpush.bf16.msra.mxu0 %v8029
    %8372 = vmatpush.bf16.msra.mxu0 %v8027
    %8373 = vmatmul.bf16.gmra.mxu0 %v7395
    %v8374 = vpop.f32.mrf.mxu0
    %v8375 = vadd.f32 %v8362, %v8374
    %v8376 = vpop.f32.mrf.mxu0
    %8377 = vdwg.mxu0
    %v8378 = vmax.f32 %v8271, 0.0
    %v8379 = vmax.f32 %v8375, 0.0
    %v8380 = vpack.c.bf16 %v8378, %v8378
    %v8381 = vpack.c.bf16 %v8379, %v8379
    %v8382 = vld [vmem:[%s11] sm:$0xf]
    %v8383 = vld [vmem:[%s11 + $0x4] sm:$0xf]
    %v8384 = vld [vmem:[%s11 + $0x8] sm:$0xf]
    %v8385 = vld [vmem:[%s11 + $0xc] sm:$0xf]
    %v8386 = vld [vmem:[%s11 + $0x10] sm:$0xf]
    %v8387 = vld [vmem:[%s11 + $0x14] sm:$0xf]
    %v8388 = vld [vmem:[%s11 + $0x18] sm:$0xf]
    %v8389 = vld [vmem:[%s11 + $0x1c] sm:$0xf]
    %v8390 = vld [vmem:[%s11 + $0x20] sm:$0xf]
    %v8391 = vld [vmem:[%s11 + $0x24] sm:$0xf]
    %v8392 = vld [vmem:[%s11 + $0x28] sm:$0xf]
    %v8393 = vld [vmem:[%s11 + $0x2c] sm:$0xf]
    %v8394 = vld [vmem:[%s11 + $0x30] sm:$0xf]
    %v8395 = vld [vmem:[%s11 + $0x34] sm:$0xf]
    %v8396 = vld [vmem:[%s11 + $0x38] sm:$0xf]
    %v8397 = vld [vmem:[%s11 + $0x3c] sm:$0xf]
    %v8398 = vld [vmem:[%s11 + $0x40] sm:$0xf]
    %v8399 = vld [vmem:[%s11 + $0x44] sm:$0xf]
    %v8400 = vld [vmem:[%s11 + $0x48] sm:$0xf]
    %v8401 = vld [vmem:[%s11 + $0x4c] sm:$0xf]
    %v8402 = vld [vmem:[%s11 + $0x50] sm:$0xf]
    %v8403 = vld [vmem:[%s11 + $0x54] sm:$0xf]
    %v8404 = vld [vmem:[%s11 + $0x58] sm:$0xf]
    %v8405 = vld [vmem:[%s11 + $0x5c] sm:$0xf]
    %v8406 = vld [vmem:[%s11 + $0x60] sm:$0xf]
    %v8407 = vld [vmem:[%s11 + $0x64] sm:$0xf]
    %v8408 = vld [vmem:[%s11 + $0x68] sm:$0xf]
    %v8409 = vld [vmem:[%s11 + $0x6c] sm:$0xf]
    %v8410 = vld [vmem:[%s11 + $0x70] sm:$0xf]
    %v8411 = vld [vmem:[%s11 + $0x74] sm:$0xf]
    %v8412 = vld [vmem:[%s11 + $0x78] sm:$0xf]
    %v8413 = vld [vmem:[%s11 + $0x7c] sm:$0xf]
    %v8414 = vld [vmem:[#allocation17] sm:$0x1]
    %v8416 = vperm.slane %v8414, 0
    %v8450 = vunpack.c.l.b16 %v8382
    %v8451 = vunpack.c.l.b16 %v8383
    %v8452 = vunpack.c.l.b16 %v8384
    %v8453 = vunpack.c.l.b16 %v8385
    %v8454 = vunpack.c.l.b16 %v8386
    %v8455 = vunpack.c.l.b16 %v8387
    %v8456 = vunpack.c.l.b16 %v8388
    %v8457 = vunpack.c.l.b16 %v8389
    %v8458 = vunpack.c.l.b16 %v8390
    %v8459 = vunpack.c.l.b16 %v8391
    %v8460 = vunpack.c.l.b16 %v8392
    %v8461 = vunpack.c.l.b16 %v8393
    %v8462 = vunpack.c.l.b16 %v8394
    %v8463 = vunpack.c.l.b16 %v8395
    %v8464 = vunpack.c.l.b16 %v8396
    %v8465 = vunpack.c.l.b16 %v8397
    %v8466 = vunpack.c.l.b16 %v8398
    %v8467 = vunpack.c.l.b16 %v8399
    %v8468 = vunpack.c.l.b16 %v8400
    %v8469 = vunpack.c.l.b16 %v8401
    %v8470 = vunpack.c.l.b16 %v8402
    %v8471 = vunpack.c.l.b16 %v8403
    %v8472 = vunpack.c.l.b16 %v8404
    %v8473 = vunpack.c.l.b16 %v8405
    %v8474 = vunpack.c.l.b16 %v8406
    %v8475 = vunpack.c.l.b16 %v8407
    %v8476 = vunpack.c.l.b16 %v8408
    %v8477 = vunpack.c.l.b16 %v8409
    %v8478 = vunpack.c.l.b16 %v8410
    %v8479 = vunpack.c.l.b16 %v8411
    %v8480 = vunpack.c.l.b16 %v8412
    %v8481 = vunpack.c.l.b16 %v8413
    %v8482 = vpack.c.b16 %v8451, %v8450
    %v8483 = vpack.c.b16 %v8453, %v8452
    %v8484 = vpack.c.b16 %v8455, %v8454
    %v8485 = vpack.c.b16 %v8457, %v8456
    %v8486 = vpack.c.b16 %v8459, %v8458
    %v8487 = vpack.c.b16 %v8461, %v8460
    %v8488 = vpack.c.b16 %v8463, %v8462
    %v8489 = vpack.c.b16 %v8465, %v8464
    %v8490 = vpack.c.b16 %v8467, %v8466
    %v8491 = vpack.c.b16 %v8469, %v8468
    %v8492 = vpack.c.b16 %v8471, %v8470
    %v8493 = vpack.c.b16 %v8473, %v8472
    %v8494 = vpack.c.b16 %v8475, %v8474
    %v8495 = vpack.c.b16 %v8477, %v8476
    %v8496 = vpack.c.b16 %v8479, %v8478
    %v8497 = vpack.c.b16 %v8481, %v8480
    %8514 = vmatpush.bf16.msra.mxu0 %v8489
    %8515 = vmatpush.bf16.msra.mxu0 %v8488
    %8516 = vmatpush.bf16.msra.mxu0 %v8487
    %8517 = vmatpush.bf16.msra.mxu0 %v8486
    %8518 = vmatpush.bf16.msra.mxu0 %v8485
    %8519 = vmatpush.bf16.msra.mxu0 %v8484
    %8520 = vmatpush.bf16.msra.mxu0 %v8483
    %8521 = vmatpush.bf16.msra.mxu0 %v8482
    %8522 = vmatmul.bf16.gmra.mxu0 %v8380
    %v8523 = vpop.f32.mrf.mxu0
    %v8524 = vadd.f32 %v8416, %v8523
    %v8525 = vpop.f32.mrf.mxu0
    %8526 = vdwg.mxu0
    %8527 = vmatpush.bf16.msra.mxu0 %v8497
    %8528 = vmatpush.bf16.msra.mxu0 %v8496
    %8529 = vmatpush.bf16.msra.mxu0 %v8495
    %8530 = vmatpush.bf16.msra.mxu0 %v8494
    %8531 = vmatpush.bf16.msra.mxu0 %v8493
    %8532 = vmatpush.bf16.msra.mxu0 %v8492
    %8533 = vmatpush.bf16.msra.mxu0 %v8491
    %8534 = vmatpush.bf16.msra.mxu0 %v8490
    %8535 = vmatmul.bf16.gmra.mxu0 %v8381
    %v8536 = vpop.f32.mrf.mxu0
    %v8537 = vadd.f32 %v8524, %v8536
    %v8538 = vpop.f32.mrf.mxu0
    %8539 = vdwg.mxu0
    %v8540 = vld [vmem:[%s1] sm:$0xff]
    %v8541 = vld [vmem:[%s1 + $0x8] sm:$0x3]
    %v8542 = vld [vmem:[%s1 + $0x10] sm:$0xff]
    %v8543 = vld [vmem:[%s1 + $0x18] sm:$0x3]
    %v8545 = vrot.slane %v8537, 1
    %v8546 = vperm.slane %v8537, 0
    %v8547 = vperm.slane %v8545, 0
    %v8550 = vmul.f32 %v8540, %v8546
    %v8551 = vmul.f32 %v8541, %v8546
    %v8552 = vmul.f32 %v8542, %v8547
    %v8553 = vmul.f32 %v8543, %v8547
    %vm8554 = vcmask 154624
    %v8555 = vsel %vm8554, %v8550, 0.0
    %8556 = vadd.xlane.f32.xlu0 %v8555
    %v8557 = vpop.xlane.xlu0 %8556
    %vm8558 = vcmask 148480
    %v8559 = vsel %vm8558, %v8551, 0.0
    %8560 = vadd.xlane.f32.xlu0 %v8559
    %v8561 = vpop.xlane.xlu0 %8560
    %v8562 = vsel %vm8554, %v8552, 0.0
    %8563 = vadd.xlane.f32.xlu0 %v8562
    %v8564 = vpop.xlane.xlu0 %8563
    %v8565 = vsel %vm8558, %v8553, 0.0
    %8566 = vadd.xlane.f32.xlu0 %v8565
    %v8567 = vpop.xlane.xlu0 %8566
    %v8572 = vlaneseq
    %v8573 = vand.u32 %v8572, 127
    %v8574 = vperm.slane %v8557, %v8573
    %v8575 = vadd.s32 %v8573, 4294967288
    %v8576 = vperm.slane %v8561, %v8575
    %vm8577 = vcmask 130112
    %v8578 = vsel %vm8577, %v8576, %v8574
    %v8579 = vperm.slane %v8564, %v8573
    %v8580 = vperm.slane %v8567, %v8575
    %v8581 = vsel %vm8577, %v8580, %v8579
    %vm8582 = vcmask 1041409
    %v8583 = vsel %vm8582, %v8581, %v8578
    %vm8585 = vcmask 74752
    %8586 = vst.msk [vmem:[#allocation29] sm:$0x3] %vm8585, %v8583
    %v8587 = vld [vmem:[#allocation2] sm:$0x3]
    %v8588 = vld [vmem:[#allocation19] sm:$0xff]
    %v8589 = vld [vmem:[#allocation19 + $0x8] sm:$0xff]
    %v8590 = vld [vmem:[#allocation19 + $0x10] sm:$0xff]
    %v8591 = vld [vmem:[#allocation19 + $0x18] sm:$0xff]
    %v8592 = vld [vmem:[#allocation19 + $0x20] sm:$0xff]
    %v8593 = vld [vmem:[#allocation19 + $0x28] sm:$0xff]
    %v8594 = vld [vmem:[#allocation19 + $0x30] sm:$0xff]
    %v8595 = vld [vmem:[#allocation19 + $0x38] sm:$0xff]
    %v8596 = vld [vmem:[#allocation19 + $0x40] sm:$0xff]
    %v8597 = vld [vmem:[#allocation19 + $0x48] sm:$0xff]
    %v8598 = vld [vmem:[#allocation19 + $0x50] sm:$0xff]
    %v8599 = vld [vmem:[#allocation19 + $0x58] sm:$0xff]
    %v8600 = vld [vmem:[#allocation19 + $0x60] sm:$0xff]
    %v8601 = vld [vmem:[#allocation19 + $0x68] sm:$0xff]
    %v8602 = vld [vmem:[#allocation19 + $0x70] sm:$0xff]
    %v8603 = vld [vmem:[#allocation19 + $0x78] sm:$0xff]
    %v8604 = vld [vmem:[#allocation19 + $0x80] sm:$0xff]
    %v8605 = vld [vmem:[#allocation19 + $0x88] sm:$0xff]
    %v8606 = vld [vmem:[#allocation19 + $0x90] sm:$0xff]
    %v8607 = vld [vmem:[#allocation19 + $0x98] sm:$0xff]
    %v8608 = vld [vmem:[#allocation19 + $0xa0] sm:$0xff]
    %v8609 = vld [vmem:[#allocation19 + $0xa8] sm:$0xff]
    %v8610 = vld [vmem:[#allocation19 + $0xb0] sm:$0xff]
    %v8611 = vld [vmem:[#allocation19 + $0xb8] sm:$0xff]
    %v8612 = vld [vmem:[#allocation19 + $0xc0] sm:$0xff]
    %v8613 = vld [vmem:[#allocation19 + $0xc8] sm:$0xff]
    %v8614 = vld [vmem:[#allocation19 + $0xd0] sm:$0xff]
    %v8615 = vld [vmem:[#allocation19 + $0xd8] sm:$0xff]
    %v8616 = vld [vmem:[#allocation19 + $0xe0] sm:$0xff]
    %v8617 = vld [vmem:[#allocation19 + $0xe8] sm:$0xff]
    %v8618 = vld [vmem:[#allocation19 + $0xf0] sm:$0xff]
    %v8619 = vld [vmem:[#allocation19 + $0xf8] sm:$0xff]
    %v8620 = vpack.c.bf16 %v8587, %v8587
    %v8621 = vld [vmem:[#allocation20] sm:$0xff]
    %v8622 = vld [vmem:[#allocation20 + $0x8] sm:$0xff]
    %v8623 = vld [vmem:[#allocation20 + $0x10] sm:$0x33]
    %v8627 = vunpack.c.l.b16 %v8621
    %v8628 = vunpack.c.h.b16 %v8621
    %v8629 = vunpack.c.l.b16 %v8622
    %v8630 = vunpack.c.h.b16 %v8622
    %v8631 = vunpack.c.l.b16 %v8623
    %v8632 = vunpack.c.h.b16 %v8623
    %v8633 = vpack.c.b16 %v8629, %v8627
    %v8634 = vpack.c.b16 %v8630, %v8628
    %v8635 = vpack.c.b16 %v8631, %v8631
    %v8636 = vpack.c.b16 %v8632, %v8632
    %v8640 = vsel %vm8554, %v8620, 0
    %vm8642 = vcmask 1040384
    %vm8643 = vcmask 1041408
    %v8644 = vsel %vm8642, 4294967295, 65535
    %v8645 = vsel %vm8643, %v8644, 0
    %v8647 = vand.u32 %v8635, %v8645
    %v8650 = vand.u32 %v8636, %v8645
    %8652 = vmatpush.bf16.msra.mxu0 0
    %8653 = vmatpush.bf16.msra.mxu0 0
    %8654 = vmatpush.bf16.msra.mxu0 0
    %8655 = vmatpush.bf16.msra.mxu0 0
    %8656 = vmatpush.bf16.msra.mxu0 0
    %8657 = vmatpush.bf16.msra.mxu0 0
    %8658 = vmatpush.bf16.msra.mxu0 %v8647
    %8659 = vmatpush.bf16.msra.mxu0 %v8633
    %8660 = vmatmul.bf16.gmra.mxu0 %v8640
    %v8661 = vpop.f32.mrf.mxu0
    %v8662 = vadd.f32 0.0, %v8661
    %v8663 = vpop.f32.mrf.mxu0
    %8664 = vdwg.mxu0
    %8665 = vmatpush.bf16.msra.mxu0 0
    %8666 = vmatpush.bf16.msra.mxu0 0
    %8667 = vmatpush.bf16.msra.mxu0 0
    %8668 = vmatpush.bf16.msra.mxu0 0
    %8669 = vmatpush.bf16.msra.mxu0 0
    %8670 = vmatpush.bf16.msra.mxu0 0
    %8671 = vmatpush.bf16.msra.mxu0 %v8650
    %8672 = vmatpush.bf16.msra.mxu0 %v8634
    %8673 = vmatmul.bf16.gmra.mxu0 %v8640
    %v8674 = vpop.f32.mrf.mxu0
    %v8675 = vadd.f32 0.0, %v8674
    %v8676 = vpop.f32.mrf.mxu0
    %8677 = vdwg.mxu0
    %v8710 = vunpack.c.l.b16 %v8588
    %v8711 = vunpack.c.h.b16 %v8588
    %v8712 = vunpack.c.l.b16 %v8589
    %v8713 = vunpack.c.h.b16 %v8589
    %v8714 = vunpack.c.l.b16 %v8590
    %v8715 = vunpack.c.h.b16 %v8590
    %v8716 = vunpack.c.l.b16 %v8591
    %v8717 = vunpack.c.h.b16 %v8591
    %v8718 = vunpack.c.l.b16 %v8592
    %v8719 = vunpack.c.h.b16 %v8592
    %v8720 = vunpack.c.l.b16 %v8593
    %v8721 = vunpack.c.h.b16 %v8593
    %v8722 = vunpack.c.l.b16 %v8594
    %v8723 = vunpack.c.h.b16 %v8594
    %v8724 = vunpack.c.l.b16 %v8595
    %v8725 = vunpack.c.h.b16 %v8595
    %v8726 = vunpack.c.l.b16 %v8596
    %v8727 = vunpack.c.h.b16 %v8596
    %v8728 = vunpack.c.l.b16 %v8597
    %v8729 = vunpack.c.h.b16 %v8597
    %v8730 = vunpack.c.l.b16 %v8598
    %v8731 = vunpack.c.h.b16 %v8598
    %v8732 = vunpack.c.l.b16 %v8599
    %v8733 = vunpack.c.h.b16 %v8599
    %v8734 = vunpack.c.l.b16 %v8600
    %v8735 = vunpack.c.h.b16 %v8600
    %v8736 = vunpack.c.l.b16 %v8601
    %v8737 = vunpack.c.h.b16 %v8601
    %v8738 = vunpack.c.l.b16 %v8602
    %v8739 = vunpack.c.h.b16 %v8602
    %v8740 = vunpack.c.l.b16 %v8603
    %v8741 = vunpack.c.h.b16 %v8603
    %v8742 = vunpack.c.l.b16 %v8604
    %v8743 = vunpack.c.h.b16 %v8604
    %v8744 = vunpack.c.l.b16 %v8605
    %v8745 = vunpack.c.h.b16 %v8605
    %v8746 = vunpack.c.l.b16 %v8606
    %v8747 = vunpack.c.h.b16 %v8606
    %v8748 = vunpack.c.l.b16 %v8607
    %v8749 = vunpack.c.h.b16 %v8607
    %v8750 = vunpack.c.l.b16 %v8608
    %v8751 = vunpack.c.h.b16 %v8608
    %v8752 = vunpack.c.l.b16 %v8609
    %v8753 = vunpack.c.h.b16 %v8609
    %v8754 = vunpack.c.l.b16 %v8610
    %v8755 = vunpack.c.h.b16 %v8610
    %v8756 = vunpack.c.l.b16 %v8611
    %v8757 = vunpack.c.h.b16 %v8611
    %v8758 = vunpack.c.l.b16 %v8612
    %v8759 = vunpack.c.h.b16 %v8612
    %v8760 = vunpack.c.l.b16 %v8613
    %v8761 = vunpack.c.h.b16 %v8613
    %v8762 = vunpack.c.l.b16 %v8614
    %v8763 = vunpack.c.h.b16 %v8614
    %v8764 = vunpack.c.l.b16 %v8615
    %v8765 = vunpack.c.h.b16 %v8615
    %v8766 = vunpack.c.l.b16 %v8616
    %v8767 = vunpack.c.h.b16 %v8616
    %v8768 = vunpack.c.l.b16 %v8617
    %v8769 = vunpack.c.h.b16 %v8617
    %v8770 = vunpack.c.l.b16 %v8618
    %v8771 = vunpack.c.h.b16 %v8618
    %v8772 = vunpack.c.l.b16 %v8619
    %v8773 = vunpack.c.h.b16 %v8619
    %v8774 = vpack.c.b16 %v8712, %v8710
    %v8775 = vpack.c.b16 %v8713, %v8711
    %v8776 = vpack.c.b16 %v8716, %v8714
    %v8777 = vpack.c.b16 %v8717, %v8715
    %v8778 = vpack.c.b16 %v8720, %v8718
    %v8779 = vpack.c.b16 %v8721, %v8719
    %v8780 = vpack.c.b16 %v8724, %v8722
    %v8781 = vpack.c.b16 %v8725, %v8723
    %v8782 = vpack.c.b16 %v8728, %v8726
    %v8783 = vpack.c.b16 %v8729, %v8727
    %v8784 = vpack.c.b16 %v8732, %v8730
    %v8785 = vpack.c.b16 %v8733, %v8731
    %v8786 = vpack.c.b16 %v8736, %v8734
    %v8787 = vpack.c.b16 %v8737, %v8735
    %v8788 = vpack.c.b16 %v8740, %v8738
    %v8789 = vpack.c.b16 %v8741, %v8739
    %v8790 = vpack.c.b16 %v8744, %v8742
    %v8791 = vpack.c.b16 %v8745, %v8743
    %v8792 = vpack.c.b16 %v8748, %v8746
    %v8793 = vpack.c.b16 %v8749, %v8747
    %v8794 = vpack.c.b16 %v8752, %v8750
    %v8795 = vpack.c.b16 %v8753, %v8751
    %v8796 = vpack.c.b16 %v8756, %v8754
    %v8797 = vpack.c.b16 %v8757, %v8755
    %v8798 = vpack.c.b16 %v8760, %v8758
    %v8799 = vpack.c.b16 %v8761, %v8759
    %v8800 = vpack.c.b16 %v8764, %v8762
    %v8801 = vpack.c.b16 %v8765, %v8763
    %v8802 = vpack.c.b16 %v8768, %v8766
    %v8803 = vpack.c.b16 %v8769, %v8767
    %v8804 = vpack.c.b16 %v8772, %v8770
    %v8805 = vpack.c.b16 %v8773, %v8771
    %8838 = vmatpush.bf16.msra.mxu0 %v8788
    %8839 = vmatpush.bf16.msra.mxu0 %v8786
    %8840 = vmatpush.bf16.msra.mxu0 %v8784
    %8841 = vmatpush.bf16.msra.mxu0 %v8782
    %8842 = vmatpush.bf16.msra.mxu0 %v8780
    %8843 = vmatpush.bf16.msra.mxu0 %v8778
    %8844 = vmatpush.bf16.msra.mxu0 %v8776
    %8845 = vmatpush.bf16.msra.mxu0 %v8774
    %8846 = vmatmul.bf16.gmra.mxu0 %v8380
    %v8847 = vpop.f32.mrf.mxu0
    %v8848 = vadd.f32 %v8662, %v8847
    %v8849 = vpop.f32.mrf.mxu0
    %8850 = vdwg.mxu0
    %8851 = vmatpush.bf16.msra.mxu0 %v8804
    %8852 = vmatpush.bf16.msra.mxu0 %v8802
    %8853 = vmatpush.bf16.msra.mxu0 %v8800
    %8854 = vmatpush.bf16.msra.mxu0 %v8798
    %8855 = vmatpush.bf16.msra.mxu0 %v8796
    %8856 = vmatpush.bf16.msra.mxu0 %v8794
    %8857 = vmatpush.bf16.msra.mxu0 %v8792
    %8858 = vmatpush.bf16.msra.mxu0 %v8790
    %8859 = vmatmul.bf16.gmra.mxu0 %v8381
    %v8860 = vpop.f32.mrf.mxu0
    %v8861 = vadd.f32 %v8848, %v8860
    %v8862 = vpop.f32.mrf.mxu0
    %8863 = vdwg.mxu0
    %8864 = vmatpush.bf16.msra.mxu0 %v8789
    %8865 = vmatpush.bf16.msra.mxu0 %v8787
    %8866 = vmatpush.bf16.msra.mxu0 %v8785
    %8867 = vmatpush.bf16.msra.mxu0 %v8783
    %8868 = vmatpush.bf16.msra.mxu0 %v8781
    %8869 = vmatpush.bf16.msra.mxu0 %v8779
    %8870 = vmatpush.bf16.msra.mxu0 %v8777
    %8871 = vmatpush.bf16.msra.mxu0 %v8775
    %8872 = vmatmul.bf16.gmra.mxu0 %v8380
    %v8873 = vpop.f32.mrf.mxu0
    %v8874 = vadd.f32 %v8675, %v8873
    %v8875 = vpop.f32.mrf.mxu0
    %8876 = vdwg.mxu0
    %8877 = vmatpush.bf16.msra.mxu0 %v8805
    %8878 = vmatpush.bf16.msra.mxu0 %v8803
    %8879 = vmatpush.bf16.msra.mxu0 %v8801
    %8880 = vmatpush.bf16.msra.mxu0 %v8799
    %8881 = vmatpush.bf16.msra.mxu0 %v8797
    %8882 = vmatpush.bf16.msra.mxu0 %v8795
    %8883 = vmatpush.bf16.msra.mxu0 %v8793
    %8884 = vmatpush.bf16.msra.mxu0 %v8791
    %8885 = vmatmul.bf16.gmra.mxu0 %v8381
    %v8886 = vpop.f32.mrf.mxu0
    %v8887 = vadd.f32 %v8874, %v8886
    %v8888 = vpop.f32.mrf.mxu0
    %8889 = vdwg.mxu0
    %v8890 = vld [vmem:[#allocation22] sm:$0x3]
    %v8892 = vperm.slane %v8890, 0
    %v8893 = vperm.slane %v8890, 1
    %v8896 = vadd.f32 %v8861, %v8892
    %v8897 = vadd.f32 %v8887, %v8893
    %v8898 = vmax.f32 %v8896, 0.0
    %v8899 = vmax.f32 %v8897, 0.0
    %v8900 = vpack.c.bf16 %v8898, %v8898
    %v8901 = vpack.c.bf16 %v8899, %v8899
    %v8902 = vld [vmem:[#allocation23] sm:$0xff]
    %v8903 = vld [vmem:[#allocation23 + $0x8] sm:$0xff]
    %v8904 = vld [vmem:[#allocation23 + $0x10] sm:$0xff]
    %v8905 = vld [vmem:[#allocation23 + $0x18] sm:$0xff]
    %v8906 = vld [vmem:[#allocation23 + $0x20] sm:$0xff]
    %v8907 = vld [vmem:[#allocation23 + $0x28] sm:$0xff]
    %v8908 = vld [vmem:[#allocation23 + $0x30] sm:$0xff]
    %v8909 = vld [vmem:[#allocation23 + $0x38] sm:$0xff]
    %v8910 = vld [vmem:[#allocation23 + $0x40] sm:$0xff]
    %v8911 = vld [vmem:[#allocation23 + $0x48] sm:$0xff]
    %v8912 = vld [vmem:[#allocation23 + $0x50] sm:$0xff]
    %v8913 = vld [vmem:[#allocation23 + $0x58] sm:$0xff]
    %v8914 = vld [vmem:[#allocation23 + $0x60] sm:$0xff]
    %v8915 = vld [vmem:[#allocation23 + $0x68] sm:$0xff]
    %v8916 = vld [vmem:[#allocation23 + $0x70] sm:$0xff]
    %v8917 = vld [vmem:[#allocation23 + $0x78] sm:$0xff]
    %v8918 = vld [vmem:[#allocation23 + $0x80] sm:$0xff]
    %v8919 = vld [vmem:[#allocation23 + $0x88] sm:$0xff]
    %v8920 = vld [vmem:[#allocation23 + $0x90] sm:$0xff]
    %v8921 = vld [vmem:[#allocation23 + $0x98] sm:$0xff]
    %v8922 = vld [vmem:[#allocation23 + $0xa0] sm:$0xff]
    %v8923 = vld [vmem:[#allocation23 + $0xa8] sm:$0xff]
    %v8924 = vld [vmem:[#allocation23 + $0xb0] sm:$0xff]
    %v8925 = vld [vmem:[#allocation23 + $0xb8] sm:$0xff]
    %v8926 = vld [vmem:[#allocation23 + $0xc0] sm:$0xff]
    %v8927 = vld [vmem:[#allocation23 + $0xc8] sm:$0xff]
    %v8928 = vld [vmem:[#allocation23 + $0xd0] sm:$0xff]
    %v8929 = vld [vmem:[#allocation23 + $0xd8] sm:$0xff]
    %v8930 = vld [vmem:[#allocation23 + $0xe0] sm:$0xff]
    %v8931 = vld [vmem:[#allocation23 + $0xe8] sm:$0xff]
    %v8932 = vld [vmem:[#allocation23 + $0xf0] sm:$0xff]
    %v8933 = vld [vmem:[#allocation23 + $0xf8] sm:$0xff]
    %v8934 = vld [vmem:[#allocation25] sm:$0x3]
    %v8936 = vperm.slane %v8934, 0
    %v8937 = vperm.slane %v8934, 1
    %v8972 = vunpack.c.l.b16 %v8902
    %v8973 = vunpack.c.h.b16 %v8902
    %v8974 = vunpack.c.l.b16 %v8903
    %v8975 = vunpack.c.h.b16 %v8903
    %v8976 = vunpack.c.l.b16 %v8904
    %v8977 = vunpack.c.h.b16 %v8904
    %v8978 = vunpack.c.l.b16 %v8905
    %v8979 = vunpack.c.h.b16 %v8905
    %v8980 = vunpack.c.l.b16 %v8906
    %v8981 = vunpack.c.h.b16 %v8906
    %v8982 = vunpack.c.l.b16 %v8907
    %v8983 = vunpack.c.h.b16 %v8907
    %v8984 = vunpack.c.l.b16 %v8908
    %v8985 = vunpack.c.h.b16 %v8908
    %v8986 = vunpack.c.l.b16 %v8909
    %v8987 = vunpack.c.h.b16 %v8909
    %v8988 = vunpack.c.l.b16 %v8910
    %v8989 = vunpack.c.h.b16 %v8910
    %v8990 = vunpack.c.l.b16 %v8911
    %v8991 = vunpack.c.h.b16 %v8911
    %v8992 = vunpack.c.l.b16 %v8912
    %v8993 = vunpack.c.h.b16 %v8912
    %v8994 = vunpack.c.l.b16 %v8913
    %v8995 = vunpack.c.h.b16 %v8913
    %v8996 = vunpack.c.l.b16 %v8914
    %v8997 = vunpack.c.h.b16 %v8914
    %v8998 = vunpack.c.l.b16 %v8915
    %v8999 = vunpack.c.h.b16 %v8915
    %v9000 = vunpack.c.l.b16 %v8916
    %v9001 = vunpack.c.h.b16 %v8916
    %v9002 = vunpack.c.l.b16 %v8917
    %v9003 = vunpack.c.h.b16 %v8917
    %v9004 = vunpack.c.l.b16 %v8918
    %v9005 = vunpack.c.h.b16 %v8918
    %v9006 = vunpack.c.l.b16 %v8919
    %v9007 = vunpack.c.h.b16 %v8919
    %v9008 = vunpack.c.l.b16 %v8920
    %v9009 = vunpack.c.h.b16 %v8920
    %v9010 = vunpack.c.l.b16 %v8921
    %v9011 = vunpack.c.h.b16 %v8921
    %v9012 = vunpack.c.l.b16 %v8922
    %v9013 = vunpack.c.h.b16 %v8922
    %v9014 = vunpack.c.l.b16 %v8923
    %v9015 = vunpack.c.h.b16 %v8923
    %v9016 = vunpack.c.l.b16 %v8924
    %v9017 = vunpack.c.h.b16 %v8924
    %v9018 = vunpack.c.l.b16 %v8925
    %v9019 = vunpack.c.h.b16 %v8925
    %v9020 = vunpack.c.l.b16 %v8926
    %v9021 = vunpack.c.h.b16 %v8926
    %v9022 = vunpack.c.l.b16 %v8927
    %v9023 = vunpack.c.h.b16 %v8927
    %v9024 = vunpack.c.l.b16 %v8928
    %v9025 = vunpack.c.h.b16 %v8928
    %v9026 = vunpack.c.l.b16 %v8929
    %v9027 = vunpack.c.h.b16 %v8929
    %v9028 = vunpack.c.l.b16 %v8930
    %v9029 = vunpack.c.h.b16 %v8930
    %v9030 = vunpack.c.l.b16 %v8931
    %v9031 = vunpack.c.h.b16 %v8931
    %v9032 = vunpack.c.l.b16 %v8932
    %v9033 = vunpack.c.h.b16 %v8932
    %v9034 = vunpack.c.l.b16 %v8933
    %v9035 = vunpack.c.h.b16 %v8933
    %v9036 = vpack.c.b16 %v8974, %v8972
    %v9037 = vpack.c.b16 %v8975, %v8973
    %v9038 = vpack.c.b16 %v8978, %v8976
    %v9039 = vpack.c.b16 %v8979, %v8977
    %v9040 = vpack.c.b16 %v8982, %v8980
    %v9041 = vpack.c.b16 %v8983, %v8981
    %v9042 = vpack.c.b16 %v8986, %v8984
    %v9043 = vpack.c.b16 %v8987, %v8985
    %v9044 = vpack.c.b16 %v8990, %v8988
    %v9045 = vpack.c.b16 %v8991, %v8989
    %v9046 = vpack.c.b16 %v8994, %v8992
    %v9047 = vpack.c.b16 %v8995, %v8993
    %v9048 = vpack.c.b16 %v8998, %v8996
    %v9049 = vpack.c.b16 %v8999, %v8997
    %v9050 = vpack.c.b16 %v9002, %v9000
    %v9051 = vpack.c.b16 %v9003, %v9001
    %v9052 = vpack.c.b16 %v9006, %v9004
    %v9053 = vpack.c.b16 %v9007, %v9005
    %v9054 = vpack.c.b16 %v9010, %v9008
    %v9055 = vpack.c.b16 %v9011, %v9009
    %v9056 = vpack.c.b16 %v9014, %v9012
    %v9057 = vpack.c.b16 %v9015, %v9013
    %v9058 = vpack.c.b16 %v9018, %v9016
    %v9059 = vpack.c.b16 %v9019, %v9017
    %v9060 = vpack.c.b16 %v9022, %v9020
    %v9061 = vpack.c.b16 %v9023, %v9021
    %v9062 = vpack.c.b16 %v9026, %v9024
    %v9063 = vpack.c.b16 %v9027, %v9025
    %v9064 = vpack.c.b16 %v9030, %v9028
    %v9065 = vpack.c.b16 %v9031, %v9029
    %v9066 = vpack.c.b16 %v9034, %v9032
    %v9067 = vpack.c.b16 %v9035, %v9033
    %9100 = vmatpush.bf16.msra.mxu0 %v9050
    %9101 = vmatpush.bf16.msra.mxu0 %v9048
    %9102 = vmatpush.bf16.msra.mxu0 %v9046
    %9103 = vmatpush.bf16.msra.mxu0 %v9044
    %9104 = vmatpush.bf16.msra.mxu0 %v9042
    %9105 = vmatpush.bf16.msra.mxu0 %v9040
    %9106 = vmatpush.bf16.msra.mxu0 %v9038
    %9107 = vmatpush.bf16.msra.mxu0 %v9036
    %9108 = vmatmul.bf16.gmra.mxu0 %v8900
    %v9109 = vpop.f32.mrf.mxu0
    %v9110 = vadd.f32 %v8936, %v9109
    %v9111 = vpop.f32.mrf.mxu0
    %9112 = vdwg.mxu0
    %9113 = vmatpush.bf16.msra.mxu0 %v9066
    %9114 = vmatpush.bf16.msra.mxu0 %v9064
    %9115 = vmatpush.bf16.msra.mxu0 %v9062
    %9116 = vmatpush.bf16.msra.mxu0 %v9060
    %9117 = vmatpush.bf16.msra.mxu0 %v9058
    %9118 = vmatpush.bf16.msra.mxu0 %v9056
    %9119 = vmatpush.bf16.msra.mxu0 %v9054
    %9120 = vmatpush.bf16.msra.mxu0 %v9052
    %9121 = vmatmul.bf16.gmra.mxu0 %v8901
    %v9122 = vpop.f32.mrf.mxu0
    %v9123 = vadd.f32 %v9110, %v9122
    %v9124 = vpop.f32.mrf.mxu0
    %9125 = vdwg.mxu0
    %9126 = vmatpush.bf16.msra.mxu0 %v9051
    %9127 = vmatpush.bf16.msra.mxu0 %v9049
    %9128 = vmatpush.bf16.msra.mxu0 %v9047
    %9129 = vmatpush.bf16.msra.mxu0 %v9045
    %9130 = vmatpush.bf16.msra.mxu0 %v9043
    %9131 = vmatpush.bf16.msra.mxu0 %v9041
    %9132 = vmatpush.bf16.msra.mxu0 %v9039
    %9133 = vmatpush.bf16.msra.mxu0 %v9037
    %9134 = vmatmul.bf16.gmra.mxu0 %v8900
    %v9135 = vpop.f32.mrf.mxu0
    %v9136 = vadd.f32 %v8937, %v9135
    %v9137 = vpop.f32.mrf.mxu0
    %9138 = vdwg.mxu0
    %9139 = vmatpush.bf16.msra.mxu0 %v9067
    %9140 = vmatpush.bf16.msra.mxu0 %v9065
    %9141 = vmatpush.bf16.msra.mxu0 %v9063
    %9142 = vmatpush.bf16.msra.mxu0 %v9061
    %9143 = vmatpush.bf16.msra.mxu0 %v9059
    %9144 = vmatpush.bf16.msra.mxu0 %v9057
    %9145 = vmatpush.bf16.msra.mxu0 %v9055
    %9146 = vmatpush.bf16.msra.mxu0 %v9053
    %9147 = vmatmul.bf16.gmra.mxu0 %v8901
    %v9148 = vpop.f32.mrf.mxu0
    %v9149 = vadd.f32 %v9136, %v9148
    %v9150 = vpop.f32.mrf.mxu0
    %9151 = vdwg.mxu0
    %v9152 = vmax.f32 %v9123, 0.0
    %v9153 = vmax.f32 %v9149, 0.0
    %v9154 = vpack.c.bf16 %v9152, %v9152
    %v9155 = vpack.c.bf16 %v9153, %v9153
    %v9156 = vld [vmem:[#allocation26] sm:$0xf]
    %v9157 = vld [vmem:[#allocation26 + $0x4] sm:$0xf]
    %v9158 = vld [vmem:[#allocation26 + $0x8] sm:$0xf]
    %v9159 = vld [vmem:[#allocation26 + $0xc] sm:$0xf]
    %v9160 = vld [vmem:[#allocation26 + $0x10] sm:$0xf]
    %v9161 = vld [vmem:[#allocation26 + $0x14] sm:$0xf]
    %v9162 = vld [vmem:[#allocation26 + $0x18] sm:$0xf]
    %v9163 = vld [vmem:[#allocation26 + $0x1c] sm:$0xf]
    %v9164 = vld [vmem:[#allocation26 + $0x20] sm:$0xf]
    %v9165 = vld [vmem:[#allocation26 + $0x24] sm:$0xf]
    %v9166 = vld [vmem:[#allocation26 + $0x28] sm:$0xf]
    %v9167 = vld [vmem:[#allocation26 + $0x2c] sm:$0xf]
    %v9168 = vld [vmem:[#allocation26 + $0x30] sm:$0xf]
    %v9169 = vld [vmem:[#allocation26 + $0x34] sm:$0xf]
    %v9170 = vld [vmem:[#allocation26 + $0x38] sm:$0xf]
    %v9171 = vld [vmem:[#allocation26 + $0x3c] sm:$0xf]
    %v9172 = vld [vmem:[#allocation26 + $0x40] sm:$0xf]
    %v9173 = vld [vmem:[#allocation26 + $0x44] sm:$0xf]
    %v9174 = vld [vmem:[#allocation26 + $0x48] sm:$0xf]
    %v9175 = vld [vmem:[#allocation26 + $0x4c] sm:$0xf]
    %v9176 = vld [vmem:[#allocation26 + $0x50] sm:$0xf]
    %v9177 = vld [vmem:[#allocation26 + $0x54] sm:$0xf]
    %v9178 = vld [vmem:[#allocation26 + $0x58] sm:$0xf]
    %v9179 = vld [vmem:[#allocation26 + $0x5c] sm:$0xf]
    %v9180 = vld [vmem:[#allocation26 + $0x60] sm:$0xf]
    %v9181 = vld [vmem:[#allocation26 + $0x64] sm:$0xf]
    %v9182 = vld [vmem:[#allocation26 + $0x68] sm:$0xf]
    %v9183 = vld [vmem:[#allocation26 + $0x6c] sm:$0xf]
    %v9184 = vld [vmem:[#allocation26 + $0x70] sm:$0xf]
    %v9185 = vld [vmem:[#allocation26 + $0x74] sm:$0xf]
    %v9186 = vld [vmem:[#allocation26 + $0x78] sm:$0xf]
    %v9187 = vld [vmem:[#allocation26 + $0x7c] sm:$0xf]
    %v9188 = vld [vmem:[#allocation28] sm:$0x1]
    %v9190 = vperm.slane %v9188, 0
    %v9224 = vunpack.c.l.b16 %v9156
    %v9225 = vunpack.c.l.b16 %v9157
    %v9226 = vunpack.c.l.b16 %v9158
    %v9227 = vunpack.c.l.b16 %v9159
    %v9228 = vunpack.c.l.b16 %v9160
    %v9229 = vunpack.c.l.b16 %v9161
    %v9230 = vunpack.c.l.b16 %v9162
    %v9231 = vunpack.c.l.b16 %v9163
    %v9232 = vunpack.c.l.b16 %v9164
    %v9233 = vunpack.c.l.b16 %v9165
    %v9234 = vunpack.c.l.b16 %v9166
    %v9235 = vunpack.c.l.b16 %v9167
    %v9236 = vunpack.c.l.b16 %v9168
    %v9237 = vunpack.c.l.b16 %v9169
    %v9238 = vunpack.c.l.b16 %v9170
    %v9239 = vunpack.c.l.b16 %v9171
    %v9240 = vunpack.c.l.b16 %v9172
    %v9241 = vunpack.c.l.b16 %v9173
    %v9242 = vunpack.c.l.b16 %v9174
    %v9243 = vunpack.c.l.b16 %v9175
    %v9244 = vunpack.c.l.b16 %v9176
    %v9245 = vunpack.c.l.b16 %v9177
    %v9246 = vunpack.c.l.b16 %v9178
    %v9247 = vunpack.c.l.b16 %v9179
    %v9248 = vunpack.c.l.b16 %v9180
    %v9249 = vunpack.c.l.b16 %v9181
    %v9250 = vunpack.c.l.b16 %v9182
    %v9251 = vunpack.c.l.b16 %v9183
    %v9252 = vunpack.c.l.b16 %v9184
    %v9253 = vunpack.c.l.b16 %v9185
    %v9254 = vunpack.c.l.b16 %v9186
    %v9255 = vunpack.c.l.b16 %v9187
    %v9256 = vpack.c.b16 %v9225, %v9224
    %v9257 = vpack.c.b16 %v9227, %v9226
    %v9258 = vpack.c.b16 %v9229, %v9228
    %v9259 = vpack.c.b16 %v9231, %v9230
    %v9260 = vpack.c.b16 %v9233, %v9232
    %v9261 = vpack.c.b16 %v9235, %v9234
    %v9262 = vpack.c.b16 %v9237, %v9236
    %v9263 = vpack.c.b16 %v9239, %v9238
    %v9264 = vpack.c.b16 %v9241, %v9240
    %v9265 = vpack.c.b16 %v9243, %v9242
    %v9266 = vpack.c.b16 %v9245, %v9244
    %v9267 = vpack.c.b16 %v9247, %v9246
    %v9268 = vpack.c.b16 %v9249, %v9248
    %v9269 = vpack.c.b16 %v9251, %v9250
    %v9270 = vpack.c.b16 %v9253, %v9252
    %v9271 = vpack.c.b16 %v9255, %v9254
    %9288 = vmatpush.bf16.msra.mxu0 %v9263
    %9289 = vmatpush.bf16.msra.mxu0 %v9262
    %9290 = vmatpush.bf16.msra.mxu0 %v9261
    %9291 = vmatpush.bf16.msra.mxu0 %v9260
    %9292 = vmatpush.bf16.msra.mxu0 %v9259
    %9293 = vmatpush.bf16.msra.mxu0 %v9258
    %9294 = vmatpush.bf16.msra.mxu0 %v9257
    %9295 = vmatpush.bf16.msra.mxu0 %v9256
    %9296 = vmatmul.bf16.gmra.mxu0 %v9154
    %v9297 = vpop.f32.mrf.mxu0
    %v9298 = vadd.f32 %v9190, %v9297
    %v9299 = vpop.f32.mrf.mxu0
    %9300 = vdwg.mxu0
    %9301 = vmatpush.bf16.msra.mxu0 %v9271
    %9302 = vmatpush.bf16.msra.mxu0 %v9270
    %9303 = vmatpush.bf16.msra.mxu0 %v9269
    %9304 = vmatpush.bf16.msra.mxu0 %v9268
    %9305 = vmatpush.bf16.msra.mxu0 %v9267
    %9306 = vmatpush.bf16.msra.mxu0 %v9266
    %9307 = vmatpush.bf16.msra.mxu0 %v9265
    %9308 = vmatpush.bf16.msra.mxu0 %v9264
    %9309 = vmatmul.bf16.gmra.mxu0 %v9155
    %v9310 = vpop.f32.mrf.mxu0
    %v9311 = vadd.f32 %v9298, %v9310
    %v9312 = vpop.f32.mrf.mxu0
    %9313 = vdwg.mxu0
    %9314 = vst [vmem:[#allocation30] sm:$0x3] %v9311
    // Predicated region
    $region150: #{single_trance_net.1} parent=1 // pred_check
      _
    $region151: #{single_trance_net.1} parent=1 // pred_check_branch
      %9316 = sbr.rel (0) target = $region153
    $region152: #{single_trance_net.1} parent=1 // pred_region
      %9318 = vsyncadd [#allocation4], 0
      %s9320 = sshll.u32 [#allocation29], 4
      %s9321 = int_to_ptr.vmem [resolvable:$true] %s9320
      %s9322 = sshll.u32 %s20, 4
      %s9323 = int_to_ptr.hbm [resolvable:$true] %s9322
      %9325 = dma.vmem_to_hbm [thread:$0]  %s9321, 32, %s9323, [#allocation4]
    $region153: #{single_trance_net.1} parent=1 // pred_fallthru
      _
    // Predicated region
    $region154: #{single_trance_net.1} parent=1 // pred_check
      _
    $region155: #{single_trance_net.1} parent=1 // pred_check_branch
      %9327 = sbr.rel (0) target = $region157
    $region156: #{single_trance_net.1} parent=1 // pred_region
      %9329 = vsyncadd [#allocation31], 0
      %s9331 = sshll.u32 [#allocation30], 4
      %s9332 = int_to_ptr.vmem [resolvable:$true] %s9331
      %s9333 = sshll.u32 %s21, 4
      %s9334 = int_to_ptr.hbm [resolvable:$true] %s9333
      %9336 = dma.vmem_to_hbm [thread:$0]  %s9332, 32, %s9334, [#allocation31]
    $region157: #{single_trance_net.1} parent=1 // pred_fallthru
      _
    // Predicated region
    $region158: #{single_trance_net.1} parent=1 // pred_check
      _
    $region159: #{single_trance_net.1} parent=1 // pred_check_branch
      %9338 = sbr.rel (0) target = $region161
    $region160: #{single_trance_net.1} parent=1 // pred_region
      %9340 = dma.done [#allocation4], 32
    $region161: #{single_trance_net.1} parent=1 // pred_fallthru
      _
    // Predicated region
    $region162: #{single_trance_net.1} parent=1 // pred_check
      _
    $region163: #{single_trance_net.1} parent=1 // pred_check_branch
      %9342 = sbr.rel (0) target = $region165
    $region164: #{single_trance_net.1} parent=1 // pred_region
      %9344 = dma.done [#allocation31], 32
    $region165: #{single_trance_net.1} parent=1 // pred_fallthru
      _
    %9345 = vsyncpa [#allocation3], 1
    %9346 = vsyncpa [#allocation6], 1
    %9347 = vsyncpa [#allocation9], 1
    %9348 = vsyncpa [#allocation12], 1
    %9349 = vsyncpa [#allocation15], 1
    %9350 = vsyncpa [#allocation18], 1
    %9351 = vsyncpa [#allocation21], 1
    %9352 = vsyncpa [#allocation24], 1
    %9353 = vsyncpa [#allocation27], 1
    %9354 = vsyncpa [#allocation4], 1
    %9355 = vsyncpa [#allocation31], 1

</llo_original>
